<compile_context>
chip_gen: v7x
topology: tpu7x:2x2x1
jax: 0.10.0
libtpu: 0.0.40
codegen_flags: <defaults>
</compile_context>

<pallas_src>
import jax
import jax.numpy as jnp
from jax import lax
from jax.experimental import pallas as pl
from jax.experimental.pallas import tpu as pltpu

CIN, H, W = 30, 11, 11
HW = H * W              # 121: LSTM input feature size
SEQ = 64                # conv output channels == LSTM sequence length
HID = 64                # LSTM hidden size
L1, L2 = 32, 9
K9 = CIN * 9            # 270: im2col contraction dim
KPAD = 272              # 270 data rows + 1 ones row (conv bias) + 1 zero row
FPAD = 128              # 121 padded to the lane width
G4 = 4 * HID            # 256: full gate vector
LHALF = 2 * HID         # 128: one vreg width of lanes
UNROLL = 8              # recurrence processed as 8 blocks of 8 steps


def _kernel(patches_ref, wconv_ref, wih_ref, whh_ref, blstm_ref,
            w1_ref, w2_ref, b2_ref, out_ref):
    f32 = jnp.float32
    bf16 = jnp.bfloat16

    # --- Conv2d(30, 64, 3, 1, 1) + bias + ReLU as one im2col matmul ----------
    # Bias rides on the all-ones row 270 of `patches`; lanes 121..127 of conv are
    # exactly zero (their patch columns are all-zero, including the ones row).
    conv = jnp.maximum(
        jnp.dot(wconv_ref[...], patches_ref[...], preferred_element_type=f32),
        0.0)                                                 # (64, 128) f32

    wih = wih_ref[...]                                       # (128, 256) bf16, rows 121.. zero
    whh = whh_ref[...]                                       # (128, 256) bf16, rows 64..  zero
    blstm = blstm_ref[...]                                   # (1, 256)   f32

    lane = lax.broadcasted_iota(jnp.int32, (1, LHALF), 1)
    low64 = lane < HID                                       # lanes 0..63 (hoisted once)

    # Packed 128-lane state: h lanes 0..63 hold h_t (lanes 64..127 are don't-care
    # and are killed by the zero rows 64..127 of whh / lin1); c holds c_t
    # replicated in both 64-lane halves.
    h = jnp.zeros((1, LHALF), f32)
    c = jnp.zeros((1, LHALF), f32)

    # Gate lane layout after the wrapper permutation:  [ f | i | o | 2g ].
    # One sigmoid covers all 256 lanes; tanh(g) is recovered as 2*sigmoid(2g)-1.
    for blk in range(SEQ // UNROLL):
        # x-projection for this block's 8 steps.  Depends only on `conv`, so the
        # scheduler hides these MXU passes under the latency-bound recurrence.
        xblk = (jnp.dot(conv[blk * UNROLL:(blk + 1) * UNROLL, :].astype(bf16),
                        wih, preferred_element_type=f32)
                + blstm)                                     # (8, 256) f32
        for t in range(UNROLL):
            gates = xblk[t:t + 1, :] + jnp.dot(
                h.astype(bf16), whh, preferred_element_type=f32)   # (1, 256)
            sig = jax.nn.sigmoid(gates)                      # single full-width EUP pass
            fi = sig[:, :LHALF]                              # [ f | i ]
            og = sig[:, LHALF:]                              # [ o | sig(2g) ]
            cg = jnp.where(low64, c, 2.0 * og - 1.0)         # [ c | tanh(g) ]
            prod = fi * cg                                   # [ f*c | i*g ]
            c = prod + pltpu.roll(prod, shift=HID, axis=1)   # c' in both 64-lane halves
            h = og * jnp.tanh(c)                             # lanes 0..63 = o*tanh(c')

    # --- head: ReLU -> Linear(64,32, no bias) -> ReLU -> Linear(32,9) --------
    h = jnp.maximum(h, 0.0)
    y = jnp.maximum(jnp.dot(h.astype(bf16), w1_ref[...],
                            preferred_element_type=f32), 0.0)          # (1, 32)
    out_ref[...] = (jnp.dot(y.astype(bf16), w2_ref[...],
                            preferred_element_type=f32)
                    + b2_ref[...])                                     # (1, 9)


def _reorder_gates(a):
    """PyTorch gate blocks [i, f, g, o] -> kernel layout [f, i, o, 2*g] (axis 0).

    The factor 2 on the g block lets the kernel use tanh(g) = 2*sigmoid(2g) - 1,
    so one sigmoid covers the whole 256-lane gate vector.
    """
    i, f, g, o = a[:HID], a[HID:2 * HID], a[2 * HID:3 * HID], a[3 * HID:]
    return jnp.concatenate([f, i, o, 2.0 * g], axis=0)


def prepare_params(params):
    """One-time weight preprocessing (reorder/transpose/pad/bf16 cast).

    Kept out of the per-call jitted path: for a ~10 us kernel the surrounding
    XLA ops would otherwise rival the Pallas call itself.
    """
    w_conv, b_conv, w_ih, w_hh, b_ih, b_hh, w1, w2, b2 = params
    bf16 = jnp.bfloat16

    # Conv weight as im2col LHS with the bias folded in as column 270 (which
    # multiplies the ones row 270 of `patches`); column 271 stays zero.
    wconv = jnp.concatenate([w_conv.reshape(SEQ, K9), b_conv.reshape(SEQ, 1)],
                            axis=1)
    wconv = jnp.pad(wconv, ((0, 0), (0, KPAD - K9 - 1))).astype(bf16)       # (64, 272)

    # LSTM input projection (128, 256): rows 121..127 are zero, so conv's padded
    # lanes (already forced to zero by the patches construction) stay inert.
    wih = jnp.pad(_reorder_gates(w_ih).T, ((0, FPAD - HW), (0, 0))).astype(bf16)
    # Recurrent weights (128, 256): zero rows 64..127 kill the don't-care lanes
    # of the packed 128-lane h vector.
    whh = jnp.pad(_reorder_gates(w_hh).T, ((0, LHALF - HID), (0, 0))).astype(bf16)
    blstm = _reorder_gates(b_ih + b_hh).reshape(1, G4).astype(jnp.float32)  # (1, 256)

    w1p = jnp.pad(w1.T, ((0, LHALF - HID), (0, 0))).astype(bf16)            # (128, 32)
    w2p = w2.T.astype(bf16)                                                 # (32, 9)
    b2p = b2.reshape(1, L2).astype(jnp.float32)                             # (1, 9)
    return (wconv, wih, whh, blstm, w1p, w2p, b2p)


def simple_conv_lstm2(x, prepped):
    """x: (1, 30, 11, 11) NCHW float32 -> (1, 9) float32."""
    wconv, wih, whh, blstm, w1p, w2p, b2p = prepped

    # im2col glue (plain JAX): (1,30,11,11) -> (272,128) with
    #   rows 0..269 = (cin,kh,kw) patches (zero in the 7 padded lane columns),
    #   row  270    = ones in cols 0..120 (conv-bias carrier), zeros elsewhere,
    #   row  271    = zeros.
    # TODO(synk): if xprof shows this glue rivaling the kernel, move the 9
    # shifted 3x3 views into the kernel (static slices of a padded-x VMEM ref).
    xp = jnp.pad(x, ((0, 0), (0, 0), (1, 1), (1, 1)))
    patches = jnp.stack(
        [xp[0, :, ki:ki + H, kj:kj + W] for ki in range(3) for kj in range(3)],
        axis=1).reshape(K9, HW)
    patches = jnp.pad(patches, ((0, 1), (0, 0)), constant_values=1.0)
    patches = jnp.pad(patches,
                      ((0, KPAD - K9 - 1), (0, FPAD - HW))).astype(jnp.bfloat16)

    cost = pl.CostEstimate(
        flops=2 * (SEQ * KPAD * FPAD        # conv im2col matmul
                   + SEQ * FPAD * G4        # x-projection
                   + SEQ * FPAD * G4        # 64 recurrent (1,128)x(128,256) steps
                   + LHALF * L1 + L1 * L2),
        transcendentals=SEQ * (G4 + LHALF),
        bytes_accessed=2 * (KPAD * FPAD + SEQ * KPAD + 2 * FPAD * G4
                            + LHALF * L1 + L1 * L2) + 4 * (G4 + 2 * L2),
    )

    # Everything fits trivially in VMEM on v5e/v6e/v7x -> no grid, no tiling,
    # no scratch, no raised vmem limit (per perf review: the kernel is
    # dependence-latency-bound, not VMEM/HBM-bound).
    vmem = pl.BlockSpec(memory_space=pltpu.MemorySpace.VMEM)
    out = pl.pallas_call(
        _kernel,
        out_shape=jax.ShapeDtypeStruct((1, L2), jnp.float32),
        in_specs=[vmem] * 8,
        out_specs=vmem,
        cost_estimate=cost,
    )(
        patches,    # (272, 128) bf16
        wconv,      # (64, 272)  bf16   (bias folded into col 270)
        wih,        # (128, 256) bf16   [f|i|o|2g], rows 121.. zero
        whh,        # (128, 256) bf16   [f|i|o|2g], rows 64..  zero
        blstm,      # (1, 256)   f32
        w1p,        # (128, 32)  bf16   rows 64.. zero
        w2p,        # (32, 9)    bf16
        b2p,        # (1, 9)     f32
    )
    return out      # (1, 9) == out.unsqueeze(0)


def reference(x, params):
    """Pure-JAX f32 reference mirroring the PyTorch forward."""
    w_conv, b_conv, w_ih, w_hh, b_ih, b_hh, w1, w2, b2 = params
    hi = lax.Precision.HIGHEST
    conv = lax.conv_general_dilated(
        x, w_conv, window_strides=(1, 1), padding="SAME",
        dimension_numbers=("NCHW", "OIHW", "NCHW"),
        precision=hi) + b_conv[None, :, None, None]
    conv = jnp.maximum(conv, 0.0)
    seq = conv.reshape(1, SEQ, HW)[0]                # (seq=64, feat=121)

    def step(carry, x_t):
        h, c = carry
        gates = (jnp.dot(x_t, w_ih.T, precision=hi) + b_ih
                 + jnp.dot(h, w_hh.T, precision=hi) + b_hh)
        i, f, g, o = jnp.split(gates, 4)
        i = jax.nn.sigmoid(i)
        f = jax.nn.sigmoid(f)
        g = jnp.tanh(g)
        o = jax.nn.sigmoid(o)
        c = f * c + i * g
        h = o * jnp.tanh(c)
        return (h, c), None

    (h, _), _ = lax.scan(step, (jnp.zeros(HID), jnp.zeros(HID)), seq)
    h = jnp.maximum(h, 0.0)                          # x[-1, -1] then relu1
    y = jnp.maximum(jnp.dot(h, w1.T, precision=hi), 0.0)
    out = jnp.dot(y, w2.T, precision=hi) + b2
    return out[None, :]


if __name__ == "__main__":
    key = jax.random.PRNGKey(0)
    ks = jax.random.split(key, 10)
    s = 0.05
    w_conv = s * jax.random.normal(ks[0], (SEQ, CIN, 3, 3), jnp.float32)
    b_conv = s * jax.random.normal(ks[1], (SEQ,), jnp.float32)
    w_ih   = s * jax.random.normal(ks[2], (4 * HID, HW), jnp.float32)   # gate order i,f,g,o
    w_hh   = s * jax.random.normal(ks[3], (4 * HID, HID), jnp.float32)
    b_ih   = s * jax.random.normal(ks[4], (4 * HID,), jnp.float32)
    b_hh   = s * jax.random.normal(ks[5], (4 * HID,), jnp.float32)
    w1     = s * jax.random.normal(ks[6], (L1, HID), jnp.float32)       # Linear(64,32) no bias
    w2     = s * jax.random.normal(ks[7], (L2, L1), jnp.float32)        # Linear(32,9)
    b2     = s * jax.random.normal(ks[8], (L2,), jnp.float32)
    params = (w_conv, b_conv, w_ih, w_hh, b_ih, b_hh, w1, w2, b2)

    x = jax.random.normal(ks[9], (1, CIN, H, W), jnp.float32)

    # Weight prep runs once, outside the per-call jitted path.
    prepped = prepare_params(params)
    prepped = jax.block_until_ready(prepped)

    fwd = jax.jit(simple_conv_lstm2)
    out = jax.block_until_ready(fwd(x, prepped))
    assert out.shape == (1, L2)

    ref = reference(x, params)
    err = float(jnp.max(jnp.abs(out - ref)))
    if err > 5e-3:
        raise AssertionError(f"kernel/reference mismatch: max abs err = {err}")
    print("KERNEL_OK")
</pallas_src>

<mosaic_0001>
module attributes {stable_mosaic.version = 11 : i64} {
  func.func @_kernel(%arg0: memref<272x128xbf16, #tpu.memory_space<vmem>>, %arg1: memref<64x272xbf16, #tpu.memory_space<vmem>>, %arg2: memref<128x256xbf16, #tpu.memory_space<vmem>>, %arg3: memref<128x256xbf16, #tpu.memory_space<vmem>>, %arg4: memref<1x256xf32, #tpu.memory_space<vmem>>, %arg5: memref<128x32xbf16, #tpu.memory_space<vmem>>, %arg6: memref<32x9xbf16, #tpu.memory_space<vmem>>, %arg7: memref<1x9xf32, #tpu.memory_space<vmem>>, %arg8: memref<1x9xf32, #tpu.memory_space<vmem>>) attributes {dimension_semantics = [], scalar_prefetch = 0 : i64, scratch_operands = 0 : i64, tpu.core_type = #tpu.core_type<tc>} {
    %c0 = arith.constant 0 : index
    %c0_0 = arith.constant 0 : index
    %0 = vector.load %arg1[%c0, %c0_0] : memref<64x272xbf16, #tpu.memory_space<vmem>>, vector<64x272xbf16>
    %c0_1 = arith.constant 0 : index
    %c0_2 = arith.constant 0 : index
    %1 = vector.load %arg0[%c0_1, %c0_2] : memref<272x128xbf16, #tpu.memory_space<vmem>>, vector<272x128xbf16>
    %cst = arith.constant dense<0.000000e+00> : vector<64x128xf32>
    %2 = tpu.matmul %0, %1, %cst {dimension_numbers = #tpu.dot_dimension_numbers<[1], [0], [0], [1], [0, 0, 1, 1], [], []>} : vector<64x272xbf16>, vector<272x128xbf16>, vector<64x128xf32> -> vector<64x128xf32>
    %cst_3 = arith.constant 0.000000e+00 : f32
    %3 = vector.broadcast %cst_3 : f32 to vector<64x128xf32>
    %4 = arith.maximumf %2, %3 : vector<64x128xf32>
    %c0_4 = arith.constant 0 : index
    %c0_5 = arith.constant 0 : index
    %5 = vector.load %arg2[%c0_4, %c0_5] : memref<128x256xbf16, #tpu.memory_space<vmem>>, vector<128x256xbf16>
    %c0_6 = arith.constant 0 : index
    %c0_7 = arith.constant 0 : index
    %6 = vector.load %arg3[%c0_6, %c0_7] : memref<128x256xbf16, #tpu.memory_space<vmem>>, vector<128x256xbf16>
    %c0_8 = arith.constant 0 : index
    %c0_9 = arith.constant 0 : index
    %7 = vector.load %arg4[%c0_8, %c0_9] : memref<1x256xf32, #tpu.memory_space<vmem>>, vector<1x256xf32>
    %8 = tpu.iota {dimensions = array<i32: 1>} : vector<1x128xi32>
    %c64_i32 = arith.constant 64 : i32
    %9 = vector.broadcast %c64_i32 : i32 to vector<1x128xi32>
    %10 = arith.cmpi slt, %8, %9 : vector<1x128xi32>
    %cst_10 = arith.constant 0.000000e+00 : f32
    %11 = vector.broadcast %cst_10 : f32 to vector<1x128xf32>
    %cst_11 = arith.constant 0.000000e+00 : f32
    %12 = vector.broadcast %cst_11 : f32 to vector<1x128xf32>
    %13 = vector.extract_strided_slice %4 {offsets = [0, 0], sizes = [8, 128], strides = [1, 1]} : vector<64x128xf32> to vector<8x128xf32>
    %14 = arith.truncf %13 : vector<8x128xf32> to vector<8x128xbf16>
    %cst_12 = arith.constant dense<0.000000e+00> : vector<8x256xf32>
    %15 = tpu.matmul %14, %5, %cst_12 {dimension_numbers = #tpu.dot_dimension_numbers<[1], [0], [0], [1], [0, 0, 1, 1], [], []>} : vector<8x128xbf16>, vector<128x256xbf16>, vector<8x256xf32> -> vector<8x256xf32>
    %16 = vector.broadcast %7 : vector<1x256xf32> to vector<8x256xf32>
    %17 = arith.addf %15, %16 : vector<8x256xf32>
    %18 = vector.extract_strided_slice %17 {offsets = [0, 0], sizes = [1, 256], strides = [1, 1]} : vector<8x256xf32> to vector<1x256xf32>
    %19 = arith.truncf %11 : vector<1x128xf32> to vector<1x128xbf16>
    %cst_13 = arith.constant dense<0.000000e+00> : vector<1x256xf32>
    %20 = tpu.matmul %19, %6, %cst_13 {dimension_numbers = #tpu.dot_dimension_numbers<[1], [0], [0], [1], [0, 0, 1, 1], [], []>} : vector<1x128xbf16>, vector<128x256xbf16>, vector<1x256xf32> -> vector<1x256xf32>
    %21 = arith.addf %18, %20 : vector<1x256xf32>
    %22 = arith.negf %21 : vector<1x256xf32>
    %23 = math.exp %22 : vector<1x256xf32>
    %cst_14 = arith.constant 1.000000e+00 : f32
    %24 = vector.broadcast %cst_14 : f32 to vector<1x256xf32>
    %25 = arith.addf %24, %23 : vector<1x256xf32>
    %26 = arith.divf %24, %25 : vector<1x256xf32>
    %27 = vector.extract_strided_slice %26 {offsets = [0, 0], sizes = [1, 128], strides = [1, 1]} : vector<1x256xf32> to vector<1x128xf32>
    %28 = vector.extract_strided_slice %26 {offsets = [0, 128], sizes = [1, 128], strides = [1, 1]} : vector<1x256xf32> to vector<1x128xf32>
    %cst_15 = arith.constant 2.000000e+00 : f32
    %29 = vector.broadcast %cst_15 : f32 to vector<1x128xf32>
    %30 = arith.mulf %29, %28 : vector<1x128xf32>
    %cst_16 = arith.constant 1.000000e+00 : f32
    %31 = vector.broadcast %cst_16 : f32 to vector<1x128xf32>
    %32 = arith.subf %30, %31 : vector<1x128xf32>
    %33 = arith.select %10, %12, %32 : vector<1x128xi1>, vector<1x128xf32>
    %34 = arith.mulf %27, %33 : vector<1x128xf32>
    %c64_i32_17 = arith.constant 64 : i32
    %35 = tpu.dynamic_rotate %34 by %c64_i32_17 dim 1 : vector<1x128xf32>, i32 -> vector<1x128xf32>
    %36 = arith.addf %34, %35 : vector<1x128xf32>
    %37 = math.tanh %36 : vector<1x128xf32>
    %38 = arith.mulf %28, %37 : vector<1x128xf32>
    %39 = vector.extract_strided_slice %17 {offsets = [1, 0], sizes = [1, 256], strides = [1, 1]} : vector<8x256xf32> to vector<1x256xf32>
    %40 = arith.truncf %38 : vector<1x128xf32> to vector<1x128xbf16>
    %cst_18 = arith.constant dense<0.000000e+00> : vector<1x256xf32>
    %41 = tpu.matmul %40, %6, %cst_18 {dimension_numbers = #tpu.dot_dimension_numbers<[1], [0], [0], [1], [0, 0, 1, 1], [], []>} : vector<1x128xbf16>, vector<128x256xbf16>, vector<1x256xf32> -> vector<1x256xf32>
    %42 = arith.addf %39, %41 : vector<1x256xf32>
    %43 = arith.negf %42 : vector<1x256xf32>
    %44 = math.exp %43 : vector<1x256xf32>
    %cst_19 = arith.constant 1.000000e+00 : f32
    %45 = vector.broadcast %cst_19 : f32 to vector<1x256xf32>
    %46 = arith.addf %45, %44 : vector<1x256xf32>
    %47 = arith.divf %45, %46 : vector<1x256xf32>
    %48 = vector.extract_strided_slice %47 {offsets = [0, 0], sizes = [1, 128], strides = [1, 1]} : vector<1x256xf32> to vector<1x128xf32>
    %49 = vector.extract_strided_slice %47 {offsets = [0, 128], sizes = [1, 128], strides = [1, 1]} : vector<1x256xf32> to vector<1x128xf32>
    %cst_20 = arith.constant 2.000000e+00 : f32
    %50 = vector.broadcast %cst_20 : f32 to vector<1x128xf32>
    %51 = arith.mulf %50, %49 : vector<1x128xf32>
    %cst_21 = arith.constant 1.000000e+00 : f32
    %52 = vector.broadcast %cst_21 : f32 to vector<1x128xf32>
    %53 = arith.subf %51, %52 : vector<1x128xf32>
    %54 = arith.select %10, %36, %53 : vector<1x128xi1>, vector<1x128xf32>
    %55 = arith.mulf %48, %54 : vector<1x128xf32>
    %c64_i32_22 = arith.constant 64 : i32
    %56 = tpu.dynamic_rotate %55 by %c64_i32_22 dim 1 : vector<1x128xf32>, i32 -> vector<1x128xf32>
    %57 = arith.addf %55, %56 : vector<1x128xf32>
    %58 = math.tanh %57 : vector<1x128xf32>
    %59 = arith.mulf %49, %58 : vector<1x128xf32>
    %60 = vector.extract_strided_slice %17 {offsets = [2, 0], sizes = [1, 256], strides = [1, 1]} : vector<8x256xf32> to vector<1x256xf32>
    %61 = arith.truncf %59 : vector<1x128xf32> to vector<1x128xbf16>
    %cst_23 = arith.constant dense<0.000000e+00> : vector<1x256xf32>
    %62 = tpu.matmul %61, %6, %cst_23 {dimension_numbers = #tpu.dot_dimension_numbers<[1], [0], [0], [1], [0, 0, 1, 1], [], []>} : vector<1x128xbf16>, vector<128x256xbf16>, vector<1x256xf32> -> vector<1x256xf32>
    %63 = arith.addf %60, %62 : vector<1x256xf32>
    %64 = arith.negf %63 : vector<1x256xf32>
    %65 = math.exp %64 : vector<1x256xf32>
    %cst_24 = arith.constant 1.000000e+00 : f32
    %66 = vector.broadcast %cst_24 : f32 to vector<1x256xf32>
    %67 = arith.addf %66, %65 : vector<1x256xf32>
    %68 = arith.divf %66, %67 : vector<1x256xf32>
    %69 = vector.extract_strided_slice %68 {offsets = [0, 0], sizes = [1, 128], strides = [1, 1]} : vector<1x256xf32> to vector<1x128xf32>
    %70 = vector.extract_strided_slice %68 {offsets = [0, 128], sizes = [1, 128], strides = [1, 1]} : vector<1x256xf32> to vector<1x128xf32>
    %cst_25 = arith.constant 2.000000e+00 : f32
    %71 = vector.broadcast %cst_25 : f32 to vector<1x128xf32>
    %72 = arith.mulf %71, %70 : vector<1x128xf32>
    %cst_26 = arith.constant 1.000000e+00 : f32
    %73 = vector.broadcast %cst_26 : f32 to vector<1x128xf32>
    %74 = arith.subf %72, %73 : vector<1x128xf32>
    %75 = arith.select %10, %57, %74 : vector<1x128xi1>, vector<1x128xf32>
    %76 = arith.mulf %69, %75 : vector<1x128xf32>
    %c64_i32_27 = arith.constant 64 : i32
    %77 = tpu.dynamic_rotate %76 by %c64_i32_27 dim 1 : vector<1x128xf32>, i32 -> vector<1x128xf32>
    %78 = arith.addf %76, %77 : vector<1x128xf32>
    %79 = math.tanh %78 : vector<1x128xf32>
    %80 = arith.mulf %70, %79 : vector<1x128xf32>
    %81 = vector.extract_strided_slice %17 {offsets = [3, 0], sizes = [1, 256], strides = [1, 1]} : vector<8x256xf32> to vector<1x256xf32>
    %82 = arith.truncf %80 : vector<1x128xf32> to vector<1x128xbf16>
    %cst_28 = arith.constant dense<0.000000e+00> : vector<1x256xf32>
    %83 = tpu.matmul %82, %6, %cst_28 {dimension_numbers = #tpu.dot_dimension_numbers<[1], [0], [0], [1], [0, 0, 1, 1], [], []>} : vector<1x128xbf16>, vector<128x256xbf16>, vector<1x256xf32> -> vector<1x256xf32>
    %84 = arith.addf %81, %83 : vector<1x256xf32>
    %85 = arith.negf %84 : vector<1x256xf32>
    %86 = math.exp %85 : vector<1x256xf32>
    %cst_29 = arith.constant 1.000000e+00 : f32
    %87 = vector.broadcast %cst_29 : f32 to vector<1x256xf32>
    %88 = arith.addf %87, %86 : vector<1x256xf32>
    %89 = arith.divf %87, %88 : vector<1x256xf32>
    %90 = vector.extract_strided_slice %89 {offsets = [0, 0], sizes = [1, 128], strides = [1, 1]} : vector<1x256xf32> to vector<1x128xf32>
    %91 = vector.extract_strided_slice %89 {offsets = [0, 128], sizes = [1, 128], strides = [1, 1]} : vector<1x256xf32> to vector<1x128xf32>
    %cst_30 = arith.constant 2.000000e+00 : f32
    %92 = vector.broadcast %cst_30 : f32 to vector<1x128xf32>
    %93 = arith.mulf %92, %91 : vector<1x128xf32>
    %cst_31 = arith.constant 1.000000e+00 : f32
    %94 = vector.broadcast %cst_31 : f32 to vector<1x128xf32>
    %95 = arith.subf %93, %94 : vector<1x128xf32>
    %96 = arith.select %10, %78, %95 : vector<1x128xi1>, vector<1x128xf32>
    %97 = arith.mulf %90, %96 : vector<1x128xf32>
    %c64_i32_32 = arith.constant 64 : i32
    %98 = tpu.dynamic_rotate %97 by %c64_i32_32 dim 1 : vector<1x128xf32>, i32 -> vector<1x128xf32>
    %99 = arith.addf %97, %98 : vector<1x128xf32>
    %100 = math.tanh %99 : vector<1x128xf32>
    %101 = arith.mulf %91, %100 : vector<1x128xf32>
    %102 = vector.extract_strided_slice %17 {offsets = [4, 0], sizes = [1, 256], strides = [1, 1]} : vector<8x256xf32> to vector<1x256xf32>
    %103 = arith.truncf %101 : vector<1x128xf32> to vector<1x128xbf16>
    %cst_33 = arith.constant dense<0.000000e+00> : vector<1x256xf32>
    %104 = tpu.matmul %103, %6, %cst_33 {dimension_numbers = #tpu.dot_dimension_numbers<[1], [0], [0], [1], [0, 0, 1, 1], [], []>} : vector<1x128xbf16>, vector<128x256xbf16>, vector<1x256xf32> -> vector<1x256xf32>
    %105 = arith.addf %102, %104 : vector<1x256xf32>
    %106 = arith.negf %105 : vector<1x256xf32>
    %107 = math.exp %106 : vector<1x256xf32>
    %cst_34 = arith.constant 1.000000e+00 : f32
    %108 = vector.broadcast %cst_34 : f32 to vector<1x256xf32>
    %109 = arith.addf %108, %107 : vector<1x256xf32>
    %110 = arith.divf %108, %109 : vector<1x256xf32>
    %111 = vector.extract_strided_slice %110 {offsets = [0, 0], sizes = [1, 128], strides = [1, 1]} : vector<1x256xf32> to vector<1x128xf32>
    %112 = vector.extract_strided_slice %110 {offsets = [0, 128], sizes = [1, 128], strides = [1, 1]} : vector<1x256xf32> to vector<1x128xf32>
    %cst_35 = arith.constant 2.000000e+00 : f32
    %113 = vector.broadcast %cst_35 : f32 to vector<1x128xf32>
    %114 = arith.mulf %113, %112 : vector<1x128xf32>
    %cst_36 = arith.constant 1.000000e+00 : f32
    %115 = vector.broadcast %cst_36 : f32 to vector<1x128xf32>
    %116 = arith.subf %114, %115 : vector<1x128xf32>
    %117 = arith.select %10, %99, %116 : vector<1x128xi1>, vector<1x128xf32>
    %118 = arith.mulf %111, %117 : vector<1x128xf32>
    %c64_i32_37 = arith.constant 64 : i32
    %119 = tpu.dynamic_rotate %118 by %c64_i32_37 dim 1 : vector<1x128xf32>, i32 -> vector<1x128xf32>
    %120 = arith.addf %118, %119 : vector<1x128xf32>
    %121 = math.tanh %120 : vector<1x128xf32>
    %122 = arith.mulf %112, %121 : vector<1x128xf32>
    %123 = vector.extract_strided_slice %17 {offsets = [5, 0], sizes = [1, 256], strides = [1, 1]} : vector<8x256xf32> to vector<1x256xf32>
    %124 = arith.truncf %122 : vector<1x128xf32> to vector<1x128xbf16>
    %cst_38 = arith.constant dense<0.000000e+00> : vector<1x256xf32>
    %125 = tpu.matmul %124, %6, %cst_38 {dimension_numbers = #tpu.dot_dimension_numbers<[1], [0], [0], [1], [0, 0, 1, 1], [], []>} : vector<1x128xbf16>, vector<128x256xbf16>, vector<1x256xf32> -> vector<1x256xf32>
    %126 = arith.addf %123, %125 : vector<1x256xf32>
    %127 = arith.negf %126 : vector<1x256xf32>
    %128 = math.exp %127 : vector<1x256xf32>
    %cst_39 = arith.constant 1.000000e+00 : f32
    %129 = vector.broadcast %cst_39 : f32 to vector<1x256xf32>
    %130 = arith.addf %129, %128 : vector<1x256xf32>
    %131 = arith.divf %129, %130 : vector<1x256xf32>
    %132 = vector.extract_strided_slice %131 {offsets = [0, 0], sizes = [1, 128], strides = [1, 1]} : vector<1x256xf32> to vector<1x128xf32>
    %133 = vector.extract_strided_slice %131 {offsets = [0, 128], sizes = [1, 128], strides = [1, 1]} : vector<1x256xf32> to vector<1x128xf32>
    %cst_40 = arith.constant 2.000000e+00 : f32
    %134 = vector.broadcast %cst_40 : f32 to vector<1x128xf32>
    %135 = arith.mulf %134, %133 : vector<1x128xf32>
    %cst_41 = arith.constant 1.000000e+00 : f32
    %136 = vector.broadcast %cst_41 : f32 to vector<1x128xf32>
    %137 = arith.subf %135, %136 : vector<1x128xf32>
    %138 = arith.select %10, %120, %137 : vector<1x128xi1>, vector<1x128xf32>
    %139 = arith.mulf %132, %138 : vector<1x128xf32>
    %c64_i32_42 = arith.constant 64 : i32
    %140 = tpu.dynamic_rotate %139 by %c64_i32_42 dim 1 : vector<1x128xf32>, i32 -> vector<1x128xf32>
    %141 = arith.addf %139, %140 : vector<1x128xf32>
    %142 = math.tanh %141 : vector<1x128xf32>
    %143 = arith.mulf %133, %142 : vector<1x128xf32>
    %144 = vector.extract_strided_slice %17 {offsets = [6, 0], sizes = [1, 256], strides = [1, 1]} : vector<8x256xf32> to vector<1x256xf32>
    %145 = arith.truncf %143 : vector<1x128xf32> to vector<1x128xbf16>
    %cst_43 = arith.constant dense<0.000000e+00> : vector<1x256xf32>
    %146 = tpu.matmul %145, %6, %cst_43 {dimension_numbers = #tpu.dot_dimension_numbers<[1], [0], [0], [1], [0, 0, 1, 1], [], []>} : vector<1x128xbf16>, vector<128x256xbf16>, vector<1x256xf32> -> vector<1x256xf32>
    %147 = arith.addf %144, %146 : vector<1x256xf32>
    %148 = arith.negf %147 : vector<1x256xf32>
    %149 = math.exp %148 : vector<1x256xf32>
    %cst_44 = arith.constant 1.000000e+00 : f32
    %150 = vector.broadcast %cst_44 : f32 to vector<1x256xf32>
    %151 = arith.addf %150, %149 : vector<1x256xf32>
    %152 = arith.divf %150, %151 : vector<1x256xf32>
    %153 = vector.extract_strided_slice %152 {offsets = [0, 0], sizes = [1, 128], strides = [1, 1]} : vector<1x256xf32> to vector<1x128xf32>
    %154 = vector.extract_strided_slice %152 {offsets = [0, 128], sizes = [1, 128], strides = [1, 1]} : vector<1x256xf32> to vector<1x128xf32>
    %cst_45 = arith.constant 2.000000e+00 : f32
    %155 = vector.broadcast %cst_45 : f32 to vector<1x128xf32>
    %156 = arith.mulf %155, %154 : vector<1x128xf32>
    %cst_46 = arith.constant 1.000000e+00 : f32
    %157 = vector.broadcast %cst_46 : f32 to vector<1x128xf32>
    %158 = arith.subf %156, %157 : vector<1x128xf32>
    %159 = arith.select %10, %141, %158 : vector<1x128xi1>, vector<1x128xf32>
    %160 = arith.mulf %153, %159 : vector<1x128xf32>
    %c64_i32_47 = arith.constant 64 : i32
    %161 = tpu.dynamic_rotate %160 by %c64_i32_47 dim 1 : vector<1x128xf32>, i32 -> vector<1x128xf32>
    %162 = arith.addf %160, %161 : vector<1x128xf32>
    %163 = math.tanh %162 : vector<1x128xf32>
    %164 = arith.mulf %154, %163 : vector<1x128xf32>
    %165 = vector.extract_strided_slice %17 {offsets = [7, 0], sizes = [1, 256], strides = [1, 1]} : vector<8x256xf32> to vector<1x256xf32>
    %166 = arith.truncf %164 : vector<1x128xf32> to vector<1x128xbf16>
    %cst_48 = arith.constant dense<0.000000e+00> : vector<1x256xf32>
    %167 = tpu.matmul %166, %6, %cst_48 {dimension_numbers = #tpu.dot_dimension_numbers<[1], [0], [0], [1], [0, 0, 1, 1], [], []>} : vector<1x128xbf16>, vector<128x256xbf16>, vector<1x256xf32> -> vector<1x256xf32>
    %168 = arith.addf %165, %167 : vector<1x256xf32>
    %169 = arith.negf %168 : vector<1x256xf32>
    %170 = math.exp %169 : vector<1x256xf32>
    %cst_49 = arith.constant 1.000000e+00 : f32
    %171 = vector.broadcast %cst_49 : f32 to vector<1x256xf32>
    %172 = arith.addf %171, %170 : vector<1x256xf32>
    %173 = arith.divf %171, %172 : vector<1x256xf32>
    %174 = vector.extract_strided_slice %173 {offsets = [0, 0], sizes = [1, 128], strides = [1, 1]} : vector<1x256xf32> to vector<1x128xf32>
    %175 = vector.extract_strided_slice %173 {offsets = [0, 128], sizes = [1, 128], strides = [1, 1]} : vector<1x256xf32> to vector<1x128xf32>
    %cst_50 = arith.constant 2.000000e+00 : f32
    %176 = vector.broadcast %cst_50 : f32 to vector<1x128xf32>
    %177 = arith.mulf %176, %175 : vector<1x128xf32>
    %cst_51 = arith.constant 1.000000e+00 : f32
    %178 = vector.broadcast %cst_51 : f32 to vector<1x128xf32>
    %179 = arith.subf %177, %178 : vector<1x128xf32>
    %180 = arith.select %10, %162, %179 : vector<1x128xi1>, vector<1x128xf32>
    %181 = arith.mulf %174, %180 : vector<1x128xf32>
    %c64_i32_52 = arith.constant 64 : i32
    %182 = tpu.dynamic_rotate %181 by %c64_i32_52 dim 1 : vector<1x128xf32>, i32 -> vector<1x128xf32>
    %183 = arith.addf %181, %182 : vector<1x128xf32>
    %184 = math.tanh %183 : vector<1x128xf32>
    %185 = arith.mulf %175, %184 : vector<1x128xf32>
    %186 = vector.extract_strided_slice %4 {offsets = [8, 0], sizes = [8, 128], strides = [1, 1]} : vector<64x128xf32> to vector<8x128xf32>
    %187 = arith.truncf %186 : vector<8x128xf32> to vector<8x128xbf16>
    %cst_53 = arith.constant dense<0.000000e+00> : vector<8x256xf32>
    %188 = tpu.matmul %187, %5, %cst_53 {dimension_numbers = #tpu.dot_dimension_numbers<[1], [0], [0], [1], [0, 0, 1, 1], [], []>} : vector<8x128xbf16>, vector<128x256xbf16>, vector<8x256xf32> -> vector<8x256xf32>
    %189 = vector.broadcast %7 : vector<1x256xf32> to vector<8x256xf32>
    %190 = arith.addf %188, %189 : vector<8x256xf32>
    %191 = vector.extract_strided_slice %190 {offsets = [0, 0], sizes = [1, 256], strides = [1, 1]} : vector<8x256xf32> to vector<1x256xf32>
    %192 = arith.truncf %185 : vector<1x128xf32> to vector<1x128xbf16>
    %cst_54 = arith.constant dense<0.000000e+00> : vector<1x256xf32>
    %193 = tpu.matmul %192, %6, %cst_54 {dimension_numbers = #tpu.dot_dimension_numbers<[1], [0], [0], [1], [0, 0, 1, 1], [], []>} : vector<1x128xbf16>, vector<128x256xbf16>, vector<1x256xf32> -> vector<1x256xf32>
    %194 = arith.addf %191, %193 : vector<1x256xf32>
    %195 = arith.negf %194 : vector<1x256xf32>
    %196 = math.exp %195 : vector<1x256xf32>
    %cst_55 = arith.constant 1.000000e+00 : f32
    %197 = vector.broadcast %cst_55 : f32 to vector<1x256xf32>
    %198 = arith.addf %197, %196 : vector<1x256xf32>
    %199 = arith.divf %197, %198 : vector<1x256xf32>
    %200 = vector.extract_strided_slice %199 {offsets = [0, 0], sizes = [1, 128], strides = [1, 1]} : vector<1x256xf32> to vector<1x128xf32>
    %201 = vector.extract_strided_slice %199 {offsets = [0, 128], sizes = [1, 128], strides = [1, 1]} : vector<1x256xf32> to vector<1x128xf32>
    %cst_56 = arith.constant 2.000000e+00 : f32
    %202 = vector.broadcast %cst_56 : f32 to vector<1x128xf32>
    %203 = arith.mulf %202, %201 : vector<1x128xf32>
    %cst_57 = arith.constant 1.000000e+00 : f32
    %204 = vector.broadcast %cst_57 : f32 to vector<1x128xf32>
    %205 = arith.subf %203, %204 : vector<1x128xf32>
    %206 = arith.select %10, %183, %205 : vector<1x128xi1>, vector<1x128xf32>
    %207 = arith.mulf %200, %206 : vector<1x128xf32>
    %c64_i32_58 = arith.constant 64 : i32
    %208 = tpu.dynamic_rotate %207 by %c64_i32_58 dim 1 : vector<1x128xf32>, i32 -> vector<1x128xf32>
    %209 = arith.addf %207, %208 : vector<1x128xf32>
    %210 = math.tanh %209 : vector<1x128xf32>
    %211 = arith.mulf %201, %210 : vector<1x128xf32>
    %212 = vector.extract_strided_slice %190 {offsets = [1, 0], sizes = [1, 256], strides = [1, 1]} : vector<8x256xf32> to vector<1x256xf32>
    %213 = arith.truncf %211 : vector<1x128xf32> to vector<1x128xbf16>
    %cst_59 = arith.constant dense<0.000000e+00> : vector<1x256xf32>
    %214 = tpu.matmul %213, %6, %cst_59 {dimension_numbers = #tpu.dot_dimension_numbers<[1], [0], [0], [1], [0, 0, 1, 1], [], []>} : vector<1x128xbf16>, vector<128x256xbf16>, vector<1x256xf32> -> vector<1x256xf32>
    %215 = arith.addf %212, %214 : vector<1x256xf32>
    %216 = arith.negf %215 : vector<1x256xf32>
    %217 = math.exp %216 : vector<1x256xf32>
    %cst_60 = arith.constant 1.000000e+00 : f32
    %218 = vector.broadcast %cst_60 : f32 to vector<1x256xf32>
    %219 = arith.addf %218, %217 : vector<1x256xf32>
    %220 = arith.divf %218, %219 : vector<1x256xf32>
    %221 = vector.extract_strided_slice %220 {offsets = [0, 0], sizes = [1, 128], strides = [1, 1]} : vector<1x256xf32> to vector<1x128xf32>
    %222 = vector.extract_strided_slice %220 {offsets = [0, 128], sizes = [1, 128], strides = [1, 1]} : vector<1x256xf32> to vector<1x128xf32>
    %cst_61 = arith.constant 2.000000e+00 : f32
    %223 = vector.broadcast %cst_61 : f32 to vector<1x128xf32>
    %224 = arith.mulf %223, %222 : vector<1x128xf32>
    %cst_62 = arith.constant 1.000000e+00 : f32
    %225 = vector.broadcast %cst_62 : f32 to vector<1x128xf32>
    %226 = arith.subf %224, %225 : vector<1x128xf32>
    %227 = arith.select %10, %209, %226 : vector<1x128xi1>, vector<1x128xf32>
    %228 = arith.mulf %221, %227 : vector<1x128xf32>
    %c64_i32_63 = arith.constant 64 : i32
    %229 = tpu.dynamic_rotate %228 by %c64_i32_63 dim 1 : vector<1x128xf32>, i32 -> vector<1x128xf32>
    %230 = arith.addf %228, %229 : vector<1x128xf32>
    %231 = math.tanh %230 : vector<1x128xf32>
    %232 = arith.mulf %222, %231 : vector<1x128xf32>
    %233 = vector.extract_strided_slice %190 {offsets = [2, 0], sizes = [1, 256], strides = [1, 1]} : vector<8x256xf32> to vector<1x256xf32>
    %234 = arith.truncf %232 : vector<1x128xf32> to vector<1x128xbf16>
    %cst_64 = arith.constant dense<0.000000e+00> : vector<1x256xf32>
    %235 = tpu.matmul %234, %6, %cst_64 {dimension_numbers = #tpu.dot_dimension_numbers<[1], [0], [0], [1], [0, 0, 1, 1], [], []>} : vector<1x128xbf16>, vector<128x256xbf16>, vector<1x256xf32> -> vector<1x256xf32>
    %236 = arith.addf %233, %235 : vector<1x256xf32>
    %237 = arith.negf %236 : vector<1x256xf32>
    %238 = math.exp %237 : vector<1x256xf32>
    %cst_65 = arith.constant 1.000000e+00 : f32
    %239 = vector.broadcast %cst_65 : f32 to vector<1x256xf32>
    %240 = arith.addf %239, %238 : vector<1x256xf32>
    %241 = arith.divf %239, %240 : vector<1x256xf32>
    %242 = vector.extract_strided_slice %241 {offsets = [0, 0], sizes = [1, 128], strides = [1, 1]} : vector<1x256xf32> to vector<1x128xf32>
    %243 = vector.extract_strided_slice %241 {offsets = [0, 128], sizes = [1, 128], strides = [1, 1]} : vector<1x256xf32> to vector<1x128xf32>
    %cst_66 = arith.constant 2.000000e+00 : f32
    %244 = vector.broadcast %cst_66 : f32 to vector<1x128xf32>
    %245 = arith.mulf %244, %243 : vector<1x128xf32>
    %cst_67 = arith.constant 1.000000e+00 : f32
    %246 = vector.broadcast %cst_67 : f32 to vector<1x128xf32>
    %247 = arith.subf %245, %246 : vector<1x128xf32>
    %248 = arith.select %10, %230, %247 : vector<1x128xi1>, vector<1x128xf32>
    %249 = arith.mulf %242, %248 : vector<1x128xf32>
    %c64_i32_68 = arith.constant 64 : i32
    %250 = tpu.dynamic_rotate %249 by %c64_i32_68 dim 1 : vector<1x128xf32>, i32 -> vector<1x128xf32>
    %251 = arith.addf %249, %250 : vector<1x128xf32>
    %252 = math.tanh %251 : vector<1x128xf32>
    %253 = arith.mulf %243, %252 : vector<1x128xf32>
    %254 = vector.extract_strided_slice %190 {offsets = [3, 0], sizes = [1, 256], strides = [1, 1]} : vector<8x256xf32> to vector<1x256xf32>
    %255 = arith.truncf %253 : vector<1x128xf32> to vector<1x128xbf16>
    %cst_69 = arith.constant dense<0.000000e+00> : vector<1x256xf32>
    %256 = tpu.matmul %255, %6, %cst_69 {dimension_numbers = #tpu.dot_dimension_numbers<[1], [0], [0], [1], [0, 0, 1, 1], [], []>} : vector<1x128xbf16>, vector<128x256xbf16>, vector<1x256xf32> -> vector<1x256xf32>
    %257 = arith.addf %254, %256 : vector<1x256xf32>
    %258 = arith.negf %257 : vector<1x256xf32>
    %259 = math.exp %258 : vector<1x256xf32>
    %cst_70 = arith.constant 1.000000e+00 : f32
    %260 = vector.broadcast %cst_70 : f32 to vector<1x256xf32>
    %261 = arith.addf %260, %259 : vector<1x256xf32>
    %262 = arith.divf %260, %261 : vector<1x256xf32>
    %263 = vector.extract_strided_slice %262 {offsets = [0, 0], sizes = [1, 128], strides = [1, 1]} : vector<1x256xf32> to vector<1x128xf32>
    %264 = vector.extract_strided_slice %262 {offsets = [0, 128], sizes = [1, 128], strides = [1, 1]} : vector<1x256xf32> to vector<1x128xf32>
    %cst_71 = arith.constant 2.000000e+00 : f32
    %265 = vector.broadcast %cst_71 : f32 to vector<1x128xf32>
    %266 = arith.mulf %265, %264 : vector<1x128xf32>
    %cst_72 = arith.constant 1.000000e+00 : f32
    %267 = vector.broadcast %cst_72 : f32 to vector<1x128xf32>
    %268 = arith.subf %266, %267 : vector<1x128xf32>
    %269 = arith.select %10, %251, %268 : vector<1x128xi1>, vector<1x128xf32>
    %270 = arith.mulf %263, %269 : vector<1x128xf32>
    %c64_i32_73 = arith.constant 64 : i32
    %271 = tpu.dynamic_rotate %270 by %c64_i32_73 dim 1 : vector<1x128xf32>, i32 -> vector<1x128xf32>
    %272 = arith.addf %270, %271 : vector<1x128xf32>
    %273 = math.tanh %272 : vector<1x128xf32>
    %274 = arith.mulf %264, %273 : vector<1x128xf32>
    %275 = vector.extract_strided_slice %190 {offsets = [4, 0], sizes = [1, 256], strides = [1, 1]} : vector<8x256xf32> to vector<1x256xf32>
    %276 = arith.truncf %274 : vector<1x128xf32> to vector<1x128xbf16>
    %cst_74 = arith.constant dense<0.000000e+00> : vector<1x256xf32>
    %277 = tpu.matmul %276, %6, %cst_74 {dimension_numbers = #tpu.dot_dimension_numbers<[1], [0], [0], [1], [0, 0, 1, 1], [], []>} : vector<1x128xbf16>, vector<128x256xbf16>, vector<1x256xf32> -> vector<1x256xf32>
    %278 = arith.addf %275, %277 : vector<1x256xf32>
    %279 = arith.negf %278 : vector<1x256xf32>
    %280 = math.exp %279 : vector<1x256xf32>
    %cst_75 = arith.constant 1.000000e+00 : f32
    %281 = vector.broadcast %cst_75 : f32 to vector<1x256xf32>
    %282 = arith.addf %281, %280 : vector<1x256xf32>
    %283 = arith.divf %281, %282 : vector<1x256xf32>
    %284 = vector.extract_strided_slice %283 {offsets = [0, 0], sizes = [1, 128], strides = [1, 1]} : vector<1x256xf32> to vector<1x128xf32>
    %285 = vector.extract_strided_slice %283 {offsets = [0, 128], sizes = [1, 128], strides = [1, 1]} : vector<1x256xf32> to vector<1x128xf32>
    %cst_76 = arith.constant 2.000000e+00 : f32
    %286 = vector.broadcast %cst_76 : f32 to vector<1x128xf32>
    %287 = arith.mulf %286, %285 : vector<1x128xf32>
    %cst_77 = arith.constant 1.000000e+00 : f32
    %288 = vector.broadcast %cst_77 : f32 to vector<1x128xf32>
    %289 = arith.subf %287, %288 : vector<1x128xf32>
    %290 = arith.select %10, %272, %289 : vector<1x128xi1>, vector<1x128xf32>
    %291 = arith.mulf %284, %290 : vector<1x128xf32>
    %c64_i32_78 = arith.constant 64 : i32
    %292 = tpu.dynamic_rotate %291 by %c64_i32_78 dim 1 : vector<1x128xf32>, i32 -> vector<1x128xf32>
    %293 = arith.addf %291, %292 : vector<1x128xf32>
    %294 = math.tanh %293 : vector<1x128xf32>
    %295 = arith.mulf %285, %294 : vector<1x128xf32>
    %296 = vector.extract_strided_slice %190 {offsets = [5, 0], sizes = [1, 256], strides = [1, 1]} : vector<8x256xf32> to vector<1x256xf32>
    %297 = arith.truncf %295 : vector<1x128xf32> to vector<1x128xbf16>
    %cst_79 = arith.constant dense<0.000000e+00> : vector<1x256xf32>
    %298 = tpu.matmul %297, %6, %cst_79 {dimension_numbers = #tpu.dot_dimension_numbers<[1], [0], [0], [1], [0, 0, 1, 1], [], []>} : vector<1x128xbf16>, vector<128x256xbf16>, vector<1x256xf32> -> vector<1x256xf32>
    %299 = arith.addf %296, %298 : vector<1x256xf32>
    %300 = arith.negf %299 : vector<1x256xf32>
    %301 = math.exp %300 : vector<1x256xf32>
    %cst_80 = arith.constant 1.000000e+00 : f32
    %302 = vector.broadcast %cst_80 : f32 to vector<1x256xf32>
    %303 = arith.addf %302, %301 : vector<1x256xf32>
    %304 = arith.divf %302, %303 : vector<1x256xf32>
    %305 = vector.extract_strided_slice %304 {offsets = [0, 0], sizes = [1, 128], strides = [1, 1]} : vector<1x256xf32> to vector<1x128xf32>
    %306 = vector.extract_strided_slice %304 {offsets = [0, 128], sizes = [1, 128], strides = [1, 1]} : vector<1x256xf32> to vector<1x128xf32>
    %cst_81 = arith.constant 2.000000e+00 : f32
    %307 = vector.broadcast %cst_81 : f32 to vector<1x128xf32>
    %308 = arith.mulf %307, %306 : vector<1x128xf32>
    %cst_82 = arith.constant 1.000000e+00 : f32
    %309 = vector.broadcast %cst_82 : f32 to vector<1x128xf32>
    %310 = arith.subf %308, %309 : vector<1x128xf32>
    %311 = arith.select %10, %293, %310 : vector<1x128xi1>, vector<1x128xf32>
    %312 = arith.mulf %305, %311 : vector<1x128xf32>
    %c64_i32_83 = arith.constant 64 : i32
    %313 = tpu.dynamic_rotate %312 by %c64_i32_83 dim 1 : vector<1x128xf32>, i32 -> vector<1x128xf32>
    %314 = arith.addf %312, %313 : vector<1x128xf32>
    %315 = math.tanh %314 : vector<1x128xf32>
    %316 = arith.mulf %306, %315 : vector<1x128xf32>
    %317 = vector.extract_strided_slice %190 {offsets = [6, 0], sizes = [1, 256], strides = [1, 1]} : vector<8x256xf32> to vector<1x256xf32>
    %318 = arith.truncf %316 : vector<1x128xf32> to vector<1x128xbf16>
    %cst_84 = arith.constant dense<0.000000e+00> : vector<1x256xf32>
    %319 = tpu.matmul %318, %6, %cst_84 {dimension_numbers = #tpu.dot_dimension_numbers<[1], [0], [0], [1], [0, 0, 1, 1], [], []>} : vector<1x128xbf16>, vector<128x256xbf16>, vector<1x256xf32> -> vector<1x256xf32>
    %320 = arith.addf %317, %319 : vector<1x256xf32>
    %321 = arith.negf %320 : vector<1x256xf32>
    %322 = math.exp %321 : vector<1x256xf32>
    %cst_85 = arith.constant 1.000000e+00 : f32
    %323 = vector.broadcast %cst_85 : f32 to vector<1x256xf32>
    %324 = arith.addf %323, %322 : vector<1x256xf32>
    %325 = arith.divf %323, %324 : vector<1x256xf32>
    %326 = vector.extract_strided_slice %325 {offsets = [0, 0], sizes = [1, 128], strides = [1, 1]} : vector<1x256xf32> to vector<1x128xf32>
    %327 = vector.extract_strided_slice %325 {offsets = [0, 128], sizes = [1, 128], strides = [1, 1]} : vector<1x256xf32> to vector<1x128xf32>
    %cst_86 = arith.constant 2.000000e+00 : f32
    %328 = vector.broadcast %cst_86 : f32 to vector<1x128xf32>
    %329 = arith.mulf %328, %327 : vector<1x128xf32>
    %cst_87 = arith.constant 1.000000e+00 : f32
    %330 = vector.broadcast %cst_87 : f32 to vector<1x128xf32>
    %331 = arith.subf %329, %330 : vector<1x128xf32>
    %332 = arith.select %10, %314, %331 : vector<1x128xi1>, vector<1x128xf32>
    %333 = arith.mulf %326, %332 : vector<1x128xf32>
    %c64_i32_88 = arith.constant 64 : i32
    %334 = tpu.dynamic_rotate %333 by %c64_i32_88 dim 1 : vector<1x128xf32>, i32 -> vector<1x128xf32>
    %335 = arith.addf %333, %334 : vector<1x128xf32>
    %336 = math.tanh %335 : vector<1x128xf32>
    %337 = arith.mulf %327, %336 : vector<1x128xf32>
    %338 = vector.extract_strided_slice %190 {offsets = [7, 0], sizes = [1, 256], strides = [1, 1]} : vector<8x256xf32> to vector<1x256xf32>
    %339 = arith.truncf %337 : vector<1x128xf32> to vector<1x128xbf16>
    %cst_89 = arith.constant dense<0.000000e+00> : vector<1x256xf32>
    %340 = tpu.matmul %339, %6, %cst_89 {dimension_numbers = #tpu.dot_dimension_numbers<[1], [0], [0], [1], [0, 0, 1, 1], [], []>} : vector<1x128xbf16>, vector<128x256xbf16>, vector<1x256xf32> -> vector<1x256xf32>
    %341 = arith.addf %338, %340 : vector<1x256xf32>
    %342 = arith.negf %341 : vector<1x256xf32>
    %343 = math.exp %342 : vector<1x256xf32>
    %cst_90 = arith.constant 1.000000e+00 : f32
    %344 = vector.broadcast %cst_90 : f32 to vector<1x256xf32>
    %345 = arith.addf %344, %343 : vector<1x256xf32>
    %346 = arith.divf %344, %345 : vector<1x256xf32>
    %347 = vector.extract_strided_slice %346 {offsets = [0, 0], sizes = [1, 128], strides = [1, 1]} : vector<1x256xf32> to vector<1x128xf32>
    %348 = vector.extract_strided_slice %346 {offsets = [0, 128], sizes = [1, 128], strides = [1, 1]} : vector<1x256xf32> to vector<1x128xf32>
    %cst_91 = arith.constant 2.000000e+00 : f32
    %349 = vector.broadcast %cst_91 : f32 to vector<1x128xf32>
    %350 = arith.mulf %349, %348 : vector<1x128xf32>
    %cst_92 = arith.constant 1.000000e+00 : f32
    %351 = vector.broadcast %cst_92 : f32 to vector<1x128xf32>
    %352 = arith.subf %350, %351 : vector<1x128xf32>
    %353 = arith.select %10, %335, %352 : vector<1x128xi1>, vector<1x128xf32>
    %354 = arith.mulf %347, %353 : vector<1x128xf32>
    %c64_i32_93 = arith.constant 64 : i32
    %355 = tpu.dynamic_rotate %354 by %c64_i32_93 dim 1 : vector<1x128xf32>, i32 -> vector<1x128xf32>
    %356 = arith.addf %354, %355 : vector<1x128xf32>
    %357 = math.tanh %356 : vector<1x128xf32>
    %358 = arith.mulf %348, %357 : vector<1x128xf32>
    %359 = vector.extract_strided_slice %4 {offsets = [16, 0], sizes = [8, 128], strides = [1, 1]} : vector<64x128xf32> to vector<8x128xf32>
    %360 = arith.truncf %359 : vector<8x128xf32> to vector<8x128xbf16>
    %cst_94 = arith.constant dense<0.000000e+00> : vector<8x256xf32>
    %361 = tpu.matmul %360, %5, %cst_94 {dimension_numbers = #tpu.dot_dimension_numbers<[1], [0], [0], [1], [0, 0, 1, 1], [], []>} : vector<8x128xbf16>, vector<128x256xbf16>, vector<8x256xf32> -> vector<8x256xf32>
    %362 = vector.broadcast %7 : vector<1x256xf32> to vector<8x256xf32>
    %363 = arith.addf %361, %362 : vector<8x256xf32>
    %364 = vector.extract_strided_slice %363 {offsets = [0, 0], sizes = [1, 256], strides = [1, 1]} : vector<8x256xf32> to vector<1x256xf32>
    %365 = arith.truncf %358 : vector<1x128xf32> to vector<1x128xbf16>
    %cst_95 = arith.constant dense<0.000000e+00> : vector<1x256xf32>
    %366 = tpu.matmul %365, %6, %cst_95 {dimension_numbers = #tpu.dot_dimension_numbers<[1], [0], [0], [1], [0, 0, 1, 1], [], []>} : vector<1x128xbf16>, vector<128x256xbf16>, vector<1x256xf32> -> vector<1x256xf32>
    %367 = arith.addf %364, %366 : vector<1x256xf32>
    %368 = arith.negf %367 : vector<1x256xf32>
    %369 = math.exp %368 : vector<1x256xf32>
    %cst_96 = arith.constant 1.000000e+00 : f32
    %370 = vector.broadcast %cst_96 : f32 to vector<1x256xf32>
    %371 = arith.addf %370, %369 : vector<1x256xf32>
    %372 = arith.divf %370, %371 : vector<1x256xf32>
    %373 = vector.extract_strided_slice %372 {offsets = [0, 0], sizes = [1, 128], strides = [1, 1]} : vector<1x256xf32> to vector<1x128xf32>
    %374 = vector.extract_strided_slice %372 {offsets = [0, 128], sizes = [1, 128], strides = [1, 1]} : vector<1x256xf32> to vector<1x128xf32>
    %cst_97 = arith.constant 2.000000e+00 : f32
    %375 = vector.broadcast %cst_97 : f32 to vector<1x128xf32>
    %376 = arith.mulf %375, %374 : vector<1x128xf32>
    %cst_98 = arith.constant 1.000000e+00 : f32
    %377 = vector.broadcast %cst_98 : f32 to vector<1x128xf32>
    %378 = arith.subf %376, %377 : vector<1x128xf32>
    %379 = arith.select %10, %356, %378 : vector<1x128xi1>, vector<1x128xf32>
    %380 = arith.mulf %373, %379 : vector<1x128xf32>
    %c64_i32_99 = arith.constant 64 : i32
    %381 = tpu.dynamic_rotate %380 by %c64_i32_99 dim 1 : vector<1x128xf32>, i32 -> vector<1x128xf32>
    %382 = arith.addf %380, %381 : vector<1x128xf32>
    %383 = math.tanh %382 : vector<1x128xf32>
    %384 = arith.mulf %374, %383 : vector<1x128xf32>
    %385 = vector.extract_strided_slice %363 {offsets = [1, 0], sizes = [1, 256], strides = [1, 1]} : vector<8x256xf32> to vector<1x256xf32>
    %386 = arith.truncf %384 : vector<1x128xf32> to vector<1x128xbf16>
    %cst_100 = arith.constant dense<0.000000e+00> : vector<1x256xf32>
    %387 = tpu.matmul %386, %6, %cst_100 {dimension_numbers = #tpu.dot_dimension_numbers<[1], [0], [0], [1], [0, 0, 1, 1], [], []>} : vector<1x128xbf16>, vector<128x256xbf16>, vector<1x256xf32> -> vector<1x256xf32>
    %388 = arith.addf %385, %387 : vector<1x256xf32>
    %389 = arith.negf %388 : vector<1x256xf32>
    %390 = math.exp %389 : vector<1x256xf32>
    %cst_101 = arith.constant 1.000000e+00 : f32
    %391 = vector.broadcast %cst_101 : f32 to vector<1x256xf32>
    %392 = arith.addf %391, %390 : vector<1x256xf32>
    %393 = arith.divf %391, %392 : vector<1x256xf32>
    %394 = vector.extract_strided_slice %393 {offsets = [0, 0], sizes = [1, 128], strides = [1, 1]} : vector<1x256xf32> to vector<1x128xf32>
    %395 = vector.extract_strided_slice %393 {offsets = [0, 128], sizes = [1, 128], strides = [1, 1]} : vector<1x256xf32> to vector<1x128xf32>
    %cst_102 = arith.constant 2.000000e+00 : f32
    %396 = vector.broadcast %cst_102 : f32 to vector<1x128xf32>
    %397 = arith.mulf %396, %395 : vector<1x128xf32>
    %cst_103 = arith.constant 1.000000e+00 : f32
    %398 = vector.broadcast %cst_103 : f32 to vector<1x128xf32>
    %399 = arith.subf %397, %398 : vector<1x128xf32>
    %400 = arith.select %10, %382, %399 : vector<1x128xi1>, vector<1x128xf32>
    %401 = arith.mulf %394, %400 : vector<1x128xf32>
    %c64_i32_104 = arith.constant 64 : i32
    %402 = tpu.dynamic_rotate %401 by %c64_i32_104 dim 1 : vector<1x128xf32>, i32 -> vector<1x128xf32>
    %403 = arith.addf %401, %402 : vector<1x128xf32>
    %404 = math.tanh %403 : vector<1x128xf32>
    %405 = arith.mulf %395, %404 : vector<1x128xf32>
    %406 = vector.extract_strided_slice %363 {offsets = [2, 0], sizes = [1, 256], strides = [1, 1]} : vector<8x256xf32> to vector<1x256xf32>
    %407 = arith.truncf %405 : vector<1x128xf32> to vector<1x128xbf16>
    %cst_105 = arith.constant dense<0.000000e+00> : vector<1x256xf32>
    %408 = tpu.matmul %407, %6, %cst_105 {dimension_numbers = #tpu.dot_dimension_numbers<[1], [0], [0], [1], [0, 0, 1, 1], [], []>} : vector<1x128xbf16>, vector<128x256xbf16>, vector<1x256xf32> -> vector<1x256xf32>
    %409 = arith.addf %406, %408 : vector<1x256xf32>
    %410 = arith.negf %409 : vector<1x256xf32>
    %411 = math.exp %410 : vector<1x256xf32>
    %cst_106 = arith.constant 1.000000e+00 : f32
    %412 = vector.broadcast %cst_106 : f32 to vector<1x256xf32>
    %413 = arith.addf %412, %411 : vector<1x256xf32>
    %414 = arith.divf %412, %413 : vector<1x256xf32>
    %415 = vector.extract_strided_slice %414 {offsets = [0, 0], sizes = [1, 128], strides = [1, 1]} : vector<1x256xf32> to vector<1x128xf32>
    %416 = vector.extract_strided_slice %414 {offsets = [0, 128], sizes = [1, 128], strides = [1, 1]} : vector<1x256xf32> to vector<1x128xf32>
    %cst_107 = arith.constant 2.000000e+00 : f32
    %417 = vector.broadcast %cst_107 : f32 to vector<1x128xf32>
    %418 = arith.mulf %417, %416 : vector<1x128xf32>
    %cst_108 = arith.constant 1.000000e+00 : f32
    %419 = vector.broadcast %cst_108 : f32 to vector<1x128xf32>
    %420 = arith.subf %418, %419 : vector<1x128xf32>
    %421 = arith.select %10, %403, %420 : vector<1x128xi1>, vector<1x128xf32>
    %422 = arith.mulf %415, %421 : vector<1x128xf32>
    %c64_i32_109 = arith.constant 64 : i32
    %423 = tpu.dynamic_rotate %422 by %c64_i32_109 dim 1 : vector<1x128xf32>, i32 -> vector<1x128xf32>
    %424 = arith.addf %422, %423 : vector<1x128xf32>
    %425 = math.tanh %424 : vector<1x128xf32>
    %426 = arith.mulf %416, %425 : vector<1x128xf32>
    %427 = vector.extract_strided_slice %363 {offsets = [3, 0], sizes = [1, 256], strides = [1, 1]} : vector<8x256xf32> to vector<1x256xf32>
    %428 = arith.truncf %426 : vector<1x128xf32> to vector<1x128xbf16>
    %cst_110 = arith.constant dense<0.000000e+00> : vector<1x256xf32>
    %429 = tpu.matmul %428, %6, %cst_110 {dimension_numbers = #tpu.dot_dimension_numbers<[1], [0], [0], [1], [0, 0, 1, 1], [], []>} : vector<1x128xbf16>, vector<128x256xbf16>, vector<1x256xf32> -> vector<1x256xf32>
    %430 = arith.addf %427, %429 : vector<1x256xf32>
    %431 = arith.negf %430 : vector<1x256xf32>
    %432 = math.exp %431 : vector<1x256xf32>
    %cst_111 = arith.constant 1.000000e+00 : f32
    %433 = vector.broadcast %cst_111 : f32 to vector<1x256xf32>
    %434 = arith.addf %433, %432 : vector<1x256xf32>
    %435 = arith.divf %433, %434 : vector<1x256xf32>
    %436 = vector.extract_strided_slice %435 {offsets = [0, 0], sizes = [1, 128], strides = [1, 1]} : vector<1x256xf32> to vector<1x128xf32>
    %437 = vector.extract_strided_slice %435 {offsets = [0, 128], sizes = [1, 128], strides = [1, 1]} : vector<1x256xf32> to vector<1x128xf32>
    %cst_112 = arith.constant 2.000000e+00 : f32
    %438 = vector.broadcast %cst_112 : f32 to vector<1x128xf32>
    %439 = arith.mulf %438, %437 : vector<1x128xf32>
    %cst_113 = arith.constant 1.000000e+00 : f32
    %440 = vector.broadcast %cst_113 : f32 to vector<1x128xf32>
    %441 = arith.subf %439, %440 : vector<1x128xf32>
    %442 = arith.select %10, %424, %441 : vector<1x128xi1>, vector<1x128xf32>
    %443 = arith.mulf %436, %442 : vector<1x128xf32>
    %c64_i32_114 = arith.constant 64 : i32
    %444 = tpu.dynamic_rotate %443 by %c64_i32_114 dim 1 : vector<1x128xf32>, i32 -> vector<1x128xf32>
    %445 = arith.addf %443, %444 : vector<1x128xf32>
    %446 = math.tanh %445 : vector<1x128xf32>
    %447 = arith.mulf %437, %446 : vector<1x128xf32>
    %448 = vector.extract_strided_slice %363 {offsets = [4, 0], sizes = [1, 256], strides = [1, 1]} : vector<8x256xf32> to vector<1x256xf32>
    %449 = arith.truncf %447 : vector<1x128xf32> to vector<1x128xbf16>
    %cst_115 = arith.constant dense<0.000000e+00> : vector<1x256xf32>
    %450 = tpu.matmul %449, %6, %cst_115 {dimension_numbers = #tpu.dot_dimension_numbers<[1], [0], [0], [1], [0, 0, 1, 1], [], []>} : vector<1x128xbf16>, vector<128x256xbf16>, vector<1x256xf32> -> vector<1x256xf32>
    %451 = arith.addf %448, %450 : vector<1x256xf32>
    %452 = arith.negf %451 : vector<1x256xf32>
    %453 = math.exp %452 : vector<1x256xf32>
    %cst_116 = arith.constant 1.000000e+00 : f32
    %454 = vector.broadcast %cst_116 : f32 to vector<1x256xf32>
    %455 = arith.addf %454, %453 : vector<1x256xf32>
    %456 = arith.divf %454, %455 : vector<1x256xf32>
    %457 = vector.extract_strided_slice %456 {offsets = [0, 0], sizes = [1, 128], strides = [1, 1]} : vector<1x256xf32> to vector<1x128xf32>
    %458 = vector.extract_strided_slice %456 {offsets = [0, 128], sizes = [1, 128], strides = [1, 1]} : vector<1x256xf32> to vector<1x128xf32>
    %cst_117 = arith.constant 2.000000e+00 : f32
    %459 = vector.broadcast %cst_117 : f32 to vector<1x128xf32>
    %460 = arith.mulf %459, %458 : vector<1x128xf32>
    %cst_118 = arith.constant 1.000000e+00 : f32
    %461 = vector.broadcast %cst_118 : f32 to vector<1x128xf32>
    %462 = arith.subf %460, %461 : vector<1x128xf32>
    %463 = arith.select %10, %445, %462 : vector<1x128xi1>, vector<1x128xf32>
    %464 = arith.mulf %457, %463 : vector<1x128xf32>
    %c64_i32_119 = arith.constant 64 : i32
    %465 = tpu.dynamic_rotate %464 by %c64_i32_119 dim 1 : vector<1x128xf32>, i32 -> vector<1x128xf32>
    %466 = arith.addf %464, %465 : vector<1x128xf32>
    %467 = math.tanh %466 : vector<1x128xf32>
    %468 = arith.mulf %458, %467 : vector<1x128xf32>
    %469 = vector.extract_strided_slice %363 {offsets = [5, 0], sizes = [1, 256], strides = [1, 1]} : vector<8x256xf32> to vector<1x256xf32>
    %470 = arith.truncf %468 : vector<1x128xf32> to vector<1x128xbf16>
    %cst_120 = arith.constant dense<0.000000e+00> : vector<1x256xf32>
    %471 = tpu.matmul %470, %6, %cst_120 {dimension_numbers = #tpu.dot_dimension_numbers<[1], [0], [0], [1], [0, 0, 1, 1], [], []>} : vector<1x128xbf16>, vector<128x256xbf16>, vector<1x256xf32> -> vector<1x256xf32>
    %472 = arith.addf %469, %471 : vector<1x256xf32>
    %473 = arith.negf %472 : vector<1x256xf32>
    %474 = math.exp %473 : vector<1x256xf32>
    %cst_121 = arith.constant 1.000000e+00 : f32
    %475 = vector.broadcast %cst_121 : f32 to vector<1x256xf32>
    %476 = arith.addf %475, %474 : vector<1x256xf32>
    %477 = arith.divf %475, %476 : vector<1x256xf32>
    %478 = vector.extract_strided_slice %477 {offsets = [0, 0], sizes = [1, 128], strides = [1, 1]} : vector<1x256xf32> to vector<1x128xf32>
    %479 = vector.extract_strided_slice %477 {offsets = [0, 128], sizes = [1, 128], strides = [1, 1]} : vector<1x256xf32> to vector<1x128xf32>
    %cst_122 = arith.constant 2.000000e+00 : f32
    %480 = vector.broadcast %cst_122 : f32 to vector<1x128xf32>
    %481 = arith.mulf %480, %479 : vector<1x128xf32>
    %cst_123 = arith.constant 1.000000e+00 : f32
    %482 = vector.broadcast %cst_123 : f32 to vector<1x128xf32>
    %483 = arith.subf %481, %482 : vector<1x128xf32>
    %484 = arith.select %10, %466, %483 : vector<1x128xi1>, vector<1x128xf32>
    %485 = arith.mulf %478, %484 : vector<1x128xf32>
    %c64_i32_124 = arith.constant 64 : i32
    %486 = tpu.dynamic_rotate %485 by %c64_i32_124 dim 1 : vector<1x128xf32>, i32 -> vector<1x128xf32>
    %487 = arith.addf %485, %486 : vector<1x128xf32>
    %488 = math.tanh %487 : vector<1x128xf32>
    %489 = arith.mulf %479, %488 : vector<1x128xf32>
    %490 = vector.extract_strided_slice %363 {offsets = [6, 0], sizes = [1, 256], strides = [1, 1]} : vector<8x256xf32> to vector<1x256xf32>
    %491 = arith.truncf %489 : vector<1x128xf32> to vector<1x128xbf16>
    %cst_125 = arith.constant dense<0.000000e+00> : vector<1x256xf32>
    %492 = tpu.matmul %491, %6, %cst_125 {dimension_numbers = #tpu.dot_dimension_numbers<[1], [0], [0], [1], [0, 0, 1, 1], [], []>} : vector<1x128xbf16>, vector<128x256xbf16>, vector<1x256xf32> -> vector<1x256xf32>
    %493 = arith.addf %490, %492 : vector<1x256xf32>
    %494 = arith.negf %493 : vector<1x256xf32>
    %495 = math.exp %494 : vector<1x256xf32>
    %cst_126 = arith.constant 1.000000e+00 : f32
    %496 = vector.broadcast %cst_126 : f32 to vector<1x256xf32>
    %497 = arith.addf %496, %495 : vector<1x256xf32>
    %498 = arith.divf %496, %497 : vector<1x256xf32>
    %499 = vector.extract_strided_slice %498 {offsets = [0, 0], sizes = [1, 128], strides = [1, 1]} : vector<1x256xf32> to vector<1x128xf32>
    %500 = vector.extract_strided_slice %498 {offsets = [0, 128], sizes = [1, 128], strides = [1, 1]} : vector<1x256xf32> to vector<1x128xf32>
    %cst_127 = arith.constant 2.000000e+00 : f32
    %501 = vector.broadcast %cst_127 : f32 to vector<1x128xf32>
    %502 = arith.mulf %501, %500 : vector<1x128xf32>
    %cst_128 = arith.constant 1.000000e+00 : f32
    %503 = vector.broadcast %cst_128 : f32 to vector<1x128xf32>
    %504 = arith.subf %502, %503 : vector<1x128xf32>
    %505 = arith.select %10, %487, %504 : vector<1x128xi1>, vector<1x128xf32>
    %506 = arith.mulf %499, %505 : vector<1x128xf32>
    %c64_i32_129 = arith.constant 64 : i32
    %507 = tpu.dynamic_rotate %506 by %c64_i32_129 dim 1 : vector<1x128xf32>, i32 -> vector<1x128xf32>
    %508 = arith.addf %506, %507 : vector<1x128xf32>
    %509 = math.tanh %508 : vector<1x128xf32>
    %510 = arith.mulf %500, %509 : vector<1x128xf32>
    %511 = vector.extract_strided_slice %363 {offsets = [7, 0], sizes = [1, 256], strides = [1, 1]} : vector<8x256xf32> to vector<1x256xf32>
    %512 = arith.truncf %510 : vector<1x128xf32> to vector<1x128xbf16>
    %cst_130 = arith.constant dense<0.000000e+00> : vector<1x256xf32>
    %513 = tpu.matmul %512, %6, %cst_130 {dimension_numbers = #tpu.dot_dimension_numbers<[1], [0], [0], [1], [0, 0, 1, 1], [], []>} : vector<1x128xbf16>, vector<128x256xbf16>, vector<1x256xf32> -> vector<1x256xf32>
    %514 = arith.addf %511, %513 : vector<1x256xf32>
    %515 = arith.negf %514 : vector<1x256xf32>
    %516 = math.exp %515 : vector<1x256xf32>
    %cst_131 = arith.constant 1.000000e+00 : f32
    %517 = vector.broadcast %cst_131 : f32 to vector<1x256xf32>
    %518 = arith.addf %517, %516 : vector<1x256xf32>
    %519 = arith.divf %517, %518 : vector<1x256xf32>
    %520 = vector.extract_strided_slice %519 {offsets = [0, 0], sizes = [1, 128], strides = [1, 1]} : vector<1x256xf32> to vector<1x128xf32>
    %521 = vector.extract_strided_slice %519 {offsets = [0, 128], sizes = [1, 128], strides = [1, 1]} : vector<1x256xf32> to vector<1x128xf32>
    %cst_132 = arith.constant 2.000000e+00 : f32
    %522 = vector.broadcast %cst_132 : f32 to vector<1x128xf32>
    %523 = arith.mulf %522, %521 : vector<1x128xf32>
    %cst_133 = arith.constant 1.000000e+00 : f32
    %524 = vector.broadcast %cst_133 : f32 to vector<1x128xf32>
    %525 = arith.subf %523, %524 : vector<1x128xf32>
    %526 = arith.select %10, %508, %525 : vector<1x128xi1>, vector<1x128xf32>
    %527 = arith.mulf %520, %526 : vector<1x128xf32>
    %c64_i32_134 = arith.constant 64 : i32
    %528 = tpu.dynamic_rotate %527 by %c64_i32_134 dim 1 : vector<1x128xf32>, i32 -> vector<1x128xf32>
    %529 = arith.addf %527, %528 : vector<1x128xf32>
    %530 = math.tanh %529 : vector<1x128xf32>
    %531 = arith.mulf %521, %530 : vector<1x128xf32>
    %532 = vector.extract_strided_slice %4 {offsets = [24, 0], sizes = [8, 128], strides = [1, 1]} : vector<64x128xf32> to vector<8x128xf32>
    %533 = arith.truncf %532 : vector<8x128xf32> to vector<8x128xbf16>
    %cst_135 = arith.constant dense<0.000000e+00> : vector<8x256xf32>
    %534 = tpu.matmul %533, %5, %cst_135 {dimension_numbers = #tpu.dot_dimension_numbers<[1], [0], [0], [1], [0, 0, 1, 1], [], []>} : vector<8x128xbf16>, vector<128x256xbf16>, vector<8x256xf32> -> vector<8x256xf32>
    %535 = vector.broadcast %7 : vector<1x256xf32> to vector<8x256xf32>
    %536 = arith.addf %534, %535 : vector<8x256xf32>
    %537 = vector.extract_strided_slice %536 {offsets = [0, 0], sizes = [1, 256], strides = [1, 1]} : vector<8x256xf32> to vector<1x256xf32>
    %538 = arith.truncf %531 : vector<1x128xf32> to vector<1x128xbf16>
    %cst_136 = arith.constant dense<0.000000e+00> : vector<1x256xf32>
    %539 = tpu.matmul %538, %6, %cst_136 {dimension_numbers = #tpu.dot_dimension_numbers<[1], [0], [0], [1], [0, 0, 1, 1], [], []>} : vector<1x128xbf16>, vector<128x256xbf16>, vector<1x256xf32> -> vector<1x256xf32>
    %540 = arith.addf %537, %539 : vector<1x256xf32>
    %541 = arith.negf %540 : vector<1x256xf32>
    %542 = math.exp %541 : vector<1x256xf32>
    %cst_137 = arith.constant 1.000000e+00 : f32
    %543 = vector.broadcast %cst_137 : f32 to vector<1x256xf32>
    %544 = arith.addf %543, %542 : vector<1x256xf32>
    %545 = arith.divf %543, %544 : vector<1x256xf32>
    %546 = vector.extract_strided_slice %545 {offsets = [0, 0], sizes = [1, 128], strides = [1, 1]} : vector<1x256xf32> to vector<1x128xf32>
    %547 = vector.extract_strided_slice %545 {offsets = [0, 128], sizes = [1, 128], strides = [1, 1]} : vector<1x256xf32> to vector<1x128xf32>
    %cst_138 = arith.constant 2.000000e+00 : f32
    %548 = vector.broadcast %cst_138 : f32 to vector<1x128xf32>
    %549 = arith.mulf %548, %547 : vector<1x128xf32>
    %cst_139 = arith.constant 1.000000e+00 : f32
    %550 = vector.broadcast %cst_139 : f32 to vector<1x128xf32>
    %551 = arith.subf %549, %550 : vector<1x128xf32>
    %552 = arith.select %10, %529, %551 : vector<1x128xi1>, vector<1x128xf32>
    %553 = arith.mulf %546, %552 : vector<1x128xf32>
    %c64_i32_140 = arith.constant 64 : i32
    %554 = tpu.dynamic_rotate %553 by %c64_i32_140 dim 1 : vector<1x128xf32>, i32 -> vector<1x128xf32>
    %555 = arith.addf %553, %554 : vector<1x128xf32>
    %556 = math.tanh %555 : vector<1x128xf32>
    %557 = arith.mulf %547, %556 : vector<1x128xf32>
    %558 = vector.extract_strided_slice %536 {offsets = [1, 0], sizes = [1, 256], strides = [1, 1]} : vector<8x256xf32> to vector<1x256xf32>
    %559 = arith.truncf %557 : vector<1x128xf32> to vector<1x128xbf16>
    %cst_141 = arith.constant dense<0.000000e+00> : vector<1x256xf32>
    %560 = tpu.matmul %559, %6, %cst_141 {dimension_numbers = #tpu.dot_dimension_numbers<[1], [0], [0], [1], [0, 0, 1, 1], [], []>} : vector<1x128xbf16>, vector<128x256xbf16>, vector<1x256xf32> -> vector<1x256xf32>
    %561 = arith.addf %558, %560 : vector<1x256xf32>
    %562 = arith.negf %561 : vector<1x256xf32>
    %563 = math.exp %562 : vector<1x256xf32>
    %cst_142 = arith.constant 1.000000e+00 : f32
    %564 = vector.broadcast %cst_142 : f32 to vector<1x256xf32>
    %565 = arith.addf %564, %563 : vector<1x256xf32>
    %566 = arith.divf %564, %565 : vector<1x256xf32>
    %567 = vector.extract_strided_slice %566 {offsets = [0, 0], sizes = [1, 128], strides = [1, 1]} : vector<1x256xf32> to vector<1x128xf32>
    %568 = vector.extract_strided_slice %566 {offsets = [0, 128], sizes = [1, 128], strides = [1, 1]} : vector<1x256xf32> to vector<1x128xf32>
    %cst_143 = arith.constant 2.000000e+00 : f32
    %569 = vector.broadcast %cst_143 : f32 to vector<1x128xf32>
    %570 = arith.mulf %569, %568 : vector<1x128xf32>
    %cst_144 = arith.constant 1.000000e+00 : f32
    %571 = vector.broadcast %cst_144 : f32 to vector<1x128xf32>
    %572 = arith.subf %570, %571 : vector<1x128xf32>
    %573 = arith.select %10, %555, %572 : vector<1x128xi1>, vector<1x128xf32>
    %574 = arith.mulf %567, %573 : vector<1x128xf32>
    %c64_i32_145 = arith.constant 64 : i32
    %575 = tpu.dynamic_rotate %574 by %c64_i32_145 dim 1 : vector<1x128xf32>, i32 -> vector<1x128xf32>
    %576 = arith.addf %574, %575 : vector<1x128xf32>
    %577 = math.tanh %576 : vector<1x128xf32>
    %578 = arith.mulf %568, %577 : vector<1x128xf32>
    %579 = vector.extract_strided_slice %536 {offsets = [2, 0], sizes = [1, 256], strides = [1, 1]} : vector<8x256xf32> to vector<1x256xf32>
    %580 = arith.truncf %578 : vector<1x128xf32> to vector<1x128xbf16>
    %cst_146 = arith.constant dense<0.000000e+00> : vector<1x256xf32>
    %581 = tpu.matmul %580, %6, %cst_146 {dimension_numbers = #tpu.dot_dimension_numbers<[1], [0], [0], [1], [0, 0, 1, 1], [], []>} : vector<1x128xbf16>, vector<128x256xbf16>, vector<1x256xf32> -> vector<1x256xf32>
    %582 = arith.addf %579, %581 : vector<1x256xf32>
    %583 = arith.negf %582 : vector<1x256xf32>
    %584 = math.exp %583 : vector<1x256xf32>
    %cst_147 = arith.constant 1.000000e+00 : f32
    %585 = vector.broadcast %cst_147 : f32 to vector<1x256xf32>
    %586 = arith.addf %585, %584 : vector<1x256xf32>
    %587 = arith.divf %585, %586 : vector<1x256xf32>
    %588 = vector.extract_strided_slice %587 {offsets = [0, 0], sizes = [1, 128], strides = [1, 1]} : vector<1x256xf32> to vector<1x128xf32>
    %589 = vector.extract_strided_slice %587 {offsets = [0, 128], sizes = [1, 128], strides = [1, 1]} : vector<1x256xf32> to vector<1x128xf32>
    %cst_148 = arith.constant 2.000000e+00 : f32
    %590 = vector.broadcast %cst_148 : f32 to vector<1x128xf32>
    %591 = arith.mulf %590, %589 : vector<1x128xf32>
    %cst_149 = arith.constant 1.000000e+00 : f32
    %592 = vector.broadcast %cst_149 : f32 to vector<1x128xf32>
    %593 = arith.subf %591, %592 : vector<1x128xf32>
    %594 = arith.select %10, %576, %593 : vector<1x128xi1>, vector<1x128xf32>
    %595 = arith.mulf %588, %594 : vector<1x128xf32>
    %c64_i32_150 = arith.constant 64 : i32
    %596 = tpu.dynamic_rotate %595 by %c64_i32_150 dim 1 : vector<1x128xf32>, i32 -> vector<1x128xf32>
    %597 = arith.addf %595, %596 : vector<1x128xf32>
    %598 = math.tanh %597 : vector<1x128xf32>
    %599 = arith.mulf %589, %598 : vector<1x128xf32>
    %600 = vector.extract_strided_slice %536 {offsets = [3, 0], sizes = [1, 256], strides = [1, 1]} : vector<8x256xf32> to vector<1x256xf32>
    %601 = arith.truncf %599 : vector<1x128xf32> to vector<1x128xbf16>
    %cst_151 = arith.constant dense<0.000000e+00> : vector<1x256xf32>
    %602 = tpu.matmul %601, %6, %cst_151 {dimension_numbers = #tpu.dot_dimension_numbers<[1], [0], [0], [1], [0, 0, 1, 1], [], []>} : vector<1x128xbf16>, vector<128x256xbf16>, vector<1x256xf32> -> vector<1x256xf32>
    %603 = arith.addf %600, %602 : vector<1x256xf32>
    %604 = arith.negf %603 : vector<1x256xf32>
    %605 = math.exp %604 : vector<1x256xf32>
    %cst_152 = arith.constant 1.000000e+00 : f32
    %606 = vector.broadcast %cst_152 : f32 to vector<1x256xf32>
    %607 = arith.addf %606, %605 : vector<1x256xf32>
    %608 = arith.divf %606, %607 : vector<1x256xf32>
    %609 = vector.extract_strided_slice %608 {offsets = [0, 0], sizes = [1, 128], strides = [1, 1]} : vector<1x256xf32> to vector<1x128xf32>
    %610 = vector.extract_strided_slice %608 {offsets = [0, 128], sizes = [1, 128], strides = [1, 1]} : vector<1x256xf32> to vector<1x128xf32>
    %cst_153 = arith.constant 2.000000e+00 : f32
    %611 = vector.broadcast %cst_153 : f32 to vector<1x128xf32>
    %612 = arith.mulf %611, %610 : vector<1x128xf32>
    %cst_154 = arith.constant 1.000000e+00 : f32
    %613 = vector.broadcast %cst_154 : f32 to vector<1x128xf32>
    %614 = arith.subf %612, %613 : vector<1x128xf32>
    %615 = arith.select %10, %597, %614 : vector<1x128xi1>, vector<1x128xf32>
    %616 = arith.mulf %609, %615 : vector<1x128xf32>
    %c64_i32_155 = arith.constant 64 : i32
    %617 = tpu.dynamic_rotate %616 by %c64_i32_155 dim 1 : vector<1x128xf32>, i32 -> vector<1x128xf32>
    %618 = arith.addf %616, %617 : vector<1x128xf32>
    %619 = math.tanh %618 : vector<1x128xf32>
    %620 = arith.mulf %610, %619 : vector<1x128xf32>
    %621 = vector.extract_strided_slice %536 {offsets = [4, 0], sizes = [1, 256], strides = [1, 1]} : vector<8x256xf32> to vector<1x256xf32>
    %622 = arith.truncf %620 : vector<1x128xf32> to vector<1x128xbf16>
    %cst_156 = arith.constant dense<0.000000e+00> : vector<1x256xf32>
    %623 = tpu.matmul %622, %6, %cst_156 {dimension_numbers = #tpu.dot_dimension_numbers<[1], [0], [0], [1], [0, 0, 1, 1], [], []>} : vector<1x128xbf16>, vector<128x256xbf16>, vector<1x256xf32> -> vector<1x256xf32>
    %624 = arith.addf %621, %623 : vector<1x256xf32>
    %625 = arith.negf %624 : vector<1x256xf32>
    %626 = math.exp %625 : vector<1x256xf32>
    %cst_157 = arith.constant 1.000000e+00 : f32
    %627 = vector.broadcast %cst_157 : f32 to vector<1x256xf32>
    %628 = arith.addf %627, %626 : vector<1x256xf32>
    %629 = arith.divf %627, %628 : vector<1x256xf32>
    %630 = vector.extract_strided_slice %629 {offsets = [0, 0], sizes = [1, 128], strides = [1, 1]} : vector<1x256xf32> to vector<1x128xf32>
    %631 = vector.extract_strided_slice %629 {offsets = [0, 128], sizes = [1, 128], strides = [1, 1]} : vector<1x256xf32> to vector<1x128xf32>
    %cst_158 = arith.constant 2.000000e+00 : f32
    %632 = vector.broadcast %cst_158 : f32 to vector<1x128xf32>
    %633 = arith.mulf %632, %631 : vector<1x128xf32>
    %cst_159 = arith.constant 1.000000e+00 : f32
    %634 = vector.broadcast %cst_159 : f32 to vector<1x128xf32>
    %635 = arith.subf %633, %634 : vector<1x128xf32>
    %636 = arith.select %10, %618, %635 : vector<1x128xi1>, vector<1x128xf32>
    %637 = arith.mulf %630, %636 : vector<1x128xf32>
    %c64_i32_160 = arith.constant 64 : i32
    %638 = tpu.dynamic_rotate %637 by %c64_i32_160 dim 1 : vector<1x128xf32>, i32 -> vector<1x128xf32>
    %639 = arith.addf %637, %638 : vector<1x128xf32>
    %640 = math.tanh %639 : vector<1x128xf32>
    %641 = arith.mulf %631, %640 : vector<1x128xf32>
    %642 = vector.extract_strided_slice %536 {offsets = [5, 0], sizes = [1, 256], strides = [1, 1]} : vector<8x256xf32> to vector<1x256xf32>
    %643 = arith.truncf %641 : vector<1x128xf32> to vector<1x128xbf16>
    %cst_161 = arith.constant dense<0.000000e+00> : vector<1x256xf32>
    %644 = tpu.matmul %643, %6, %cst_161 {dimension_numbers = #tpu.dot_dimension_numbers<[1], [0], [0], [1], [0, 0, 1, 1], [], []>} : vector<1x128xbf16>, vector<128x256xbf16>, vector<1x256xf32> -> vector<1x256xf32>
    %645 = arith.addf %642, %644 : vector<1x256xf32>
    %646 = arith.negf %645 : vector<1x256xf32>
    %647 = math.exp %646 : vector<1x256xf32>
    %cst_162 = arith.constant 1.000000e+00 : f32
    %648 = vector.broadcast %cst_162 : f32 to vector<1x256xf32>
    %649 = arith.addf %648, %647 : vector<1x256xf32>
    %650 = arith.divf %648, %649 : vector<1x256xf32>
    %651 = vector.extract_strided_slice %650 {offsets = [0, 0], sizes = [1, 128], strides = [1, 1]} : vector<1x256xf32> to vector<1x128xf32>
    %652 = vector.extract_strided_slice %650 {offsets = [0, 128], sizes = [1, 128], strides = [1, 1]} : vector<1x256xf32> to vector<1x128xf32>
    %cst_163 = arith.constant 2.000000e+00 : f32
    %653 = vector.broadcast %cst_163 : f32 to vector<1x128xf32>
    %654 = arith.mulf %653, %652 : vector<1x128xf32>
    %cst_164 = arith.constant 1.000000e+00 : f32
    %655 = vector.broadcast %cst_164 : f32 to vector<1x128xf32>
    %656 = arith.subf %654, %655 : vector<1x128xf32>
    %657 = arith.select %10, %639, %656 : vector<1x128xi1>, vector<1x128xf32>
    %658 = arith.mulf %651, %657 : vector<1x128xf32>
    %c64_i32_165 = arith.constant 64 : i32
    %659 = tpu.dynamic_rotate %658 by %c64_i32_165 dim 1 : vector<1x128xf32>, i32 -> vector<1x128xf32>
    %660 = arith.addf %658, %659 : vector<1x128xf32>
    %661 = math.tanh %660 : vector<1x128xf32>
    %662 = arith.mulf %652, %661 : vector<1x128xf32>
    %663 = vector.extract_strided_slice %536 {offsets = [6, 0], sizes = [1, 256], strides = [1, 1]} : vector<8x256xf32> to vector<1x256xf32>
    %664 = arith.truncf %662 : vector<1x128xf32> to vector<1x128xbf16>
    %cst_166 = arith.constant dense<0.000000e+00> : vector<1x256xf32>
    %665 = tpu.matmul %664, %6, %cst_166 {dimension_numbers = #tpu.dot_dimension_numbers<[1], [0], [0], [1], [0, 0, 1, 1], [], []>} : vector<1x128xbf16>, vector<128x256xbf16>, vector<1x256xf32> -> vector<1x256xf32>
    %666 = arith.addf %663, %665 : vector<1x256xf32>
    %667 = arith.negf %666 : vector<1x256xf32>
    %668 = math.exp %667 : vector<1x256xf32>
    %cst_167 = arith.constant 1.000000e+00 : f32
    %669 = vector.broadcast %cst_167 : f32 to vector<1x256xf32>
    %670 = arith.addf %669, %668 : vector<1x256xf32>
    %671 = arith.divf %669, %670 : vector<1x256xf32>
    %672 = vector.extract_strided_slice %671 {offsets = [0, 0], sizes = [1, 128], strides = [1, 1]} : vector<1x256xf32> to vector<1x128xf32>
    %673 = vector.extract_strided_slice %671 {offsets = [0, 128], sizes = [1, 128], strides = [1, 1]} : vector<1x256xf32> to vector<1x128xf32>
    %cst_168 = arith.constant 2.000000e+00 : f32
    %674 = vector.broadcast %cst_168 : f32 to vector<1x128xf32>
    %675 = arith.mulf %674, %673 : vector<1x128xf32>
    %cst_169 = arith.constant 1.000000e+00 : f32
    %676 = vector.broadcast %cst_169 : f32 to vector<1x128xf32>
    %677 = arith.subf %675, %676 : vector<1x128xf32>
    %678 = arith.select %10, %660, %677 : vector<1x128xi1>, vector<1x128xf32>
    %679 = arith.mulf %672, %678 : vector<1x128xf32>
    %c64_i32_170 = arith.constant 64 : i32
    %680 = tpu.dynamic_rotate %679 by %c64_i32_170 dim 1 : vector<1x128xf32>, i32 -> vector<1x128xf32>
    %681 = arith.addf %679, %680 : vector<1x128xf32>
    %682 = math.tanh %681 : vector<1x128xf32>
    %683 = arith.mulf %673, %682 : vector<1x128xf32>
    %684 = vector.extract_strided_slice %536 {offsets = [7, 0], sizes = [1, 256], strides = [1, 1]} : vector<8x256xf32> to vector<1x256xf32>
    %685 = arith.truncf %683 : vector<1x128xf32> to vector<1x128xbf16>
    %cst_171 = arith.constant dense<0.000000e+00> : vector<1x256xf32>
    %686 = tpu.matmul %685, %6, %cst_171 {dimension_numbers = #tpu.dot_dimension_numbers<[1], [0], [0], [1], [0, 0, 1, 1], [], []>} : vector<1x128xbf16>, vector<128x256xbf16>, vector<1x256xf32> -> vector<1x256xf32>
    %687 = arith.addf %684, %686 : vector<1x256xf32>
    %688 = arith.negf %687 : vector<1x256xf32>
    %689 = math.exp %688 : vector<1x256xf32>
    %cst_172 = arith.constant 1.000000e+00 : f32
    %690 = vector.broadcast %cst_172 : f32 to vector<1x256xf32>
    %691 = arith.addf %690, %689 : vector<1x256xf32>
    %692 = arith.divf %690, %691 : vector<1x256xf32>
    %693 = vector.extract_strided_slice %692 {offsets = [0, 0], sizes = [1, 128], strides = [1, 1]} : vector<1x256xf32> to vector<1x128xf32>
    %694 = vector.extract_strided_slice %692 {offsets = [0, 128], sizes = [1, 128], strides = [1, 1]} : vector<1x256xf32> to vector<1x128xf32>
    %cst_173 = arith.constant 2.000000e+00 : f32
    %695 = vector.broadcast %cst_173 : f32 to vector<1x128xf32>
    %696 = arith.mulf %695, %694 : vector<1x128xf32>
    %cst_174 = arith.constant 1.000000e+00 : f32
    %697 = vector.broadcast %cst_174 : f32 to vector<1x128xf32>
    %698 = arith.subf %696, %697 : vector<1x128xf32>
    %699 = arith.select %10, %681, %698 : vector<1x128xi1>, vector<1x128xf32>
    %700 = arith.mulf %693, %699 : vector<1x128xf32>
    %c64_i32_175 = arith.constant 64 : i32
    %701 = tpu.dynamic_rotate %700 by %c64_i32_175 dim 1 : vector<1x128xf32>, i32 -> vector<1x128xf32>
    %702 = arith.addf %700, %701 : vector<1x128xf32>
    %703 = math.tanh %702 : vector<1x128xf32>
    %704 = arith.mulf %694, %703 : vector<1x128xf32>
    %705 = vector.extract_strided_slice %4 {offsets = [32, 0], sizes = [8, 128], strides = [1, 1]} : vector<64x128xf32> to vector<8x128xf32>
    %706 = arith.truncf %705 : vector<8x128xf32> to vector<8x128xbf16>
    %cst_176 = arith.constant dense<0.000000e+00> : vector<8x256xf32>
    %707 = tpu.matmul %706, %5, %cst_176 {dimension_numbers = #tpu.dot_dimension_numbers<[1], [0], [0], [1], [0, 0, 1, 1], [], []>} : vector<8x128xbf16>, vector<128x256xbf16>, vector<8x256xf32> -> vector<8x256xf32>
    %708 = vector.broadcast %7 : vector<1x256xf32> to vector<8x256xf32>
    %709 = arith.addf %707, %708 : vector<8x256xf32>
    %710 = vector.extract_strided_slice %709 {offsets = [0, 0], sizes = [1, 256], strides = [1, 1]} : vector<8x256xf32> to vector<1x256xf32>
    %711 = arith.truncf %704 : vector<1x128xf32> to vector<1x128xbf16>
    %cst_177 = arith.constant dense<0.000000e+00> : vector<1x256xf32>
    %712 = tpu.matmul %711, %6, %cst_177 {dimension_numbers = #tpu.dot_dimension_numbers<[1], [0], [0], [1], [0, 0, 1, 1], [], []>} : vector<1x128xbf16>, vector<128x256xbf16>, vector<1x256xf32> -> vector<1x256xf32>
    %713 = arith.addf %710, %712 : vector<1x256xf32>
    %714 = arith.negf %713 : vector<1x256xf32>
    %715 = math.exp %714 : vector<1x256xf32>
    %cst_178 = arith.constant 1.000000e+00 : f32
    %716 = vector.broadcast %cst_178 : f32 to vector<1x256xf32>
    %717 = arith.addf %716, %715 : vector<1x256xf32>
    %718 = arith.divf %716, %717 : vector<1x256xf32>
    %719 = vector.extract_strided_slice %718 {offsets = [0, 0], sizes = [1, 128], strides = [1, 1]} : vector<1x256xf32> to vector<1x128xf32>
    %720 = vector.extract_strided_slice %718 {offsets = [0, 128], sizes = [1, 128], strides = [1, 1]} : vector<1x256xf32> to vector<1x128xf32>
    %cst_179 = arith.constant 2.000000e+00 : f32
    %721 = vector.broadcast %cst_179 : f32 to vector<1x128xf32>
    %722 = arith.mulf %721, %720 : vector<1x128xf32>
    %cst_180 = arith.constant 1.000000e+00 : f32
    %723 = vector.broadcast %cst_180 : f32 to vector<1x128xf32>
    %724 = arith.subf %722, %723 : vector<1x128xf32>
    %725 = arith.select %10, %702, %724 : vector<1x128xi1>, vector<1x128xf32>
    %726 = arith.mulf %719, %725 : vector<1x128xf32>
    %c64_i32_181 = arith.constant 64 : i32
    %727 = tpu.dynamic_rotate %726 by %c64_i32_181 dim 1 : vector<1x128xf32>, i32 -> vector<1x128xf32>
    %728 = arith.addf %726, %727 : vector<1x128xf32>
    %729 = math.tanh %728 : vector<1x128xf32>
    %730 = arith.mulf %720, %729 : vector<1x128xf32>
    %731 = vector.extract_strided_slice %709 {offsets = [1, 0], sizes = [1, 256], strides = [1, 1]} : vector<8x256xf32> to vector<1x256xf32>
    %732 = arith.truncf %730 : vector<1x128xf32> to vector<1x128xbf16>
    %cst_182 = arith.constant dense<0.000000e+00> : vector<1x256xf32>
    %733 = tpu.matmul %732, %6, %cst_182 {dimension_numbers = #tpu.dot_dimension_numbers<[1], [0], [0], [1], [0, 0, 1, 1], [], []>} : vector<1x128xbf16>, vector<128x256xbf16>, vector<1x256xf32> -> vector<1x256xf32>
    %734 = arith.addf %731, %733 : vector<1x256xf32>
    %735 = arith.negf %734 : vector<1x256xf32>
    %736 = math.exp %735 : vector<1x256xf32>
    %cst_183 = arith.constant 1.000000e+00 : f32
    %737 = vector.broadcast %cst_183 : f32 to vector<1x256xf32>
    %738 = arith.addf %737, %736 : vector<1x256xf32>
    %739 = arith.divf %737, %738 : vector<1x256xf32>
    %740 = vector.extract_strided_slice %739 {offsets = [0, 0], sizes = [1, 128], strides = [1, 1]} : vector<1x256xf32> to vector<1x128xf32>
    %741 = vector.extract_strided_slice %739 {offsets = [0, 128], sizes = [1, 128], strides = [1, 1]} : vector<1x256xf32> to vector<1x128xf32>
    %cst_184 = arith.constant 2.000000e+00 : f32
    %742 = vector.broadcast %cst_184 : f32 to vector<1x128xf32>
    %743 = arith.mulf %742, %741 : vector<1x128xf32>
    %cst_185 = arith.constant 1.000000e+00 : f32
    %744 = vector.broadcast %cst_185 : f32 to vector<1x128xf32>
    %745 = arith.subf %743, %744 : vector<1x128xf32>
    %746 = arith.select %10, %728, %745 : vector<1x128xi1>, vector<1x128xf32>
    %747 = arith.mulf %740, %746 : vector<1x128xf32>
    %c64_i32_186 = arith.constant 64 : i32
    %748 = tpu.dynamic_rotate %747 by %c64_i32_186 dim 1 : vector<1x128xf32>, i32 -> vector<1x128xf32>
    %749 = arith.addf %747, %748 : vector<1x128xf32>
    %750 = math.tanh %749 : vector<1x128xf32>
    %751 = arith.mulf %741, %750 : vector<1x128xf32>
    %752 = vector.extract_strided_slice %709 {offsets = [2, 0], sizes = [1, 256], strides = [1, 1]} : vector<8x256xf32> to vector<1x256xf32>
    %753 = arith.truncf %751 : vector<1x128xf32> to vector<1x128xbf16>
    %cst_187 = arith.constant dense<0.000000e+00> : vector<1x256xf32>
    %754 = tpu.matmul %753, %6, %cst_187 {dimension_numbers = #tpu.dot_dimension_numbers<[1], [0], [0], [1], [0, 0, 1, 1], [], []>} : vector<1x128xbf16>, vector<128x256xbf16>, vector<1x256xf32> -> vector<1x256xf32>
    %755 = arith.addf %752, %754 : vector<1x256xf32>
    %756 = arith.negf %755 : vector<1x256xf32>
    %757 = math.exp %756 : vector<1x256xf32>
    %cst_188 = arith.constant 1.000000e+00 : f32
    %758 = vector.broadcast %cst_188 : f32 to vector<1x256xf32>
    %759 = arith.addf %758, %757 : vector<1x256xf32>
    %760 = arith.divf %758, %759 : vector<1x256xf32>
    %761 = vector.extract_strided_slice %760 {offsets = [0, 0], sizes = [1, 128], strides = [1, 1]} : vector<1x256xf32> to vector<1x128xf32>
    %762 = vector.extract_strided_slice %760 {offsets = [0, 128], sizes = [1, 128], strides = [1, 1]} : vector<1x256xf32> to vector<1x128xf32>
    %cst_189 = arith.constant 2.000000e+00 : f32
    %763 = vector.broadcast %cst_189 : f32 to vector<1x128xf32>
    %764 = arith.mulf %763, %762 : vector<1x128xf32>
    %cst_190 = arith.constant 1.000000e+00 : f32
    %765 = vector.broadcast %cst_190 : f32 to vector<1x128xf32>
    %766 = arith.subf %764, %765 : vector<1x128xf32>
    %767 = arith.select %10, %749, %766 : vector<1x128xi1>, vector<1x128xf32>
    %768 = arith.mulf %761, %767 : vector<1x128xf32>
    %c64_i32_191 = arith.constant 64 : i32
    %769 = tpu.dynamic_rotate %768 by %c64_i32_191 dim 1 : vector<1x128xf32>, i32 -> vector<1x128xf32>
    %770 = arith.addf %768, %769 : vector<1x128xf32>
    %771 = math.tanh %770 : vector<1x128xf32>
    %772 = arith.mulf %762, %771 : vector<1x128xf32>
    %773 = vector.extract_strided_slice %709 {offsets = [3, 0], sizes = [1, 256], strides = [1, 1]} : vector<8x256xf32> to vector<1x256xf32>
    %774 = arith.truncf %772 : vector<1x128xf32> to vector<1x128xbf16>
    %cst_192 = arith.constant dense<0.000000e+00> : vector<1x256xf32>
    %775 = tpu.matmul %774, %6, %cst_192 {dimension_numbers = #tpu.dot_dimension_numbers<[1], [0], [0], [1], [0, 0, 1, 1], [], []>} : vector<1x128xbf16>, vector<128x256xbf16>, vector<1x256xf32> -> vector<1x256xf32>
    %776 = arith.addf %773, %775 : vector<1x256xf32>
    %777 = arith.negf %776 : vector<1x256xf32>
    %778 = math.exp %777 : vector<1x256xf32>
    %cst_193 = arith.constant 1.000000e+00 : f32
    %779 = vector.broadcast %cst_193 : f32 to vector<1x256xf32>
    %780 = arith.addf %779, %778 : vector<1x256xf32>
    %781 = arith.divf %779, %780 : vector<1x256xf32>
    %782 = vector.extract_strided_slice %781 {offsets = [0, 0], sizes = [1, 128], strides = [1, 1]} : vector<1x256xf32> to vector<1x128xf32>
    %783 = vector.extract_strided_slice %781 {offsets = [0, 128], sizes = [1, 128], strides = [1, 1]} : vector<1x256xf32> to vector<1x128xf32>
    %cst_194 = arith.constant 2.000000e+00 : f32
    %784 = vector.broadcast %cst_194 : f32 to vector<1x128xf32>
    %785 = arith.mulf %784, %783 : vector<1x128xf32>
    %cst_195 = arith.constant 1.000000e+00 : f32
    %786 = vector.broadcast %cst_195 : f32 to vector<1x128xf32>
    %787 = arith.subf %785, %786 : vector<1x128xf32>
    %788 = arith.select %10, %770, %787 : vector<1x128xi1>, vector<1x128xf32>
    %789 = arith.mulf %782, %788 : vector<1x128xf32>
    %c64_i32_196 = arith.constant 64 : i32
    %790 = tpu.dynamic_rotate %789 by %c64_i32_196 dim 1 : vector<1x128xf32>, i32 -> vector<1x128xf32>
    %791 = arith.addf %789, %790 : vector<1x128xf32>
    %792 = math.tanh %791 : vector<1x128xf32>
    %793 = arith.mulf %783, %792 : vector<1x128xf32>
    %794 = vector.extract_strided_slice %709 {offsets = [4, 0], sizes = [1, 256], strides = [1, 1]} : vector<8x256xf32> to vector<1x256xf32>
    %795 = arith.truncf %793 : vector<1x128xf32> to vector<1x128xbf16>
    %cst_197 = arith.constant dense<0.000000e+00> : vector<1x256xf32>
    %796 = tpu.matmul %795, %6, %cst_197 {dimension_numbers = #tpu.dot_dimension_numbers<[1], [0], [0], [1], [0, 0, 1, 1], [], []>} : vector<1x128xbf16>, vector<128x256xbf16>, vector<1x256xf32> -> vector<1x256xf32>
    %797 = arith.addf %794, %796 : vector<1x256xf32>
    %798 = arith.negf %797 : vector<1x256xf32>
    %799 = math.exp %798 : vector<1x256xf32>
    %cst_198 = arith.constant 1.000000e+00 : f32
    %800 = vector.broadcast %cst_198 : f32 to vector<1x256xf32>
    %801 = arith.addf %800, %799 : vector<1x256xf32>
    %802 = arith.divf %800, %801 : vector<1x256xf32>
    %803 = vector.extract_strided_slice %802 {offsets = [0, 0], sizes = [1, 128], strides = [1, 1]} : vector<1x256xf32> to vector<1x128xf32>
    %804 = vector.extract_strided_slice %802 {offsets = [0, 128], sizes = [1, 128], strides = [1, 1]} : vector<1x256xf32> to vector<1x128xf32>
    %cst_199 = arith.constant 2.000000e+00 : f32
    %805 = vector.broadcast %cst_199 : f32 to vector<1x128xf32>
    %806 = arith.mulf %805, %804 : vector<1x128xf32>
    %cst_200 = arith.constant 1.000000e+00 : f32
    %807 = vector.broadcast %cst_200 : f32 to vector<1x128xf32>
    %808 = arith.subf %806, %807 : vector<1x128xf32>
    %809 = arith.select %10, %791, %808 : vector<1x128xi1>, vector<1x128xf32>
    %810 = arith.mulf %803, %809 : vector<1x128xf32>
    %c64_i32_201 = arith.constant 64 : i32
    %811 = tpu.dynamic_rotate %810 by %c64_i32_201 dim 1 : vector<1x128xf32>, i32 -> vector<1x128xf32>
    %812 = arith.addf %810, %811 : vector<1x128xf32>
    %813 = math.tanh %812 : vector<1x128xf32>
    %814 = arith.mulf %804, %813 : vector<1x128xf32>
    %815 = vector.extract_strided_slice %709 {offsets = [5, 0], sizes = [1, 256], strides = [1, 1]} : vector<8x256xf32> to vector<1x256xf32>
    %816 = arith.truncf %814 : vector<1x128xf32> to vector<1x128xbf16>
    %cst_202 = arith.constant dense<0.000000e+00> : vector<1x256xf32>
    %817 = tpu.matmul %816, %6, %cst_202 {dimension_numbers = #tpu.dot_dimension_numbers<[1], [0], [0], [1], [0, 0, 1, 1], [], []>} : vector<1x128xbf16>, vector<128x256xbf16>, vector<1x256xf32> -> vector<1x256xf32>
    %818 = arith.addf %815, %817 : vector<1x256xf32>
    %819 = arith.negf %818 : vector<1x256xf32>
    %820 = math.exp %819 : vector<1x256xf32>
    %cst_203 = arith.constant 1.000000e+00 : f32
    %821 = vector.broadcast %cst_203 : f32 to vector<1x256xf32>
    %822 = arith.addf %821, %820 : vector<1x256xf32>
    %823 = arith.divf %821, %822 : vector<1x256xf32>
    %824 = vector.extract_strided_slice %823 {offsets = [0, 0], sizes = [1, 128], strides = [1, 1]} : vector<1x256xf32> to vector<1x128xf32>
    %825 = vector.extract_strided_slice %823 {offsets = [0, 128], sizes = [1, 128], strides = [1, 1]} : vector<1x256xf32> to vector<1x128xf32>
    %cst_204 = arith.constant 2.000000e+00 : f32
    %826 = vector.broadcast %cst_204 : f32 to vector<1x128xf32>
    %827 = arith.mulf %826, %825 : vector<1x128xf32>
    %cst_205 = arith.constant 1.000000e+00 : f32
    %828 = vector.broadcast %cst_205 : f32 to vector<1x128xf32>
    %829 = arith.subf %827, %828 : vector<1x128xf32>
    %830 = arith.select %10, %812, %829 : vector<1x128xi1>, vector<1x128xf32>
    %831 = arith.mulf %824, %830 : vector<1x128xf32>
    %c64_i32_206 = arith.constant 64 : i32
    %832 = tpu.dynamic_rotate %831 by %c64_i32_206 dim 1 : vector<1x128xf32>, i32 -> vector<1x128xf32>
    %833 = arith.addf %831, %832 : vector<1x128xf32>
    %834 = math.tanh %833 : vector<1x128xf32>
    %835 = arith.mulf %825, %834 : vector<1x128xf32>
    %836 = vector.extract_strided_slice %709 {offsets = [6, 0], sizes = [1, 256], strides = [1, 1]} : vector<8x256xf32> to vector<1x256xf32>
    %837 = arith.truncf %835 : vector<1x128xf32> to vector<1x128xbf16>
    %cst_207 = arith.constant dense<0.000000e+00> : vector<1x256xf32>
    %838 = tpu.matmul %837, %6, %cst_207 {dimension_numbers = #tpu.dot_dimension_numbers<[1], [0], [0], [1], [0, 0, 1, 1], [], []>} : vector<1x128xbf16>, vector<128x256xbf16>, vector<1x256xf32> -> vector<1x256xf32>
    %839 = arith.addf %836, %838 : vector<1x256xf32>
    %840 = arith.negf %839 : vector<1x256xf32>
    %841 = math.exp %840 : vector<1x256xf32>
    %cst_208 = arith.constant 1.000000e+00 : f32
    %842 = vector.broadcast %cst_208 : f32 to vector<1x256xf32>
    %843 = arith.addf %842, %841 : vector<1x256xf32>
    %844 = arith.divf %842, %843 : vector<1x256xf32>
    %845 = vector.extract_strided_slice %844 {offsets = [0, 0], sizes = [1, 128], strides = [1, 1]} : vector<1x256xf32> to vector<1x128xf32>
    %846 = vector.extract_strided_slice %844 {offsets = [0, 128], sizes = [1, 128], strides = [1, 1]} : vector<1x256xf32> to vector<1x128xf32>
    %cst_209 = arith.constant 2.000000e+00 : f32
    %847 = vector.broadcast %cst_209 : f32 to vector<1x128xf32>
    %848 = arith.mulf %847, %846 : vector<1x128xf32>
    %cst_210 = arith.constant 1.000000e+00 : f32
    %849 = vector.broadcast %cst_210 : f32 to vector<1x128xf32>
    %850 = arith.subf %848, %849 : vector<1x128xf32>
    %851 = arith.select %10, %833, %850 : vector<1x128xi1>, vector<1x128xf32>
    %852 = arith.mulf %845, %851 : vector<1x128xf32>
    %c64_i32_211 = arith.constant 64 : i32
    %853 = tpu.dynamic_rotate %852 by %c64_i32_211 dim 1 : vector<1x128xf32>, i32 -> vector<1x128xf32>
    %854 = arith.addf %852, %853 : vector<1x128xf32>
    %855 = math.tanh %854 : vector<1x128xf32>
    %856 = arith.mulf %846, %855 : vector<1x128xf32>
    %857 = vector.extract_strided_slice %709 {offsets = [7, 0], sizes = [1, 256], strides = [1, 1]} : vector<8x256xf32> to vector<1x256xf32>
    %858 = arith.truncf %856 : vector<1x128xf32> to vector<1x128xbf16>
    %cst_212 = arith.constant dense<0.000000e+00> : vector<1x256xf32>
    %859 = tpu.matmul %858, %6, %cst_212 {dimension_numbers = #tpu.dot_dimension_numbers<[1], [0], [0], [1], [0, 0, 1, 1], [], []>} : vector<1x128xbf16>, vector<128x256xbf16>, vector<1x256xf32> -> vector<1x256xf32>
    %860 = arith.addf %857, %859 : vector<1x256xf32>
    %861 = arith.negf %860 : vector<1x256xf32>
    %862 = math.exp %861 : vector<1x256xf32>
    %cst_213 = arith.constant 1.000000e+00 : f32
    %863 = vector.broadcast %cst_213 : f32 to vector<1x256xf32>
    %864 = arith.addf %863, %862 : vector<1x256xf32>
    %865 = arith.divf %863, %864 : vector<1x256xf32>
    %866 = vector.extract_strided_slice %865 {offsets = [0, 0], sizes = [1, 128], strides = [1, 1]} : vector<1x256xf32> to vector<1x128xf32>
    %867 = vector.extract_strided_slice %865 {offsets = [0, 128], sizes = [1, 128], strides = [1, 1]} : vector<1x256xf32> to vector<1x128xf32>
    %cst_214 = arith.constant 2.000000e+00 : f32
    %868 = vector.broadcast %cst_214 : f32 to vector<1x128xf32>
    %869 = arith.mulf %868, %867 : vector<1x128xf32>
    %cst_215 = arith.constant 1.000000e+00 : f32
    %870 = vector.broadcast %cst_215 : f32 to vector<1x128xf32>
    %871 = arith.subf %869, %870 : vector<1x128xf32>
    %872 = arith.select %10, %854, %871 : vector<1x128xi1>, vector<1x128xf32>
    %873 = arith.mulf %866, %872 : vector<1x128xf32>
    %c64_i32_216 = arith.constant 64 : i32
    %874 = tpu.dynamic_rotate %873 by %c64_i32_216 dim 1 : vector<1x128xf32>, i32 -> vector<1x128xf32>
    %875 = arith.addf %873, %874 : vector<1x128xf32>
    %876 = math.tanh %875 : vector<1x128xf32>
    %877 = arith.mulf %867, %876 : vector<1x128xf32>
    %878 = vector.extract_strided_slice %4 {offsets = [40, 0], sizes = [8, 128], strides = [1, 1]} : vector<64x128xf32> to vector<8x128xf32>
    %879 = arith.truncf %878 : vector<8x128xf32> to vector<8x128xbf16>
    %cst_217 = arith.constant dense<0.000000e+00> : vector<8x256xf32>
    %880 = tpu.matmul %879, %5, %cst_217 {dimension_numbers = #tpu.dot_dimension_numbers<[1], [0], [0], [1], [0, 0, 1, 1], [], []>} : vector<8x128xbf16>, vector<128x256xbf16>, vector<8x256xf32> -> vector<8x256xf32>
    %881 = vector.broadcast %7 : vector<1x256xf32> to vector<8x256xf32>
    %882 = arith.addf %880, %881 : vector<8x256xf32>
    %883 = vector.extract_strided_slice %882 {offsets = [0, 0], sizes = [1, 256], strides = [1, 1]} : vector<8x256xf32> to vector<1x256xf32>
    %884 = arith.truncf %877 : vector<1x128xf32> to vector<1x128xbf16>
    %cst_218 = arith.constant dense<0.000000e+00> : vector<1x256xf32>
    %885 = tpu.matmul %884, %6, %cst_218 {dimension_numbers = #tpu.dot_dimension_numbers<[1], [0], [0], [1], [0, 0, 1, 1], [], []>} : vector<1x128xbf16>, vector<128x256xbf16>, vector<1x256xf32> -> vector<1x256xf32>
    %886 = arith.addf %883, %885 : vector<1x256xf32>
    %887 = arith.negf %886 : vector<1x256xf32>
    %888 = math.exp %887 : vector<1x256xf32>
    %cst_219 = arith.constant 1.000000e+00 : f32
    %889 = vector.broadcast %cst_219 : f32 to vector<1x256xf32>
    %890 = arith.addf %889, %888 : vector<1x256xf32>
    %891 = arith.divf %889, %890 : vector<1x256xf32>
    %892 = vector.extract_strided_slice %891 {offsets = [0, 0], sizes = [1, 128], strides = [1, 1]} : vector<1x256xf32> to vector<1x128xf32>
    %893 = vector.extract_strided_slice %891 {offsets = [0, 128], sizes = [1, 128], strides = [1, 1]} : vector<1x256xf32> to vector<1x128xf32>
    %cst_220 = arith.constant 2.000000e+00 : f32
    %894 = vector.broadcast %cst_220 : f32 to vector<1x128xf32>
    %895 = arith.mulf %894, %893 : vector<1x128xf32>
    %cst_221 = arith.constant 1.000000e+00 : f32
    %896 = vector.broadcast %cst_221 : f32 to vector<1x128xf32>
    %897 = arith.subf %895, %896 : vector<1x128xf32>
    %898 = arith.select %10, %875, %897 : vector<1x128xi1>, vector<1x128xf32>
    %899 = arith.mulf %892, %898 : vector<1x128xf32>
    %c64_i32_222 = arith.constant 64 : i32
    %900 = tpu.dynamic_rotate %899 by %c64_i32_222 dim 1 : vector<1x128xf32>, i32 -> vector<1x128xf32>
    %901 = arith.addf %899, %900 : vector<1x128xf32>
    %902 = math.tanh %901 : vector<1x128xf32>
    %903 = arith.mulf %893, %902 : vector<1x128xf32>
    %904 = vector.extract_strided_slice %882 {offsets = [1, 0], sizes = [1, 256], strides = [1, 1]} : vector<8x256xf32> to vector<1x256xf32>
    %905 = arith.truncf %903 : vector<1x128xf32> to vector<1x128xbf16>
    %cst_223 = arith.constant dense<0.000000e+00> : vector<1x256xf32>
    %906 = tpu.matmul %905, %6, %cst_223 {dimension_numbers = #tpu.dot_dimension_numbers<[1], [0], [0], [1], [0, 0, 1, 1], [], []>} : vector<1x128xbf16>, vector<128x256xbf16>, vector<1x256xf32> -> vector<1x256xf32>
    %907 = arith.addf %904, %906 : vector<1x256xf32>
    %908 = arith.negf %907 : vector<1x256xf32>
    %909 = math.exp %908 : vector<1x256xf32>
    %cst_224 = arith.constant 1.000000e+00 : f32
    %910 = vector.broadcast %cst_224 : f32 to vector<1x256xf32>
    %911 = arith.addf %910, %909 : vector<1x256xf32>
    %912 = arith.divf %910, %911 : vector<1x256xf32>
    %913 = vector.extract_strided_slice %912 {offsets = [0, 0], sizes = [1, 128], strides = [1, 1]} : vector<1x256xf32> to vector<1x128xf32>
    %914 = vector.extract_strided_slice %912 {offsets = [0, 128], sizes = [1, 128], strides = [1, 1]} : vector<1x256xf32> to vector<1x128xf32>
    %cst_225 = arith.constant 2.000000e+00 : f32
    %915 = vector.broadcast %cst_225 : f32 to vector<1x128xf32>
    %916 = arith.mulf %915, %914 : vector<1x128xf32>
    %cst_226 = arith.constant 1.000000e+00 : f32
    %917 = vector.broadcast %cst_226 : f32 to vector<1x128xf32>
    %918 = arith.subf %916, %917 : vector<1x128xf32>
    %919 = arith.select %10, %901, %918 : vector<1x128xi1>, vector<1x128xf32>
    %920 = arith.mulf %913, %919 : vector<1x128xf32>
    %c64_i32_227 = arith.constant 64 : i32
    %921 = tpu.dynamic_rotate %920 by %c64_i32_227 dim 1 : vector<1x128xf32>, i32 -> vector<1x128xf32>
    %922 = arith.addf %920, %921 : vector<1x128xf32>
    %923 = math.tanh %922 : vector<1x128xf32>
    %924 = arith.mulf %914, %923 : vector<1x128xf32>
    %925 = vector.extract_strided_slice %882 {offsets = [2, 0], sizes = [1, 256], strides = [1, 1]} : vector<8x256xf32> to vector<1x256xf32>
    %926 = arith.truncf %924 : vector<1x128xf32> to vector<1x128xbf16>
    %cst_228 = arith.constant dense<0.000000e+00> : vector<1x256xf32>
    %927 = tpu.matmul %926, %6, %cst_228 {dimension_numbers = #tpu.dot_dimension_numbers<[1], [0], [0], [1], [0, 0, 1, 1], [], []>} : vector<1x128xbf16>, vector<128x256xbf16>, vector<1x256xf32> -> vector<1x256xf32>
    %928 = arith.addf %925, %927 : vector<1x256xf32>
    %929 = arith.negf %928 : vector<1x256xf32>
    %930 = math.exp %929 : vector<1x256xf32>
    %cst_229 = arith.constant 1.000000e+00 : f32
    %931 = vector.broadcast %cst_229 : f32 to vector<1x256xf32>
    %932 = arith.addf %931, %930 : vector<1x256xf32>
    %933 = arith.divf %931, %932 : vector<1x256xf32>
    %934 = vector.extract_strided_slice %933 {offsets = [0, 0], sizes = [1, 128], strides = [1, 1]} : vector<1x256xf32> to vector<1x128xf32>
    %935 = vector.extract_strided_slice %933 {offsets = [0, 128], sizes = [1, 128], strides = [1, 1]} : vector<1x256xf32> to vector<1x128xf32>
    %cst_230 = arith.constant 2.000000e+00 : f32
    %936 = vector.broadcast %cst_230 : f32 to vector<1x128xf32>
    %937 = arith.mulf %936, %935 : vector<1x128xf32>
    %cst_231 = arith.constant 1.000000e+00 : f32
    %938 = vector.broadcast %cst_231 : f32 to vector<1x128xf32>
    %939 = arith.subf %937, %938 : vector<1x128xf32>
    %940 = arith.select %10, %922, %939 : vector<1x128xi1>, vector<1x128xf32>
    %941 = arith.mulf %934, %940 : vector<1x128xf32>
    %c64_i32_232 = arith.constant 64 : i32
    %942 = tpu.dynamic_rotate %941 by %c64_i32_232 dim 1 : vector<1x128xf32>, i32 -> vector<1x128xf32>
    %943 = arith.addf %941, %942 : vector<1x128xf32>
    %944 = math.tanh %943 : vector<1x128xf32>
    %945 = arith.mulf %935, %944 : vector<1x128xf32>
    %946 = vector.extract_strided_slice %882 {offsets = [3, 0], sizes = [1, 256], strides = [1, 1]} : vector<8x256xf32> to vector<1x256xf32>
    %947 = arith.truncf %945 : vector<1x128xf32> to vector<1x128xbf16>
    %cst_233 = arith.constant dense<0.000000e+00> : vector<1x256xf32>
    %948 = tpu.matmul %947, %6, %cst_233 {dimension_numbers = #tpu.dot_dimension_numbers<[1], [0], [0], [1], [0, 0, 1, 1], [], []>} : vector<1x128xbf16>, vector<128x256xbf16>, vector<1x256xf32> -> vector<1x256xf32>
    %949 = arith.addf %946, %948 : vector<1x256xf32>
    %950 = arith.negf %949 : vector<1x256xf32>
    %951 = math.exp %950 : vector<1x256xf32>
    %cst_234 = arith.constant 1.000000e+00 : f32
    %952 = vector.broadcast %cst_234 : f32 to vector<1x256xf32>
    %953 = arith.addf %952, %951 : vector<1x256xf32>
    %954 = arith.divf %952, %953 : vector<1x256xf32>
    %955 = vector.extract_strided_slice %954 {offsets = [0, 0], sizes = [1, 128], strides = [1, 1]} : vector<1x256xf32> to vector<1x128xf32>
    %956 = vector.extract_strided_slice %954 {offsets = [0, 128], sizes = [1, 128], strides = [1, 1]} : vector<1x256xf32> to vector<1x128xf32>
    %cst_235 = arith.constant 2.000000e+00 : f32
    %957 = vector.broadcast %cst_235 : f32 to vector<1x128xf32>
    %958 = arith.mulf %957, %956 : vector<1x128xf32>
    %cst_236 = arith.constant 1.000000e+00 : f32
    %959 = vector.broadcast %cst_236 : f32 to vector<1x128xf32>
    %960 = arith.subf %958, %959 : vector<1x128xf32>
    %961 = arith.select %10, %943, %960 : vector<1x128xi1>, vector<1x128xf32>
    %962 = arith.mulf %955, %961 : vector<1x128xf32>
    %c64_i32_237 = arith.constant 64 : i32
    %963 = tpu.dynamic_rotate %962 by %c64_i32_237 dim 1 : vector<1x128xf32>, i32 -> vector<1x128xf32>
    %964 = arith.addf %962, %963 : vector<1x128xf32>
    %965 = math.tanh %964 : vector<1x128xf32>
    %966 = arith.mulf %956, %965 : vector<1x128xf32>
    %967 = vector.extract_strided_slice %882 {offsets = [4, 0], sizes = [1, 256], strides = [1, 1]} : vector<8x256xf32> to vector<1x256xf32>
    %968 = arith.truncf %966 : vector<1x128xf32> to vector<1x128xbf16>
    %cst_238 = arith.constant dense<0.000000e+00> : vector<1x256xf32>
    %969 = tpu.matmul %968, %6, %cst_238 {dimension_numbers = #tpu.dot_dimension_numbers<[1], [0], [0], [1], [0, 0, 1, 1], [], []>} : vector<1x128xbf16>, vector<128x256xbf16>, vector<1x256xf32> -> vector<1x256xf32>
    %970 = arith.addf %967, %969 : vector<1x256xf32>
    %971 = arith.negf %970 : vector<1x256xf32>
    %972 = math.exp %971 : vector<1x256xf32>
    %cst_239 = arith.constant 1.000000e+00 : f32
    %973 = vector.broadcast %cst_239 : f32 to vector<1x256xf32>
    %974 = arith.addf %973, %972 : vector<1x256xf32>
    %975 = arith.divf %973, %974 : vector<1x256xf32>
    %976 = vector.extract_strided_slice %975 {offsets = [0, 0], sizes = [1, 128], strides = [1, 1]} : vector<1x256xf32> to vector<1x128xf32>
    %977 = vector.extract_strided_slice %975 {offsets = [0, 128], sizes = [1, 128], strides = [1, 1]} : vector<1x256xf32> to vector<1x128xf32>
    %cst_240 = arith.constant 2.000000e+00 : f32
    %978 = vector.broadcast %cst_240 : f32 to vector<1x128xf32>
    %979 = arith.mulf %978, %977 : vector<1x128xf32>
    %cst_241 = arith.constant 1.000000e+00 : f32
    %980 = vector.broadcast %cst_241 : f32 to vector<1x128xf32>
    %981 = arith.subf %979, %980 : vector<1x128xf32>
    %982 = arith.select %10, %964, %981 : vector<1x128xi1>, vector<1x128xf32>
    %983 = arith.mulf %976, %982 : vector<1x128xf32>
    %c64_i32_242 = arith.constant 64 : i32
    %984 = tpu.dynamic_rotate %983 by %c64_i32_242 dim 1 : vector<1x128xf32>, i32 -> vector<1x128xf32>
    %985 = arith.addf %983, %984 : vector<1x128xf32>
    %986 = math.tanh %985 : vector<1x128xf32>
    %987 = arith.mulf %977, %986 : vector<1x128xf32>
    %988 = vector.extract_strided_slice %882 {offsets = [5, 0], sizes = [1, 256], strides = [1, 1]} : vector<8x256xf32> to vector<1x256xf32>
    %989 = arith.truncf %987 : vector<1x128xf32> to vector<1x128xbf16>
    %cst_243 = arith.constant dense<0.000000e+00> : vector<1x256xf32>
    %990 = tpu.matmul %989, %6, %cst_243 {dimension_numbers = #tpu.dot_dimension_numbers<[1], [0], [0], [1], [0, 0, 1, 1], [], []>} : vector<1x128xbf16>, vector<128x256xbf16>, vector<1x256xf32> -> vector<1x256xf32>
    %991 = arith.addf %988, %990 : vector<1x256xf32>
    %992 = arith.negf %991 : vector<1x256xf32>
    %993 = math.exp %992 : vector<1x256xf32>
    %cst_244 = arith.constant 1.000000e+00 : f32
    %994 = vector.broadcast %cst_244 : f32 to vector<1x256xf32>
    %995 = arith.addf %994, %993 : vector<1x256xf32>
    %996 = arith.divf %994, %995 : vector<1x256xf32>
    %997 = vector.extract_strided_slice %996 {offsets = [0, 0], sizes = [1, 128], strides = [1, 1]} : vector<1x256xf32> to vector<1x128xf32>
    %998 = vector.extract_strided_slice %996 {offsets = [0, 128], sizes = [1, 128], strides = [1, 1]} : vector<1x256xf32> to vector<1x128xf32>
    %cst_245 = arith.constant 2.000000e+00 : f32
    %999 = vector.broadcast %cst_245 : f32 to vector<1x128xf32>
    %1000 = arith.mulf %999, %998 : vector<1x128xf32>
    %cst_246 = arith.constant 1.000000e+00 : f32
    %1001 = vector.broadcast %cst_246 : f32 to vector<1x128xf32>
    %1002 = arith.subf %1000, %1001 : vector<1x128xf32>
    %1003 = arith.select %10, %985, %1002 : vector<1x128xi1>, vector<1x128xf32>
    %1004 = arith.mulf %997, %1003 : vector<1x128xf32>
    %c64_i32_247 = arith.constant 64 : i32
    %1005 = tpu.dynamic_rotate %1004 by %c64_i32_247 dim 1 : vector<1x128xf32>, i32 -> vector<1x128xf32>
    %1006 = arith.addf %1004, %1005 : vector<1x128xf32>
    %1007 = math.tanh %1006 : vector<1x128xf32>
    %1008 = arith.mulf %998, %1007 : vector<1x128xf32>
    %1009 = vector.extract_strided_slice %882 {offsets = [6, 0], sizes = [1, 256], strides = [1, 1]} : vector<8x256xf32> to vector<1x256xf32>
    %1010 = arith.truncf %1008 : vector<1x128xf32> to vector<1x128xbf16>
    %cst_248 = arith.constant dense<0.000000e+00> : vector<1x256xf32>
    %1011 = tpu.matmul %1010, %6, %cst_248 {dimension_numbers = #tpu.dot_dimension_numbers<[1], [0], [0], [1], [0, 0, 1, 1], [], []>} : vector<1x128xbf16>, vector<128x256xbf16>, vector<1x256xf32> -> vector<1x256xf32>
    %1012 = arith.addf %1009, %1011 : vector<1x256xf32>
    %1013 = arith.negf %1012 : vector<1x256xf32>
    %1014 = math.exp %1013 : vector<1x256xf32>
    %cst_249 = arith.constant 1.000000e+00 : f32
    %1015 = vector.broadcast %cst_249 : f32 to vector<1x256xf32>
    %1016 = arith.addf %1015, %1014 : vector<1x256xf32>
    %1017 = arith.divf %1015, %1016 : vector<1x256xf32>
    %1018 = vector.extract_strided_slice %1017 {offsets = [0, 0], sizes = [1, 128], strides = [1, 1]} : vector<1x256xf32> to vector<1x128xf32>
    %1019 = vector.extract_strided_slice %1017 {offsets = [0, 128], sizes = [1, 128], strides = [1, 1]} : vector<1x256xf32> to vector<1x128xf32>
    %cst_250 = arith.constant 2.000000e+00 : f32
    %1020 = vector.broadcast %cst_250 : f32 to vector<1x128xf32>
    %1021 = arith.mulf %1020, %1019 : vector<1x128xf32>
    %cst_251 = arith.constant 1.000000e+00 : f32
    %1022 = vector.broadcast %cst_251 : f32 to vector<1x128xf32>
    %1023 = arith.subf %1021, %1022 : vector<1x128xf32>
    %1024 = arith.select %10, %1006, %1023 : vector<1x128xi1>, vector<1x128xf32>
    %1025 = arith.mulf %1018, %1024 : vector<1x128xf32>
    %c64_i32_252 = arith.constant 64 : i32
    %1026 = tpu.dynamic_rotate %1025 by %c64_i32_252 dim 1 : vector<1x128xf32>, i32 -> vector<1x128xf32>
    %1027 = arith.addf %1025, %1026 : vector<1x128xf32>
    %1028 = math.tanh %1027 : vector<1x128xf32>
    %1029 = arith.mulf %1019, %1028 : vector<1x128xf32>
    %1030 = vector.extract_strided_slice %882 {offsets = [7, 0], sizes = [1, 256], strides = [1, 1]} : vector<8x256xf32> to vector<1x256xf32>
    %1031 = arith.truncf %1029 : vector<1x128xf32> to vector<1x128xbf16>
    %cst_253 = arith.constant dense<0.000000e+00> : vector<1x256xf32>
    %1032 = tpu.matmul %1031, %6, %cst_253 {dimension_numbers = #tpu.dot_dimension_numbers<[1], [0], [0], [1], [0, 0, 1, 1], [], []>} : vector<1x128xbf16>, vector<128x256xbf16>, vector<1x256xf32> -> vector<1x256xf32>
    %1033 = arith.addf %1030, %1032 : vector<1x256xf32>
    %1034 = arith.negf %1033 : vector<1x256xf32>
    %1035 = math.exp %1034 : vector<1x256xf32>
    %cst_254 = arith.constant 1.000000e+00 : f32
    %1036 = vector.broadcast %cst_254 : f32 to vector<1x256xf32>
    %1037 = arith.addf %1036, %1035 : vector<1x256xf32>
    %1038 = arith.divf %1036, %1037 : vector<1x256xf32>
    %1039 = vector.extract_strided_slice %1038 {offsets = [0, 0], sizes = [1, 128], strides = [1, 1]} : vector<1x256xf32> to vector<1x128xf32>
    %1040 = vector.extract_strided_slice %1038 {offsets = [0, 128], sizes = [1, 128], strides = [1, 1]} : vector<1x256xf32> to vector<1x128xf32>
    %cst_255 = arith.constant 2.000000e+00 : f32
    %1041 = vector.broadcast %cst_255 : f32 to vector<1x128xf32>
    %1042 = arith.mulf %1041, %1040 : vector<1x128xf32>
    %cst_256 = arith.constant 1.000000e+00 : f32
    %1043 = vector.broadcast %cst_256 : f32 to vector<1x128xf32>
    %1044 = arith.subf %1042, %1043 : vector<1x128xf32>
    %1045 = arith.select %10, %1027, %1044 : vector<1x128xi1>, vector<1x128xf32>
    %1046 = arith.mulf %1039, %1045 : vector<1x128xf32>
    %c64_i32_257 = arith.constant 64 : i32
    %1047 = tpu.dynamic_rotate %1046 by %c64_i32_257 dim 1 : vector<1x128xf32>, i32 -> vector<1x128xf32>
    %1048 = arith.addf %1046, %1047 : vector<1x128xf32>
    %1049 = math.tanh %1048 : vector<1x128xf32>
    %1050 = arith.mulf %1040, %1049 : vector<1x128xf32>
    %1051 = vector.extract_strided_slice %4 {offsets = [48, 0], sizes = [8, 128], strides = [1, 1]} : vector<64x128xf32> to vector<8x128xf32>
    %1052 = arith.truncf %1051 : vector<8x128xf32> to vector<8x128xbf16>
    %cst_258 = arith.constant dense<0.000000e+00> : vector<8x256xf32>
    %1053 = tpu.matmul %1052, %5, %cst_258 {dimension_numbers = #tpu.dot_dimension_numbers<[1], [0], [0], [1], [0, 0, 1, 1], [], []>} : vector<8x128xbf16>, vector<128x256xbf16>, vector<8x256xf32> -> vector<8x256xf32>
    %1054 = vector.broadcast %7 : vector<1x256xf32> to vector<8x256xf32>
    %1055 = arith.addf %1053, %1054 : vector<8x256xf32>
    %1056 = vector.extract_strided_slice %1055 {offsets = [0, 0], sizes = [1, 256], strides = [1, 1]} : vector<8x256xf32> to vector<1x256xf32>
    %1057 = arith.truncf %1050 : vector<1x128xf32> to vector<1x128xbf16>
    %cst_259 = arith.constant dense<0.000000e+00> : vector<1x256xf32>
    %1058 = tpu.matmul %1057, %6, %cst_259 {dimension_numbers = #tpu.dot_dimension_numbers<[1], [0], [0], [1], [0, 0, 1, 1], [], []>} : vector<1x128xbf16>, vector<128x256xbf16>, vector<1x256xf32> -> vector<1x256xf32>
    %1059 = arith.addf %1056, %1058 : vector<1x256xf32>
    %1060 = arith.negf %1059 : vector<1x256xf32>
    %1061 = math.exp %1060 : vector<1x256xf32>
    %cst_260 = arith.constant 1.000000e+00 : f32
    %1062 = vector.broadcast %cst_260 : f32 to vector<1x256xf32>
    %1063 = arith.addf %1062, %1061 : vector<1x256xf32>
    %1064 = arith.divf %1062, %1063 : vector<1x256xf32>
    %1065 = vector.extract_strided_slice %1064 {offsets = [0, 0], sizes = [1, 128], strides = [1, 1]} : vector<1x256xf32> to vector<1x128xf32>
    %1066 = vector.extract_strided_slice %1064 {offsets = [0, 128], sizes = [1, 128], strides = [1, 1]} : vector<1x256xf32> to vector<1x128xf32>
    %cst_261 = arith.constant 2.000000e+00 : f32
    %1067 = vector.broadcast %cst_261 : f32 to vector<1x128xf32>
    %1068 = arith.mulf %1067, %1066 : vector<1x128xf32>
    %cst_262 = arith.constant 1.000000e+00 : f32
    %1069 = vector.broadcast %cst_262 : f32 to vector<1x128xf32>
    %1070 = arith.subf %1068, %1069 : vector<1x128xf32>
    %1071 = arith.select %10, %1048, %1070 : vector<1x128xi1>, vector<1x128xf32>
    %1072 = arith.mulf %1065, %1071 : vector<1x128xf32>
    %c64_i32_263 = arith.constant 64 : i32
    %1073 = tpu.dynamic_rotate %1072 by %c64_i32_263 dim 1 : vector<1x128xf32>, i32 -> vector<1x128xf32>
    %1074 = arith.addf %1072, %1073 : vector<1x128xf32>
    %1075 = math.tanh %1074 : vector<1x128xf32>
    %1076 = arith.mulf %1066, %1075 : vector<1x128xf32>
    %1077 = vector.extract_strided_slice %1055 {offsets = [1, 0], sizes = [1, 256], strides = [1, 1]} : vector<8x256xf32> to vector<1x256xf32>
    %1078 = arith.truncf %1076 : vector<1x128xf32> to vector<1x128xbf16>
    %cst_264 = arith.constant dense<0.000000e+00> : vector<1x256xf32>
    %1079 = tpu.matmul %1078, %6, %cst_264 {dimension_numbers = #tpu.dot_dimension_numbers<[1], [0], [0], [1], [0, 0, 1, 1], [], []>} : vector<1x128xbf16>, vector<128x256xbf16>, vector<1x256xf32> -> vector<1x256xf32>
    %1080 = arith.addf %1077, %1079 : vector<1x256xf32>
    %1081 = arith.negf %1080 : vector<1x256xf32>
    %1082 = math.exp %1081 : vector<1x256xf32>
    %cst_265 = arith.constant 1.000000e+00 : f32
    %1083 = vector.broadcast %cst_265 : f32 to vector<1x256xf32>
    %1084 = arith.addf %1083, %1082 : vector<1x256xf32>
    %1085 = arith.divf %1083, %1084 : vector<1x256xf32>
    %1086 = vector.extract_strided_slice %1085 {offsets = [0, 0], sizes = [1, 128], strides = [1, 1]} : vector<1x256xf32> to vector<1x128xf32>
    %1087 = vector.extract_strided_slice %1085 {offsets = [0, 128], sizes = [1, 128], strides = [1, 1]} : vector<1x256xf32> to vector<1x128xf32>
    %cst_266 = arith.constant 2.000000e+00 : f32
    %1088 = vector.broadcast %cst_266 : f32 to vector<1x128xf32>
    %1089 = arith.mulf %1088, %1087 : vector<1x128xf32>
    %cst_267 = arith.constant 1.000000e+00 : f32
    %1090 = vector.broadcast %cst_267 : f32 to vector<1x128xf32>
    %1091 = arith.subf %1089, %1090 : vector<1x128xf32>
    %1092 = arith.select %10, %1074, %1091 : vector<1x128xi1>, vector<1x128xf32>
    %1093 = arith.mulf %1086, %1092 : vector<1x128xf32>
    %c64_i32_268 = arith.constant 64 : i32
    %1094 = tpu.dynamic_rotate %1093 by %c64_i32_268 dim 1 : vector<1x128xf32>, i32 -> vector<1x128xf32>
    %1095 = arith.addf %1093, %1094 : vector<1x128xf32>
    %1096 = math.tanh %1095 : vector<1x128xf32>
    %1097 = arith.mulf %1087, %1096 : vector<1x128xf32>
    %1098 = vector.extract_strided_slice %1055 {offsets = [2, 0], sizes = [1, 256], strides = [1, 1]} : vector<8x256xf32> to vector<1x256xf32>
    %1099 = arith.truncf %1097 : vector<1x128xf32> to vector<1x128xbf16>
    %cst_269 = arith.constant dense<0.000000e+00> : vector<1x256xf32>
    %1100 = tpu.matmul %1099, %6, %cst_269 {dimension_numbers = #tpu.dot_dimension_numbers<[1], [0], [0], [1], [0, 0, 1, 1], [], []>} : vector<1x128xbf16>, vector<128x256xbf16>, vector<1x256xf32> -> vector<1x256xf32>
    %1101 = arith.addf %1098, %1100 : vector<1x256xf32>
    %1102 = arith.negf %1101 : vector<1x256xf32>
    %1103 = math.exp %1102 : vector<1x256xf32>
    %cst_270 = arith.constant 1.000000e+00 : f32
    %1104 = vector.broadcast %cst_270 : f32 to vector<1x256xf32>
    %1105 = arith.addf %1104, %1103 : vector<1x256xf32>
    %1106 = arith.divf %1104, %1105 : vector<1x256xf32>
    %1107 = vector.extract_strided_slice %1106 {offsets = [0, 0], sizes = [1, 128], strides = [1, 1]} : vector<1x256xf32> to vector<1x128xf32>
    %1108 = vector.extract_strided_slice %1106 {offsets = [0, 128], sizes = [1, 128], strides = [1, 1]} : vector<1x256xf32> to vector<1x128xf32>
    %cst_271 = arith.constant 2.000000e+00 : f32
    %1109 = vector.broadcast %cst_271 : f32 to vector<1x128xf32>
    %1110 = arith.mulf %1109, %1108 : vector<1x128xf32>
    %cst_272 = arith.constant 1.000000e+00 : f32
    %1111 = vector.broadcast %cst_272 : f32 to vector<1x128xf32>
    %1112 = arith.subf %1110, %1111 : vector<1x128xf32>
    %1113 = arith.select %10, %1095, %1112 : vector<1x128xi1>, vector<1x128xf32>
    %1114 = arith.mulf %1107, %1113 : vector<1x128xf32>
    %c64_i32_273 = arith.constant 64 : i32
    %1115 = tpu.dynamic_rotate %1114 by %c64_i32_273 dim 1 : vector<1x128xf32>, i32 -> vector<1x128xf32>
    %1116 = arith.addf %1114, %1115 : vector<1x128xf32>
    %1117 = math.tanh %1116 : vector<1x128xf32>
    %1118 = arith.mulf %1108, %1117 : vector<1x128xf32>
    %1119 = vector.extract_strided_slice %1055 {offsets = [3, 0], sizes = [1, 256], strides = [1, 1]} : vector<8x256xf32> to vector<1x256xf32>
    %1120 = arith.truncf %1118 : vector<1x128xf32> to vector<1x128xbf16>
    %cst_274 = arith.constant dense<0.000000e+00> : vector<1x256xf32>
    %1121 = tpu.matmul %1120, %6, %cst_274 {dimension_numbers = #tpu.dot_dimension_numbers<[1], [0], [0], [1], [0, 0, 1, 1], [], []>} : vector<1x128xbf16>, vector<128x256xbf16>, vector<1x256xf32> -> vector<1x256xf32>
    %1122 = arith.addf %1119, %1121 : vector<1x256xf32>
    %1123 = arith.negf %1122 : vector<1x256xf32>
    %1124 = math.exp %1123 : vector<1x256xf32>
    %cst_275 = arith.constant 1.000000e+00 : f32
    %1125 = vector.broadcast %cst_275 : f32 to vector<1x256xf32>
    %1126 = arith.addf %1125, %1124 : vector<1x256xf32>
    %1127 = arith.divf %1125, %1126 : vector<1x256xf32>
    %1128 = vector.extract_strided_slice %1127 {offsets = [0, 0], sizes = [1, 128], strides = [1, 1]} : vector<1x256xf32> to vector<1x128xf32>
    %1129 = vector.extract_strided_slice %1127 {offsets = [0, 128], sizes = [1, 128], strides = [1, 1]} : vector<1x256xf32> to vector<1x128xf32>
    %cst_276 = arith.constant 2.000000e+00 : f32
    %1130 = vector.broadcast %cst_276 : f32 to vector<1x128xf32>
    %1131 = arith.mulf %1130, %1129 : vector<1x128xf32>
    %cst_277 = arith.constant 1.000000e+00 : f32
    %1132 = vector.broadcast %cst_277 : f32 to vector<1x128xf32>
    %1133 = arith.subf %1131, %1132 : vector<1x128xf32>
    %1134 = arith.select %10, %1116, %1133 : vector<1x128xi1>, vector<1x128xf32>
    %1135 = arith.mulf %1128, %1134 : vector<1x128xf32>
    %c64_i32_278 = arith.constant 64 : i32
    %1136 = tpu.dynamic_rotate %1135 by %c64_i32_278 dim 1 : vector<1x128xf32>, i32 -> vector<1x128xf32>
    %1137 = arith.addf %1135, %1136 : vector<1x128xf32>
    %1138 = math.tanh %1137 : vector<1x128xf32>
    %1139 = arith.mulf %1129, %1138 : vector<1x128xf32>
    %1140 = vector.extract_strided_slice %1055 {offsets = [4, 0], sizes = [1, 256], strides = [1, 1]} : vector<8x256xf32> to vector<1x256xf32>
    %1141 = arith.truncf %1139 : vector<1x128xf32> to vector<1x128xbf16>
    %cst_279 = arith.constant dense<0.000000e+00> : vector<1x256xf32>
    %1142 = tpu.matmul %1141, %6, %cst_279 {dimension_numbers = #tpu.dot_dimension_numbers<[1], [0], [0], [1], [0, 0, 1, 1], [], []>} : vector<1x128xbf16>, vector<128x256xbf16>, vector<1x256xf32> -> vector<1x256xf32>
    %1143 = arith.addf %1140, %1142 : vector<1x256xf32>
    %1144 = arith.negf %1143 : vector<1x256xf32>
    %1145 = math.exp %1144 : vector<1x256xf32>
    %cst_280 = arith.constant 1.000000e+00 : f32
    %1146 = vector.broadcast %cst_280 : f32 to vector<1x256xf32>
    %1147 = arith.addf %1146, %1145 : vector<1x256xf32>
    %1148 = arith.divf %1146, %1147 : vector<1x256xf32>
    %1149 = vector.extract_strided_slice %1148 {offsets = [0, 0], sizes = [1, 128], strides = [1, 1]} : vector<1x256xf32> to vector<1x128xf32>
    %1150 = vector.extract_strided_slice %1148 {offsets = [0, 128], sizes = [1, 128], strides = [1, 1]} : vector<1x256xf32> to vector<1x128xf32>
    %cst_281 = arith.constant 2.000000e+00 : f32
    %1151 = vector.broadcast %cst_281 : f32 to vector<1x128xf32>
    %1152 = arith.mulf %1151, %1150 : vector<1x128xf32>
    %cst_282 = arith.constant 1.000000e+00 : f32
    %1153 = vector.broadcast %cst_282 : f32 to vector<1x128xf32>
    %1154 = arith.subf %1152, %1153 : vector<1x128xf32>
    %1155 = arith.select %10, %1137, %1154 : vector<1x128xi1>, vector<1x128xf32>
    %1156 = arith.mulf %1149, %1155 : vector<1x128xf32>
    %c64_i32_283 = arith.constant 64 : i32
    %1157 = tpu.dynamic_rotate %1156 by %c64_i32_283 dim 1 : vector<1x128xf32>, i32 -> vector<1x128xf32>
    %1158 = arith.addf %1156, %1157 : vector<1x128xf32>
    %1159 = math.tanh %1158 : vector<1x128xf32>
    %1160 = arith.mulf %1150, %1159 : vector<1x128xf32>
    %1161 = vector.extract_strided_slice %1055 {offsets = [5, 0], sizes = [1, 256], strides = [1, 1]} : vector<8x256xf32> to vector<1x256xf32>
    %1162 = arith.truncf %1160 : vector<1x128xf32> to vector<1x128xbf16>
    %cst_284 = arith.constant dense<0.000000e+00> : vector<1x256xf32>
    %1163 = tpu.matmul %1162, %6, %cst_284 {dimension_numbers = #tpu.dot_dimension_numbers<[1], [0], [0], [1], [0, 0, 1, 1], [], []>} : vector<1x128xbf16>, vector<128x256xbf16>, vector<1x256xf32> -> vector<1x256xf32>
    %1164 = arith.addf %1161, %1163 : vector<1x256xf32>
    %1165 = arith.negf %1164 : vector<1x256xf32>
    %1166 = math.exp %1165 : vector<1x256xf32>
    %cst_285 = arith.constant 1.000000e+00 : f32
    %1167 = vector.broadcast %cst_285 : f32 to vector<1x256xf32>
    %1168 = arith.addf %1167, %1166 : vector<1x256xf32>
    %1169 = arith.divf %1167, %1168 : vector<1x256xf32>
    %1170 = vector.extract_strided_slice %1169 {offsets = [0, 0], sizes = [1, 128], strides = [1, 1]} : vector<1x256xf32> to vector<1x128xf32>
    %1171 = vector.extract_strided_slice %1169 {offsets = [0, 128], sizes = [1, 128], strides = [1, 1]} : vector<1x256xf32> to vector<1x128xf32>
    %cst_286 = arith.constant 2.000000e+00 : f32
    %1172 = vector.broadcast %cst_286 : f32 to vector<1x128xf32>
    %1173 = arith.mulf %1172, %1171 : vector<1x128xf32>
    %cst_287 = arith.constant 1.000000e+00 : f32
    %1174 = vector.broadcast %cst_287 : f32 to vector<1x128xf32>
    %1175 = arith.subf %1173, %1174 : vector<1x128xf32>
    %1176 = arith.select %10, %1158, %1175 : vector<1x128xi1>, vector<1x128xf32>
    %1177 = arith.mulf %1170, %1176 : vector<1x128xf32>
    %c64_i32_288 = arith.constant 64 : i32
    %1178 = tpu.dynamic_rotate %1177 by %c64_i32_288 dim 1 : vector<1x128xf32>, i32 -> vector<1x128xf32>
    %1179 = arith.addf %1177, %1178 : vector<1x128xf32>
    %1180 = math.tanh %1179 : vector<1x128xf32>
    %1181 = arith.mulf %1171, %1180 : vector<1x128xf32>
    %1182 = vector.extract_strided_slice %1055 {offsets = [6, 0], sizes = [1, 256], strides = [1, 1]} : vector<8x256xf32> to vector<1x256xf32>
    %1183 = arith.truncf %1181 : vector<1x128xf32> to vector<1x128xbf16>
    %cst_289 = arith.constant dense<0.000000e+00> : vector<1x256xf32>
    %1184 = tpu.matmul %1183, %6, %cst_289 {dimension_numbers = #tpu.dot_dimension_numbers<[1], [0], [0], [1], [0, 0, 1, 1], [], []>} : vector<1x128xbf16>, vector<128x256xbf16>, vector<1x256xf32> -> vector<1x256xf32>
    %1185 = arith.addf %1182, %1184 : vector<1x256xf32>
    %1186 = arith.negf %1185 : vector<1x256xf32>
    %1187 = math.exp %1186 : vector<1x256xf32>
    %cst_290 = arith.constant 1.000000e+00 : f32
    %1188 = vector.broadcast %cst_290 : f32 to vector<1x256xf32>
    %1189 = arith.addf %1188, %1187 : vector<1x256xf32>
    %1190 = arith.divf %1188, %1189 : vector<1x256xf32>
    %1191 = vector.extract_strided_slice %1190 {offsets = [0, 0], sizes = [1, 128], strides = [1, 1]} : vector<1x256xf32> to vector<1x128xf32>
    %1192 = vector.extract_strided_slice %1190 {offsets = [0, 128], sizes = [1, 128], strides = [1, 1]} : vector<1x256xf32> to vector<1x128xf32>
    %cst_291 = arith.constant 2.000000e+00 : f32
    %1193 = vector.broadcast %cst_291 : f32 to vector<1x128xf32>
    %1194 = arith.mulf %1193, %1192 : vector<1x128xf32>
    %cst_292 = arith.constant 1.000000e+00 : f32
    %1195 = vector.broadcast %cst_292 : f32 to vector<1x128xf32>
    %1196 = arith.subf %1194, %1195 : vector<1x128xf32>
    %1197 = arith.select %10, %1179, %1196 : vector<1x128xi1>, vector<1x128xf32>
    %1198 = arith.mulf %1191, %1197 : vector<1x128xf32>
    %c64_i32_293 = arith.constant 64 : i32
    %1199 = tpu.dynamic_rotate %1198 by %c64_i32_293 dim 1 : vector<1x128xf32>, i32 -> vector<1x128xf32>
    %1200 = arith.addf %1198, %1199 : vector<1x128xf32>
    %1201 = math.tanh %1200 : vector<1x128xf32>
    %1202 = arith.mulf %1192, %1201 : vector<1x128xf32>
    %1203 = vector.extract_strided_slice %1055 {offsets = [7, 0], sizes = [1, 256], strides = [1, 1]} : vector<8x256xf32> to vector<1x256xf32>
    %1204 = arith.truncf %1202 : vector<1x128xf32> to vector<1x128xbf16>
    %cst_294 = arith.constant dense<0.000000e+00> : vector<1x256xf32>
    %1205 = tpu.matmul %1204, %6, %cst_294 {dimension_numbers = #tpu.dot_dimension_numbers<[1], [0], [0], [1], [0, 0, 1, 1], [], []>} : vector<1x128xbf16>, vector<128x256xbf16>, vector<1x256xf32> -> vector<1x256xf32>
    %1206 = arith.addf %1203, %1205 : vector<1x256xf32>
    %1207 = arith.negf %1206 : vector<1x256xf32>
    %1208 = math.exp %1207 : vector<1x256xf32>
    %cst_295 = arith.constant 1.000000e+00 : f32
    %1209 = vector.broadcast %cst_295 : f32 to vector<1x256xf32>
    %1210 = arith.addf %1209, %1208 : vector<1x256xf32>
    %1211 = arith.divf %1209, %1210 : vector<1x256xf32>
    %1212 = vector.extract_strided_slice %1211 {offsets = [0, 0], sizes = [1, 128], strides = [1, 1]} : vector<1x256xf32> to vector<1x128xf32>
    %1213 = vector.extract_strided_slice %1211 {offsets = [0, 128], sizes = [1, 128], strides = [1, 1]} : vector<1x256xf32> to vector<1x128xf32>
    %cst_296 = arith.constant 2.000000e+00 : f32
    %1214 = vector.broadcast %cst_296 : f32 to vector<1x128xf32>
    %1215 = arith.mulf %1214, %1213 : vector<1x128xf32>
    %cst_297 = arith.constant 1.000000e+00 : f32
    %1216 = vector.broadcast %cst_297 : f32 to vector<1x128xf32>
    %1217 = arith.subf %1215, %1216 : vector<1x128xf32>
    %1218 = arith.select %10, %1200, %1217 : vector<1x128xi1>, vector<1x128xf32>
    %1219 = arith.mulf %1212, %1218 : vector<1x128xf32>
    %c64_i32_298 = arith.constant 64 : i32
    %1220 = tpu.dynamic_rotate %1219 by %c64_i32_298 dim 1 : vector<1x128xf32>, i32 -> vector<1x128xf32>
    %1221 = arith.addf %1219, %1220 : vector<1x128xf32>
    %1222 = math.tanh %1221 : vector<1x128xf32>
    %1223 = arith.mulf %1213, %1222 : vector<1x128xf32>
    %1224 = vector.extract_strided_slice %4 {offsets = [56, 0], sizes = [8, 128], strides = [1, 1]} : vector<64x128xf32> to vector<8x128xf32>
    %1225 = arith.truncf %1224 : vector<8x128xf32> to vector<8x128xbf16>
    %cst_299 = arith.constant dense<0.000000e+00> : vector<8x256xf32>
    %1226 = tpu.matmul %1225, %5, %cst_299 {dimension_numbers = #tpu.dot_dimension_numbers<[1], [0], [0], [1], [0, 0, 1, 1], [], []>} : vector<8x128xbf16>, vector<128x256xbf16>, vector<8x256xf32> -> vector<8x256xf32>
    %1227 = vector.broadcast %7 : vector<1x256xf32> to vector<8x256xf32>
    %1228 = arith.addf %1226, %1227 : vector<8x256xf32>
    %1229 = vector.extract_strided_slice %1228 {offsets = [0, 0], sizes = [1, 256], strides = [1, 1]} : vector<8x256xf32> to vector<1x256xf32>
    %1230 = arith.truncf %1223 : vector<1x128xf32> to vector<1x128xbf16>
    %cst_300 = arith.constant dense<0.000000e+00> : vector<1x256xf32>
    %1231 = tpu.matmul %1230, %6, %cst_300 {dimension_numbers = #tpu.dot_dimension_numbers<[1], [0], [0], [1], [0, 0, 1, 1], [], []>} : vector<1x128xbf16>, vector<128x256xbf16>, vector<1x256xf32> -> vector<1x256xf32>
    %1232 = arith.addf %1229, %1231 : vector<1x256xf32>
    %1233 = arith.negf %1232 : vector<1x256xf32>
    %1234 = math.exp %1233 : vector<1x256xf32>
    %cst_301 = arith.constant 1.000000e+00 : f32
    %1235 = vector.broadcast %cst_301 : f32 to vector<1x256xf32>
    %1236 = arith.addf %1235, %1234 : vector<1x256xf32>
    %1237 = arith.divf %1235, %1236 : vector<1x256xf32>
    %1238 = vector.extract_strided_slice %1237 {offsets = [0, 0], sizes = [1, 128], strides = [1, 1]} : vector<1x256xf32> to vector<1x128xf32>
    %1239 = vector.extract_strided_slice %1237 {offsets = [0, 128], sizes = [1, 128], strides = [1, 1]} : vector<1x256xf32> to vector<1x128xf32>
    %cst_302 = arith.constant 2.000000e+00 : f32
    %1240 = vector.broadcast %cst_302 : f32 to vector<1x128xf32>
    %1241 = arith.mulf %1240, %1239 : vector<1x128xf32>
    %cst_303 = arith.constant 1.000000e+00 : f32
    %1242 = vector.broadcast %cst_303 : f32 to vector<1x128xf32>
    %1243 = arith.subf %1241, %1242 : vector<1x128xf32>
    %1244 = arith.select %10, %1221, %1243 : vector<1x128xi1>, vector<1x128xf32>
    %1245 = arith.mulf %1238, %1244 : vector<1x128xf32>
    %c64_i32_304 = arith.constant 64 : i32
    %1246 = tpu.dynamic_rotate %1245 by %c64_i32_304 dim 1 : vector<1x128xf32>, i32 -> vector<1x128xf32>
    %1247 = arith.addf %1245, %1246 : vector<1x128xf32>
    %1248 = math.tanh %1247 : vector<1x128xf32>
    %1249 = arith.mulf %1239, %1248 : vector<1x128xf32>
    %1250 = vector.extract_strided_slice %1228 {offsets = [1, 0], sizes = [1, 256], strides = [1, 1]} : vector<8x256xf32> to vector<1x256xf32>
    %1251 = arith.truncf %1249 : vector<1x128xf32> to vector<1x128xbf16>
    %cst_305 = arith.constant dense<0.000000e+00> : vector<1x256xf32>
    %1252 = tpu.matmul %1251, %6, %cst_305 {dimension_numbers = #tpu.dot_dimension_numbers<[1], [0], [0], [1], [0, 0, 1, 1], [], []>} : vector<1x128xbf16>, vector<128x256xbf16>, vector<1x256xf32> -> vector<1x256xf32>
    %1253 = arith.addf %1250, %1252 : vector<1x256xf32>
    %1254 = arith.negf %1253 : vector<1x256xf32>
    %1255 = math.exp %1254 : vector<1x256xf32>
    %cst_306 = arith.constant 1.000000e+00 : f32
    %1256 = vector.broadcast %cst_306 : f32 to vector<1x256xf32>
    %1257 = arith.addf %1256, %1255 : vector<1x256xf32>
    %1258 = arith.divf %1256, %1257 : vector<1x256xf32>
    %1259 = vector.extract_strided_slice %1258 {offsets = [0, 0], sizes = [1, 128], strides = [1, 1]} : vector<1x256xf32> to vector<1x128xf32>
    %1260 = vector.extract_strided_slice %1258 {offsets = [0, 128], sizes = [1, 128], strides = [1, 1]} : vector<1x256xf32> to vector<1x128xf32>
    %cst_307 = arith.constant 2.000000e+00 : f32
    %1261 = vector.broadcast %cst_307 : f32 to vector<1x128xf32>
    %1262 = arith.mulf %1261, %1260 : vector<1x128xf32>
    %cst_308 = arith.constant 1.000000e+00 : f32
    %1263 = vector.broadcast %cst_308 : f32 to vector<1x128xf32>
    %1264 = arith.subf %1262, %1263 : vector<1x128xf32>
    %1265 = arith.select %10, %1247, %1264 : vector<1x128xi1>, vector<1x128xf32>
    %1266 = arith.mulf %1259, %1265 : vector<1x128xf32>
    %c64_i32_309 = arith.constant 64 : i32
    %1267 = tpu.dynamic_rotate %1266 by %c64_i32_309 dim 1 : vector<1x128xf32>, i32 -> vector<1x128xf32>
    %1268 = arith.addf %1266, %1267 : vector<1x128xf32>
    %1269 = math.tanh %1268 : vector<1x128xf32>
    %1270 = arith.mulf %1260, %1269 : vector<1x128xf32>
    %1271 = vector.extract_strided_slice %1228 {offsets = [2, 0], sizes = [1, 256], strides = [1, 1]} : vector<8x256xf32> to vector<1x256xf32>
    %1272 = arith.truncf %1270 : vector<1x128xf32> to vector<1x128xbf16>
    %cst_310 = arith.constant dense<0.000000e+00> : vector<1x256xf32>
    %1273 = tpu.matmul %1272, %6, %cst_310 {dimension_numbers = #tpu.dot_dimension_numbers<[1], [0], [0], [1], [0, 0, 1, 1], [], []>} : vector<1x128xbf16>, vector<128x256xbf16>, vector<1x256xf32> -> vector<1x256xf32>
    %1274 = arith.addf %1271, %1273 : vector<1x256xf32>
    %1275 = arith.negf %1274 : vector<1x256xf32>
    %1276 = math.exp %1275 : vector<1x256xf32>
    %cst_311 = arith.constant 1.000000e+00 : f32
    %1277 = vector.broadcast %cst_311 : f32 to vector<1x256xf32>
    %1278 = arith.addf %1277, %1276 : vector<1x256xf32>
    %1279 = arith.divf %1277, %1278 : vector<1x256xf32>
    %1280 = vector.extract_strided_slice %1279 {offsets = [0, 0], sizes = [1, 128], strides = [1, 1]} : vector<1x256xf32> to vector<1x128xf32>
    %1281 = vector.extract_strided_slice %1279 {offsets = [0, 128], sizes = [1, 128], strides = [1, 1]} : vector<1x256xf32> to vector<1x128xf32>
    %cst_312 = arith.constant 2.000000e+00 : f32
    %1282 = vector.broadcast %cst_312 : f32 to vector<1x128xf32>
    %1283 = arith.mulf %1282, %1281 : vector<1x128xf32>
    %cst_313 = arith.constant 1.000000e+00 : f32
    %1284 = vector.broadcast %cst_313 : f32 to vector<1x128xf32>
    %1285 = arith.subf %1283, %1284 : vector<1x128xf32>
    %1286 = arith.select %10, %1268, %1285 : vector<1x128xi1>, vector<1x128xf32>
    %1287 = arith.mulf %1280, %1286 : vector<1x128xf32>
    %c64_i32_314 = arith.constant 64 : i32
    %1288 = tpu.dynamic_rotate %1287 by %c64_i32_314 dim 1 : vector<1x128xf32>, i32 -> vector<1x128xf32>
    %1289 = arith.addf %1287, %1288 : vector<1x128xf32>
    %1290 = math.tanh %1289 : vector<1x128xf32>
    %1291 = arith.mulf %1281, %1290 : vector<1x128xf32>
    %1292 = vector.extract_strided_slice %1228 {offsets = [3, 0], sizes = [1, 256], strides = [1, 1]} : vector<8x256xf32> to vector<1x256xf32>
    %1293 = arith.truncf %1291 : vector<1x128xf32> to vector<1x128xbf16>
    %cst_315 = arith.constant dense<0.000000e+00> : vector<1x256xf32>
    %1294 = tpu.matmul %1293, %6, %cst_315 {dimension_numbers = #tpu.dot_dimension_numbers<[1], [0], [0], [1], [0, 0, 1, 1], [], []>} : vector<1x128xbf16>, vector<128x256xbf16>, vector<1x256xf32> -> vector<1x256xf32>
    %1295 = arith.addf %1292, %1294 : vector<1x256xf32>
    %1296 = arith.negf %1295 : vector<1x256xf32>
    %1297 = math.exp %1296 : vector<1x256xf32>
    %cst_316 = arith.constant 1.000000e+00 : f32
    %1298 = vector.broadcast %cst_316 : f32 to vector<1x256xf32>
    %1299 = arith.addf %1298, %1297 : vector<1x256xf32>
    %1300 = arith.divf %1298, %1299 : vector<1x256xf32>
    %1301 = vector.extract_strided_slice %1300 {offsets = [0, 0], sizes = [1, 128], strides = [1, 1]} : vector<1x256xf32> to vector<1x128xf32>
    %1302 = vector.extract_strided_slice %1300 {offsets = [0, 128], sizes = [1, 128], strides = [1, 1]} : vector<1x256xf32> to vector<1x128xf32>
    %cst_317 = arith.constant 2.000000e+00 : f32
    %1303 = vector.broadcast %cst_317 : f32 to vector<1x128xf32>
    %1304 = arith.mulf %1303, %1302 : vector<1x128xf32>
    %cst_318 = arith.constant 1.000000e+00 : f32
    %1305 = vector.broadcast %cst_318 : f32 to vector<1x128xf32>
    %1306 = arith.subf %1304, %1305 : vector<1x128xf32>
    %1307 = arith.select %10, %1289, %1306 : vector<1x128xi1>, vector<1x128xf32>
    %1308 = arith.mulf %1301, %1307 : vector<1x128xf32>
    %c64_i32_319 = arith.constant 64 : i32
    %1309 = tpu.dynamic_rotate %1308 by %c64_i32_319 dim 1 : vector<1x128xf32>, i32 -> vector<1x128xf32>
    %1310 = arith.addf %1308, %1309 : vector<1x128xf32>
    %1311 = math.tanh %1310 : vector<1x128xf32>
    %1312 = arith.mulf %1302, %1311 : vector<1x128xf32>
    %1313 = vector.extract_strided_slice %1228 {offsets = [4, 0], sizes = [1, 256], strides = [1, 1]} : vector<8x256xf32> to vector<1x256xf32>
    %1314 = arith.truncf %1312 : vector<1x128xf32> to vector<1x128xbf16>
    %cst_320 = arith.constant dense<0.000000e+00> : vector<1x256xf32>
    %1315 = tpu.matmul %1314, %6, %cst_320 {dimension_numbers = #tpu.dot_dimension_numbers<[1], [0], [0], [1], [0, 0, 1, 1], [], []>} : vector<1x128xbf16>, vector<128x256xbf16>, vector<1x256xf32> -> vector<1x256xf32>
    %1316 = arith.addf %1313, %1315 : vector<1x256xf32>
    %1317 = arith.negf %1316 : vector<1x256xf32>
    %1318 = math.exp %1317 : vector<1x256xf32>
    %cst_321 = arith.constant 1.000000e+00 : f32
    %1319 = vector.broadcast %cst_321 : f32 to vector<1x256xf32>
    %1320 = arith.addf %1319, %1318 : vector<1x256xf32>
    %1321 = arith.divf %1319, %1320 : vector<1x256xf32>
    %1322 = vector.extract_strided_slice %1321 {offsets = [0, 0], sizes = [1, 128], strides = [1, 1]} : vector<1x256xf32> to vector<1x128xf32>
    %1323 = vector.extract_strided_slice %1321 {offsets = [0, 128], sizes = [1, 128], strides = [1, 1]} : vector<1x256xf32> to vector<1x128xf32>
    %cst_322 = arith.constant 2.000000e+00 : f32
    %1324 = vector.broadcast %cst_322 : f32 to vector<1x128xf32>
    %1325 = arith.mulf %1324, %1323 : vector<1x128xf32>
    %cst_323 = arith.constant 1.000000e+00 : f32
    %1326 = vector.broadcast %cst_323 : f32 to vector<1x128xf32>
    %1327 = arith.subf %1325, %1326 : vector<1x128xf32>
    %1328 = arith.select %10, %1310, %1327 : vector<1x128xi1>, vector<1x128xf32>
    %1329 = arith.mulf %1322, %1328 : vector<1x128xf32>
    %c64_i32_324 = arith.constant 64 : i32
    %1330 = tpu.dynamic_rotate %1329 by %c64_i32_324 dim 1 : vector<1x128xf32>, i32 -> vector<1x128xf32>
    %1331 = arith.addf %1329, %1330 : vector<1x128xf32>
    %1332 = math.tanh %1331 : vector<1x128xf32>
    %1333 = arith.mulf %1323, %1332 : vector<1x128xf32>
    %1334 = vector.extract_strided_slice %1228 {offsets = [5, 0], sizes = [1, 256], strides = [1, 1]} : vector<8x256xf32> to vector<1x256xf32>
    %1335 = arith.truncf %1333 : vector<1x128xf32> to vector<1x128xbf16>
    %cst_325 = arith.constant dense<0.000000e+00> : vector<1x256xf32>
    %1336 = tpu.matmul %1335, %6, %cst_325 {dimension_numbers = #tpu.dot_dimension_numbers<[1], [0], [0], [1], [0, 0, 1, 1], [], []>} : vector<1x128xbf16>, vector<128x256xbf16>, vector<1x256xf32> -> vector<1x256xf32>
    %1337 = arith.addf %1334, %1336 : vector<1x256xf32>
    %1338 = arith.negf %1337 : vector<1x256xf32>
    %1339 = math.exp %1338 : vector<1x256xf32>
    %cst_326 = arith.constant 1.000000e+00 : f32
    %1340 = vector.broadcast %cst_326 : f32 to vector<1x256xf32>
    %1341 = arith.addf %1340, %1339 : vector<1x256xf32>
    %1342 = arith.divf %1340, %1341 : vector<1x256xf32>
    %1343 = vector.extract_strided_slice %1342 {offsets = [0, 0], sizes = [1, 128], strides = [1, 1]} : vector<1x256xf32> to vector<1x128xf32>
    %1344 = vector.extract_strided_slice %1342 {offsets = [0, 128], sizes = [1, 128], strides = [1, 1]} : vector<1x256xf32> to vector<1x128xf32>
    %cst_327 = arith.constant 2.000000e+00 : f32
    %1345 = vector.broadcast %cst_327 : f32 to vector<1x128xf32>
    %1346 = arith.mulf %1345, %1344 : vector<1x128xf32>
    %cst_328 = arith.constant 1.000000e+00 : f32
    %1347 = vector.broadcast %cst_328 : f32 to vector<1x128xf32>
    %1348 = arith.subf %1346, %1347 : vector<1x128xf32>
    %1349 = arith.select %10, %1331, %1348 : vector<1x128xi1>, vector<1x128xf32>
    %1350 = arith.mulf %1343, %1349 : vector<1x128xf32>
    %c64_i32_329 = arith.constant 64 : i32
    %1351 = tpu.dynamic_rotate %1350 by %c64_i32_329 dim 1 : vector<1x128xf32>, i32 -> vector<1x128xf32>
    %1352 = arith.addf %1350, %1351 : vector<1x128xf32>
    %1353 = math.tanh %1352 : vector<1x128xf32>
    %1354 = arith.mulf %1344, %1353 : vector<1x128xf32>
    %1355 = vector.extract_strided_slice %1228 {offsets = [6, 0], sizes = [1, 256], strides = [1, 1]} : vector<8x256xf32> to vector<1x256xf32>
    %1356 = arith.truncf %1354 : vector<1x128xf32> to vector<1x128xbf16>
    %cst_330 = arith.constant dense<0.000000e+00> : vector<1x256xf32>
    %1357 = tpu.matmul %1356, %6, %cst_330 {dimension_numbers = #tpu.dot_dimension_numbers<[1], [0], [0], [1], [0, 0, 1, 1], [], []>} : vector<1x128xbf16>, vector<128x256xbf16>, vector<1x256xf32> -> vector<1x256xf32>
    %1358 = arith.addf %1355, %1357 : vector<1x256xf32>
    %1359 = arith.negf %1358 : vector<1x256xf32>
    %1360 = math.exp %1359 : vector<1x256xf32>
    %cst_331 = arith.constant 1.000000e+00 : f32
    %1361 = vector.broadcast %cst_331 : f32 to vector<1x256xf32>
    %1362 = arith.addf %1361, %1360 : vector<1x256xf32>
    %1363 = arith.divf %1361, %1362 : vector<1x256xf32>
    %1364 = vector.extract_strided_slice %1363 {offsets = [0, 0], sizes = [1, 128], strides = [1, 1]} : vector<1x256xf32> to vector<1x128xf32>
    %1365 = vector.extract_strided_slice %1363 {offsets = [0, 128], sizes = [1, 128], strides = [1, 1]} : vector<1x256xf32> to vector<1x128xf32>
    %cst_332 = arith.constant 2.000000e+00 : f32
    %1366 = vector.broadcast %cst_332 : f32 to vector<1x128xf32>
    %1367 = arith.mulf %1366, %1365 : vector<1x128xf32>
    %cst_333 = arith.constant 1.000000e+00 : f32
    %1368 = vector.broadcast %cst_333 : f32 to vector<1x128xf32>
    %1369 = arith.subf %1367, %1368 : vector<1x128xf32>
    %1370 = arith.select %10, %1352, %1369 : vector<1x128xi1>, vector<1x128xf32>
    %1371 = arith.mulf %1364, %1370 : vector<1x128xf32>
    %c64_i32_334 = arith.constant 64 : i32
    %1372 = tpu.dynamic_rotate %1371 by %c64_i32_334 dim 1 : vector<1x128xf32>, i32 -> vector<1x128xf32>
    %1373 = arith.addf %1371, %1372 : vector<1x128xf32>
    %1374 = math.tanh %1373 : vector<1x128xf32>
    %1375 = arith.mulf %1365, %1374 : vector<1x128xf32>
    %1376 = vector.extract_strided_slice %1228 {offsets = [7, 0], sizes = [1, 256], strides = [1, 1]} : vector<8x256xf32> to vector<1x256xf32>
    %1377 = arith.truncf %1375 : vector<1x128xf32> to vector<1x128xbf16>
    %cst_335 = arith.constant dense<0.000000e+00> : vector<1x256xf32>
    %1378 = tpu.matmul %1377, %6, %cst_335 {dimension_numbers = #tpu.dot_dimension_numbers<[1], [0], [0], [1], [0, 0, 1, 1], [], []>} : vector<1x128xbf16>, vector<128x256xbf16>, vector<1x256xf32> -> vector<1x256xf32>
    %1379 = arith.addf %1376, %1378 : vector<1x256xf32>
    %1380 = arith.negf %1379 : vector<1x256xf32>
    %1381 = math.exp %1380 : vector<1x256xf32>
    %cst_336 = arith.constant 1.000000e+00 : f32
    %1382 = vector.broadcast %cst_336 : f32 to vector<1x256xf32>
    %1383 = arith.addf %1382, %1381 : vector<1x256xf32>
    %1384 = arith.divf %1382, %1383 : vector<1x256xf32>
    %1385 = vector.extract_strided_slice %1384 {offsets = [0, 0], sizes = [1, 128], strides = [1, 1]} : vector<1x256xf32> to vector<1x128xf32>
    %1386 = vector.extract_strided_slice %1384 {offsets = [0, 128], sizes = [1, 128], strides = [1, 1]} : vector<1x256xf32> to vector<1x128xf32>
    %cst_337 = arith.constant 2.000000e+00 : f32
    %1387 = vector.broadcast %cst_337 : f32 to vector<1x128xf32>
    %1388 = arith.mulf %1387, %1386 : vector<1x128xf32>
    %cst_338 = arith.constant 1.000000e+00 : f32
    %1389 = vector.broadcast %cst_338 : f32 to vector<1x128xf32>
    %1390 = arith.subf %1388, %1389 : vector<1x128xf32>
    %1391 = arith.select %10, %1373, %1390 : vector<1x128xi1>, vector<1x128xf32>
    %1392 = arith.mulf %1385, %1391 : vector<1x128xf32>
    %c64_i32_339 = arith.constant 64 : i32
    %1393 = tpu.dynamic_rotate %1392 by %c64_i32_339 dim 1 : vector<1x128xf32>, i32 -> vector<1x128xf32>
    %1394 = arith.addf %1392, %1393 : vector<1x128xf32>
    %1395 = math.tanh %1394 : vector<1x128xf32>
    %1396 = arith.mulf %1386, %1395 : vector<1x128xf32>
    %cst_340 = arith.constant 0.000000e+00 : f32
    %1397 = vector.broadcast %cst_340 : f32 to vector<1x128xf32>
    %1398 = arith.maximumf %1396, %1397 : vector<1x128xf32>
    %1399 = arith.truncf %1398 : vector<1x128xf32> to vector<1x128xbf16>
    %c0_341 = arith.constant 0 : index
    %c0_342 = arith.constant 0 : index
    %1400 = vector.load %arg5[%c0_341, %c0_342] : memref<128x32xbf16, #tpu.memory_space<vmem>>, vector<128x32xbf16>
    %cst_343 = arith.constant dense<0.000000e+00> : vector<1x32xf32>
    %1401 = tpu.matmul %1399, %1400, %cst_343 {dimension_numbers = #tpu.dot_dimension_numbers<[1], [0], [0], [1], [0, 0, 1, 1], [], []>} : vector<1x128xbf16>, vector<128x32xbf16>, vector<1x32xf32> -> vector<1x32xf32>
    %cst_344 = arith.constant 0.000000e+00 : f32
    %1402 = vector.broadcast %cst_344 : f32 to vector<1x32xf32>
    %1403 = arith.maximumf %1401, %1402 : vector<1x32xf32>
    %1404 = arith.truncf %1403 : vector<1x32xf32> to vector<1x32xbf16>
    %c0_345 = arith.constant 0 : index
    %c0_346 = arith.constant 0 : index
    %1405 = vector.load %arg6[%c0_345, %c0_346] : memref<32x9xbf16, #tpu.memory_space<vmem>>, vector<32x9xbf16>
    %cst_347 = arith.constant dense<0.000000e+00> : vector<1x9xf32>
    %1406 = tpu.matmul %1404, %1405, %cst_347 {dimension_numbers = #tpu.dot_dimension_numbers<[1], [0], [0], [1], [0, 0, 1, 1], [], []>} : vector<1x32xbf16>, vector<32x9xbf16>, vector<1x9xf32> -> vector<1x9xf32>
    %c0_348 = arith.constant 0 : index
    %c0_349 = arith.constant 0 : index
    %1407 = vector.load %arg7[%c0_348, %c0_349] : memref<1x9xf32, #tpu.memory_space<vmem>>, vector<1x9xf32>
    %1408 = arith.addf %1406, %1407 : vector<1x9xf32>
    %c0_350 = arith.constant 0 : index
    %c0_351 = arith.constant 0 : index
    %1409 = vector.load %arg8[%c0_350, %c0_351] : memref<1x9xf32, #tpu.memory_space<vmem>>, vector<1x9xf32>
    tpu.vector_store %arg8[%c0_350, %c0_351], %1408 {strides = array<i32>} : memref<1x9xf32, #tpu.memory_space<vmem>>, vector<1x9xf32>,
    return
  }
}

</mosaic_0001>

<llo_original>
// kernel: simple_conv_lstm2.1
$region0: #{simple_conv_lstm2.1}
  #allocation0 [shape = 'u32[]', space=smem, size = 0x4, offset = 0x4, fixed_abs, tag = 'smem constant byte address 0x4 - core index']
  #allocation1 [shape = 'u32[144,128]{1,0:T(1,128)}', space=vmem, size = 0x12000, scoped, tag = 'internal scratch']
  %s0 = inlined_call_operand.vmem [shape: bf16[272,128], index: 0, kind: input, shape index: {}]
  %s1 = inlined_call_operand.vmem [shape: bf16[64,272], index: 1, kind: input, shape index: {}]
  %s2 = inlined_call_operand.vmem [shape: bf16[128,256], index: 2, kind: input, shape index: {}]
  %s3 = inlined_call_operand.vmem [shape: bf16[128,256], index: 3, kind: input, shape index: {}]
  %s4 = inlined_call_operand.vmem [shape: f32[1,256], index: 4, kind: input, shape index: {}]
  %s5 = inlined_call_operand.vmem [shape: bf16[128,32], index: 5, kind: input, shape index: {}]
  %s6 = inlined_call_operand.vmem [shape: bf16[32,9], index: 6, kind: input, shape index: {}]
  %s7 = inlined_call_operand.vmem [shape: f32[1,9], index: 7, kind: input, shape index: {}]
  %s8 = inlined_call_operand.hbm [shape: f32[1,9], index: 8, kind: output, shape index: {}]
  %s9 = sld [smem:[#allocation0]]
  $region42: #{simple_conv_lstm2.1} parent=0
    _
  %s11 = ssub.s32 1, %s9
  %s12 = scalar_select 0, %s11, %s9
  $region1: #{simple_conv_lstm2.1} parent=0
    #allocation2 [shape = 'u8[512]{0}', space=vmem, size = 0x400, scoped, tag = 'output window, operand 0, single buffered']
    #allocation3 [shape = 's32[1]{0}', space=sflag, size = 0x4, scoped, tag = 'scoped memory for simple_conv_lstm2.1']
    %13 = vsyncpa [#allocation3], 0
    // Predicated region
    $region2: #{simple_conv_lstm2.1} parent=1 // pred_check
      _
    $region3: #{simple_conv_lstm2.1} parent=1 // pred_check_branch
      %15 = sbr.rel (0) target = $region5
    $region4: #{simple_conv_lstm2.1} parent=1 // pred_region
      _
    $region5: #{simple_conv_lstm2.1} parent=1 // pred_fallthru
      _
    // Predicated region
    $region6: #{simple_conv_lstm2.1} parent=1 // pred_check
      _
    $region7: #{simple_conv_lstm2.1} parent=1 // pred_check_branch
      %17 = sbr.rel (0) target = $region9
    $region8: #{simple_conv_lstm2.1} parent=1 // pred_region
      _
    $region9: #{simple_conv_lstm2.1} parent=1 // pred_fallthru
      _
    // Predicated region
    $region10: #{simple_conv_lstm2.1} parent=1 // pred_check
      _
    $region11: #{simple_conv_lstm2.1} parent=1 // pred_check_branch
      %19 = sbr.rel (0) target = $region13
    $region12: #{simple_conv_lstm2.1} parent=1 // pred_region
      _
    $region13: #{simple_conv_lstm2.1} parent=1 // pred_fallthru
      _
    // Predicated region
    $region14: #{simple_conv_lstm2.1} parent=1 // pred_check
      _
    $region15: #{simple_conv_lstm2.1} parent=1 // pred_check_branch
      %21 = sbr.rel (0) target = $region17
    $region16: #{simple_conv_lstm2.1} parent=1 // pred_region
      _
    $region17: #{simple_conv_lstm2.1} parent=1 // pred_fallthru
      _
    // Predicated region
    $region18: #{simple_conv_lstm2.1} parent=1 // pred_check
      _
    $region19: #{simple_conv_lstm2.1} parent=1 // pred_check_branch
      %23 = sbr.rel (0) target = $region21
    $region20: #{simple_conv_lstm2.1} parent=1 // pred_region
      _
    $region21: #{simple_conv_lstm2.1} parent=1 // pred_fallthru
      _
    // Predicated region
    $region22: #{simple_conv_lstm2.1} parent=1 // pred_check
      _
    $region23: #{simple_conv_lstm2.1} parent=1 // pred_check_branch
      %25 = sbr.rel (0) target = $region25
    $region24: #{simple_conv_lstm2.1} parent=1 // pred_region
      _
    $region25: #{simple_conv_lstm2.1} parent=1 // pred_fallthru
      _
    // Predicated region
    $region26: #{simple_conv_lstm2.1} parent=1 // pred_check
      _
    $region27: #{simple_conv_lstm2.1} parent=1 // pred_check_branch
      %27 = sbr.rel (0) target = $region29
    $region28: #{simple_conv_lstm2.1} parent=1 // pred_region
      _
    $region29: #{simple_conv_lstm2.1} parent=1 // pred_fallthru
      _
    // Predicated region
    $region30: #{simple_conv_lstm2.1} parent=1 // pred_check
      _
    $region31: #{simple_conv_lstm2.1} parent=1 // pred_check_branch
      %29 = sbr.rel (0) target = $region33
    $region32: #{simple_conv_lstm2.1} parent=1 // pred_region
      _
    $region33: #{simple_conv_lstm2.1} parent=1 // pred_fallthru
      _
    %v31 = vld [vmem:[%s1] sm:$0xff]
    %v32 = vld [vmem:[%s1 + $0x8] sm:$0xf]
    %v33 = vld [vmem:[%s1 + $0xc] sm:$0xff]
    %v34 = vld [vmem:[%s1 + $0x14] sm:$0xf]
    %v35 = vld [vmem:[%s1 + $0x18] sm:$0xff]
    %v36 = vld [vmem:[%s1 + $0x20] sm:$0xf]
    %v37 = vld [vmem:[%s1 + $0x24] sm:$0xff]
    %v38 = vld [vmem:[%s1 + $0x2c] sm:$0xf]
    %v39 = vld [vmem:[%s1 + $0x30] sm:$0xff]
    %v40 = vld [vmem:[%s1 + $0x38] sm:$0xf]
    %v41 = vld [vmem:[%s1 + $0x3c] sm:$0xff]
    %v42 = vld [vmem:[%s1 + $0x44] sm:$0xf]
    %v43 = vld [vmem:[%s1 + $0x48] sm:$0xff]
    %v44 = vld [vmem:[%s1 + $0x50] sm:$0xf]
    %v45 = vld [vmem:[%s1 + $0x54] sm:$0xff]
    %v46 = vld [vmem:[%s1 + $0x5c] sm:$0xf]
    %v47 = vld [vmem:[%s0] sm:$0xf]
    %v48 = vld [vmem:[%s0 + $0x4] sm:$0xf]
    %v49 = vld [vmem:[%s0 + $0x8] sm:$0xf]
    %v50 = vld [vmem:[%s0 + $0xc] sm:$0xf]
    %v51 = vld [vmem:[%s0 + $0x10] sm:$0xf]
    %v52 = vld [vmem:[%s0 + $0x14] sm:$0xf]
    %v53 = vld [vmem:[%s0 + $0x18] sm:$0xf]
    %v54 = vld [vmem:[%s0 + $0x1c] sm:$0xf]
    %v55 = vld [vmem:[%s0 + $0x20] sm:$0xf]
    %v56 = vld [vmem:[%s0 + $0x24] sm:$0xf]
    %v57 = vld [vmem:[%s0 + $0x28] sm:$0xf]
    %v58 = vld [vmem:[%s0 + $0x2c] sm:$0xf]
    %v59 = vld [vmem:[%s0 + $0x30] sm:$0xf]
    %v60 = vld [vmem:[%s0 + $0x34] sm:$0xf]
    %v61 = vld [vmem:[%s0 + $0x38] sm:$0xf]
    %v62 = vld [vmem:[%s0 + $0x3c] sm:$0xf]
    %v63 = vld [vmem:[%s0 + $0x40] sm:$0xf]
    %v64 = vld [vmem:[%s0 + $0x44] sm:$0xf]
    %v65 = vld [vmem:[%s0 + $0x48] sm:$0xf]
    %v66 = vld [vmem:[%s0 + $0x4c] sm:$0xf]
    %v67 = vld [vmem:[%s0 + $0x50] sm:$0xf]
    %v68 = vld [vmem:[%s0 + $0x54] sm:$0xf]
    %v69 = vld [vmem:[%s0 + $0x58] sm:$0xf]
    %v70 = vld [vmem:[%s0 + $0x5c] sm:$0xf]
    %v71 = vld [vmem:[%s0 + $0x60] sm:$0xf]
    %v72 = vld [vmem:[%s0 + $0x64] sm:$0xf]
    %v73 = vld [vmem:[%s0 + $0x68] sm:$0xf]
    %v74 = vld [vmem:[%s0 + $0x6c] sm:$0xf]
    %v75 = vld [vmem:[%s0 + $0x70] sm:$0xf]
    %v76 = vld [vmem:[%s0 + $0x74] sm:$0xf]
    %v77 = vld [vmem:[%s0 + $0x78] sm:$0xf]
    %v78 = vld [vmem:[%s0 + $0x7c] sm:$0xf]
    %v79 = vld [vmem:[%s0 + $0x80] sm:$0xf]
    %v80 = vld [vmem:[%s0 + $0x84] sm:$0xf]
    %v97 = vunpack.c.l.b16 %v31
    %v98 = vunpack.c.h.b16 %v31
    %v99 = vunpack.c.l.b16 %v32
    %v100 = vunpack.c.l.b16 %v33
    %v101 = vunpack.c.h.b16 %v33
    %v102 = vunpack.c.l.b16 %v34
    %v103 = vunpack.c.l.b16 %v35
    %v104 = vunpack.c.h.b16 %v35
    %v105 = vunpack.c.l.b16 %v36
    %v106 = vunpack.c.l.b16 %v37
    %v107 = vunpack.c.h.b16 %v37
    %v108 = vunpack.c.l.b16 %v38
    %v109 = vunpack.c.l.b16 %v39
    %v110 = vunpack.c.h.b16 %v39
    %v111 = vunpack.c.l.b16 %v40
    %v112 = vunpack.c.l.b16 %v41
    %v113 = vunpack.c.h.b16 %v41
    %v114 = vunpack.c.l.b16 %v42
    %v115 = vunpack.c.l.b16 %v43
    %v116 = vunpack.c.h.b16 %v43
    %v117 = vunpack.c.l.b16 %v44
    %v118 = vunpack.c.l.b16 %v45
    %v119 = vunpack.c.h.b16 %v45
    %v120 = vunpack.c.l.b16 %v46
    %v121 = vpack.c.b16 %v100, %v97
    %v122 = vpack.c.b16 %v101, %v98
    %v123 = vpack.c.b16 %v102, %v99
    %v124 = vpack.c.b16 %v106, %v103
    %v125 = vpack.c.b16 %v107, %v104
    %v126 = vpack.c.b16 %v108, %v105
    %v127 = vpack.c.b16 %v112, %v109
    %v128 = vpack.c.b16 %v113, %v110
    %v129 = vpack.c.b16 %v114, %v111
    %v130 = vpack.c.b16 %v118, %v115
    %v131 = vpack.c.b16 %v119, %v116
    %v132 = vpack.c.b16 %v120, %v117
    %v175 = vunpack.c.l.b16 %v47
    %v176 = vunpack.c.l.b16 %v48
    %v177 = vunpack.c.l.b16 %v49
    %v178 = vunpack.c.l.b16 %v50
    %v179 = vunpack.c.l.b16 %v51
    %v180 = vunpack.c.l.b16 %v52
    %v181 = vunpack.c.l.b16 %v53
    %v182 = vunpack.c.l.b16 %v54
    %v183 = vunpack.c.l.b16 %v55
    %v184 = vunpack.c.l.b16 %v56
    %v185 = vunpack.c.l.b16 %v57
    %v186 = vunpack.c.l.b16 %v58
    %v187 = vunpack.c.l.b16 %v59
    %v188 = vunpack.c.l.b16 %v60
    %v189 = vunpack.c.l.b16 %v61
    %v190 = vunpack.c.l.b16 %v62
    %v191 = vunpack.c.l.b16 %v63
    %v192 = vunpack.c.l.b16 %v64
    %v193 = vunpack.c.l.b16 %v65
    %v194 = vunpack.c.l.b16 %v66
    %v195 = vunpack.c.l.b16 %v67
    %v196 = vunpack.c.l.b16 %v68
    %v197 = vunpack.c.l.b16 %v69
    %v198 = vunpack.c.l.b16 %v70
    %v199 = vunpack.c.l.b16 %v71
    %v200 = vunpack.c.l.b16 %v72
    %v201 = vunpack.c.l.b16 %v73
    %v202 = vunpack.c.l.b16 %v74
    %v203 = vunpack.c.l.b16 %v75
    %v204 = vunpack.c.l.b16 %v76
    %v205 = vunpack.c.l.b16 %v77
    %v206 = vunpack.c.l.b16 %v78
    %v207 = vunpack.c.l.b16 %v79
    %v208 = vunpack.c.l.b16 %v80
    %v209 = vpack.c.b16 %v176, %v175
    %v210 = vpack.c.b16 %v178, %v177
    %v211 = vpack.c.b16 %v180, %v179
    %v212 = vpack.c.b16 %v182, %v181
    %v213 = vpack.c.b16 %v184, %v183
    %v214 = vpack.c.b16 %v186, %v185
    %v215 = vpack.c.b16 %v188, %v187
    %v216 = vpack.c.b16 %v190, %v189
    %v217 = vpack.c.b16 %v192, %v191
    %v218 = vpack.c.b16 %v194, %v193
    %v219 = vpack.c.b16 %v196, %v195
    %v220 = vpack.c.b16 %v198, %v197
    %v221 = vpack.c.b16 %v200, %v199
    %v222 = vpack.c.b16 %v202, %v201
    %v223 = vpack.c.b16 %v204, %v203
    %v224 = vpack.c.b16 %v206, %v205
    %v225 = vpack.c.b16 %v208, %v207
    %vm243 = vcmask 130048
    %v245 = vsel %vm243, %v123, 0
    %v248 = vsel %vm243, %v126, 0
    %v251 = vsel %vm243, %v129, 0
    %v254 = vsel %vm243, %v132, 0
    %256 = vmatprep.subr.bf16.mxu0 0
    %257 = vmatpush1.bf16.msra.mxu0 %v209
    %258 = vmatprep.subr.bf16.mxu0 0
    %259 = vmatpush1.bf16.msra.mxu0 %v210
    %260 = vmatprep.subr.bf16.mxu0 0
    %261 = vmatpush1.bf16.msra.mxu0 %v211
    %262 = vmatprep.subr.bf16.mxu0 0
    %263 = vmatpush1.bf16.msra.mxu0 %v212
    %264 = vmatprep.subr.bf16.mxu0 0
    %265 = vmatpush1.bf16.msra.mxu0 %v213
    %266 = vmatprep.subr.bf16.mxu0 0
    %267 = vmatpush1.bf16.msra.mxu0 %v214
    %268 = vmatprep.subr.bf16.mxu0 0
    %269 = vmatpush1.bf16.msra.mxu0 %v215
    %270 = vmatprep.subr.bf16.mxu0 0
    %271 = vmatpush1.bf16.msra.mxu0 %v216
    %272 = vmatprep.subr.bf16.mxu0 0
    %273 = vmatpush1.bf16.msra.mxu0 %v217
    %274 = vmatprep.subr.bf16.mxu0 0
    %275 = vmatpush1.bf16.msra.mxu0 %v218
    %276 = vmatprep.subr.bf16.mxu0 0
    %277 = vmatpush1.bf16.msra.mxu0 %v219
    %278 = vmatprep.subr.bf16.mxu0 0
    %279 = vmatpush1.bf16.msra.mxu0 %v220
    %280 = vmatprep.subr.bf16.mxu0 0
    %281 = vmatpush1.bf16.msra.mxu0 %v221
    %282 = vmatprep.subr.bf16.mxu0 0
    %283 = vmatpush1.bf16.msra.mxu0 %v222
    %284 = vmatprep.subr.bf16.mxu0 0
    %285 = vmatpush1.bf16.msra.mxu0 %v223
    %286 = vmatprep.subr.bf16.mxu0 0
    %287 = vmatpush1.bf16.msra.mxu0 %v224
    %288 = vmatprep.mubr.bf16.mxu0 %v122
    %289 = vmatmul.mubr.bf16.gmra.mrb[0].mxu0 %v121
    %v290 = vpop.f32.mrb[0].mxu0
    %v291 = vadd.f32 0.0, %v290
    %v292 = vpop.f32.mrb[0].mxu0
    %v293 = vpop.f32.mrb[0].mxu0
    %v294 = vadd.f32 0.0, %v293
    %v295 = vpop.f32.mrb[0].mxu0
    %296 = vmatprep.mubr.bf16.mxu0 %v125
    %297 = vmatmul.mubr.bf16.gmra.mrb[0].mxu0 %v124
    %v298 = vpop.f32.mrb[0].mxu0
    %v299 = vadd.f32 0.0, %v298
    %v300 = vpop.f32.mrb[0].mxu0
    %v301 = vpop.f32.mrb[0].mxu0
    %v302 = vadd.f32 0.0, %v301
    %v303 = vpop.f32.mrb[0].mxu0
    %304 = vmatprep.mubr.bf16.mxu0 %v128
    %305 = vmatmul.mubr.bf16.gmra.mrb[0].mxu0 %v127
    %v306 = vpop.f32.mrb[0].mxu0
    %v307 = vadd.f32 0.0, %v306
    %v308 = vpop.f32.mrb[0].mxu0
    %v309 = vpop.f32.mrb[0].mxu0
    %v310 = vadd.f32 0.0, %v309
    %v311 = vpop.f32.mrb[0].mxu0
    %312 = vmatprep.mubr.bf16.mxu0 %v131
    %313 = vmatmul.mubr.bf16.gmra.mrb[0].mxu0 %v130
    %v314 = vpop.f32.mrb[0].mxu0
    %v315 = vadd.f32 0.0, %v314
    %v316 = vpop.f32.mrb[0].mxu0
    %v317 = vpop.f32.mrb[0].mxu0
    %v318 = vadd.f32 0.0, %v317
    %v319 = vpop.f32.mrb[0].mxu0
    %320 = vdwg.mxu0
    %321 = vmatprep.subr.bf16.mxu0 0
    %322 = vmatpush1.bf16.msra.mxu0 %v225
    %323 = vmatprep.subr.bf16.mxu0 0
    %324 = vmatpush1.bf16.msra.mxu0 0
    %325 = vmatprep.subr.bf16.mxu0 0
    %326 = vmatpush1.bf16.msra.mxu0 0
    %327 = vmatprep.subr.bf16.mxu0 0
    %328 = vmatpush1.bf16.msra.mxu0 0
    %329 = vmatprep.subr.bf16.mxu0 0
    %330 = vmatpush1.bf16.msra.mxu0 0
    %331 = vmatprep.subr.bf16.mxu0 0
    %332 = vmatpush1.bf16.msra.mxu0 0
    %333 = vmatprep.subr.bf16.mxu0 0
    %334 = vmatpush1.bf16.msra.mxu0 0
    %335 = vmatprep.subr.bf16.mxu0 0
    %336 = vmatpush1.bf16.msra.mxu0 0
    %337 = vmatprep.subr.bf16.mxu0 0
    %338 = vmatpush1.bf16.msra.mxu0 0
    %339 = vmatprep.subr.bf16.mxu0 0
    %340 = vmatpush1.bf16.msra.mxu0 0
    %341 = vmatprep.subr.bf16.mxu0 0
    %342 = vmatpush1.bf16.msra.mxu0 0
    %343 = vmatprep.subr.bf16.mxu0 0
    %344 = vmatpush1.bf16.msra.mxu0 0
    %345 = vmatprep.subr.bf16.mxu0 0
    %346 = vmatpush1.bf16.msra.mxu0 0
    %347 = vmatprep.subr.bf16.mxu0 0
    %348 = vmatpush1.bf16.msra.mxu0 0
    %349 = vmatprep.subr.bf16.mxu0 0
    %350 = vmatpush1.bf16.msra.mxu0 0
    %351 = vmatprep.subr.bf16.mxu0 0
    %352 = vmatpush1.bf16.msra.mxu0 0
    %353 = vmatprep.mubr.bf16.mxu0 0
    %354 = vmatmul.mubr.bf16.gmra.mrb[0].mxu0 %v245
    %v355 = vpop.f32.mrb[0].mxu0
    %v356 = vadd.f32 %v291, %v355
    %v357 = vpop.f32.mrb[0].mxu0
    %v358 = vpop.f32.mrb[0].mxu0
    %v359 = vadd.f32 %v294, %v358
    %v360 = vpop.f32.mrb[0].mxu0
    %361 = vmatprep.mubr.bf16.mxu0 0
    %362 = vmatmul.mubr.bf16.gmra.mrb[0].mxu0 %v248
    %v363 = vpop.f32.mrb[0].mxu0
    %v364 = vadd.f32 %v299, %v363
    %v365 = vpop.f32.mrb[0].mxu0
    %v366 = vpop.f32.mrb[0].mxu0
    %v367 = vadd.f32 %v302, %v366
    %v368 = vpop.f32.mrb[0].mxu0
    %369 = vmatprep.mubr.bf16.mxu0 0
    %370 = vmatmul.mubr.bf16.gmra.mrb[0].mxu0 %v251
    %v371 = vpop.f32.mrb[0].mxu0
    %v372 = vadd.f32 %v307, %v371
    %v373 = vpop.f32.mrb[0].mxu0
    %v374 = vpop.f32.mrb[0].mxu0
    %v375 = vadd.f32 %v310, %v374
    %v376 = vpop.f32.mrb[0].mxu0
    %377 = vmatprep.mubr.bf16.mxu0 0
    %378 = vmatmul.mubr.bf16.gmra.mrb[0].mxu0 %v254
    %v379 = vpop.f32.mrb[0].mxu0
    %v380 = vadd.f32 %v315, %v379
    %v381 = vpop.f32.mrb[0].mxu0
    %v382 = vpop.f32.mrb[0].mxu0
    %v383 = vadd.f32 %v318, %v382
    %v384 = vpop.f32.mrb[0].mxu0
    %385 = vdwg.mxu0
    %v386 = vmax.f32 %v356, 0.0
    %v387 = vmax.f32 %v359, 0.0
    %v388 = vmax.f32 %v364, 0.0
    %v389 = vmax.f32 %v367, 0.0
    %v390 = vmax.f32 %v372, 0.0
    %v391 = vmax.f32 %v375, 0.0
    %v392 = vmax.f32 %v380, 0.0
    %v393 = vmax.f32 %v383, 0.0
    %v394 = vld [vmem:[%s2] sm:$0xff]
    %v395 = vld [vmem:[%s2 + $0x8] sm:$0xff]
    %v396 = vld [vmem:[%s2 + $0x10] sm:$0xff]
    %v397 = vld [vmem:[%s2 + $0x18] sm:$0xff]
    %v398 = vld [vmem:[%s2 + $0x20] sm:$0xff]
    %v399 = vld [vmem:[%s2 + $0x28] sm:$0xff]
    %v400 = vld [vmem:[%s2 + $0x30] sm:$0xff]
    %v401 = vld [vmem:[%s2 + $0x38] sm:$0xff]
    %v402 = vld [vmem:[%s2 + $0x40] sm:$0xff]
    %v403 = vld [vmem:[%s2 + $0x48] sm:$0xff]
    %v404 = vld [vmem:[%s2 + $0x50] sm:$0xff]
    %v405 = vld [vmem:[%s2 + $0x58] sm:$0xff]
    %v406 = vld [vmem:[%s2 + $0x60] sm:$0xff]
    %v407 = vld [vmem:[%s2 + $0x68] sm:$0xff]
    %v408 = vld [vmem:[%s2 + $0x70] sm:$0xff]
    %v409 = vld [vmem:[%s2 + $0x78] sm:$0xff]
    %v410 = vld [vmem:[%s3] sm:$0xff]
    %v411 = vld [vmem:[%s3 + $0x8] sm:$0xff]
    %v412 = vld [vmem:[%s3 + $0x10] sm:$0xff]
    %v413 = vld [vmem:[%s3 + $0x18] sm:$0xff]
    %v414 = vld [vmem:[%s3 + $0x20] sm:$0xff]
    %v415 = vld [vmem:[%s3 + $0x28] sm:$0xff]
    %v416 = vld [vmem:[%s3 + $0x30] sm:$0xff]
    %v417 = vld [vmem:[%s3 + $0x38] sm:$0xff]
    %v418 = vld [vmem:[%s3 + $0x40] sm:$0xff]
    %v419 = vld [vmem:[%s3 + $0x48] sm:$0xff]
    %v420 = vld [vmem:[%s3 + $0x50] sm:$0xff]
    %v421 = vld [vmem:[%s3 + $0x58] sm:$0xff]
    %v422 = vld [vmem:[%s3 + $0x60] sm:$0xff]
    %v423 = vld [vmem:[%s3 + $0x68] sm:$0xff]
    %v424 = vld [vmem:[%s3 + $0x70] sm:$0xff]
    %v425 = vld [vmem:[%s3 + $0x78] sm:$0xff]
    %v426 = vld [vmem:[%s4] sm:$0x3]
    %v427 = vlaneseq
    %v428 = vand.u32 %v427, 127
    %vm429 = vcmp.lt.s32.totalorder %v428, 64
    %v430 = vpack.c.bf16 %v386, %v386
    %v432 = vlaneseq
    %v433 = vshrl.u32 %v432, 7
    %v434 = vsub.s32 0, %v433
    %v435 = vrot.slane %v426, %v434
    %v436 = vlaneseq
    %v437 = vshrl.u32 %v436, 7
    %v438 = vsub.s32 1, %v437
    %v439 = vrot.slane %v426, %v438
    %v458 = vunpack.c.l.b16 %v394
    %v459 = vunpack.c.h.b16 %v394
    %v460 = vunpack.c.l.b16 %v395
    %v461 = vunpack.c.h.b16 %v395
    %v462 = vunpack.c.l.b16 %v396
    %v463 = vunpack.c.h.b16 %v396
    %v464 = vunpack.c.l.b16 %v397
    %v465 = vunpack.c.h.b16 %v397
    %v466 = vunpack.c.l.b16 %v398
    %v467 = vunpack.c.h.b16 %v398
    %v468 = vunpack.c.l.b16 %v399
    %v469 = vunpack.c.h.b16 %v399
    %v470 = vunpack.c.l.b16 %v400
    %v471 = vunpack.c.h.b16 %v400
    %v472 = vunpack.c.l.b16 %v401
    %v473 = vunpack.c.h.b16 %v401
    %v474 = vunpack.c.l.b16 %v402
    %v475 = vunpack.c.h.b16 %v402
    %v476 = vunpack.c.l.b16 %v403
    %v477 = vunpack.c.h.b16 %v403
    %v478 = vunpack.c.l.b16 %v404
    %v479 = vunpack.c.h.b16 %v404
    %v480 = vunpack.c.l.b16 %v405
    %v481 = vunpack.c.h.b16 %v405
    %v482 = vunpack.c.l.b16 %v406
    %v483 = vunpack.c.h.b16 %v406
    %v484 = vunpack.c.l.b16 %v407
    %v485 = vunpack.c.h.b16 %v407
    %v486 = vunpack.c.l.b16 %v408
    %v487 = vunpack.c.h.b16 %v408
    %v488 = vunpack.c.l.b16 %v409
    %v489 = vunpack.c.h.b16 %v409
    %v490 = vpack.c.b16 %v460, %v458
    %v491 = vpack.c.b16 %v461, %v459
    %v492 = vpack.c.b16 %v464, %v462
    %v493 = vpack.c.b16 %v465, %v463
    %v494 = vpack.c.b16 %v468, %v466
    %v495 = vpack.c.b16 %v469, %v467
    %v496 = vpack.c.b16 %v472, %v470
    %v497 = vpack.c.b16 %v473, %v471
    %v498 = vpack.c.b16 %v476, %v474
    %v499 = vpack.c.b16 %v477, %v475
    %v500 = vpack.c.b16 %v480, %v478
    %v501 = vpack.c.b16 %v481, %v479
    %v502 = vpack.c.b16 %v484, %v482
    %v503 = vpack.c.b16 %v485, %v483
    %v504 = vpack.c.b16 %v488, %v486
    %v505 = vpack.c.b16 %v489, %v487
    %522 = vmatprep.subr.bf16.mxu0 %v491
    %523 = vmatpush1.bf16.msra.mxu0 %v490
    %524 = vmatprep.subr.bf16.mxu0 %v493
    %525 = vmatpush1.bf16.msra.mxu0 %v492
    %526 = vmatprep.subr.bf16.mxu0 %v495
    %527 = vmatpush1.bf16.msra.mxu0 %v494
    %528 = vmatprep.subr.bf16.mxu0 %v497
    %529 = vmatpush1.bf16.msra.mxu0 %v496
    %530 = vmatprep.subr.bf16.mxu0 %v499
    %531 = vmatpush1.bf16.msra.mxu0 %v498
    %532 = vmatprep.subr.bf16.mxu0 %v501
    %533 = vmatpush1.bf16.msra.mxu0 %v500
    %534 = vmatprep.subr.bf16.mxu0 %v503
    %535 = vmatpush1.bf16.msra.mxu0 %v502
    %536 = vmatprep.subr.bf16.mxu0 %v505
    %537 = vmatpush1.bf16.msra.mxu0 %v504
    %538 = vmatprep.subr.bf16.mxu0 0
    %539 = vmatpush1.bf16.msra.mxu0 0
    %540 = vmatprep.subr.bf16.mxu0 0
    %541 = vmatpush1.bf16.msra.mxu0 0
    %542 = vmatprep.subr.bf16.mxu0 0
    %543 = vmatpush1.bf16.msra.mxu0 0
    %544 = vmatprep.subr.bf16.mxu0 0
    %545 = vmatpush1.bf16.msra.mxu0 0
    %546 = vmatprep.subr.bf16.mxu0 0
    %547 = vmatpush1.bf16.msra.mxu0 0
    %548 = vmatprep.subr.bf16.mxu0 0
    %549 = vmatpush1.bf16.msra.mxu0 0
    %550 = vmatprep.subr.bf16.mxu0 0
    %551 = vmatpush1.bf16.msra.mxu0 0
    %552 = vmatprep.subr.bf16.mxu0 0
    %553 = vmatpush1.bf16.msra.mxu0 0
    %554 = vmatprep.mubr.bf16.mxu0 0
    %555 = vmatmul.mubr.bf16.gmra.mrb[0].mxu0 %v430
    %v556 = vpop.f32.mrb[0].mxu0
    %v557 = vadd.f32 %v435, %v556
    %v558 = vpop.f32.mrb[0].mxu0
    %v559 = vadd.f32 %v439, %v558
    %v560 = vpop.f32.mrb[0].mxu0
    %v561 = vpop.f32.mrb[0].mxu0
    %562 = vdwg.mxu0
    %v579 = vunpack.c.l.b16 %v410
    %v580 = vunpack.c.h.b16 %v410
    %v581 = vunpack.c.l.b16 %v411
    %v582 = vunpack.c.h.b16 %v411
    %v583 = vunpack.c.l.b16 %v412
    %v584 = vunpack.c.h.b16 %v412
    %v585 = vunpack.c.l.b16 %v413
    %v586 = vunpack.c.h.b16 %v413
    %v587 = vunpack.c.l.b16 %v414
    %v588 = vunpack.c.h.b16 %v414
    %v589 = vunpack.c.l.b16 %v415
    %v590 = vunpack.c.h.b16 %v415
    %v591 = vunpack.c.l.b16 %v416
    %v592 = vunpack.c.h.b16 %v416
    %v593 = vunpack.c.l.b16 %v417
    %v594 = vunpack.c.h.b16 %v417
    %v595 = vunpack.c.l.b16 %v418
    %v596 = vunpack.c.h.b16 %v418
    %v597 = vunpack.c.l.b16 %v419
    %v598 = vunpack.c.h.b16 %v419
    %v599 = vunpack.c.l.b16 %v420
    %v600 = vunpack.c.h.b16 %v420
    %v601 = vunpack.c.l.b16 %v421
    %v602 = vunpack.c.h.b16 %v421
    %v603 = vunpack.c.l.b16 %v422
    %v604 = vunpack.c.h.b16 %v422
    %v605 = vunpack.c.l.b16 %v423
    %v606 = vunpack.c.h.b16 %v423
    %v607 = vunpack.c.l.b16 %v424
    %v608 = vunpack.c.h.b16 %v424
    %v609 = vunpack.c.l.b16 %v425
    %v610 = vunpack.c.h.b16 %v425
    %v611 = vpack.c.b16 %v581, %v579
    %v612 = vpack.c.b16 %v582, %v580
    %v613 = vpack.c.b16 %v585, %v583
    %v614 = vpack.c.b16 %v586, %v584
    %v615 = vpack.c.b16 %v589, %v587
    %v616 = vpack.c.b16 %v590, %v588
    %v617 = vpack.c.b16 %v593, %v591
    %v618 = vpack.c.b16 %v594, %v592
    %v619 = vpack.c.b16 %v597, %v595
    %v620 = vpack.c.b16 %v598, %v596
    %v621 = vpack.c.b16 %v601, %v599
    %v622 = vpack.c.b16 %v602, %v600
    %v623 = vpack.c.b16 %v605, %v603
    %v624 = vpack.c.b16 %v606, %v604
    %v625 = vpack.c.b16 %v609, %v607
    %v626 = vpack.c.b16 %v610, %v608
    %643 = vmatprep.subr.bf16.mxu0 %v612
    %644 = vmatpush1.bf16.msra.mxu0 %v611
    %645 = vmatprep.subr.bf16.mxu0 %v614
    %646 = vmatpush1.bf16.msra.mxu0 %v613
    %647 = vmatprep.subr.bf16.mxu0 %v616
    %648 = vmatpush1.bf16.msra.mxu0 %v615
    %649 = vmatprep.subr.bf16.mxu0 %v618
    %650 = vmatpush1.bf16.msra.mxu0 %v617
    %651 = vmatprep.subr.bf16.mxu0 %v620
    %652 = vmatpush1.bf16.msra.mxu0 %v619
    %653 = vmatprep.subr.bf16.mxu0 %v622
    %654 = vmatpush1.bf16.msra.mxu0 %v621
    %655 = vmatprep.subr.bf16.mxu0 %v624
    %656 = vmatpush1.bf16.msra.mxu0 %v623
    %657 = vmatprep.subr.bf16.mxu0 %v626
    %658 = vmatpush1.bf16.msra.mxu0 %v625
    %659 = vmatprep.subr.bf16.mxu0 0
    %660 = vmatpush1.bf16.msra.mxu0 0
    %661 = vmatprep.subr.bf16.mxu0 0
    %662 = vmatpush1.bf16.msra.mxu0 0
    %663 = vmatprep.subr.bf16.mxu0 0
    %664 = vmatpush1.bf16.msra.mxu0 0
    %665 = vmatprep.subr.bf16.mxu0 0
    %666 = vmatpush1.bf16.msra.mxu0 0
    %667 = vmatprep.subr.bf16.mxu0 0
    %668 = vmatpush1.bf16.msra.mxu0 0
    %669 = vmatprep.subr.bf16.mxu0 0
    %670 = vmatpush1.bf16.msra.mxu0 0
    %671 = vmatprep.subr.bf16.mxu0 0
    %672 = vmatpush1.bf16.msra.mxu0 0
    %673 = vmatprep.subr.bf16.mxu0 0
    %674 = vmatpush1.bf16.msra.mxu0 0
    %675 = vmatprep.mubr.bf16.mxu0 0
    %676 = vmatmul.mubr.bf16.gmra.mrb[0].mxu0 0
    %v677 = vpop.f32.mrb[0].mxu0
    %v678 = vadd.f32 0.0, %v677
    %v679 = vpop.f32.mrb[0].mxu0
    %v680 = vadd.f32 0.0, %v679
    %v681 = vpop.f32.mrb[0].mxu0
    %v682 = vpop.f32.mrb[0].mxu0
    %683 = vdwg.mxu0
    %v684 = vadd.f32 %v557, %v678
    %v685 = vadd.f32 %v559, %v680
    %v686 = vxor.u32 %v684, 2147483648
    %v687 = vxor.u32 %v685, 2147483648
    %v688 = vmul.f32 %v686, 1.442695
    %v689 = vpow.pop %v688
    %v690 = vmul.f32 %v687, 1.442695
    %v691 = vpow.pop %v690
    %v692 = vadd.f32 %v689, 1.0
    %v693 = vadd.f32 %v691, 1.0
    %v694 = vrcp.pop %v692
    %v695 = vmul.f32 1.0, %v694
    %v696 = vrcp.pop %v693
    %v697 = vmul.f32 1.0, %v696
    %v698 = vmul.f32 %v697, 2.0
    %v699 = vsub.f32 %v698, 1.0
    %v700 = vsel %vm429, 0.0, %v699
    %v701 = vmul.f32 %v695, %v700
    %702 = vrot.lane.b32.xlu0 %v701, 64
    %v703 = vpop.permute.xlu0 %702
    %v704 = vadd.f32 %v701, %v703
    %v705 = vtanh.pop %v704
    %v706 = vmul.f32 %v697, %v705
    %v707 = vpack.c.bf16 %v706, %v706
    %708 = vmatprep.subr.bf16.mxu0 %v612
    %709 = vmatpush1.bf16.msra.mxu0 %v611
    %710 = vmatprep.subr.bf16.mxu0 %v614
    %711 = vmatpush1.bf16.msra.mxu0 %v613
    %712 = vmatprep.subr.bf16.mxu0 %v616
    %713 = vmatpush1.bf16.msra.mxu0 %v615
    %714 = vmatprep.subr.bf16.mxu0 %v618
    %715 = vmatpush1.bf16.msra.mxu0 %v617
    %716 = vmatprep.subr.bf16.mxu0 %v620
    %717 = vmatpush1.bf16.msra.mxu0 %v619
    %718 = vmatprep.subr.bf16.mxu0 %v622
    %719 = vmatpush1.bf16.msra.mxu0 %v621
    %720 = vmatprep.subr.bf16.mxu0 %v624
    %721 = vmatpush1.bf16.msra.mxu0 %v623
    %722 = vmatprep.subr.bf16.mxu0 %v626
    %723 = vmatpush1.bf16.msra.mxu0 %v625
    %724 = vmatprep.subr.bf16.mxu0 0
    %725 = vmatpush1.bf16.msra.mxu0 0
    %726 = vmatprep.subr.bf16.mxu0 0
    %727 = vmatpush1.bf16.msra.mxu0 0
    %728 = vmatprep.subr.bf16.mxu0 0
    %729 = vmatpush1.bf16.msra.mxu0 0
    %730 = vmatprep.subr.bf16.mxu0 0
    %731 = vmatpush1.bf16.msra.mxu0 0
    %732 = vmatprep.subr.bf16.mxu0 0
    %733 = vmatpush1.bf16.msra.mxu0 0
    %734 = vmatprep.subr.bf16.mxu0 0
    %735 = vmatpush1.bf16.msra.mxu0 0
    %736 = vmatprep.subr.bf16.mxu0 0
    %737 = vmatpush1.bf16.msra.mxu0 0
    %738 = vmatprep.subr.bf16.mxu0 0
    %739 = vmatpush1.bf16.msra.mxu0 0
    %740 = vmatprep.mubr.bf16.mxu0 0
    %741 = vmatmul.mubr.bf16.gmra.mrb[0].mxu0 %v707
    %v742 = vpop.f32.mrb[0].mxu0
    %v743 = vadd.f32 0.0, %v742
    %v744 = vpop.f32.mrb[0].mxu0
    %v745 = vadd.f32 0.0, %v744
    %v746 = vpop.f32.mrb[0].mxu0
    %v747 = vpop.f32.mrb[0].mxu0
    %748 = vdwg.mxu0
    %v751 = vrot.slane %v743, 7
    %v752 = vrot.slane %v745, 7
    %v755 = vadd.f32 %v557, %v751
    %v756 = vadd.f32 %v559, %v752
    %v757 = vxor.u32 %v755, 2147483648
    %v758 = vxor.u32 %v756, 2147483648
    %v759 = vmul.f32 %v757, 1.442695
    %v760 = vpow.pop %v759
    %v761 = vmul.f32 %v758, 1.442695
    %v762 = vpow.pop %v761
    %v763 = vadd.f32 %v760, 1.0
    %v764 = vadd.f32 %v762, 1.0
    %v765 = vrcp.pop %v763
    %v766 = vmul.f32 1.0, %v765
    %v767 = vrcp.pop %v764
    %v768 = vmul.f32 1.0, %v767
    %v769 = vmul.f32 %v768, 2.0
    %v770 = vsub.f32 %v769, 1.0
    %v772 = vrot.slane %v770, 1
    %v774 = vsel %vm429, %v704, %v772
    %v776 = vrot.slane %v774, 7
    %v778 = vmul.f32 %v766, %v776
    %v780 = vrot.slane %v778, 1
    %782 = vrot.lane.b32.xlu0 %v780, 64
    %v783 = vpop.permute.xlu0 %782
    %v785 = vrot.slane %v783, 7
    %v787 = vadd.f32 %v778, %v785
    %v788 = vtanh.pop %v787
    %v789 = vmul.f32 %v768, %v788
    %v790 = vpack.c.bf16 %v789, %v789
    %v792 = vshrl.u32 %v790, 16
    %795 = vmatprep.subr.bf16.mxu0 %v612
    %796 = vmatpush1.bf16.msra.mxu0 %v611
    %797 = vmatprep.subr.bf16.mxu0 %v614
    %798 = vmatpush1.bf16.msra.mxu0 %v613
    %799 = vmatprep.subr.bf16.mxu0 %v616
    %800 = vmatpush1.bf16.msra.mxu0 %v615
    %801 = vmatprep.subr.bf16.mxu0 %v618
    %802 = vmatpush1.bf16.msra.mxu0 %v617
    %803 = vmatprep.subr.bf16.mxu0 %v620
    %804 = vmatpush1.bf16.msra.mxu0 %v619
    %805 = vmatprep.subr.bf16.mxu0 %v622
    %806 = vmatpush1.bf16.msra.mxu0 %v621
    %807 = vmatprep.subr.bf16.mxu0 %v624
    %808 = vmatpush1.bf16.msra.mxu0 %v623
    %809 = vmatprep.subr.bf16.mxu0 %v626
    %810 = vmatpush1.bf16.msra.mxu0 %v625
    %811 = vmatprep.subr.bf16.mxu0 0
    %812 = vmatpush1.bf16.msra.mxu0 0
    %813 = vmatprep.subr.bf16.mxu0 0
    %814 = vmatpush1.bf16.msra.mxu0 0
    %815 = vmatprep.subr.bf16.mxu0 0
    %816 = vmatpush1.bf16.msra.mxu0 0
    %817 = vmatprep.subr.bf16.mxu0 0
    %818 = vmatpush1.bf16.msra.mxu0 0
    %819 = vmatprep.subr.bf16.mxu0 0
    %820 = vmatpush1.bf16.msra.mxu0 0
    %821 = vmatprep.subr.bf16.mxu0 0
    %822 = vmatpush1.bf16.msra.mxu0 0
    %823 = vmatprep.subr.bf16.mxu0 0
    %824 = vmatpush1.bf16.msra.mxu0 0
    %825 = vmatprep.subr.bf16.mxu0 0
    %826 = vmatpush1.bf16.msra.mxu0 0
    %827 = vmatprep.mubr.bf16.mxu0 0
    %828 = vmatmul.mubr.bf16.gmra.mrb[0].mxu0 %v792
    %v829 = vpop.f32.mrb[0].mxu0
    %v830 = vadd.f32 0.0, %v829
    %v831 = vpop.f32.mrb[0].mxu0
    %v832 = vadd.f32 0.0, %v831
    %v833 = vpop.f32.mrb[0].mxu0
    %v834 = vpop.f32.mrb[0].mxu0
    %835 = vdwg.mxu0
    %v838 = vrot.slane %v830, 6
    %v839 = vrot.slane %v832, 6
    %v842 = vadd.f32 %v557, %v838
    %v843 = vadd.f32 %v559, %v839
    %v844 = vxor.u32 %v842, 2147483648
    %v845 = vxor.u32 %v843, 2147483648
    %v846 = vmul.f32 %v844, 1.442695
    %v847 = vpow.pop %v846
    %v848 = vmul.f32 %v845, 1.442695
    %v849 = vpow.pop %v848
    %v850 = vadd.f32 %v847, 1.0
    %v851 = vadd.f32 %v849, 1.0
    %v852 = vrcp.pop %v850
    %v853 = vmul.f32 1.0, %v852
    %v854 = vrcp.pop %v851
    %v855 = vmul.f32 1.0, %v854
    %v856 = vmul.f32 %v855, 2.0
    %v857 = vsub.f32 %v856, 1.0
    %v859 = vrot.slane %v857, 1
    %v861 = vsel %vm429, %v787, %v859
    %v863 = vrot.slane %v861, 7
    %v865 = vmul.f32 %v853, %v863
    %v867 = vrot.slane %v865, 2
    %869 = vrot.lane.b32.xlu0 %v867, 64
    %v870 = vpop.permute.xlu0 %869
    %v872 = vrot.slane %v870, 6
    %v874 = vadd.f32 %v865, %v872
    %v875 = vtanh.pop %v874
    %v876 = vmul.f32 %v855, %v875
    %v877 = vpack.c.bf16 %v876, %v876
    %v879 = vrot.slane %v877, 1
    %881 = vmatprep.subr.bf16.mxu0 %v612
    %882 = vmatpush1.bf16.msra.mxu0 %v611
    %883 = vmatprep.subr.bf16.mxu0 %v614
    %884 = vmatpush1.bf16.msra.mxu0 %v613
    %885 = vmatprep.subr.bf16.mxu0 %v616
    %886 = vmatpush1.bf16.msra.mxu0 %v615
    %887 = vmatprep.subr.bf16.mxu0 %v618
    %888 = vmatpush1.bf16.msra.mxu0 %v617
    %889 = vmatprep.subr.bf16.mxu0 %v620
    %890 = vmatpush1.bf16.msra.mxu0 %v619
    %891 = vmatprep.subr.bf16.mxu0 %v622
    %892 = vmatpush1.bf16.msra.mxu0 %v621
    %893 = vmatprep.subr.bf16.mxu0 %v624
    %894 = vmatpush1.bf16.msra.mxu0 %v623
    %895 = vmatprep.subr.bf16.mxu0 %v626
    %896 = vmatpush1.bf16.msra.mxu0 %v625
    %897 = vmatprep.subr.bf16.mxu0 0
    %898 = vmatpush1.bf16.msra.mxu0 0
    %899 = vmatprep.subr.bf16.mxu0 0
    %900 = vmatpush1.bf16.msra.mxu0 0
    %901 = vmatprep.subr.bf16.mxu0 0
    %902 = vmatpush1.bf16.msra.mxu0 0
    %903 = vmatprep.subr.bf16.mxu0 0
    %904 = vmatpush1.bf16.msra.mxu0 0
    %905 = vmatprep.subr.bf16.mxu0 0
    %906 = vmatpush1.bf16.msra.mxu0 0
    %907 = vmatprep.subr.bf16.mxu0 0
    %908 = vmatpush1.bf16.msra.mxu0 0
    %909 = vmatprep.subr.bf16.mxu0 0
    %910 = vmatpush1.bf16.msra.mxu0 0
    %911 = vmatprep.subr.bf16.mxu0 0
    %912 = vmatpush1.bf16.msra.mxu0 0
    %913 = vmatprep.mubr.bf16.mxu0 0
    %914 = vmatmul.mubr.bf16.gmra.mrb[0].mxu0 %v879
    %v915 = vpop.f32.mrb[0].mxu0
    %v916 = vadd.f32 0.0, %v915
    %v917 = vpop.f32.mrb[0].mxu0
    %v918 = vadd.f32 0.0, %v917
    %v919 = vpop.f32.mrb[0].mxu0
    %v920 = vpop.f32.mrb[0].mxu0
    %921 = vdwg.mxu0
    %v924 = vrot.slane %v916, 5
    %v925 = vrot.slane %v918, 5
    %v928 = vadd.f32 %v557, %v924
    %v929 = vadd.f32 %v559, %v925
    %v930 = vxor.u32 %v928, 2147483648
    %v931 = vxor.u32 %v929, 2147483648
    %v932 = vmul.f32 %v930, 1.442695
    %v933 = vpow.pop %v932
    %v934 = vmul.f32 %v931, 1.442695
    %v935 = vpow.pop %v934
    %v936 = vadd.f32 %v933, 1.0
    %v937 = vadd.f32 %v935, 1.0
    %v938 = vrcp.pop %v936
    %v939 = vmul.f32 1.0, %v938
    %v940 = vrcp.pop %v937
    %v941 = vmul.f32 1.0, %v940
    %v942 = vmul.f32 %v941, 2.0
    %v943 = vsub.f32 %v942, 1.0
    %v945 = vrot.slane %v943, 1
    %v947 = vsel %vm429, %v874, %v945
    %v949 = vrot.slane %v947, 7
    %v951 = vmul.f32 %v939, %v949
    %v953 = vrot.slane %v951, 3
    %955 = vrot.lane.b32.xlu0 %v953, 64
    %v956 = vpop.permute.xlu0 %955
    %v958 = vrot.slane %v956, 5
    %v960 = vadd.f32 %v951, %v958
    %v961 = vtanh.pop %v960
    %v962 = vmul.f32 %v941, %v961
    %v963 = vpack.c.bf16 %v962, %v962
    %v965 = vshrl.u32 %v963, 16
    %v967 = vrot.slane %v965, 1
    %969 = vmatprep.subr.bf16.mxu0 %v612
    %970 = vmatpush1.bf16.msra.mxu0 %v611
    %971 = vmatprep.subr.bf16.mxu0 %v614
    %972 = vmatpush1.bf16.msra.mxu0 %v613
    %973 = vmatprep.subr.bf16.mxu0 %v616
    %974 = vmatpush1.bf16.msra.mxu0 %v615
    %975 = vmatprep.subr.bf16.mxu0 %v618
    %976 = vmatpush1.bf16.msra.mxu0 %v617
    %977 = vmatprep.subr.bf16.mxu0 %v620
    %978 = vmatpush1.bf16.msra.mxu0 %v619
    %979 = vmatprep.subr.bf16.mxu0 %v622
    %980 = vmatpush1.bf16.msra.mxu0 %v621
    %981 = vmatprep.subr.bf16.mxu0 %v624
    %982 = vmatpush1.bf16.msra.mxu0 %v623
    %983 = vmatprep.subr.bf16.mxu0 %v626
    %984 = vmatpush1.bf16.msra.mxu0 %v625
    %985 = vmatprep.subr.bf16.mxu0 0
    %986 = vmatpush1.bf16.msra.mxu0 0
    %987 = vmatprep.subr.bf16.mxu0 0
    %988 = vmatpush1.bf16.msra.mxu0 0
    %989 = vmatprep.subr.bf16.mxu0 0
    %990 = vmatpush1.bf16.msra.mxu0 0
    %991 = vmatprep.subr.bf16.mxu0 0
    %992 = vmatpush1.bf16.msra.mxu0 0
    %993 = vmatprep.subr.bf16.mxu0 0
    %994 = vmatpush1.bf16.msra.mxu0 0
    %995 = vmatprep.subr.bf16.mxu0 0
    %996 = vmatpush1.bf16.msra.mxu0 0
    %997 = vmatprep.subr.bf16.mxu0 0
    %998 = vmatpush1.bf16.msra.mxu0 0
    %999 = vmatprep.subr.bf16.mxu0 0
    %1000 = vmatpush1.bf16.msra.mxu0 0
    %1001 = vmatprep.mubr.bf16.mxu0 0
    %1002 = vmatmul.mubr.bf16.gmra.mrb[0].mxu0 %v967
    %v1003 = vpop.f32.mrb[0].mxu0
    %v1004 = vadd.f32 0.0, %v1003
    %v1005 = vpop.f32.mrb[0].mxu0
    %v1006 = vadd.f32 0.0, %v1005
    %v1007 = vpop.f32.mrb[0].mxu0
    %v1008 = vpop.f32.mrb[0].mxu0
    %1009 = vdwg.mxu0
    %v1012 = vrot.slane %v1004, 4
    %v1013 = vrot.slane %v1006, 4
    %v1016 = vadd.f32 %v557, %v1012
    %v1017 = vadd.f32 %v559, %v1013
    %v1018 = vxor.u32 %v1016, 2147483648
    %v1019 = vxor.u32 %v1017, 2147483648
    %v1020 = vmul.f32 %v1018, 1.442695
    %v1021 = vpow.pop %v1020
    %v1022 = vmul.f32 %v1019, 1.442695
    %v1023 = vpow.pop %v1022
    %v1024 = vadd.f32 %v1021, 1.0
    %v1025 = vadd.f32 %v1023, 1.0
    %v1026 = vrcp.pop %v1024
    %v1027 = vmul.f32 1.0, %v1026
    %v1028 = vrcp.pop %v1025
    %v1029 = vmul.f32 1.0, %v1028
    %v1030 = vmul.f32 %v1029, 2.0
    %v1031 = vsub.f32 %v1030, 1.0
    %v1033 = vrot.slane %v1031, 1
    %v1035 = vsel %vm429, %v960, %v1033
    %v1037 = vrot.slane %v1035, 7
    %v1039 = vmul.f32 %v1027, %v1037
    %v1041 = vrot.slane %v1039, 4
    %1043 = vrot.lane.b32.xlu0 %v1041, 64
    %v1044 = vpop.permute.xlu0 %1043
    %v1046 = vrot.slane %v1044, 4
    %v1048 = vadd.f32 %v1039, %v1046
    %v1049 = vtanh.pop %v1048
    %v1050 = vmul.f32 %v1029, %v1049
    %v1051 = vpack.c.bf16 %v1050, %v1050
    %v1053 = vrot.slane %v1051, 2
    %1055 = vmatprep.subr.bf16.mxu0 %v612
    %1056 = vmatpush1.bf16.msra.mxu0 %v611
    %1057 = vmatprep.subr.bf16.mxu0 %v614
    %1058 = vmatpush1.bf16.msra.mxu0 %v613
    %1059 = vmatprep.subr.bf16.mxu0 %v616
    %1060 = vmatpush1.bf16.msra.mxu0 %v615
    %1061 = vmatprep.subr.bf16.mxu0 %v618
    %1062 = vmatpush1.bf16.msra.mxu0 %v617
    %1063 = vmatprep.subr.bf16.mxu0 %v620
    %1064 = vmatpush1.bf16.msra.mxu0 %v619
    %1065 = vmatprep.subr.bf16.mxu0 %v622
    %1066 = vmatpush1.bf16.msra.mxu0 %v621
    %1067 = vmatprep.subr.bf16.mxu0 %v624
    %1068 = vmatpush1.bf16.msra.mxu0 %v623
    %1069 = vmatprep.subr.bf16.mxu0 %v626
    %1070 = vmatpush1.bf16.msra.mxu0 %v625
    %1071 = vmatprep.subr.bf16.mxu0 0
    %1072 = vmatpush1.bf16.msra.mxu0 0
    %1073 = vmatprep.subr.bf16.mxu0 0
    %1074 = vmatpush1.bf16.msra.mxu0 0
    %1075 = vmatprep.subr.bf16.mxu0 0
    %1076 = vmatpush1.bf16.msra.mxu0 0
    %1077 = vmatprep.subr.bf16.mxu0 0
    %1078 = vmatpush1.bf16.msra.mxu0 0
    %1079 = vmatprep.subr.bf16.mxu0 0
    %1080 = vmatpush1.bf16.msra.mxu0 0
    %1081 = vmatprep.subr.bf16.mxu0 0
    %1082 = vmatpush1.bf16.msra.mxu0 0
    %1083 = vmatprep.subr.bf16.mxu0 0
    %1084 = vmatpush1.bf16.msra.mxu0 0
    %1085 = vmatprep.subr.bf16.mxu0 0
    %1086 = vmatpush1.bf16.msra.mxu0 0
    %1087 = vmatprep.mubr.bf16.mxu0 0
    %1088 = vmatmul.mubr.bf16.gmra.mrb[0].mxu0 %v1053
    %v1089 = vpop.f32.mrb[0].mxu0
    %v1090 = vadd.f32 0.0, %v1089
    %v1091 = vpop.f32.mrb[0].mxu0
    %v1092 = vadd.f32 0.0, %v1091
    %v1093 = vpop.f32.mrb[0].mxu0
    %v1094 = vpop.f32.mrb[0].mxu0
    %1095 = vdwg.mxu0
    %v1098 = vrot.slane %v1090, 3
    %v1099 = vrot.slane %v1092, 3
    %v1102 = vadd.f32 %v557, %v1098
    %v1103 = vadd.f32 %v559, %v1099
    %v1104 = vxor.u32 %v1102, 2147483648
    %v1105 = vxor.u32 %v1103, 2147483648
    %v1106 = vmul.f32 %v1104, 1.442695
    %v1107 = vpow.pop %v1106
    %v1108 = vmul.f32 %v1105, 1.442695
    %v1109 = vpow.pop %v1108
    %v1110 = vadd.f32 %v1107, 1.0
    %v1111 = vadd.f32 %v1109, 1.0
    %v1112 = vrcp.pop %v1110
    %v1113 = vmul.f32 1.0, %v1112
    %v1114 = vrcp.pop %v1111
    %v1115 = vmul.f32 1.0, %v1114
    %v1116 = vmul.f32 %v1115, 2.0
    %v1117 = vsub.f32 %v1116, 1.0
    %v1119 = vrot.slane %v1117, 1
    %v1121 = vsel %vm429, %v1048, %v1119
    %v1123 = vrot.slane %v1121, 7
    %v1125 = vmul.f32 %v1113, %v1123
    %v1127 = vrot.slane %v1125, 5
    %1129 = vrot.lane.b32.xlu0 %v1127, 64
    %v1130 = vpop.permute.xlu0 %1129
    %v1132 = vrot.slane %v1130, 3
    %v1134 = vadd.f32 %v1125, %v1132
    %v1135 = vtanh.pop %v1134
    %v1136 = vmul.f32 %v1115, %v1135
    %v1137 = vpack.c.bf16 %v1136, %v1136
    %v1139 = vshrl.u32 %v1137, 16
    %v1141 = vrot.slane %v1139, 2
    %1143 = vmatprep.subr.bf16.mxu0 %v612
    %1144 = vmatpush1.bf16.msra.mxu0 %v611
    %1145 = vmatprep.subr.bf16.mxu0 %v614
    %1146 = vmatpush1.bf16.msra.mxu0 %v613
    %1147 = vmatprep.subr.bf16.mxu0 %v616
    %1148 = vmatpush1.bf16.msra.mxu0 %v615
    %1149 = vmatprep.subr.bf16.mxu0 %v618
    %1150 = vmatpush1.bf16.msra.mxu0 %v617
    %1151 = vmatprep.subr.bf16.mxu0 %v620
    %1152 = vmatpush1.bf16.msra.mxu0 %v619
    %1153 = vmatprep.subr.bf16.mxu0 %v622
    %1154 = vmatpush1.bf16.msra.mxu0 %v621
    %1155 = vmatprep.subr.bf16.mxu0 %v624
    %1156 = vmatpush1.bf16.msra.mxu0 %v623
    %1157 = vmatprep.subr.bf16.mxu0 %v626
    %1158 = vmatpush1.bf16.msra.mxu0 %v625
    %1159 = vmatprep.subr.bf16.mxu0 0
    %1160 = vmatpush1.bf16.msra.mxu0 0
    %1161 = vmatprep.subr.bf16.mxu0 0
    %1162 = vmatpush1.bf16.msra.mxu0 0
    %1163 = vmatprep.subr.bf16.mxu0 0
    %1164 = vmatpush1.bf16.msra.mxu0 0
    %1165 = vmatprep.subr.bf16.mxu0 0
    %1166 = vmatpush1.bf16.msra.mxu0 0
    %1167 = vmatprep.subr.bf16.mxu0 0
    %1168 = vmatpush1.bf16.msra.mxu0 0
    %1169 = vmatprep.subr.bf16.mxu0 0
    %1170 = vmatpush1.bf16.msra.mxu0 0
    %1171 = vmatprep.subr.bf16.mxu0 0
    %1172 = vmatpush1.bf16.msra.mxu0 0
    %1173 = vmatprep.subr.bf16.mxu0 0
    %1174 = vmatpush1.bf16.msra.mxu0 0
    %1175 = vmatprep.mubr.bf16.mxu0 0
    %1176 = vmatmul.mubr.bf16.gmra.mrb[0].mxu0 %v1141
    %v1177 = vpop.f32.mrb[0].mxu0
    %v1178 = vadd.f32 0.0, %v1177
    %v1179 = vpop.f32.mrb[0].mxu0
    %v1180 = vadd.f32 0.0, %v1179
    %v1181 = vpop.f32.mrb[0].mxu0
    %v1182 = vpop.f32.mrb[0].mxu0
    %1183 = vdwg.mxu0
    %v1186 = vrot.slane %v1178, 2
    %v1187 = vrot.slane %v1180, 2
    %v1190 = vadd.f32 %v557, %v1186
    %v1191 = vadd.f32 %v559, %v1187
    %v1192 = vxor.u32 %v1190, 2147483648
    %v1193 = vxor.u32 %v1191, 2147483648
    %v1194 = vmul.f32 %v1192, 1.442695
    %v1195 = vpow.pop %v1194
    %v1196 = vmul.f32 %v1193, 1.442695
    %v1197 = vpow.pop %v1196
    %v1198 = vadd.f32 %v1195, 1.0
    %v1199 = vadd.f32 %v1197, 1.0
    %v1200 = vrcp.pop %v1198
    %v1201 = vmul.f32 1.0, %v1200
    %v1202 = vrcp.pop %v1199
    %v1203 = vmul.f32 1.0, %v1202
    %v1204 = vmul.f32 %v1203, 2.0
    %v1205 = vsub.f32 %v1204, 1.0
    %v1207 = vrot.slane %v1205, 1
    %v1209 = vsel %vm429, %v1134, %v1207
    %v1211 = vrot.slane %v1209, 7
    %v1213 = vmul.f32 %v1201, %v1211
    %v1215 = vrot.slane %v1213, 6
    %1217 = vrot.lane.b32.xlu0 %v1215, 64
    %v1218 = vpop.permute.xlu0 %1217
    %v1220 = vrot.slane %v1218, 2
    %v1222 = vadd.f32 %v1213, %v1220
    %v1223 = vtanh.pop %v1222
    %v1224 = vmul.f32 %v1203, %v1223
    %v1225 = vpack.c.bf16 %v1224, %v1224
    %v1227 = vrot.slane %v1225, 3
    %1229 = vmatprep.subr.bf16.mxu0 %v612
    %1230 = vmatpush1.bf16.msra.mxu0 %v611
    %1231 = vmatprep.subr.bf16.mxu0 %v614
    %1232 = vmatpush1.bf16.msra.mxu0 %v613
    %1233 = vmatprep.subr.bf16.mxu0 %v616
    %1234 = vmatpush1.bf16.msra.mxu0 %v615
    %1235 = vmatprep.subr.bf16.mxu0 %v618
    %1236 = vmatpush1.bf16.msra.mxu0 %v617
    %1237 = vmatprep.subr.bf16.mxu0 %v620
    %1238 = vmatpush1.bf16.msra.mxu0 %v619
    %1239 = vmatprep.subr.bf16.mxu0 %v622
    %1240 = vmatpush1.bf16.msra.mxu0 %v621
    %1241 = vmatprep.subr.bf16.mxu0 %v624
    %1242 = vmatpush1.bf16.msra.mxu0 %v623
    %1243 = vmatprep.subr.bf16.mxu0 %v626
    %1244 = vmatpush1.bf16.msra.mxu0 %v625
    %1245 = vmatprep.subr.bf16.mxu0 0
    %1246 = vmatpush1.bf16.msra.mxu0 0
    %1247 = vmatprep.subr.bf16.mxu0 0
    %1248 = vmatpush1.bf16.msra.mxu0 0
    %1249 = vmatprep.subr.bf16.mxu0 0
    %1250 = vmatpush1.bf16.msra.mxu0 0
    %1251 = vmatprep.subr.bf16.mxu0 0
    %1252 = vmatpush1.bf16.msra.mxu0 0
    %1253 = vmatprep.subr.bf16.mxu0 0
    %1254 = vmatpush1.bf16.msra.mxu0 0
    %1255 = vmatprep.subr.bf16.mxu0 0
    %1256 = vmatpush1.bf16.msra.mxu0 0
    %1257 = vmatprep.subr.bf16.mxu0 0
    %1258 = vmatpush1.bf16.msra.mxu0 0
    %1259 = vmatprep.subr.bf16.mxu0 0
    %1260 = vmatpush1.bf16.msra.mxu0 0
    %1261 = vmatprep.mubr.bf16.mxu0 0
    %1262 = vmatmul.mubr.bf16.gmra.mrb[0].mxu0 %v1227
    %v1263 = vpop.f32.mrb[0].mxu0
    %v1264 = vadd.f32 0.0, %v1263
    %v1265 = vpop.f32.mrb[0].mxu0
    %v1266 = vadd.f32 0.0, %v1265
    %v1267 = vpop.f32.mrb[0].mxu0
    %v1268 = vpop.f32.mrb[0].mxu0
    %1269 = vdwg.mxu0
    %v1272 = vrot.slane %v1264, 1
    %v1273 = vrot.slane %v1266, 1
    %v1276 = vadd.f32 %v557, %v1272
    %v1277 = vadd.f32 %v559, %v1273
    %v1278 = vxor.u32 %v1276, 2147483648
    %v1279 = vxor.u32 %v1277, 2147483648
    %v1280 = vmul.f32 %v1278, 1.442695
    %v1281 = vpow.pop %v1280
    %v1282 = vmul.f32 %v1279, 1.442695
    %v1283 = vpow.pop %v1282
    %v1284 = vadd.f32 %v1281, 1.0
    %v1285 = vadd.f32 %v1283, 1.0
    %v1286 = vrcp.pop %v1284
    %v1287 = vmul.f32 1.0, %v1286
    %v1288 = vrcp.pop %v1285
    %v1289 = vmul.f32 1.0, %v1288
    %v1290 = vmul.f32 %v1289, 2.0
    %v1291 = vsub.f32 %v1290, 1.0
    %v1293 = vrot.slane %v1291, 1
    %v1295 = vsel %vm429, %v1222, %v1293
    %v1297 = vrot.slane %v1295, 7
    %v1299 = vmul.f32 %v1287, %v1297
    %v1301 = vrot.slane %v1299, 7
    %1303 = vrot.lane.b32.xlu0 %v1301, 64
    %v1304 = vpop.permute.xlu0 %1303
    %v1306 = vrot.slane %v1304, 1
    %v1308 = vadd.f32 %v1299, %v1306
    %v1309 = vtanh.pop %v1308
    %v1310 = vmul.f32 %v1289, %v1309
    %v1311 = vpack.c.bf16 %v387, %v387
    %1312 = vmatprep.subr.bf16.mxu0 %v491
    %1313 = vmatpush1.bf16.msra.mxu0 %v490
    %1314 = vmatprep.subr.bf16.mxu0 %v493
    %1315 = vmatpush1.bf16.msra.mxu0 %v492
    %1316 = vmatprep.subr.bf16.mxu0 %v495
    %1317 = vmatpush1.bf16.msra.mxu0 %v494
    %1318 = vmatprep.subr.bf16.mxu0 %v497
    %1319 = vmatpush1.bf16.msra.mxu0 %v496
    %1320 = vmatprep.subr.bf16.mxu0 %v499
    %1321 = vmatpush1.bf16.msra.mxu0 %v498
    %1322 = vmatprep.subr.bf16.mxu0 %v501
    %1323 = vmatpush1.bf16.msra.mxu0 %v500
    %1324 = vmatprep.subr.bf16.mxu0 %v503
    %1325 = vmatpush1.bf16.msra.mxu0 %v502
    %1326 = vmatprep.subr.bf16.mxu0 %v505
    %1327 = vmatpush1.bf16.msra.mxu0 %v504
    %1328 = vmatprep.subr.bf16.mxu0 0
    %1329 = vmatpush1.bf16.msra.mxu0 0
    %1330 = vmatprep.subr.bf16.mxu0 0
    %1331 = vmatpush1.bf16.msra.mxu0 0
    %1332 = vmatprep.subr.bf16.mxu0 0
    %1333 = vmatpush1.bf16.msra.mxu0 0
    %1334 = vmatprep.subr.bf16.mxu0 0
    %1335 = vmatpush1.bf16.msra.mxu0 0
    %1336 = vmatprep.subr.bf16.mxu0 0
    %1337 = vmatpush1.bf16.msra.mxu0 0
    %1338 = vmatprep.subr.bf16.mxu0 0
    %1339 = vmatpush1.bf16.msra.mxu0 0
    %1340 = vmatprep.subr.bf16.mxu0 0
    %1341 = vmatpush1.bf16.msra.mxu0 0
    %1342 = vmatprep.subr.bf16.mxu0 0
    %1343 = vmatpush1.bf16.msra.mxu0 0
    %1344 = vmatprep.mubr.bf16.mxu0 0
    %1345 = vmatmul.mubr.bf16.gmra.mrb[0].mxu0 %v1311
    %v1346 = vpop.f32.mrb[0].mxu0
    %v1347 = vadd.f32 %v435, %v1346
    %v1348 = vpop.f32.mrb[0].mxu0
    %v1349 = vadd.f32 %v439, %v1348
    %v1350 = vpop.f32.mrb[0].mxu0
    %v1351 = vpop.f32.mrb[0].mxu0
    %1352 = vdwg.mxu0
    %v1353 = vpack.c.bf16 %v1310, %v1310
    %v1355 = vshrl.u32 %v1353, 16
    %v1357 = vrot.slane %v1355, 3
    %1359 = vmatprep.subr.bf16.mxu0 %v612
    %1360 = vmatpush1.bf16.msra.mxu0 %v611
    %1361 = vmatprep.subr.bf16.mxu0 %v614
    %1362 = vmatpush1.bf16.msra.mxu0 %v613
    %1363 = vmatprep.subr.bf16.mxu0 %v616
    %1364 = vmatpush1.bf16.msra.mxu0 %v615
    %1365 = vmatprep.subr.bf16.mxu0 %v618
    %1366 = vmatpush1.bf16.msra.mxu0 %v617
    %1367 = vmatprep.subr.bf16.mxu0 %v620
    %1368 = vmatpush1.bf16.msra.mxu0 %v619
    %1369 = vmatprep.subr.bf16.mxu0 %v622
    %1370 = vmatpush1.bf16.msra.mxu0 %v621
    %1371 = vmatprep.subr.bf16.mxu0 %v624
    %1372 = vmatpush1.bf16.msra.mxu0 %v623
    %1373 = vmatprep.subr.bf16.mxu0 %v626
    %1374 = vmatpush1.bf16.msra.mxu0 %v625
    %1375 = vmatprep.subr.bf16.mxu0 0
    %1376 = vmatpush1.bf16.msra.mxu0 0
    %1377 = vmatprep.subr.bf16.mxu0 0
    %1378 = vmatpush1.bf16.msra.mxu0 0
    %1379 = vmatprep.subr.bf16.mxu0 0
    %1380 = vmatpush1.bf16.msra.mxu0 0
    %1381 = vmatprep.subr.bf16.mxu0 0
    %1382 = vmatpush1.bf16.msra.mxu0 0
    %1383 = vmatprep.subr.bf16.mxu0 0
    %1384 = vmatpush1.bf16.msra.mxu0 0
    %1385 = vmatprep.subr.bf16.mxu0 0
    %1386 = vmatpush1.bf16.msra.mxu0 0
    %1387 = vmatprep.subr.bf16.mxu0 0
    %1388 = vmatpush1.bf16.msra.mxu0 0
    %1389 = vmatprep.subr.bf16.mxu0 0
    %1390 = vmatpush1.bf16.msra.mxu0 0
    %1391 = vmatprep.mubr.bf16.mxu0 0
    %1392 = vmatmul.mubr.bf16.gmra.mrb[0].mxu0 %v1357
    %v1393 = vpop.f32.mrb[0].mxu0
    %v1394 = vadd.f32 0.0, %v1393
    %v1395 = vpop.f32.mrb[0].mxu0
    %v1396 = vadd.f32 0.0, %v1395
    %v1397 = vpop.f32.mrb[0].mxu0
    %v1398 = vpop.f32.mrb[0].mxu0
    %1399 = vdwg.mxu0
    %v1400 = vadd.f32 %v1347, %v1394
    %v1401 = vadd.f32 %v1349, %v1396
    %v1402 = vxor.u32 %v1400, 2147483648
    %v1403 = vxor.u32 %v1401, 2147483648
    %v1404 = vmul.f32 %v1402, 1.442695
    %v1405 = vpow.pop %v1404
    %v1406 = vmul.f32 %v1403, 1.442695
    %v1407 = vpow.pop %v1406
    %v1408 = vadd.f32 %v1405, 1.0
    %v1409 = vadd.f32 %v1407, 1.0
    %v1410 = vrcp.pop %v1408
    %v1411 = vmul.f32 1.0, %v1410
    %v1412 = vrcp.pop %v1409
    %v1413 = vmul.f32 1.0, %v1412
    %v1414 = vmul.f32 %v1413, 2.0
    %v1415 = vsub.f32 %v1414, 1.0
    %v1417 = vrot.slane %v1415, 1
    %v1419 = vsel %vm429, %v1308, %v1417
    %v1421 = vrot.slane %v1419, 7
    %v1423 = vmul.f32 %v1411, %v1421
    %1424 = vrot.lane.b32.xlu0 %v1423, 64
    %v1425 = vpop.permute.xlu0 %1424
    %v1426 = vadd.f32 %v1423, %v1425
    %v1427 = vtanh.pop %v1426
    %v1428 = vmul.f32 %v1413, %v1427
    %v1429 = vpack.c.bf16 %v1428, %v1428
    %1430 = vmatprep.subr.bf16.mxu0 %v612
    %1431 = vmatpush1.bf16.msra.mxu0 %v611
    %1432 = vmatprep.subr.bf16.mxu0 %v614
    %1433 = vmatpush1.bf16.msra.mxu0 %v613
    %1434 = vmatprep.subr.bf16.mxu0 %v616
    %1435 = vmatpush1.bf16.msra.mxu0 %v615
    %1436 = vmatprep.subr.bf16.mxu0 %v618
    %1437 = vmatpush1.bf16.msra.mxu0 %v617
    %1438 = vmatprep.subr.bf16.mxu0 %v620
    %1439 = vmatpush1.bf16.msra.mxu0 %v619
    %1440 = vmatprep.subr.bf16.mxu0 %v622
    %1441 = vmatpush1.bf16.msra.mxu0 %v621
    %1442 = vmatprep.subr.bf16.mxu0 %v624
    %1443 = vmatpush1.bf16.msra.mxu0 %v623
    %1444 = vmatprep.subr.bf16.mxu0 %v626
    %1445 = vmatpush1.bf16.msra.mxu0 %v625
    %1446 = vmatprep.subr.bf16.mxu0 0
    %1447 = vmatpush1.bf16.msra.mxu0 0
    %1448 = vmatprep.subr.bf16.mxu0 0
    %1449 = vmatpush1.bf16.msra.mxu0 0
    %1450 = vmatprep.subr.bf16.mxu0 0
    %1451 = vmatpush1.bf16.msra.mxu0 0
    %1452 = vmatprep.subr.bf16.mxu0 0
    %1453 = vmatpush1.bf16.msra.mxu0 0
    %1454 = vmatprep.subr.bf16.mxu0 0
    %1455 = vmatpush1.bf16.msra.mxu0 0
    %1456 = vmatprep.subr.bf16.mxu0 0
    %1457 = vmatpush1.bf16.msra.mxu0 0
    %1458 = vmatprep.subr.bf16.mxu0 0
    %1459 = vmatpush1.bf16.msra.mxu0 0
    %1460 = vmatprep.subr.bf16.mxu0 0
    %1461 = vmatpush1.bf16.msra.mxu0 0
    %1462 = vmatprep.mubr.bf16.mxu0 0
    %1463 = vmatmul.mubr.bf16.gmra.mrb[0].mxu0 %v1429
    %v1464 = vpop.f32.mrb[0].mxu0
    %v1465 = vadd.f32 0.0, %v1464
    %v1466 = vpop.f32.mrb[0].mxu0
    %v1467 = vadd.f32 0.0, %v1466
    %v1468 = vpop.f32.mrb[0].mxu0
    %v1469 = vpop.f32.mrb[0].mxu0
    %1470 = vdwg.mxu0
    %v1473 = vrot.slane %v1465, 7
    %v1474 = vrot.slane %v1467, 7
    %v1477 = vadd.f32 %v1347, %v1473
    %v1478 = vadd.f32 %v1349, %v1474
    %v1479 = vxor.u32 %v1477, 2147483648
    %v1480 = vxor.u32 %v1478, 2147483648
    %v1481 = vmul.f32 %v1479, 1.442695
    %v1482 = vpow.pop %v1481
    %v1483 = vmul.f32 %v1480, 1.442695
    %v1484 = vpow.pop %v1483
    %v1485 = vadd.f32 %v1482, 1.0
    %v1486 = vadd.f32 %v1484, 1.0
    %v1487 = vrcp.pop %v1485
    %v1488 = vmul.f32 1.0, %v1487
    %v1489 = vrcp.pop %v1486
    %v1490 = vmul.f32 1.0, %v1489
    %v1491 = vmul.f32 %v1490, 2.0
    %v1492 = vsub.f32 %v1491, 1.0
    %v1494 = vrot.slane %v1492, 1
    %v1496 = vsel %vm429, %v1426, %v1494
    %v1498 = vrot.slane %v1496, 7
    %v1500 = vmul.f32 %v1488, %v1498
    %v1502 = vrot.slane %v1500, 1
    %1504 = vrot.lane.b32.xlu0 %v1502, 64
    %v1505 = vpop.permute.xlu0 %1504
    %v1507 = vrot.slane %v1505, 7
    %v1509 = vadd.f32 %v1500, %v1507
    %v1510 = vtanh.pop %v1509
    %v1511 = vmul.f32 %v1490, %v1510
    %v1512 = vpack.c.bf16 %v1511, %v1511
    %v1514 = vshrl.u32 %v1512, 16
    %1517 = vmatprep.subr.bf16.mxu0 %v612
    %1518 = vmatpush1.bf16.msra.mxu0 %v611
    %1519 = vmatprep.subr.bf16.mxu0 %v614
    %1520 = vmatpush1.bf16.msra.mxu0 %v613
    %1521 = vmatprep.subr.bf16.mxu0 %v616
    %1522 = vmatpush1.bf16.msra.mxu0 %v615
    %1523 = vmatprep.subr.bf16.mxu0 %v618
    %1524 = vmatpush1.bf16.msra.mxu0 %v617
    %1525 = vmatprep.subr.bf16.mxu0 %v620
    %1526 = vmatpush1.bf16.msra.mxu0 %v619
    %1527 = vmatprep.subr.bf16.mxu0 %v622
    %1528 = vmatpush1.bf16.msra.mxu0 %v621
    %1529 = vmatprep.subr.bf16.mxu0 %v624
    %1530 = vmatpush1.bf16.msra.mxu0 %v623
    %1531 = vmatprep.subr.bf16.mxu0 %v626
    %1532 = vmatpush1.bf16.msra.mxu0 %v625
    %1533 = vmatprep.subr.bf16.mxu0 0
    %1534 = vmatpush1.bf16.msra.mxu0 0
    %1535 = vmatprep.subr.bf16.mxu0 0
    %1536 = vmatpush1.bf16.msra.mxu0 0
    %1537 = vmatprep.subr.bf16.mxu0 0
    %1538 = vmatpush1.bf16.msra.mxu0 0
    %1539 = vmatprep.subr.bf16.mxu0 0
    %1540 = vmatpush1.bf16.msra.mxu0 0
    %1541 = vmatprep.subr.bf16.mxu0 0
    %1542 = vmatpush1.bf16.msra.mxu0 0
    %1543 = vmatprep.subr.bf16.mxu0 0
    %1544 = vmatpush1.bf16.msra.mxu0 0
    %1545 = vmatprep.subr.bf16.mxu0 0
    %1546 = vmatpush1.bf16.msra.mxu0 0
    %1547 = vmatprep.subr.bf16.mxu0 0
    %1548 = vmatpush1.bf16.msra.mxu0 0
    %1549 = vmatprep.mubr.bf16.mxu0 0
    %1550 = vmatmul.mubr.bf16.gmra.mrb[0].mxu0 %v1514
    %v1551 = vpop.f32.mrb[0].mxu0
    %v1552 = vadd.f32 0.0, %v1551
    %v1553 = vpop.f32.mrb[0].mxu0
    %v1554 = vadd.f32 0.0, %v1553
    %v1555 = vpop.f32.mrb[0].mxu0
    %v1556 = vpop.f32.mrb[0].mxu0
    %1557 = vdwg.mxu0
    %v1560 = vrot.slane %v1552, 6
    %v1561 = vrot.slane %v1554, 6
    %v1564 = vadd.f32 %v1347, %v1560
    %v1565 = vadd.f32 %v1349, %v1561
    %v1566 = vxor.u32 %v1564, 2147483648
    %v1567 = vxor.u32 %v1565, 2147483648
    %v1568 = vmul.f32 %v1566, 1.442695
    %v1569 = vpow.pop %v1568
    %v1570 = vmul.f32 %v1567, 1.442695
    %v1571 = vpow.pop %v1570
    %v1572 = vadd.f32 %v1569, 1.0
    %v1573 = vadd.f32 %v1571, 1.0
    %v1574 = vrcp.pop %v1572
    %v1575 = vmul.f32 1.0, %v1574
    %v1576 = vrcp.pop %v1573
    %v1577 = vmul.f32 1.0, %v1576
    %v1578 = vmul.f32 %v1577, 2.0
    %v1579 = vsub.f32 %v1578, 1.0
    %v1581 = vrot.slane %v1579, 1
    %v1583 = vsel %vm429, %v1509, %v1581
    %v1585 = vrot.slane %v1583, 7
    %v1587 = vmul.f32 %v1575, %v1585
    %v1589 = vrot.slane %v1587, 2
    %1591 = vrot.lane.b32.xlu0 %v1589, 64
    %v1592 = vpop.permute.xlu0 %1591
    %v1594 = vrot.slane %v1592, 6
    %v1596 = vadd.f32 %v1587, %v1594
    %v1597 = vtanh.pop %v1596
    %v1598 = vmul.f32 %v1577, %v1597
    %v1599 = vpack.c.bf16 %v1598, %v1598
    %v1601 = vrot.slane %v1599, 1
    %1603 = vmatprep.subr.bf16.mxu0 %v612
    %1604 = vmatpush1.bf16.msra.mxu0 %v611
    %1605 = vmatprep.subr.bf16.mxu0 %v614
    %1606 = vmatpush1.bf16.msra.mxu0 %v613
    %1607 = vmatprep.subr.bf16.mxu0 %v616
    %1608 = vmatpush1.bf16.msra.mxu0 %v615
    %1609 = vmatprep.subr.bf16.mxu0 %v618
    %1610 = vmatpush1.bf16.msra.mxu0 %v617
    %1611 = vmatprep.subr.bf16.mxu0 %v620
    %1612 = vmatpush1.bf16.msra.mxu0 %v619
    %1613 = vmatprep.subr.bf16.mxu0 %v622
    %1614 = vmatpush1.bf16.msra.mxu0 %v621
    %1615 = vmatprep.subr.bf16.mxu0 %v624
    %1616 = vmatpush1.bf16.msra.mxu0 %v623
    %1617 = vmatprep.subr.bf16.mxu0 %v626
    %1618 = vmatpush1.bf16.msra.mxu0 %v625
    %1619 = vmatprep.subr.bf16.mxu0 0
    %1620 = vmatpush1.bf16.msra.mxu0 0
    %1621 = vmatprep.subr.bf16.mxu0 0
    %1622 = vmatpush1.bf16.msra.mxu0 0
    %1623 = vmatprep.subr.bf16.mxu0 0
    %1624 = vmatpush1.bf16.msra.mxu0 0
    %1625 = vmatprep.subr.bf16.mxu0 0
    %1626 = vmatpush1.bf16.msra.mxu0 0
    %1627 = vmatprep.subr.bf16.mxu0 0
    %1628 = vmatpush1.bf16.msra.mxu0 0
    %1629 = vmatprep.subr.bf16.mxu0 0
    %1630 = vmatpush1.bf16.msra.mxu0 0
    %1631 = vmatprep.subr.bf16.mxu0 0
    %1632 = vmatpush1.bf16.msra.mxu0 0
    %1633 = vmatprep.subr.bf16.mxu0 0
    %1634 = vmatpush1.bf16.msra.mxu0 0
    %1635 = vmatprep.mubr.bf16.mxu0 0
    %1636 = vmatmul.mubr.bf16.gmra.mrb[0].mxu0 %v1601
    %v1637 = vpop.f32.mrb[0].mxu0
    %v1638 = vadd.f32 0.0, %v1637
    %v1639 = vpop.f32.mrb[0].mxu0
    %v1640 = vadd.f32 0.0, %v1639
    %v1641 = vpop.f32.mrb[0].mxu0
    %v1642 = vpop.f32.mrb[0].mxu0
    %1643 = vdwg.mxu0
    %v1646 = vrot.slane %v1638, 5
    %v1647 = vrot.slane %v1640, 5
    %v1650 = vadd.f32 %v1347, %v1646
    %v1651 = vadd.f32 %v1349, %v1647
    %v1652 = vxor.u32 %v1650, 2147483648
    %v1653 = vxor.u32 %v1651, 2147483648
    %v1654 = vmul.f32 %v1652, 1.442695
    %v1655 = vpow.pop %v1654
    %v1656 = vmul.f32 %v1653, 1.442695
    %v1657 = vpow.pop %v1656
    %v1658 = vadd.f32 %v1655, 1.0
    %v1659 = vadd.f32 %v1657, 1.0
    %v1660 = vrcp.pop %v1658
    %v1661 = vmul.f32 1.0, %v1660
    %v1662 = vrcp.pop %v1659
    %v1663 = vmul.f32 1.0, %v1662
    %v1664 = vmul.f32 %v1663, 2.0
    %v1665 = vsub.f32 %v1664, 1.0
    %v1667 = vrot.slane %v1665, 1
    %v1669 = vsel %vm429, %v1596, %v1667
    %v1671 = vrot.slane %v1669, 7
    %v1673 = vmul.f32 %v1661, %v1671
    %v1675 = vrot.slane %v1673, 3
    %1677 = vrot.lane.b32.xlu0 %v1675, 64
    %v1678 = vpop.permute.xlu0 %1677
    %v1680 = vrot.slane %v1678, 5
    %v1682 = vadd.f32 %v1673, %v1680
    %v1683 = vtanh.pop %v1682
    %v1684 = vmul.f32 %v1663, %v1683
    %v1685 = vpack.c.bf16 %v1684, %v1684
    %v1687 = vshrl.u32 %v1685, 16
    %v1689 = vrot.slane %v1687, 1
    %1691 = vmatprep.subr.bf16.mxu0 %v612
    %1692 = vmatpush1.bf16.msra.mxu0 %v611
    %1693 = vmatprep.subr.bf16.mxu0 %v614
    %1694 = vmatpush1.bf16.msra.mxu0 %v613
    %1695 = vmatprep.subr.bf16.mxu0 %v616
    %1696 = vmatpush1.bf16.msra.mxu0 %v615
    %1697 = vmatprep.subr.bf16.mxu0 %v618
    %1698 = vmatpush1.bf16.msra.mxu0 %v617
    %1699 = vmatprep.subr.bf16.mxu0 %v620
    %1700 = vmatpush1.bf16.msra.mxu0 %v619
    %1701 = vmatprep.subr.bf16.mxu0 %v622
    %1702 = vmatpush1.bf16.msra.mxu0 %v621
    %1703 = vmatprep.subr.bf16.mxu0 %v624
    %1704 = vmatpush1.bf16.msra.mxu0 %v623
    %1705 = vmatprep.subr.bf16.mxu0 %v626
    %1706 = vmatpush1.bf16.msra.mxu0 %v625
    %1707 = vmatprep.subr.bf16.mxu0 0
    %1708 = vmatpush1.bf16.msra.mxu0 0
    %1709 = vmatprep.subr.bf16.mxu0 0
    %1710 = vmatpush1.bf16.msra.mxu0 0
    %1711 = vmatprep.subr.bf16.mxu0 0
    %1712 = vmatpush1.bf16.msra.mxu0 0
    %1713 = vmatprep.subr.bf16.mxu0 0
    %1714 = vmatpush1.bf16.msra.mxu0 0
    %1715 = vmatprep.subr.bf16.mxu0 0
    %1716 = vmatpush1.bf16.msra.mxu0 0
    %1717 = vmatprep.subr.bf16.mxu0 0
    %1718 = vmatpush1.bf16.msra.mxu0 0
    %1719 = vmatprep.subr.bf16.mxu0 0
    %1720 = vmatpush1.bf16.msra.mxu0 0
    %1721 = vmatprep.subr.bf16.mxu0 0
    %1722 = vmatpush1.bf16.msra.mxu0 0
    %1723 = vmatprep.mubr.bf16.mxu0 0
    %1724 = vmatmul.mubr.bf16.gmra.mrb[0].mxu0 %v1689
    %v1725 = vpop.f32.mrb[0].mxu0
    %v1726 = vadd.f32 0.0, %v1725
    %v1727 = vpop.f32.mrb[0].mxu0
    %v1728 = vadd.f32 0.0, %v1727
    %v1729 = vpop.f32.mrb[0].mxu0
    %v1730 = vpop.f32.mrb[0].mxu0
    %1731 = vdwg.mxu0
    %v1734 = vrot.slane %v1726, 4
    %v1735 = vrot.slane %v1728, 4
    %v1738 = vadd.f32 %v1347, %v1734
    %v1739 = vadd.f32 %v1349, %v1735
    %v1740 = vxor.u32 %v1738, 2147483648
    %v1741 = vxor.u32 %v1739, 2147483648
    %v1742 = vmul.f32 %v1740, 1.442695
    %v1743 = vpow.pop %v1742
    %v1744 = vmul.f32 %v1741, 1.442695
    %v1745 = vpow.pop %v1744
    %v1746 = vadd.f32 %v1743, 1.0
    %v1747 = vadd.f32 %v1745, 1.0
    %v1748 = vrcp.pop %v1746
    %v1749 = vmul.f32 1.0, %v1748
    %v1750 = vrcp.pop %v1747
    %v1751 = vmul.f32 1.0, %v1750
    %v1752 = vmul.f32 %v1751, 2.0
    %v1753 = vsub.f32 %v1752, 1.0
    %v1755 = vrot.slane %v1753, 1
    %v1757 = vsel %vm429, %v1682, %v1755
    %v1759 = vrot.slane %v1757, 7
    %v1761 = vmul.f32 %v1749, %v1759
    %v1763 = vrot.slane %v1761, 4
    %1765 = vrot.lane.b32.xlu0 %v1763, 64
    %v1766 = vpop.permute.xlu0 %1765
    %v1768 = vrot.slane %v1766, 4
    %v1770 = vadd.f32 %v1761, %v1768
    %v1771 = vtanh.pop %v1770
    %v1772 = vmul.f32 %v1751, %v1771
    %v1773 = vpack.c.bf16 %v1772, %v1772
    %v1775 = vrot.slane %v1773, 2
    %1777 = vmatprep.subr.bf16.mxu0 %v612
    %1778 = vmatpush1.bf16.msra.mxu0 %v611
    %1779 = vmatprep.subr.bf16.mxu0 %v614
    %1780 = vmatpush1.bf16.msra.mxu0 %v613
    %1781 = vmatprep.subr.bf16.mxu0 %v616
    %1782 = vmatpush1.bf16.msra.mxu0 %v615
    %1783 = vmatprep.subr.bf16.mxu0 %v618
    %1784 = vmatpush1.bf16.msra.mxu0 %v617
    %1785 = vmatprep.subr.bf16.mxu0 %v620
    %1786 = vmatpush1.bf16.msra.mxu0 %v619
    %1787 = vmatprep.subr.bf16.mxu0 %v622
    %1788 = vmatpush1.bf16.msra.mxu0 %v621
    %1789 = vmatprep.subr.bf16.mxu0 %v624
    %1790 = vmatpush1.bf16.msra.mxu0 %v623
    %1791 = vmatprep.subr.bf16.mxu0 %v626
    %1792 = vmatpush1.bf16.msra.mxu0 %v625
    %1793 = vmatprep.subr.bf16.mxu0 0
    %1794 = vmatpush1.bf16.msra.mxu0 0
    %1795 = vmatprep.subr.bf16.mxu0 0
    %1796 = vmatpush1.bf16.msra.mxu0 0
    %1797 = vmatprep.subr.bf16.mxu0 0
    %1798 = vmatpush1.bf16.msra.mxu0 0
    %1799 = vmatprep.subr.bf16.mxu0 0
    %1800 = vmatpush1.bf16.msra.mxu0 0
    %1801 = vmatprep.subr.bf16.mxu0 0
    %1802 = vmatpush1.bf16.msra.mxu0 0
    %1803 = vmatprep.subr.bf16.mxu0 0
    %1804 = vmatpush1.bf16.msra.mxu0 0
    %1805 = vmatprep.subr.bf16.mxu0 0
    %1806 = vmatpush1.bf16.msra.mxu0 0
    %1807 = vmatprep.subr.bf16.mxu0 0
    %1808 = vmatpush1.bf16.msra.mxu0 0
    %1809 = vmatprep.mubr.bf16.mxu0 0
    %1810 = vmatmul.mubr.bf16.gmra.mrb[0].mxu0 %v1775
    %v1811 = vpop.f32.mrb[0].mxu0
    %v1812 = vadd.f32 0.0, %v1811
    %v1813 = vpop.f32.mrb[0].mxu0
    %v1814 = vadd.f32 0.0, %v1813
    %v1815 = vpop.f32.mrb[0].mxu0
    %v1816 = vpop.f32.mrb[0].mxu0
    %1817 = vdwg.mxu0
    %v1820 = vrot.slane %v1812, 3
    %v1821 = vrot.slane %v1814, 3
    %v1824 = vadd.f32 %v1347, %v1820
    %v1825 = vadd.f32 %v1349, %v1821
    %v1826 = vxor.u32 %v1824, 2147483648
    %v1827 = vxor.u32 %v1825, 2147483648
    %v1828 = vmul.f32 %v1826, 1.442695
    %v1829 = vpow.pop %v1828
    %v1830 = vmul.f32 %v1827, 1.442695
    %v1831 = vpow.pop %v1830
    %v1832 = vadd.f32 %v1829, 1.0
    %v1833 = vadd.f32 %v1831, 1.0
    %v1834 = vrcp.pop %v1832
    %v1835 = vmul.f32 1.0, %v1834
    %v1836 = vrcp.pop %v1833
    %v1837 = vmul.f32 1.0, %v1836
    %v1838 = vmul.f32 %v1837, 2.0
    %v1839 = vsub.f32 %v1838, 1.0
    %v1841 = vrot.slane %v1839, 1
    %v1843 = vsel %vm429, %v1770, %v1841
    %v1845 = vrot.slane %v1843, 7
    %v1847 = vmul.f32 %v1835, %v1845
    %v1849 = vrot.slane %v1847, 5
    %1851 = vrot.lane.b32.xlu0 %v1849, 64
    %v1852 = vpop.permute.xlu0 %1851
    %v1854 = vrot.slane %v1852, 3
    %v1856 = vadd.f32 %v1847, %v1854
    %v1857 = vtanh.pop %v1856
    %v1858 = vmul.f32 %v1837, %v1857
    %v1859 = vpack.c.bf16 %v1858, %v1858
    %v1861 = vshrl.u32 %v1859, 16
    %v1863 = vrot.slane %v1861, 2
    %1865 = vmatprep.subr.bf16.mxu0 %v612
    %1866 = vmatpush1.bf16.msra.mxu0 %v611
    %1867 = vmatprep.subr.bf16.mxu0 %v614
    %1868 = vmatpush1.bf16.msra.mxu0 %v613
    %1869 = vmatprep.subr.bf16.mxu0 %v616
    %1870 = vmatpush1.bf16.msra.mxu0 %v615
    %1871 = vmatprep.subr.bf16.mxu0 %v618
    %1872 = vmatpush1.bf16.msra.mxu0 %v617
    %1873 = vmatprep.subr.bf16.mxu0 %v620
    %1874 = vmatpush1.bf16.msra.mxu0 %v619
    %1875 = vmatprep.subr.bf16.mxu0 %v622
    %1876 = vmatpush1.bf16.msra.mxu0 %v621
    %1877 = vmatprep.subr.bf16.mxu0 %v624
    %1878 = vmatpush1.bf16.msra.mxu0 %v623
    %1879 = vmatprep.subr.bf16.mxu0 %v626
    %1880 = vmatpush1.bf16.msra.mxu0 %v625
    %1881 = vmatprep.subr.bf16.mxu0 0
    %1882 = vmatpush1.bf16.msra.mxu0 0
    %1883 = vmatprep.subr.bf16.mxu0 0
    %1884 = vmatpush1.bf16.msra.mxu0 0
    %1885 = vmatprep.subr.bf16.mxu0 0
    %1886 = vmatpush1.bf16.msra.mxu0 0
    %1887 = vmatprep.subr.bf16.mxu0 0
    %1888 = vmatpush1.bf16.msra.mxu0 0
    %1889 = vmatprep.subr.bf16.mxu0 0
    %1890 = vmatpush1.bf16.msra.mxu0 0
    %1891 = vmatprep.subr.bf16.mxu0 0
    %1892 = vmatpush1.bf16.msra.mxu0 0
    %1893 = vmatprep.subr.bf16.mxu0 0
    %1894 = vmatpush1.bf16.msra.mxu0 0
    %1895 = vmatprep.subr.bf16.mxu0 0
    %1896 = vmatpush1.bf16.msra.mxu0 0
    %1897 = vmatprep.mubr.bf16.mxu0 0
    %1898 = vmatmul.mubr.bf16.gmra.mrb[0].mxu0 %v1863
    %v1899 = vpop.f32.mrb[0].mxu0
    %v1900 = vadd.f32 0.0, %v1899
    %v1901 = vpop.f32.mrb[0].mxu0
    %v1902 = vadd.f32 0.0, %v1901
    %v1903 = vpop.f32.mrb[0].mxu0
    %v1904 = vpop.f32.mrb[0].mxu0
    %1905 = vdwg.mxu0
    %v1908 = vrot.slane %v1900, 2
    %v1909 = vrot.slane %v1902, 2
    %v1912 = vadd.f32 %v1347, %v1908
    %v1913 = vadd.f32 %v1349, %v1909
    %v1914 = vxor.u32 %v1912, 2147483648
    %v1915 = vxor.u32 %v1913, 2147483648
    %v1916 = vmul.f32 %v1914, 1.442695
    %v1917 = vpow.pop %v1916
    %v1918 = vmul.f32 %v1915, 1.442695
    %v1919 = vpow.pop %v1918
    %v1920 = vadd.f32 %v1917, 1.0
    %v1921 = vadd.f32 %v1919, 1.0
    %v1922 = vrcp.pop %v1920
    %v1923 = vmul.f32 1.0, %v1922
    %v1924 = vrcp.pop %v1921
    %v1925 = vmul.f32 1.0, %v1924
    %v1926 = vmul.f32 %v1925, 2.0
    %v1927 = vsub.f32 %v1926, 1.0
    %v1929 = vrot.slane %v1927, 1
    %v1931 = vsel %vm429, %v1856, %v1929
    %v1933 = vrot.slane %v1931, 7
    %v1935 = vmul.f32 %v1923, %v1933
    %v1937 = vrot.slane %v1935, 6
    %1939 = vrot.lane.b32.xlu0 %v1937, 64
    %v1940 = vpop.permute.xlu0 %1939
    %v1942 = vrot.slane %v1940, 2
    %v1944 = vadd.f32 %v1935, %v1942
    %v1945 = vtanh.pop %v1944
    %v1946 = vmul.f32 %v1925, %v1945
    %v1947 = vpack.c.bf16 %v1946, %v1946
    %v1949 = vrot.slane %v1947, 3
    %1951 = vmatprep.subr.bf16.mxu0 %v612
    %1952 = vmatpush1.bf16.msra.mxu0 %v611
    %1953 = vmatprep.subr.bf16.mxu0 %v614
    %1954 = vmatpush1.bf16.msra.mxu0 %v613
    %1955 = vmatprep.subr.bf16.mxu0 %v616
    %1956 = vmatpush1.bf16.msra.mxu0 %v615
    %1957 = vmatprep.subr.bf16.mxu0 %v618
    %1958 = vmatpush1.bf16.msra.mxu0 %v617
    %1959 = vmatprep.subr.bf16.mxu0 %v620
    %1960 = vmatpush1.bf16.msra.mxu0 %v619
    %1961 = vmatprep.subr.bf16.mxu0 %v622
    %1962 = vmatpush1.bf16.msra.mxu0 %v621
    %1963 = vmatprep.subr.bf16.mxu0 %v624
    %1964 = vmatpush1.bf16.msra.mxu0 %v623
    %1965 = vmatprep.subr.bf16.mxu0 %v626
    %1966 = vmatpush1.bf16.msra.mxu0 %v625
    %1967 = vmatprep.subr.bf16.mxu0 0
    %1968 = vmatpush1.bf16.msra.mxu0 0
    %1969 = vmatprep.subr.bf16.mxu0 0
    %1970 = vmatpush1.bf16.msra.mxu0 0
    %1971 = vmatprep.subr.bf16.mxu0 0
    %1972 = vmatpush1.bf16.msra.mxu0 0
    %1973 = vmatprep.subr.bf16.mxu0 0
    %1974 = vmatpush1.bf16.msra.mxu0 0
    %1975 = vmatprep.subr.bf16.mxu0 0
    %1976 = vmatpush1.bf16.msra.mxu0 0
    %1977 = vmatprep.subr.bf16.mxu0 0
    %1978 = vmatpush1.bf16.msra.mxu0 0
    %1979 = vmatprep.subr.bf16.mxu0 0
    %1980 = vmatpush1.bf16.msra.mxu0 0
    %1981 = vmatprep.subr.bf16.mxu0 0
    %1982 = vmatpush1.bf16.msra.mxu0 0
    %1983 = vmatprep.mubr.bf16.mxu0 0
    %1984 = vmatmul.mubr.bf16.gmra.mrb[0].mxu0 %v1949
    %v1985 = vpop.f32.mrb[0].mxu0
    %v1986 = vadd.f32 0.0, %v1985
    %v1987 = vpop.f32.mrb[0].mxu0
    %v1988 = vadd.f32 0.0, %v1987
    %v1989 = vpop.f32.mrb[0].mxu0
    %v1990 = vpop.f32.mrb[0].mxu0
    %1991 = vdwg.mxu0
    %v1994 = vrot.slane %v1986, 1
    %v1995 = vrot.slane %v1988, 1
    %v1998 = vadd.f32 %v1347, %v1994
    %v1999 = vadd.f32 %v1349, %v1995
    %v2000 = vxor.u32 %v1998, 2147483648
    %v2001 = vxor.u32 %v1999, 2147483648
    %v2002 = vmul.f32 %v2000, 1.442695
    %v2003 = vpow.pop %v2002
    %v2004 = vmul.f32 %v2001, 1.442695
    %v2005 = vpow.pop %v2004
    %v2006 = vadd.f32 %v2003, 1.0
    %v2007 = vadd.f32 %v2005, 1.0
    %v2008 = vrcp.pop %v2006
    %v2009 = vmul.f32 1.0, %v2008
    %v2010 = vrcp.pop %v2007
    %v2011 = vmul.f32 1.0, %v2010
    %v2012 = vmul.f32 %v2011, 2.0
    %v2013 = vsub.f32 %v2012, 1.0
    %v2015 = vrot.slane %v2013, 1
    %v2017 = vsel %vm429, %v1944, %v2015
    %v2019 = vrot.slane %v2017, 7
    %v2021 = vmul.f32 %v2009, %v2019
    %v2023 = vrot.slane %v2021, 7
    %2025 = vrot.lane.b32.xlu0 %v2023, 64
    %v2026 = vpop.permute.xlu0 %2025
    %v2028 = vrot.slane %v2026, 1
    %v2030 = vadd.f32 %v2021, %v2028
    %v2031 = vtanh.pop %v2030
    %v2032 = vmul.f32 %v2011, %v2031
    %v2033 = vpack.c.bf16 %v388, %v388
    %2034 = vmatprep.subr.bf16.mxu0 %v491
    %2035 = vmatpush1.bf16.msra.mxu0 %v490
    %2036 = vmatprep.subr.bf16.mxu0 %v493
    %2037 = vmatpush1.bf16.msra.mxu0 %v492
    %2038 = vmatprep.subr.bf16.mxu0 %v495
    %2039 = vmatpush1.bf16.msra.mxu0 %v494
    %2040 = vmatprep.subr.bf16.mxu0 %v497
    %2041 = vmatpush1.bf16.msra.mxu0 %v496
    %2042 = vmatprep.subr.bf16.mxu0 %v499
    %2043 = vmatpush1.bf16.msra.mxu0 %v498
    %2044 = vmatprep.subr.bf16.mxu0 %v501
    %2045 = vmatpush1.bf16.msra.mxu0 %v500
    %2046 = vmatprep.subr.bf16.mxu0 %v503
    %2047 = vmatpush1.bf16.msra.mxu0 %v502
    %2048 = vmatprep.subr.bf16.mxu0 %v505
    %2049 = vmatpush1.bf16.msra.mxu0 %v504
    %2050 = vmatprep.subr.bf16.mxu0 0
    %2051 = vmatpush1.bf16.msra.mxu0 0
    %2052 = vmatprep.subr.bf16.mxu0 0
    %2053 = vmatpush1.bf16.msra.mxu0 0
    %2054 = vmatprep.subr.bf16.mxu0 0
    %2055 = vmatpush1.bf16.msra.mxu0 0
    %2056 = vmatprep.subr.bf16.mxu0 0
    %2057 = vmatpush1.bf16.msra.mxu0 0
    %2058 = vmatprep.subr.bf16.mxu0 0
    %2059 = vmatpush1.bf16.msra.mxu0 0
    %2060 = vmatprep.subr.bf16.mxu0 0
    %2061 = vmatpush1.bf16.msra.mxu0 0
    %2062 = vmatprep.subr.bf16.mxu0 0
    %2063 = vmatpush1.bf16.msra.mxu0 0
    %2064 = vmatprep.subr.bf16.mxu0 0
    %2065 = vmatpush1.bf16.msra.mxu0 0
    %2066 = vmatprep.mubr.bf16.mxu0 0
    %2067 = vmatmul.mubr.bf16.gmra.mrb[0].mxu0 %v2033
    %v2068 = vpop.f32.mrb[0].mxu0
    %v2069 = vadd.f32 %v435, %v2068
    %v2070 = vpop.f32.mrb[0].mxu0
    %v2071 = vadd.f32 %v439, %v2070
    %v2072 = vpop.f32.mrb[0].mxu0
    %v2073 = vpop.f32.mrb[0].mxu0
    %2074 = vdwg.mxu0
    %v2075 = vpack.c.bf16 %v2032, %v2032
    %v2077 = vshrl.u32 %v2075, 16
    %v2079 = vrot.slane %v2077, 3
    %2081 = vmatprep.subr.bf16.mxu0 %v612
    %2082 = vmatpush1.bf16.msra.mxu0 %v611
    %2083 = vmatprep.subr.bf16.mxu0 %v614
    %2084 = vmatpush1.bf16.msra.mxu0 %v613
    %2085 = vmatprep.subr.bf16.mxu0 %v616
    %2086 = vmatpush1.bf16.msra.mxu0 %v615
    %2087 = vmatprep.subr.bf16.mxu0 %v618
    %2088 = vmatpush1.bf16.msra.mxu0 %v617
    %2089 = vmatprep.subr.bf16.mxu0 %v620
    %2090 = vmatpush1.bf16.msra.mxu0 %v619
    %2091 = vmatprep.subr.bf16.mxu0 %v622
    %2092 = vmatpush1.bf16.msra.mxu0 %v621
    %2093 = vmatprep.subr.bf16.mxu0 %v624
    %2094 = vmatpush1.bf16.msra.mxu0 %v623
    %2095 = vmatprep.subr.bf16.mxu0 %v626
    %2096 = vmatpush1.bf16.msra.mxu0 %v625
    %2097 = vmatprep.subr.bf16.mxu0 0
    %2098 = vmatpush1.bf16.msra.mxu0 0
    %2099 = vmatprep.subr.bf16.mxu0 0
    %2100 = vmatpush1.bf16.msra.mxu0 0
    %2101 = vmatprep.subr.bf16.mxu0 0
    %2102 = vmatpush1.bf16.msra.mxu0 0
    %2103 = vmatprep.subr.bf16.mxu0 0
    %2104 = vmatpush1.bf16.msra.mxu0 0
    %2105 = vmatprep.subr.bf16.mxu0 0
    %2106 = vmatpush1.bf16.msra.mxu0 0
    %2107 = vmatprep.subr.bf16.mxu0 0
    %2108 = vmatpush1.bf16.msra.mxu0 0
    %2109 = vmatprep.subr.bf16.mxu0 0
    %2110 = vmatpush1.bf16.msra.mxu0 0
    %2111 = vmatprep.subr.bf16.mxu0 0
    %2112 = vmatpush1.bf16.msra.mxu0 0
    %2113 = vmatprep.mubr.bf16.mxu0 0
    %2114 = vmatmul.mubr.bf16.gmra.mrb[0].mxu0 %v2079
    %v2115 = vpop.f32.mrb[0].mxu0
    %v2116 = vadd.f32 0.0, %v2115
    %v2117 = vpop.f32.mrb[0].mxu0
    %v2118 = vadd.f32 0.0, %v2117
    %v2119 = vpop.f32.mrb[0].mxu0
    %v2120 = vpop.f32.mrb[0].mxu0
    %2121 = vdwg.mxu0
    %v2122 = vadd.f32 %v2069, %v2116
    %v2123 = vadd.f32 %v2071, %v2118
    %v2124 = vxor.u32 %v2122, 2147483648
    %v2125 = vxor.u32 %v2123, 2147483648
    %v2126 = vmul.f32 %v2124, 1.442695
    %v2127 = vpow.pop %v2126
    %v2128 = vmul.f32 %v2125, 1.442695
    %v2129 = vpow.pop %v2128
    %v2130 = vadd.f32 %v2127, 1.0
    %v2131 = vadd.f32 %v2129, 1.0
    %v2132 = vrcp.pop %v2130
    %v2133 = vmul.f32 1.0, %v2132
    %v2134 = vrcp.pop %v2131
    %v2135 = vmul.f32 1.0, %v2134
    %v2136 = vmul.f32 %v2135, 2.0
    %v2137 = vsub.f32 %v2136, 1.0
    %v2139 = vrot.slane %v2137, 1
    %v2141 = vsel %vm429, %v2030, %v2139
    %v2143 = vrot.slane %v2141, 7
    %v2145 = vmul.f32 %v2133, %v2143
    %2146 = vrot.lane.b32.xlu0 %v2145, 64
    %v2147 = vpop.permute.xlu0 %2146
    %v2148 = vadd.f32 %v2145, %v2147
    %v2149 = vtanh.pop %v2148
    %v2150 = vmul.f32 %v2135, %v2149
    %v2151 = vpack.c.bf16 %v2150, %v2150
    %2152 = vmatprep.subr.bf16.mxu0 %v612
    %2153 = vmatpush1.bf16.msra.mxu0 %v611
    %2154 = vmatprep.subr.bf16.mxu0 %v614
    %2155 = vmatpush1.bf16.msra.mxu0 %v613
    %2156 = vmatprep.subr.bf16.mxu0 %v616
    %2157 = vmatpush1.bf16.msra.mxu0 %v615
    %2158 = vmatprep.subr.bf16.mxu0 %v618
    %2159 = vmatpush1.bf16.msra.mxu0 %v617
    %2160 = vmatprep.subr.bf16.mxu0 %v620
    %2161 = vmatpush1.bf16.msra.mxu0 %v619
    %2162 = vmatprep.subr.bf16.mxu0 %v622
    %2163 = vmatpush1.bf16.msra.mxu0 %v621
    %2164 = vmatprep.subr.bf16.mxu0 %v624
    %2165 = vmatpush1.bf16.msra.mxu0 %v623
    %2166 = vmatprep.subr.bf16.mxu0 %v626
    %2167 = vmatpush1.bf16.msra.mxu0 %v625
    %2168 = vmatprep.subr.bf16.mxu0 0
    %2169 = vmatpush1.bf16.msra.mxu0 0
    %2170 = vmatprep.subr.bf16.mxu0 0
    %2171 = vmatpush1.bf16.msra.mxu0 0
    %2172 = vmatprep.subr.bf16.mxu0 0
    %2173 = vmatpush1.bf16.msra.mxu0 0
    %2174 = vmatprep.subr.bf16.mxu0 0
    %2175 = vmatpush1.bf16.msra.mxu0 0
    %2176 = vmatprep.subr.bf16.mxu0 0
    %2177 = vmatpush1.bf16.msra.mxu0 0
    %2178 = vmatprep.subr.bf16.mxu0 0
    %2179 = vmatpush1.bf16.msra.mxu0 0
    %2180 = vmatprep.subr.bf16.mxu0 0
    %2181 = vmatpush1.bf16.msra.mxu0 0
    %2182 = vmatprep.subr.bf16.mxu0 0
    %2183 = vmatpush1.bf16.msra.mxu0 0
    %2184 = vmatprep.mubr.bf16.mxu0 0
    %2185 = vmatmul.mubr.bf16.gmra.mrb[0].mxu0 %v2151
    %v2186 = vpop.f32.mrb[0].mxu0
    %v2187 = vadd.f32 0.0, %v2186
    %v2188 = vpop.f32.mrb[0].mxu0
    %v2189 = vadd.f32 0.0, %v2188
    %v2190 = vpop.f32.mrb[0].mxu0
    %v2191 = vpop.f32.mrb[0].mxu0
    %2192 = vdwg.mxu0
    %v2195 = vrot.slane %v2187, 7
    %v2196 = vrot.slane %v2189, 7
    %v2199 = vadd.f32 %v2069, %v2195
    %v2200 = vadd.f32 %v2071, %v2196
    %v2201 = vxor.u32 %v2199, 2147483648
    %v2202 = vxor.u32 %v2200, 2147483648
    %v2203 = vmul.f32 %v2201, 1.442695
    %v2204 = vpow.pop %v2203
    %v2205 = vmul.f32 %v2202, 1.442695
    %v2206 = vpow.pop %v2205
    %v2207 = vadd.f32 %v2204, 1.0
    %v2208 = vadd.f32 %v2206, 1.0
    %v2209 = vrcp.pop %v2207
    %v2210 = vmul.f32 1.0, %v2209
    %v2211 = vrcp.pop %v2208
    %v2212 = vmul.f32 1.0, %v2211
    %v2213 = vmul.f32 %v2212, 2.0
    %v2214 = vsub.f32 %v2213, 1.0
    %v2216 = vrot.slane %v2214, 1
    %v2218 = vsel %vm429, %v2148, %v2216
    %v2220 = vrot.slane %v2218, 7
    %v2222 = vmul.f32 %v2210, %v2220
    %v2224 = vrot.slane %v2222, 1
    %2226 = vrot.lane.b32.xlu0 %v2224, 64
    %v2227 = vpop.permute.xlu0 %2226
    %v2229 = vrot.slane %v2227, 7
    %v2231 = vadd.f32 %v2222, %v2229
    %v2232 = vtanh.pop %v2231
    %v2233 = vmul.f32 %v2212, %v2232
    %v2234 = vpack.c.bf16 %v2233, %v2233
    %v2236 = vshrl.u32 %v2234, 16
    %2239 = vmatprep.subr.bf16.mxu0 %v612
    %2240 = vmatpush1.bf16.msra.mxu0 %v611
    %2241 = vmatprep.subr.bf16.mxu0 %v614
    %2242 = vmatpush1.bf16.msra.mxu0 %v613
    %2243 = vmatprep.subr.bf16.mxu0 %v616
    %2244 = vmatpush1.bf16.msra.mxu0 %v615
    %2245 = vmatprep.subr.bf16.mxu0 %v618
    %2246 = vmatpush1.bf16.msra.mxu0 %v617
    %2247 = vmatprep.subr.bf16.mxu0 %v620
    %2248 = vmatpush1.bf16.msra.mxu0 %v619
    %2249 = vmatprep.subr.bf16.mxu0 %v622
    %2250 = vmatpush1.bf16.msra.mxu0 %v621
    %2251 = vmatprep.subr.bf16.mxu0 %v624
    %2252 = vmatpush1.bf16.msra.mxu0 %v623
    %2253 = vmatprep.subr.bf16.mxu0 %v626
    %2254 = vmatpush1.bf16.msra.mxu0 %v625
    %2255 = vmatprep.subr.bf16.mxu0 0
    %2256 = vmatpush1.bf16.msra.mxu0 0
    %2257 = vmatprep.subr.bf16.mxu0 0
    %2258 = vmatpush1.bf16.msra.mxu0 0
    %2259 = vmatprep.subr.bf16.mxu0 0
    %2260 = vmatpush1.bf16.msra.mxu0 0
    %2261 = vmatprep.subr.bf16.mxu0 0
    %2262 = vmatpush1.bf16.msra.mxu0 0
    %2263 = vmatprep.subr.bf16.mxu0 0
    %2264 = vmatpush1.bf16.msra.mxu0 0
    %2265 = vmatprep.subr.bf16.mxu0 0
    %2266 = vmatpush1.bf16.msra.mxu0 0
    %2267 = vmatprep.subr.bf16.mxu0 0
    %2268 = vmatpush1.bf16.msra.mxu0 0
    %2269 = vmatprep.subr.bf16.mxu0 0
    %2270 = vmatpush1.bf16.msra.mxu0 0
    %2271 = vmatprep.mubr.bf16.mxu0 0
    %2272 = vmatmul.mubr.bf16.gmra.mrb[0].mxu0 %v2236
    %v2273 = vpop.f32.mrb[0].mxu0
    %v2274 = vadd.f32 0.0, %v2273
    %v2275 = vpop.f32.mrb[0].mxu0
    %v2276 = vadd.f32 0.0, %v2275
    %v2277 = vpop.f32.mrb[0].mxu0
    %v2278 = vpop.f32.mrb[0].mxu0
    %2279 = vdwg.mxu0
    %v2282 = vrot.slane %v2274, 6
    %v2283 = vrot.slane %v2276, 6
    %v2286 = vadd.f32 %v2069, %v2282
    %v2287 = vadd.f32 %v2071, %v2283
    %v2288 = vxor.u32 %v2286, 2147483648
    %v2289 = vxor.u32 %v2287, 2147483648
    %v2290 = vmul.f32 %v2288, 1.442695
    %v2291 = vpow.pop %v2290
    %v2292 = vmul.f32 %v2289, 1.442695
    %v2293 = vpow.pop %v2292
    %v2294 = vadd.f32 %v2291, 1.0
    %v2295 = vadd.f32 %v2293, 1.0
    %v2296 = vrcp.pop %v2294
    %v2297 = vmul.f32 1.0, %v2296
    %v2298 = vrcp.pop %v2295
    %v2299 = vmul.f32 1.0, %v2298
    %v2300 = vmul.f32 %v2299, 2.0
    %v2301 = vsub.f32 %v2300, 1.0
    %v2303 = vrot.slane %v2301, 1
    %v2305 = vsel %vm429, %v2231, %v2303
    %v2307 = vrot.slane %v2305, 7
    %v2309 = vmul.f32 %v2297, %v2307
    %v2311 = vrot.slane %v2309, 2
    %2313 = vrot.lane.b32.xlu0 %v2311, 64
    %v2314 = vpop.permute.xlu0 %2313
    %v2316 = vrot.slane %v2314, 6
    %v2318 = vadd.f32 %v2309, %v2316
    %v2319 = vtanh.pop %v2318
    %v2320 = vmul.f32 %v2299, %v2319
    %v2321 = vpack.c.bf16 %v2320, %v2320
    %v2323 = vrot.slane %v2321, 1
    %2325 = vmatprep.subr.bf16.mxu0 %v612
    %2326 = vmatpush1.bf16.msra.mxu0 %v611
    %2327 = vmatprep.subr.bf16.mxu0 %v614
    %2328 = vmatpush1.bf16.msra.mxu0 %v613
    %2329 = vmatprep.subr.bf16.mxu0 %v616
    %2330 = vmatpush1.bf16.msra.mxu0 %v615
    %2331 = vmatprep.subr.bf16.mxu0 %v618
    %2332 = vmatpush1.bf16.msra.mxu0 %v617
    %2333 = vmatprep.subr.bf16.mxu0 %v620
    %2334 = vmatpush1.bf16.msra.mxu0 %v619
    %2335 = vmatprep.subr.bf16.mxu0 %v622
    %2336 = vmatpush1.bf16.msra.mxu0 %v621
    %2337 = vmatprep.subr.bf16.mxu0 %v624
    %2338 = vmatpush1.bf16.msra.mxu0 %v623
    %2339 = vmatprep.subr.bf16.mxu0 %v626
    %2340 = vmatpush1.bf16.msra.mxu0 %v625
    %2341 = vmatprep.subr.bf16.mxu0 0
    %2342 = vmatpush1.bf16.msra.mxu0 0
    %2343 = vmatprep.subr.bf16.mxu0 0
    %2344 = vmatpush1.bf16.msra.mxu0 0
    %2345 = vmatprep.subr.bf16.mxu0 0
    %2346 = vmatpush1.bf16.msra.mxu0 0
    %2347 = vmatprep.subr.bf16.mxu0 0
    %2348 = vmatpush1.bf16.msra.mxu0 0
    %2349 = vmatprep.subr.bf16.mxu0 0
    %2350 = vmatpush1.bf16.msra.mxu0 0
    %2351 = vmatprep.subr.bf16.mxu0 0
    %2352 = vmatpush1.bf16.msra.mxu0 0
    %2353 = vmatprep.subr.bf16.mxu0 0
    %2354 = vmatpush1.bf16.msra.mxu0 0
    %2355 = vmatprep.subr.bf16.mxu0 0
    %2356 = vmatpush1.bf16.msra.mxu0 0
    %2357 = vmatprep.mubr.bf16.mxu0 0
    %2358 = vmatmul.mubr.bf16.gmra.mrb[0].mxu0 %v2323
    %v2359 = vpop.f32.mrb[0].mxu0
    %v2360 = vadd.f32 0.0, %v2359
    %v2361 = vpop.f32.mrb[0].mxu0
    %v2362 = vadd.f32 0.0, %v2361
    %v2363 = vpop.f32.mrb[0].mxu0
    %v2364 = vpop.f32.mrb[0].mxu0
    %2365 = vdwg.mxu0
    %v2368 = vrot.slane %v2360, 5
    %v2369 = vrot.slane %v2362, 5
    %v2372 = vadd.f32 %v2069, %v2368
    %v2373 = vadd.f32 %v2071, %v2369
    %v2374 = vxor.u32 %v2372, 2147483648
    %v2375 = vxor.u32 %v2373, 2147483648
    %v2376 = vmul.f32 %v2374, 1.442695
    %v2377 = vpow.pop %v2376
    %v2378 = vmul.f32 %v2375, 1.442695
    %v2379 = vpow.pop %v2378
    %v2380 = vadd.f32 %v2377, 1.0
    %v2381 = vadd.f32 %v2379, 1.0
    %v2382 = vrcp.pop %v2380
    %v2383 = vmul.f32 1.0, %v2382
    %v2384 = vrcp.pop %v2381
    %v2385 = vmul.f32 1.0, %v2384
    %v2386 = vmul.f32 %v2385, 2.0
    %v2387 = vsub.f32 %v2386, 1.0
    %v2389 = vrot.slane %v2387, 1
    %v2391 = vsel %vm429, %v2318, %v2389
    %v2393 = vrot.slane %v2391, 7
    %v2395 = vmul.f32 %v2383, %v2393
    %v2397 = vrot.slane %v2395, 3
    %2399 = vrot.lane.b32.xlu0 %v2397, 64
    %v2400 = vpop.permute.xlu0 %2399
    %v2402 = vrot.slane %v2400, 5
    %v2404 = vadd.f32 %v2395, %v2402
    %v2405 = vtanh.pop %v2404
    %v2406 = vmul.f32 %v2385, %v2405
    %v2407 = vpack.c.bf16 %v2406, %v2406
    %v2409 = vshrl.u32 %v2407, 16
    %v2411 = vrot.slane %v2409, 1
    %2413 = vmatprep.subr.bf16.mxu0 %v612
    %2414 = vmatpush1.bf16.msra.mxu0 %v611
    %2415 = vmatprep.subr.bf16.mxu0 %v614
    %2416 = vmatpush1.bf16.msra.mxu0 %v613
    %2417 = vmatprep.subr.bf16.mxu0 %v616
    %2418 = vmatpush1.bf16.msra.mxu0 %v615
    %2419 = vmatprep.subr.bf16.mxu0 %v618
    %2420 = vmatpush1.bf16.msra.mxu0 %v617
    %2421 = vmatprep.subr.bf16.mxu0 %v620
    %2422 = vmatpush1.bf16.msra.mxu0 %v619
    %2423 = vmatprep.subr.bf16.mxu0 %v622
    %2424 = vmatpush1.bf16.msra.mxu0 %v621
    %2425 = vmatprep.subr.bf16.mxu0 %v624
    %2426 = vmatpush1.bf16.msra.mxu0 %v623
    %2427 = vmatprep.subr.bf16.mxu0 %v626
    %2428 = vmatpush1.bf16.msra.mxu0 %v625
    %2429 = vmatprep.subr.bf16.mxu0 0
    %2430 = vmatpush1.bf16.msra.mxu0 0
    %2431 = vmatprep.subr.bf16.mxu0 0
    %2432 = vmatpush1.bf16.msra.mxu0 0
    %2433 = vmatprep.subr.bf16.mxu0 0
    %2434 = vmatpush1.bf16.msra.mxu0 0
    %2435 = vmatprep.subr.bf16.mxu0 0
    %2436 = vmatpush1.bf16.msra.mxu0 0
    %2437 = vmatprep.subr.bf16.mxu0 0
    %2438 = vmatpush1.bf16.msra.mxu0 0
    %2439 = vmatprep.subr.bf16.mxu0 0
    %2440 = vmatpush1.bf16.msra.mxu0 0
    %2441 = vmatprep.subr.bf16.mxu0 0
    %2442 = vmatpush1.bf16.msra.mxu0 0
    %2443 = vmatprep.subr.bf16.mxu0 0
    %2444 = vmatpush1.bf16.msra.mxu0 0
    %2445 = vmatprep.mubr.bf16.mxu0 0
    %2446 = vmatmul.mubr.bf16.gmra.mrb[0].mxu0 %v2411
    %v2447 = vpop.f32.mrb[0].mxu0
    %v2448 = vadd.f32 0.0, %v2447
    %v2449 = vpop.f32.mrb[0].mxu0
    %v2450 = vadd.f32 0.0, %v2449
    %v2451 = vpop.f32.mrb[0].mxu0
    %v2452 = vpop.f32.mrb[0].mxu0
    %2453 = vdwg.mxu0
    %v2456 = vrot.slane %v2448, 4
    %v2457 = vrot.slane %v2450, 4
    %v2460 = vadd.f32 %v2069, %v2456
    %v2461 = vadd.f32 %v2071, %v2457
    %v2462 = vxor.u32 %v2460, 2147483648
    %v2463 = vxor.u32 %v2461, 2147483648
    %v2464 = vmul.f32 %v2462, 1.442695
    %v2465 = vpow.pop %v2464
    %v2466 = vmul.f32 %v2463, 1.442695
    %v2467 = vpow.pop %v2466
    %v2468 = vadd.f32 %v2465, 1.0
    %v2469 = vadd.f32 %v2467, 1.0
    %v2470 = vrcp.pop %v2468
    %v2471 = vmul.f32 1.0, %v2470
    %v2472 = vrcp.pop %v2469
    %v2473 = vmul.f32 1.0, %v2472
    %v2474 = vmul.f32 %v2473, 2.0
    %v2475 = vsub.f32 %v2474, 1.0
    %v2477 = vrot.slane %v2475, 1
    %v2479 = vsel %vm429, %v2404, %v2477
    %v2481 = vrot.slane %v2479, 7
    %v2483 = vmul.f32 %v2471, %v2481
    %v2485 = vrot.slane %v2483, 4
    %2487 = vrot.lane.b32.xlu0 %v2485, 64
    %v2488 = vpop.permute.xlu0 %2487
    %v2490 = vrot.slane %v2488, 4
    %v2492 = vadd.f32 %v2483, %v2490
    %v2493 = vtanh.pop %v2492
    %v2494 = vmul.f32 %v2473, %v2493
    %v2495 = vpack.c.bf16 %v2494, %v2494
    %v2497 = vrot.slane %v2495, 2
    %2499 = vmatprep.subr.bf16.mxu0 %v612
    %2500 = vmatpush1.bf16.msra.mxu0 %v611
    %2501 = vmatprep.subr.bf16.mxu0 %v614
    %2502 = vmatpush1.bf16.msra.mxu0 %v613
    %2503 = vmatprep.subr.bf16.mxu0 %v616
    %2504 = vmatpush1.bf16.msra.mxu0 %v615
    %2505 = vmatprep.subr.bf16.mxu0 %v618
    %2506 = vmatpush1.bf16.msra.mxu0 %v617
    %2507 = vmatprep.subr.bf16.mxu0 %v620
    %2508 = vmatpush1.bf16.msra.mxu0 %v619
    %2509 = vmatprep.subr.bf16.mxu0 %v622
    %2510 = vmatpush1.bf16.msra.mxu0 %v621
    %2511 = vmatprep.subr.bf16.mxu0 %v624
    %2512 = vmatpush1.bf16.msra.mxu0 %v623
    %2513 = vmatprep.subr.bf16.mxu0 %v626
    %2514 = vmatpush1.bf16.msra.mxu0 %v625
    %2515 = vmatprep.subr.bf16.mxu0 0
    %2516 = vmatpush1.bf16.msra.mxu0 0
    %2517 = vmatprep.subr.bf16.mxu0 0
    %2518 = vmatpush1.bf16.msra.mxu0 0
    %2519 = vmatprep.subr.bf16.mxu0 0
    %2520 = vmatpush1.bf16.msra.mxu0 0
    %2521 = vmatprep.subr.bf16.mxu0 0
    %2522 = vmatpush1.bf16.msra.mxu0 0
    %2523 = vmatprep.subr.bf16.mxu0 0
    %2524 = vmatpush1.bf16.msra.mxu0 0
    %2525 = vmatprep.subr.bf16.mxu0 0
    %2526 = vmatpush1.bf16.msra.mxu0 0
    %2527 = vmatprep.subr.bf16.mxu0 0
    %2528 = vmatpush1.bf16.msra.mxu0 0
    %2529 = vmatprep.subr.bf16.mxu0 0
    %2530 = vmatpush1.bf16.msra.mxu0 0
    %2531 = vmatprep.mubr.bf16.mxu0 0
    %2532 = vmatmul.mubr.bf16.gmra.mrb[0].mxu0 %v2497
    %v2533 = vpop.f32.mrb[0].mxu0
    %v2534 = vadd.f32 0.0, %v2533
    %v2535 = vpop.f32.mrb[0].mxu0
    %v2536 = vadd.f32 0.0, %v2535
    %v2537 = vpop.f32.mrb[0].mxu0
    %v2538 = vpop.f32.mrb[0].mxu0
    %2539 = vdwg.mxu0
    %v2542 = vrot.slane %v2534, 3
    %v2543 = vrot.slane %v2536, 3
    %v2546 = vadd.f32 %v2069, %v2542
    %v2547 = vadd.f32 %v2071, %v2543
    %v2548 = vxor.u32 %v2546, 2147483648
    %v2549 = vxor.u32 %v2547, 2147483648
    %v2550 = vmul.f32 %v2548, 1.442695
    %v2551 = vpow.pop %v2550
    %v2552 = vmul.f32 %v2549, 1.442695
    %v2553 = vpow.pop %v2552
    %v2554 = vadd.f32 %v2551, 1.0
    %v2555 = vadd.f32 %v2553, 1.0
    %v2556 = vrcp.pop %v2554
    %v2557 = vmul.f32 1.0, %v2556
    %v2558 = vrcp.pop %v2555
    %v2559 = vmul.f32 1.0, %v2558
    %v2560 = vmul.f32 %v2559, 2.0
    %v2561 = vsub.f32 %v2560, 1.0
    %v2563 = vrot.slane %v2561, 1
    %v2565 = vsel %vm429, %v2492, %v2563
    %v2567 = vrot.slane %v2565, 7
    %v2569 = vmul.f32 %v2557, %v2567
    %v2571 = vrot.slane %v2569, 5
    %2573 = vrot.lane.b32.xlu0 %v2571, 64
    %v2574 = vpop.permute.xlu0 %2573
    %v2576 = vrot.slane %v2574, 3
    %v2578 = vadd.f32 %v2569, %v2576
    %v2579 = vtanh.pop %v2578
    %v2580 = vmul.f32 %v2559, %v2579
    %v2581 = vpack.c.bf16 %v2580, %v2580
    %v2583 = vshrl.u32 %v2581, 16
    %v2585 = vrot.slane %v2583, 2
    %2587 = vmatprep.subr.bf16.mxu0 %v612
    %2588 = vmatpush1.bf16.msra.mxu0 %v611
    %2589 = vmatprep.subr.bf16.mxu0 %v614
    %2590 = vmatpush1.bf16.msra.mxu0 %v613
    %2591 = vmatprep.subr.bf16.mxu0 %v616
    %2592 = vmatpush1.bf16.msra.mxu0 %v615
    %2593 = vmatprep.subr.bf16.mxu0 %v618
    %2594 = vmatpush1.bf16.msra.mxu0 %v617
    %2595 = vmatprep.subr.bf16.mxu0 %v620
    %2596 = vmatpush1.bf16.msra.mxu0 %v619
    %2597 = vmatprep.subr.bf16.mxu0 %v622
    %2598 = vmatpush1.bf16.msra.mxu0 %v621
    %2599 = vmatprep.subr.bf16.mxu0 %v624
    %2600 = vmatpush1.bf16.msra.mxu0 %v623
    %2601 = vmatprep.subr.bf16.mxu0 %v626
    %2602 = vmatpush1.bf16.msra.mxu0 %v625
    %2603 = vmatprep.subr.bf16.mxu0 0
    %2604 = vmatpush1.bf16.msra.mxu0 0
    %2605 = vmatprep.subr.bf16.mxu0 0
    %2606 = vmatpush1.bf16.msra.mxu0 0
    %2607 = vmatprep.subr.bf16.mxu0 0
    %2608 = vmatpush1.bf16.msra.mxu0 0
    %2609 = vmatprep.subr.bf16.mxu0 0
    %2610 = vmatpush1.bf16.msra.mxu0 0
    %2611 = vmatprep.subr.bf16.mxu0 0
    %2612 = vmatpush1.bf16.msra.mxu0 0
    %2613 = vmatprep.subr.bf16.mxu0 0
    %2614 = vmatpush1.bf16.msra.mxu0 0
    %2615 = vmatprep.subr.bf16.mxu0 0
    %2616 = vmatpush1.bf16.msra.mxu0 0
    %2617 = vmatprep.subr.bf16.mxu0 0
    %2618 = vmatpush1.bf16.msra.mxu0 0
    %2619 = vmatprep.mubr.bf16.mxu0 0
    %2620 = vmatmul.mubr.bf16.gmra.mrb[0].mxu0 %v2585
    %v2621 = vpop.f32.mrb[0].mxu0
    %v2622 = vadd.f32 0.0, %v2621
    %v2623 = vpop.f32.mrb[0].mxu0
    %v2624 = vadd.f32 0.0, %v2623
    %v2625 = vpop.f32.mrb[0].mxu0
    %v2626 = vpop.f32.mrb[0].mxu0
    %2627 = vdwg.mxu0
    %v2630 = vrot.slane %v2622, 2
    %v2631 = vrot.slane %v2624, 2
    %v2634 = vadd.f32 %v2069, %v2630
    %v2635 = vadd.f32 %v2071, %v2631
    %v2636 = vxor.u32 %v2634, 2147483648
    %v2637 = vxor.u32 %v2635, 2147483648
    %v2638 = vmul.f32 %v2636, 1.442695
    %v2639 = vpow.pop %v2638
    %v2640 = vmul.f32 %v2637, 1.442695
    %v2641 = vpow.pop %v2640
    %v2642 = vadd.f32 %v2639, 1.0
    %v2643 = vadd.f32 %v2641, 1.0
    %v2644 = vrcp.pop %v2642
    %v2645 = vmul.f32 1.0, %v2644
    %v2646 = vrcp.pop %v2643
    %v2647 = vmul.f32 1.0, %v2646
    %v2648 = vmul.f32 %v2647, 2.0
    %v2649 = vsub.f32 %v2648, 1.0
    %v2651 = vrot.slane %v2649, 1
    %v2653 = vsel %vm429, %v2578, %v2651
    %v2655 = vrot.slane %v2653, 7
    %v2657 = vmul.f32 %v2645, %v2655
    %v2659 = vrot.slane %v2657, 6
    %2661 = vrot.lane.b32.xlu0 %v2659, 64
    %v2662 = vpop.permute.xlu0 %2661
    %v2664 = vrot.slane %v2662, 2
    %v2666 = vadd.f32 %v2657, %v2664
    %v2667 = vtanh.pop %v2666
    %v2668 = vmul.f32 %v2647, %v2667
    %v2669 = vpack.c.bf16 %v2668, %v2668
    %v2671 = vrot.slane %v2669, 3
    %2673 = vmatprep.subr.bf16.mxu0 %v612
    %2674 = vmatpush1.bf16.msra.mxu0 %v611
    %2675 = vmatprep.subr.bf16.mxu0 %v614
    %2676 = vmatpush1.bf16.msra.mxu0 %v613
    %2677 = vmatprep.subr.bf16.mxu0 %v616
    %2678 = vmatpush1.bf16.msra.mxu0 %v615
    %2679 = vmatprep.subr.bf16.mxu0 %v618
    %2680 = vmatpush1.bf16.msra.mxu0 %v617
    %2681 = vmatprep.subr.bf16.mxu0 %v620
    %2682 = vmatpush1.bf16.msra.mxu0 %v619
    %2683 = vmatprep.subr.bf16.mxu0 %v622
    %2684 = vmatpush1.bf16.msra.mxu0 %v621
    %2685 = vmatprep.subr.bf16.mxu0 %v624
    %2686 = vmatpush1.bf16.msra.mxu0 %v623
    %2687 = vmatprep.subr.bf16.mxu0 %v626
    %2688 = vmatpush1.bf16.msra.mxu0 %v625
    %2689 = vmatprep.subr.bf16.mxu0 0
    %2690 = vmatpush1.bf16.msra.mxu0 0
    %2691 = vmatprep.subr.bf16.mxu0 0
    %2692 = vmatpush1.bf16.msra.mxu0 0
    %2693 = vmatprep.subr.bf16.mxu0 0
    %2694 = vmatpush1.bf16.msra.mxu0 0
    %2695 = vmatprep.subr.bf16.mxu0 0
    %2696 = vmatpush1.bf16.msra.mxu0 0
    %2697 = vmatprep.subr.bf16.mxu0 0
    %2698 = vmatpush1.bf16.msra.mxu0 0
    %2699 = vmatprep.subr.bf16.mxu0 0
    %2700 = vmatpush1.bf16.msra.mxu0 0
    %2701 = vmatprep.subr.bf16.mxu0 0
    %2702 = vmatpush1.bf16.msra.mxu0 0
    %2703 = vmatprep.subr.bf16.mxu0 0
    %2704 = vmatpush1.bf16.msra.mxu0 0
    %2705 = vmatprep.mubr.bf16.mxu0 0
    %2706 = vmatmul.mubr.bf16.gmra.mrb[0].mxu0 %v2671
    %v2707 = vpop.f32.mrb[0].mxu0
    %v2708 = vadd.f32 0.0, %v2707
    %v2709 = vpop.f32.mrb[0].mxu0
    %v2710 = vadd.f32 0.0, %v2709
    %v2711 = vpop.f32.mrb[0].mxu0
    %v2712 = vpop.f32.mrb[0].mxu0
    %2713 = vdwg.mxu0
    %v2716 = vrot.slane %v2708, 1
    %v2717 = vrot.slane %v2710, 1
    %v2720 = vadd.f32 %v2069, %v2716
    %v2721 = vadd.f32 %v2071, %v2717
    %v2722 = vxor.u32 %v2720, 2147483648
    %v2723 = vxor.u32 %v2721, 2147483648
    %v2724 = vmul.f32 %v2722, 1.442695
    %v2725 = vpow.pop %v2724
    %v2726 = vmul.f32 %v2723, 1.442695
    %v2727 = vpow.pop %v2726
    %v2728 = vadd.f32 %v2725, 1.0
    %v2729 = vadd.f32 %v2727, 1.0
    %v2730 = vrcp.pop %v2728
    %v2731 = vmul.f32 1.0, %v2730
    %v2732 = vrcp.pop %v2729
    %v2733 = vmul.f32 1.0, %v2732
    %v2734 = vmul.f32 %v2733, 2.0
    %v2735 = vsub.f32 %v2734, 1.0
    %v2737 = vrot.slane %v2735, 1
    %v2739 = vsel %vm429, %v2666, %v2737
    %v2741 = vrot.slane %v2739, 7
    %v2743 = vmul.f32 %v2731, %v2741
    %v2745 = vrot.slane %v2743, 7
    %2747 = vrot.lane.b32.xlu0 %v2745, 64
    %v2748 = vpop.permute.xlu0 %2747
    %v2750 = vrot.slane %v2748, 1
    %v2752 = vadd.f32 %v2743, %v2750
    %v2753 = vtanh.pop %v2752
    %v2754 = vmul.f32 %v2733, %v2753
    %v2755 = vpack.c.bf16 %v389, %v389
    %2756 = vmatprep.subr.bf16.mxu0 %v491
    %2757 = vmatpush1.bf16.msra.mxu0 %v490
    %2758 = vmatprep.subr.bf16.mxu0 %v493
    %2759 = vmatpush1.bf16.msra.mxu0 %v492
    %2760 = vmatprep.subr.bf16.mxu0 %v495
    %2761 = vmatpush1.bf16.msra.mxu0 %v494
    %2762 = vmatprep.subr.bf16.mxu0 %v497
    %2763 = vmatpush1.bf16.msra.mxu0 %v496
    %2764 = vmatprep.subr.bf16.mxu0 %v499
    %2765 = vmatpush1.bf16.msra.mxu0 %v498
    %2766 = vmatprep.subr.bf16.mxu0 %v501
    %2767 = vmatpush1.bf16.msra.mxu0 %v500
    %2768 = vmatprep.subr.bf16.mxu0 %v503
    %2769 = vmatpush1.bf16.msra.mxu0 %v502
    %2770 = vmatprep.subr.bf16.mxu0 %v505
    %2771 = vmatpush1.bf16.msra.mxu0 %v504
    %2772 = vmatprep.subr.bf16.mxu0 0
    %2773 = vmatpush1.bf16.msra.mxu0 0
    %2774 = vmatprep.subr.bf16.mxu0 0
    %2775 = vmatpush1.bf16.msra.mxu0 0
    %2776 = vmatprep.subr.bf16.mxu0 0
    %2777 = vmatpush1.bf16.msra.mxu0 0
    %2778 = vmatprep.subr.bf16.mxu0 0
    %2779 = vmatpush1.bf16.msra.mxu0 0
    %2780 = vmatprep.subr.bf16.mxu0 0
    %2781 = vmatpush1.bf16.msra.mxu0 0
    %2782 = vmatprep.subr.bf16.mxu0 0
    %2783 = vmatpush1.bf16.msra.mxu0 0
    %2784 = vmatprep.subr.bf16.mxu0 0
    %2785 = vmatpush1.bf16.msra.mxu0 0
    %2786 = vmatprep.subr.bf16.mxu0 0
    %2787 = vmatpush1.bf16.msra.mxu0 0
    %2788 = vmatprep.mubr.bf16.mxu0 0
    %2789 = vmatmul.mubr.bf16.gmra.mrb[0].mxu0 %v2755
    %v2790 = vpop.f32.mrb[0].mxu0
    %v2791 = vadd.f32 %v435, %v2790
    %v2792 = vpop.f32.mrb[0].mxu0
    %v2793 = vadd.f32 %v439, %v2792
    %v2794 = vpop.f32.mrb[0].mxu0
    %v2795 = vpop.f32.mrb[0].mxu0
    %2796 = vdwg.mxu0
    %v2797 = vpack.c.bf16 %v2754, %v2754
    %v2799 = vshrl.u32 %v2797, 16
    %v2801 = vrot.slane %v2799, 3
    %2803 = vmatprep.subr.bf16.mxu0 %v612
    %2804 = vmatpush1.bf16.msra.mxu0 %v611
    %2805 = vmatprep.subr.bf16.mxu0 %v614
    %2806 = vmatpush1.bf16.msra.mxu0 %v613
    %2807 = vmatprep.subr.bf16.mxu0 %v616
    %2808 = vmatpush1.bf16.msra.mxu0 %v615
    %2809 = vmatprep.subr.bf16.mxu0 %v618
    %2810 = vmatpush1.bf16.msra.mxu0 %v617
    %2811 = vmatprep.subr.bf16.mxu0 %v620
    %2812 = vmatpush1.bf16.msra.mxu0 %v619
    %2813 = vmatprep.subr.bf16.mxu0 %v622
    %2814 = vmatpush1.bf16.msra.mxu0 %v621
    %2815 = vmatprep.subr.bf16.mxu0 %v624
    %2816 = vmatpush1.bf16.msra.mxu0 %v623
    %2817 = vmatprep.subr.bf16.mxu0 %v626
    %2818 = vmatpush1.bf16.msra.mxu0 %v625
    %2819 = vmatprep.subr.bf16.mxu0 0
    %2820 = vmatpush1.bf16.msra.mxu0 0
    %2821 = vmatprep.subr.bf16.mxu0 0
    %2822 = vmatpush1.bf16.msra.mxu0 0
    %2823 = vmatprep.subr.bf16.mxu0 0
    %2824 = vmatpush1.bf16.msra.mxu0 0
    %2825 = vmatprep.subr.bf16.mxu0 0
    %2826 = vmatpush1.bf16.msra.mxu0 0
    %2827 = vmatprep.subr.bf16.mxu0 0
    %2828 = vmatpush1.bf16.msra.mxu0 0
    %2829 = vmatprep.subr.bf16.mxu0 0
    %2830 = vmatpush1.bf16.msra.mxu0 0
    %2831 = vmatprep.subr.bf16.mxu0 0
    %2832 = vmatpush1.bf16.msra.mxu0 0
    %2833 = vmatprep.subr.bf16.mxu0 0
    %2834 = vmatpush1.bf16.msra.mxu0 0
    %2835 = vmatprep.mubr.bf16.mxu0 0
    %2836 = vmatmul.mubr.bf16.gmra.mrb[0].mxu0 %v2801
    %v2837 = vpop.f32.mrb[0].mxu0
    %v2838 = vadd.f32 0.0, %v2837
    %v2839 = vpop.f32.mrb[0].mxu0
    %v2840 = vadd.f32 0.0, %v2839
    %v2841 = vpop.f32.mrb[0].mxu0
    %v2842 = vpop.f32.mrb[0].mxu0
    %2843 = vdwg.mxu0
    %v2844 = vadd.f32 %v2791, %v2838
    %v2845 = vadd.f32 %v2793, %v2840
    %v2846 = vxor.u32 %v2844, 2147483648
    %v2847 = vxor.u32 %v2845, 2147483648
    %v2848 = vmul.f32 %v2846, 1.442695
    %v2849 = vpow.pop %v2848
    %v2850 = vmul.f32 %v2847, 1.442695
    %v2851 = vpow.pop %v2850
    %v2852 = vadd.f32 %v2849, 1.0
    %v2853 = vadd.f32 %v2851, 1.0
    %v2854 = vrcp.pop %v2852
    %v2855 = vmul.f32 1.0, %v2854
    %v2856 = vrcp.pop %v2853
    %v2857 = vmul.f32 1.0, %v2856
    %v2858 = vmul.f32 %v2857, 2.0
    %v2859 = vsub.f32 %v2858, 1.0
    %v2861 = vrot.slane %v2859, 1
    %v2863 = vsel %vm429, %v2752, %v2861
    %v2865 = vrot.slane %v2863, 7
    %v2867 = vmul.f32 %v2855, %v2865
    %2868 = vrot.lane.b32.xlu0 %v2867, 64
    %v2869 = vpop.permute.xlu0 %2868
    %v2870 = vadd.f32 %v2867, %v2869
    %v2871 = vtanh.pop %v2870
    %v2872 = vmul.f32 %v2857, %v2871
    %v2873 = vpack.c.bf16 %v2872, %v2872
    %2874 = vmatprep.subr.bf16.mxu0 %v612
    %2875 = vmatpush1.bf16.msra.mxu0 %v611
    %2876 = vmatprep.subr.bf16.mxu0 %v614
    %2877 = vmatpush1.bf16.msra.mxu0 %v613
    %2878 = vmatprep.subr.bf16.mxu0 %v616
    %2879 = vmatpush1.bf16.msra.mxu0 %v615
    %2880 = vmatprep.subr.bf16.mxu0 %v618
    %2881 = vmatpush1.bf16.msra.mxu0 %v617
    %2882 = vmatprep.subr.bf16.mxu0 %v620
    %2883 = vmatpush1.bf16.msra.mxu0 %v619
    %2884 = vmatprep.subr.bf16.mxu0 %v622
    %2885 = vmatpush1.bf16.msra.mxu0 %v621
    %2886 = vmatprep.subr.bf16.mxu0 %v624
    %2887 = vmatpush1.bf16.msra.mxu0 %v623
    %2888 = vmatprep.subr.bf16.mxu0 %v626
    %2889 = vmatpush1.bf16.msra.mxu0 %v625
    %2890 = vmatprep.subr.bf16.mxu0 0
    %2891 = vmatpush1.bf16.msra.mxu0 0
    %2892 = vmatprep.subr.bf16.mxu0 0
    %2893 = vmatpush1.bf16.msra.mxu0 0
    %2894 = vmatprep.subr.bf16.mxu0 0
    %2895 = vmatpush1.bf16.msra.mxu0 0
    %2896 = vmatprep.subr.bf16.mxu0 0
    %2897 = vmatpush1.bf16.msra.mxu0 0
    %2898 = vmatprep.subr.bf16.mxu0 0
    %2899 = vmatpush1.bf16.msra.mxu0 0
    %2900 = vmatprep.subr.bf16.mxu0 0
    %2901 = vmatpush1.bf16.msra.mxu0 0
    %2902 = vmatprep.subr.bf16.mxu0 0
    %2903 = vmatpush1.bf16.msra.mxu0 0
    %2904 = vmatprep.subr.bf16.mxu0 0
    %2905 = vmatpush1.bf16.msra.mxu0 0
    %2906 = vmatprep.mubr.bf16.mxu0 0
    %2907 = vmatmul.mubr.bf16.gmra.mrb[0].mxu0 %v2873
    %v2908 = vpop.f32.mrb[0].mxu0
    %v2909 = vadd.f32 0.0, %v2908
    %v2910 = vpop.f32.mrb[0].mxu0
    %v2911 = vadd.f32 0.0, %v2910
    %v2912 = vpop.f32.mrb[0].mxu0
    %v2913 = vpop.f32.mrb[0].mxu0
    %2914 = vdwg.mxu0
    %v2917 = vrot.slane %v2909, 7
    %v2918 = vrot.slane %v2911, 7
    %v2921 = vadd.f32 %v2791, %v2917
    %v2922 = vadd.f32 %v2793, %v2918
    %v2923 = vxor.u32 %v2921, 2147483648
    %v2924 = vxor.u32 %v2922, 2147483648
    %v2925 = vmul.f32 %v2923, 1.442695
    %v2926 = vpow.pop %v2925
    %v2927 = vmul.f32 %v2924, 1.442695
    %v2928 = vpow.pop %v2927
    %v2929 = vadd.f32 %v2926, 1.0
    %v2930 = vadd.f32 %v2928, 1.0
    %v2931 = vrcp.pop %v2929
    %v2932 = vmul.f32 1.0, %v2931
    %v2933 = vrcp.pop %v2930
    %v2934 = vmul.f32 1.0, %v2933
    %v2935 = vmul.f32 %v2934, 2.0
    %v2936 = vsub.f32 %v2935, 1.0
    %v2938 = vrot.slane %v2936, 1
    %v2940 = vsel %vm429, %v2870, %v2938
    %v2942 = vrot.slane %v2940, 7
    %v2944 = vmul.f32 %v2932, %v2942
    %v2946 = vrot.slane %v2944, 1
    %2948 = vrot.lane.b32.xlu0 %v2946, 64
    %v2949 = vpop.permute.xlu0 %2948
    %v2951 = vrot.slane %v2949, 7
    %v2953 = vadd.f32 %v2944, %v2951
    %v2954 = vtanh.pop %v2953
    %v2955 = vmul.f32 %v2934, %v2954
    %v2956 = vpack.c.bf16 %v2955, %v2955
    %v2958 = vshrl.u32 %v2956, 16
    %2961 = vmatprep.subr.bf16.mxu0 %v612
    %2962 = vmatpush1.bf16.msra.mxu0 %v611
    %2963 = vmatprep.subr.bf16.mxu0 %v614
    %2964 = vmatpush1.bf16.msra.mxu0 %v613
    %2965 = vmatprep.subr.bf16.mxu0 %v616
    %2966 = vmatpush1.bf16.msra.mxu0 %v615
    %2967 = vmatprep.subr.bf16.mxu0 %v618
    %2968 = vmatpush1.bf16.msra.mxu0 %v617
    %2969 = vmatprep.subr.bf16.mxu0 %v620
    %2970 = vmatpush1.bf16.msra.mxu0 %v619
    %2971 = vmatprep.subr.bf16.mxu0 %v622
    %2972 = vmatpush1.bf16.msra.mxu0 %v621
    %2973 = vmatprep.subr.bf16.mxu0 %v624
    %2974 = vmatpush1.bf16.msra.mxu0 %v623
    %2975 = vmatprep.subr.bf16.mxu0 %v626
    %2976 = vmatpush1.bf16.msra.mxu0 %v625
    %2977 = vmatprep.subr.bf16.mxu0 0
    %2978 = vmatpush1.bf16.msra.mxu0 0
    %2979 = vmatprep.subr.bf16.mxu0 0
    %2980 = vmatpush1.bf16.msra.mxu0 0
    %2981 = vmatprep.subr.bf16.mxu0 0
    %2982 = vmatpush1.bf16.msra.mxu0 0
    %2983 = vmatprep.subr.bf16.mxu0 0
    %2984 = vmatpush1.bf16.msra.mxu0 0
    %2985 = vmatprep.subr.bf16.mxu0 0
    %2986 = vmatpush1.bf16.msra.mxu0 0
    %2987 = vmatprep.subr.bf16.mxu0 0
    %2988 = vmatpush1.bf16.msra.mxu0 0
    %2989 = vmatprep.subr.bf16.mxu0 0
    %2990 = vmatpush1.bf16.msra.mxu0 0
    %2991 = vmatprep.subr.bf16.mxu0 0
    %2992 = vmatpush1.bf16.msra.mxu0 0
    %2993 = vmatprep.mubr.bf16.mxu0 0
    %2994 = vmatmul.mubr.bf16.gmra.mrb[0].mxu0 %v2958
    %v2995 = vpop.f32.mrb[0].mxu0
    %v2996 = vadd.f32 0.0, %v2995
    %v2997 = vpop.f32.mrb[0].mxu0
    %v2998 = vadd.f32 0.0, %v2997
    %v2999 = vpop.f32.mrb[0].mxu0
    %v3000 = vpop.f32.mrb[0].mxu0
    %3001 = vdwg.mxu0
    %v3004 = vrot.slane %v2996, 6
    %v3005 = vrot.slane %v2998, 6
    %v3008 = vadd.f32 %v2791, %v3004
    %v3009 = vadd.f32 %v2793, %v3005
    %v3010 = vxor.u32 %v3008, 2147483648
    %v3011 = vxor.u32 %v3009, 2147483648
    %v3012 = vmul.f32 %v3010, 1.442695
    %v3013 = vpow.pop %v3012
    %v3014 = vmul.f32 %v3011, 1.442695
    %v3015 = vpow.pop %v3014
    %v3016 = vadd.f32 %v3013, 1.0
    %v3017 = vadd.f32 %v3015, 1.0
    %v3018 = vrcp.pop %v3016
    %v3019 = vmul.f32 1.0, %v3018
    %v3020 = vrcp.pop %v3017
    %v3021 = vmul.f32 1.0, %v3020
    %v3022 = vmul.f32 %v3021, 2.0
    %v3023 = vsub.f32 %v3022, 1.0
    %v3025 = vrot.slane %v3023, 1
    %v3027 = vsel %vm429, %v2953, %v3025
    %v3029 = vrot.slane %v3027, 7
    %v3031 = vmul.f32 %v3019, %v3029
    %v3033 = vrot.slane %v3031, 2
    %3035 = vrot.lane.b32.xlu0 %v3033, 64
    %v3036 = vpop.permute.xlu0 %3035
    %v3038 = vrot.slane %v3036, 6
    %v3040 = vadd.f32 %v3031, %v3038
    %v3041 = vtanh.pop %v3040
    %v3042 = vmul.f32 %v3021, %v3041
    %v3043 = vpack.c.bf16 %v3042, %v3042
    %v3045 = vrot.slane %v3043, 1
    %3047 = vmatprep.subr.bf16.mxu0 %v612
    %3048 = vmatpush1.bf16.msra.mxu0 %v611
    %3049 = vmatprep.subr.bf16.mxu0 %v614
    %3050 = vmatpush1.bf16.msra.mxu0 %v613
    %3051 = vmatprep.subr.bf16.mxu0 %v616
    %3052 = vmatpush1.bf16.msra.mxu0 %v615
    %3053 = vmatprep.subr.bf16.mxu0 %v618
    %3054 = vmatpush1.bf16.msra.mxu0 %v617
    %3055 = vmatprep.subr.bf16.mxu0 %v620
    %3056 = vmatpush1.bf16.msra.mxu0 %v619
    %3057 = vmatprep.subr.bf16.mxu0 %v622
    %3058 = vmatpush1.bf16.msra.mxu0 %v621
    %3059 = vmatprep.subr.bf16.mxu0 %v624
    %3060 = vmatpush1.bf16.msra.mxu0 %v623
    %3061 = vmatprep.subr.bf16.mxu0 %v626
    %3062 = vmatpush1.bf16.msra.mxu0 %v625
    %3063 = vmatprep.subr.bf16.mxu0 0
    %3064 = vmatpush1.bf16.msra.mxu0 0
    %3065 = vmatprep.subr.bf16.mxu0 0
    %3066 = vmatpush1.bf16.msra.mxu0 0
    %3067 = vmatprep.subr.bf16.mxu0 0
    %3068 = vmatpush1.bf16.msra.mxu0 0
    %3069 = vmatprep.subr.bf16.mxu0 0
    %3070 = vmatpush1.bf16.msra.mxu0 0
    %3071 = vmatprep.subr.bf16.mxu0 0
    %3072 = vmatpush1.bf16.msra.mxu0 0
    %3073 = vmatprep.subr.bf16.mxu0 0
    %3074 = vmatpush1.bf16.msra.mxu0 0
    %3075 = vmatprep.subr.bf16.mxu0 0
    %3076 = vmatpush1.bf16.msra.mxu0 0
    %3077 = vmatprep.subr.bf16.mxu0 0
    %3078 = vmatpush1.bf16.msra.mxu0 0
    %3079 = vmatprep.mubr.bf16.mxu0 0
    %3080 = vmatmul.mubr.bf16.gmra.mrb[0].mxu0 %v3045
    %v3081 = vpop.f32.mrb[0].mxu0
    %v3082 = vadd.f32 0.0, %v3081
    %v3083 = vpop.f32.mrb[0].mxu0
    %v3084 = vadd.f32 0.0, %v3083
    %v3085 = vpop.f32.mrb[0].mxu0
    %v3086 = vpop.f32.mrb[0].mxu0
    %3087 = vdwg.mxu0
    %v3090 = vrot.slane %v3082, 5
    %v3091 = vrot.slane %v3084, 5
    %v3094 = vadd.f32 %v2791, %v3090
    %v3095 = vadd.f32 %v2793, %v3091
    %v3096 = vxor.u32 %v3094, 2147483648
    %v3097 = vxor.u32 %v3095, 2147483648
    %v3098 = vmul.f32 %v3096, 1.442695
    %v3099 = vpow.pop %v3098
    %v3100 = vmul.f32 %v3097, 1.442695
    %v3101 = vpow.pop %v3100
    %v3102 = vadd.f32 %v3099, 1.0
    %v3103 = vadd.f32 %v3101, 1.0
    %v3104 = vrcp.pop %v3102
    %v3105 = vmul.f32 1.0, %v3104
    %v3106 = vrcp.pop %v3103
    %v3107 = vmul.f32 1.0, %v3106
    %v3108 = vmul.f32 %v3107, 2.0
    %v3109 = vsub.f32 %v3108, 1.0
    %v3111 = vrot.slane %v3109, 1
    %v3113 = vsel %vm429, %v3040, %v3111
    %v3115 = vrot.slane %v3113, 7
    %v3117 = vmul.f32 %v3105, %v3115
    %v3119 = vrot.slane %v3117, 3
    %3121 = vrot.lane.b32.xlu0 %v3119, 64
    %v3122 = vpop.permute.xlu0 %3121
    %v3124 = vrot.slane %v3122, 5
    %v3126 = vadd.f32 %v3117, %v3124
    %v3127 = vtanh.pop %v3126
    %v3128 = vmul.f32 %v3107, %v3127
    %v3129 = vpack.c.bf16 %v3128, %v3128
    %v3131 = vshrl.u32 %v3129, 16
    %v3133 = vrot.slane %v3131, 1
    %3135 = vmatprep.subr.bf16.mxu0 %v612
    %3136 = vmatpush1.bf16.msra.mxu0 %v611
    %3137 = vmatprep.subr.bf16.mxu0 %v614
    %3138 = vmatpush1.bf16.msra.mxu0 %v613
    %3139 = vmatprep.subr.bf16.mxu0 %v616
    %3140 = vmatpush1.bf16.msra.mxu0 %v615
    %3141 = vmatprep.subr.bf16.mxu0 %v618
    %3142 = vmatpush1.bf16.msra.mxu0 %v617
    %3143 = vmatprep.subr.bf16.mxu0 %v620
    %3144 = vmatpush1.bf16.msra.mxu0 %v619
    %3145 = vmatprep.subr.bf16.mxu0 %v622
    %3146 = vmatpush1.bf16.msra.mxu0 %v621
    %3147 = vmatprep.subr.bf16.mxu0 %v624
    %3148 = vmatpush1.bf16.msra.mxu0 %v623
    %3149 = vmatprep.subr.bf16.mxu0 %v626
    %3150 = vmatpush1.bf16.msra.mxu0 %v625
    %3151 = vmatprep.subr.bf16.mxu0 0
    %3152 = vmatpush1.bf16.msra.mxu0 0
    %3153 = vmatprep.subr.bf16.mxu0 0
    %3154 = vmatpush1.bf16.msra.mxu0 0
    %3155 = vmatprep.subr.bf16.mxu0 0
    %3156 = vmatpush1.bf16.msra.mxu0 0
    %3157 = vmatprep.subr.bf16.mxu0 0
    %3158 = vmatpush1.bf16.msra.mxu0 0
    %3159 = vmatprep.subr.bf16.mxu0 0
    %3160 = vmatpush1.bf16.msra.mxu0 0
    %3161 = vmatprep.subr.bf16.mxu0 0
    %3162 = vmatpush1.bf16.msra.mxu0 0
    %3163 = vmatprep.subr.bf16.mxu0 0
    %3164 = vmatpush1.bf16.msra.mxu0 0
    %3165 = vmatprep.subr.bf16.mxu0 0
    %3166 = vmatpush1.bf16.msra.mxu0 0
    %3167 = vmatprep.mubr.bf16.mxu0 0
    %3168 = vmatmul.mubr.bf16.gmra.mrb[0].mxu0 %v3133
    %v3169 = vpop.f32.mrb[0].mxu0
    %v3170 = vadd.f32 0.0, %v3169
    %v3171 = vpop.f32.mrb[0].mxu0
    %v3172 = vadd.f32 0.0, %v3171
    %v3173 = vpop.f32.mrb[0].mxu0
    %v3174 = vpop.f32.mrb[0].mxu0
    %3175 = vdwg.mxu0
    %v3178 = vrot.slane %v3170, 4
    %v3179 = vrot.slane %v3172, 4
    %v3182 = vadd.f32 %v2791, %v3178
    %v3183 = vadd.f32 %v2793, %v3179
    %v3184 = vxor.u32 %v3182, 2147483648
    %v3185 = vxor.u32 %v3183, 2147483648
    %v3186 = vmul.f32 %v3184, 1.442695
    %v3187 = vpow.pop %v3186
    %v3188 = vmul.f32 %v3185, 1.442695
    %v3189 = vpow.pop %v3188
    %v3190 = vadd.f32 %v3187, 1.0
    %v3191 = vadd.f32 %v3189, 1.0
    %v3192 = vrcp.pop %v3190
    %v3193 = vmul.f32 1.0, %v3192
    %v3194 = vrcp.pop %v3191
    %v3195 = vmul.f32 1.0, %v3194
    %v3196 = vmul.f32 %v3195, 2.0
    %v3197 = vsub.f32 %v3196, 1.0
    %v3199 = vrot.slane %v3197, 1
    %v3201 = vsel %vm429, %v3126, %v3199
    %v3203 = vrot.slane %v3201, 7
    %v3205 = vmul.f32 %v3193, %v3203
    %v3207 = vrot.slane %v3205, 4
    %3209 = vrot.lane.b32.xlu0 %v3207, 64
    %v3210 = vpop.permute.xlu0 %3209
    %v3212 = vrot.slane %v3210, 4
    %v3214 = vadd.f32 %v3205, %v3212
    %v3215 = vtanh.pop %v3214
    %v3216 = vmul.f32 %v3195, %v3215
    %v3217 = vpack.c.bf16 %v3216, %v3216
    %v3219 = vrot.slane %v3217, 2
    %3221 = vmatprep.subr.bf16.mxu0 %v612
    %3222 = vmatpush1.bf16.msra.mxu0 %v611
    %3223 = vmatprep.subr.bf16.mxu0 %v614
    %3224 = vmatpush1.bf16.msra.mxu0 %v613
    %3225 = vmatprep.subr.bf16.mxu0 %v616
    %3226 = vmatpush1.bf16.msra.mxu0 %v615
    %3227 = vmatprep.subr.bf16.mxu0 %v618
    %3228 = vmatpush1.bf16.msra.mxu0 %v617
    %3229 = vmatprep.subr.bf16.mxu0 %v620
    %3230 = vmatpush1.bf16.msra.mxu0 %v619
    %3231 = vmatprep.subr.bf16.mxu0 %v622
    %3232 = vmatpush1.bf16.msra.mxu0 %v621
    %3233 = vmatprep.subr.bf16.mxu0 %v624
    %3234 = vmatpush1.bf16.msra.mxu0 %v623
    %3235 = vmatprep.subr.bf16.mxu0 %v626
    %3236 = vmatpush1.bf16.msra.mxu0 %v625
    %3237 = vmatprep.subr.bf16.mxu0 0
    %3238 = vmatpush1.bf16.msra.mxu0 0
    %3239 = vmatprep.subr.bf16.mxu0 0
    %3240 = vmatpush1.bf16.msra.mxu0 0
    %3241 = vmatprep.subr.bf16.mxu0 0
    %3242 = vmatpush1.bf16.msra.mxu0 0
    %3243 = vmatprep.subr.bf16.mxu0 0
    %3244 = vmatpush1.bf16.msra.mxu0 0
    %3245 = vmatprep.subr.bf16.mxu0 0
    %3246 = vmatpush1.bf16.msra.mxu0 0
    %3247 = vmatprep.subr.bf16.mxu0 0
    %3248 = vmatpush1.bf16.msra.mxu0 0
    %3249 = vmatprep.subr.bf16.mxu0 0
    %3250 = vmatpush1.bf16.msra.mxu0 0
    %3251 = vmatprep.subr.bf16.mxu0 0
    %3252 = vmatpush1.bf16.msra.mxu0 0
    %3253 = vmatprep.mubr.bf16.mxu0 0
    %3254 = vmatmul.mubr.bf16.gmra.mrb[0].mxu0 %v3219
    %v3255 = vpop.f32.mrb[0].mxu0
    %v3256 = vadd.f32 0.0, %v3255
    %v3257 = vpop.f32.mrb[0].mxu0
    %v3258 = vadd.f32 0.0, %v3257
    %v3259 = vpop.f32.mrb[0].mxu0
    %v3260 = vpop.f32.mrb[0].mxu0
    %3261 = vdwg.mxu0
    %v3264 = vrot.slane %v3256, 3
    %v3265 = vrot.slane %v3258, 3
    %v3268 = vadd.f32 %v2791, %v3264
    %v3269 = vadd.f32 %v2793, %v3265
    %v3270 = vxor.u32 %v3268, 2147483648
    %v3271 = vxor.u32 %v3269, 2147483648
    %v3272 = vmul.f32 %v3270, 1.442695
    %v3273 = vpow.pop %v3272
    %v3274 = vmul.f32 %v3271, 1.442695
    %v3275 = vpow.pop %v3274
    %v3276 = vadd.f32 %v3273, 1.0
    %v3277 = vadd.f32 %v3275, 1.0
    %v3278 = vrcp.pop %v3276
    %v3279 = vmul.f32 1.0, %v3278
    %v3280 = vrcp.pop %v3277
    %v3281 = vmul.f32 1.0, %v3280
    %v3282 = vmul.f32 %v3281, 2.0
    %v3283 = vsub.f32 %v3282, 1.0
    %v3285 = vrot.slane %v3283, 1
    %v3287 = vsel %vm429, %v3214, %v3285
    %v3289 = vrot.slane %v3287, 7
    %v3291 = vmul.f32 %v3279, %v3289
    %v3293 = vrot.slane %v3291, 5
    %3295 = vrot.lane.b32.xlu0 %v3293, 64
    %v3296 = vpop.permute.xlu0 %3295
    %v3298 = vrot.slane %v3296, 3
    %v3300 = vadd.f32 %v3291, %v3298
    %v3301 = vtanh.pop %v3300
    %v3302 = vmul.f32 %v3281, %v3301
    %v3303 = vpack.c.bf16 %v3302, %v3302
    %v3305 = vshrl.u32 %v3303, 16
    %v3307 = vrot.slane %v3305, 2
    %3309 = vmatprep.subr.bf16.mxu0 %v612
    %3310 = vmatpush1.bf16.msra.mxu0 %v611
    %3311 = vmatprep.subr.bf16.mxu0 %v614
    %3312 = vmatpush1.bf16.msra.mxu0 %v613
    %3313 = vmatprep.subr.bf16.mxu0 %v616
    %3314 = vmatpush1.bf16.msra.mxu0 %v615
    %3315 = vmatprep.subr.bf16.mxu0 %v618
    %3316 = vmatpush1.bf16.msra.mxu0 %v617
    %3317 = vmatprep.subr.bf16.mxu0 %v620
    %3318 = vmatpush1.bf16.msra.mxu0 %v619
    %3319 = vmatprep.subr.bf16.mxu0 %v622
    %3320 = vmatpush1.bf16.msra.mxu0 %v621
    %3321 = vmatprep.subr.bf16.mxu0 %v624
    %3322 = vmatpush1.bf16.msra.mxu0 %v623
    %3323 = vmatprep.subr.bf16.mxu0 %v626
    %3324 = vmatpush1.bf16.msra.mxu0 %v625
    %3325 = vmatprep.subr.bf16.mxu0 0
    %3326 = vmatpush1.bf16.msra.mxu0 0
    %3327 = vmatprep.subr.bf16.mxu0 0
    %3328 = vmatpush1.bf16.msra.mxu0 0
    %3329 = vmatprep.subr.bf16.mxu0 0
    %3330 = vmatpush1.bf16.msra.mxu0 0
    %3331 = vmatprep.subr.bf16.mxu0 0
    %3332 = vmatpush1.bf16.msra.mxu0 0
    %3333 = vmatprep.subr.bf16.mxu0 0
    %3334 = vmatpush1.bf16.msra.mxu0 0
    %3335 = vmatprep.subr.bf16.mxu0 0
    %3336 = vmatpush1.bf16.msra.mxu0 0
    %3337 = vmatprep.subr.bf16.mxu0 0
    %3338 = vmatpush1.bf16.msra.mxu0 0
    %3339 = vmatprep.subr.bf16.mxu0 0
    %3340 = vmatpush1.bf16.msra.mxu0 0
    %3341 = vmatprep.mubr.bf16.mxu0 0
    %3342 = vmatmul.mubr.bf16.gmra.mrb[0].mxu0 %v3307
    %v3343 = vpop.f32.mrb[0].mxu0
    %v3344 = vadd.f32 0.0, %v3343
    %v3345 = vpop.f32.mrb[0].mxu0
    %v3346 = vadd.f32 0.0, %v3345
    %v3347 = vpop.f32.mrb[0].mxu0
    %v3348 = vpop.f32.mrb[0].mxu0
    %3349 = vdwg.mxu0
    %v3352 = vrot.slane %v3344, 2
    %v3353 = vrot.slane %v3346, 2
    %v3356 = vadd.f32 %v2791, %v3352
    %v3357 = vadd.f32 %v2793, %v3353
    %v3358 = vxor.u32 %v3356, 2147483648
    %v3359 = vxor.u32 %v3357, 2147483648
    %v3360 = vmul.f32 %v3358, 1.442695
    %v3361 = vpow.pop %v3360
    %v3362 = vmul.f32 %v3359, 1.442695
    %v3363 = vpow.pop %v3362
    %v3364 = vadd.f32 %v3361, 1.0
    %v3365 = vadd.f32 %v3363, 1.0
    %v3366 = vrcp.pop %v3364
    %v3367 = vmul.f32 1.0, %v3366
    %v3368 = vrcp.pop %v3365
    %v3369 = vmul.f32 1.0, %v3368
    %v3370 = vmul.f32 %v3369, 2.0
    %v3371 = vsub.f32 %v3370, 1.0
    %v3373 = vrot.slane %v3371, 1
    %v3375 = vsel %vm429, %v3300, %v3373
    %v3377 = vrot.slane %v3375, 7
    %v3379 = vmul.f32 %v3367, %v3377
    %v3381 = vrot.slane %v3379, 6
    %3383 = vrot.lane.b32.xlu0 %v3381, 64
    %v3384 = vpop.permute.xlu0 %3383
    %v3386 = vrot.slane %v3384, 2
    %v3388 = vadd.f32 %v3379, %v3386
    %v3389 = vtanh.pop %v3388
    %v3390 = vmul.f32 %v3369, %v3389
    %v3391 = vpack.c.bf16 %v3390, %v3390
    %v3393 = vrot.slane %v3391, 3
    %3395 = vmatprep.subr.bf16.mxu0 %v612
    %3396 = vmatpush1.bf16.msra.mxu0 %v611
    %3397 = vmatprep.subr.bf16.mxu0 %v614
    %3398 = vmatpush1.bf16.msra.mxu0 %v613
    %3399 = vmatprep.subr.bf16.mxu0 %v616
    %3400 = vmatpush1.bf16.msra.mxu0 %v615
    %3401 = vmatprep.subr.bf16.mxu0 %v618
    %3402 = vmatpush1.bf16.msra.mxu0 %v617
    %3403 = vmatprep.subr.bf16.mxu0 %v620
    %3404 = vmatpush1.bf16.msra.mxu0 %v619
    %3405 = vmatprep.subr.bf16.mxu0 %v622
    %3406 = vmatpush1.bf16.msra.mxu0 %v621
    %3407 = vmatprep.subr.bf16.mxu0 %v624
    %3408 = vmatpush1.bf16.msra.mxu0 %v623
    %3409 = vmatprep.subr.bf16.mxu0 %v626
    %3410 = vmatpush1.bf16.msra.mxu0 %v625
    %3411 = vmatprep.subr.bf16.mxu0 0
    %3412 = vmatpush1.bf16.msra.mxu0 0
    %3413 = vmatprep.subr.bf16.mxu0 0
    %3414 = vmatpush1.bf16.msra.mxu0 0
    %3415 = vmatprep.subr.bf16.mxu0 0
    %3416 = vmatpush1.bf16.msra.mxu0 0
    %3417 = vmatprep.subr.bf16.mxu0 0
    %3418 = vmatpush1.bf16.msra.mxu0 0
    %3419 = vmatprep.subr.bf16.mxu0 0
    %3420 = vmatpush1.bf16.msra.mxu0 0
    %3421 = vmatprep.subr.bf16.mxu0 0
    %3422 = vmatpush1.bf16.msra.mxu0 0
    %3423 = vmatprep.subr.bf16.mxu0 0
    %3424 = vmatpush1.bf16.msra.mxu0 0
    %3425 = vmatprep.subr.bf16.mxu0 0
    %3426 = vmatpush1.bf16.msra.mxu0 0
    %3427 = vmatprep.mubr.bf16.mxu0 0
    %3428 = vmatmul.mubr.bf16.gmra.mrb[0].mxu0 %v3393
    %v3429 = vpop.f32.mrb[0].mxu0
    %v3430 = vadd.f32 0.0, %v3429
    %v3431 = vpop.f32.mrb[0].mxu0
    %v3432 = vadd.f32 0.0, %v3431
    %v3433 = vpop.f32.mrb[0].mxu0
    %v3434 = vpop.f32.mrb[0].mxu0
    %3435 = vdwg.mxu0
    %v3438 = vrot.slane %v3430, 1
    %v3439 = vrot.slane %v3432, 1
    %v3442 = vadd.f32 %v2791, %v3438
    %v3443 = vadd.f32 %v2793, %v3439
    %v3444 = vxor.u32 %v3442, 2147483648
    %v3445 = vxor.u32 %v3443, 2147483648
    %v3446 = vmul.f32 %v3444, 1.442695
    %v3447 = vpow.pop %v3446
    %v3448 = vmul.f32 %v3445, 1.442695
    %v3449 = vpow.pop %v3448
    %v3450 = vadd.f32 %v3447, 1.0
    %v3451 = vadd.f32 %v3449, 1.0
    %v3452 = vrcp.pop %v3450
    %v3453 = vmul.f32 1.0, %v3452
    %v3454 = vrcp.pop %v3451
    %v3455 = vmul.f32 1.0, %v3454
    %v3456 = vmul.f32 %v3455, 2.0
    %v3457 = vsub.f32 %v3456, 1.0
    %v3459 = vrot.slane %v3457, 1
    %v3461 = vsel %vm429, %v3388, %v3459
    %v3463 = vrot.slane %v3461, 7
    %v3465 = vmul.f32 %v3453, %v3463
    %v3467 = vrot.slane %v3465, 7
    %3469 = vrot.lane.b32.xlu0 %v3467, 64
    %v3470 = vpop.permute.xlu0 %3469
    %v3472 = vrot.slane %v3470, 1
    %v3474 = vadd.f32 %v3465, %v3472
    %v3475 = vtanh.pop %v3474
    %v3476 = vmul.f32 %v3455, %v3475
    %v3477 = vpack.c.bf16 %v390, %v390
    %3478 = vmatprep.subr.bf16.mxu0 %v491
    %3479 = vmatpush1.bf16.msra.mxu0 %v490
    %3480 = vmatprep.subr.bf16.mxu0 %v493
    %3481 = vmatpush1.bf16.msra.mxu0 %v492
    %3482 = vmatprep.subr.bf16.mxu0 %v495
    %3483 = vmatpush1.bf16.msra.mxu0 %v494
    %3484 = vmatprep.subr.bf16.mxu0 %v497
    %3485 = vmatpush1.bf16.msra.mxu0 %v496
    %3486 = vmatprep.subr.bf16.mxu0 %v499
    %3487 = vmatpush1.bf16.msra.mxu0 %v498
    %3488 = vmatprep.subr.bf16.mxu0 %v501
    %3489 = vmatpush1.bf16.msra.mxu0 %v500
    %3490 = vmatprep.subr.bf16.mxu0 %v503
    %3491 = vmatpush1.bf16.msra.mxu0 %v502
    %3492 = vmatprep.subr.bf16.mxu0 %v505
    %3493 = vmatpush1.bf16.msra.mxu0 %v504
    %3494 = vmatprep.subr.bf16.mxu0 0
    %3495 = vmatpush1.bf16.msra.mxu0 0
    %3496 = vmatprep.subr.bf16.mxu0 0
    %3497 = vmatpush1.bf16.msra.mxu0 0
    %3498 = vmatprep.subr.bf16.mxu0 0
    %3499 = vmatpush1.bf16.msra.mxu0 0
    %3500 = vmatprep.subr.bf16.mxu0 0
    %3501 = vmatpush1.bf16.msra.mxu0 0
    %3502 = vmatprep.subr.bf16.mxu0 0
    %3503 = vmatpush1.bf16.msra.mxu0 0
    %3504 = vmatprep.subr.bf16.mxu0 0
    %3505 = vmatpush1.bf16.msra.mxu0 0
    %3506 = vmatprep.subr.bf16.mxu0 0
    %3507 = vmatpush1.bf16.msra.mxu0 0
    %3508 = vmatprep.subr.bf16.mxu0 0
    %3509 = vmatpush1.bf16.msra.mxu0 0
    %3510 = vmatprep.mubr.bf16.mxu0 0
    %3511 = vmatmul.mubr.bf16.gmra.mrb[0].mxu0 %v3477
    %v3512 = vpop.f32.mrb[0].mxu0
    %v3513 = vadd.f32 %v435, %v3512
    %v3514 = vpop.f32.mrb[0].mxu0
    %v3515 = vadd.f32 %v439, %v3514
    %v3516 = vpop.f32.mrb[0].mxu0
    %v3517 = vpop.f32.mrb[0].mxu0
    %3518 = vdwg.mxu0
    %v3519 = vpack.c.bf16 %v3476, %v3476
    %v3521 = vshrl.u32 %v3519, 16
    %v3523 = vrot.slane %v3521, 3
    %3525 = vmatprep.subr.bf16.mxu0 %v612
    %3526 = vmatpush1.bf16.msra.mxu0 %v611
    %3527 = vmatprep.subr.bf16.mxu0 %v614
    %3528 = vmatpush1.bf16.msra.mxu0 %v613
    %3529 = vmatprep.subr.bf16.mxu0 %v616
    %3530 = vmatpush1.bf16.msra.mxu0 %v615
    %3531 = vmatprep.subr.bf16.mxu0 %v618
    %3532 = vmatpush1.bf16.msra.mxu0 %v617
    %3533 = vmatprep.subr.bf16.mxu0 %v620
    %3534 = vmatpush1.bf16.msra.mxu0 %v619
    %3535 = vmatprep.subr.bf16.mxu0 %v622
    %3536 = vmatpush1.bf16.msra.mxu0 %v621
    %3537 = vmatprep.subr.bf16.mxu0 %v624
    %3538 = vmatpush1.bf16.msra.mxu0 %v623
    %3539 = vmatprep.subr.bf16.mxu0 %v626
    %3540 = vmatpush1.bf16.msra.mxu0 %v625
    %3541 = vmatprep.subr.bf16.mxu0 0
    %3542 = vmatpush1.bf16.msra.mxu0 0
    %3543 = vmatprep.subr.bf16.mxu0 0
    %3544 = vmatpush1.bf16.msra.mxu0 0
    %3545 = vmatprep.subr.bf16.mxu0 0
    %3546 = vmatpush1.bf16.msra.mxu0 0
    %3547 = vmatprep.subr.bf16.mxu0 0
    %3548 = vmatpush1.bf16.msra.mxu0 0
    %3549 = vmatprep.subr.bf16.mxu0 0
    %3550 = vmatpush1.bf16.msra.mxu0 0
    %3551 = vmatprep.subr.bf16.mxu0 0
    %3552 = vmatpush1.bf16.msra.mxu0 0
    %3553 = vmatprep.subr.bf16.mxu0 0
    %3554 = vmatpush1.bf16.msra.mxu0 0
    %3555 = vmatprep.subr.bf16.mxu0 0
    %3556 = vmatpush1.bf16.msra.mxu0 0
    %3557 = vmatprep.mubr.bf16.mxu0 0
    %3558 = vmatmul.mubr.bf16.gmra.mrb[0].mxu0 %v3523
    %v3559 = vpop.f32.mrb[0].mxu0
    %v3560 = vadd.f32 0.0, %v3559
    %v3561 = vpop.f32.mrb[0].mxu0
    %v3562 = vadd.f32 0.0, %v3561
    %v3563 = vpop.f32.mrb[0].mxu0
    %v3564 = vpop.f32.mrb[0].mxu0
    %3565 = vdwg.mxu0
    %v3566 = vadd.f32 %v3513, %v3560
    %v3567 = vadd.f32 %v3515, %v3562
    %v3568 = vxor.u32 %v3566, 2147483648
    %v3569 = vxor.u32 %v3567, 2147483648
    %v3570 = vmul.f32 %v3568, 1.442695
    %v3571 = vpow.pop %v3570
    %v3572 = vmul.f32 %v3569, 1.442695
    %v3573 = vpow.pop %v3572
    %v3574 = vadd.f32 %v3571, 1.0
    %v3575 = vadd.f32 %v3573, 1.0
    %v3576 = vrcp.pop %v3574
    %v3577 = vmul.f32 1.0, %v3576
    %v3578 = vrcp.pop %v3575
    %v3579 = vmul.f32 1.0, %v3578
    %v3580 = vmul.f32 %v3579, 2.0
    %v3581 = vsub.f32 %v3580, 1.0
    %v3583 = vrot.slane %v3581, 1
    %v3585 = vsel %vm429, %v3474, %v3583
    %v3587 = vrot.slane %v3585, 7
    %v3589 = vmul.f32 %v3577, %v3587
    %3590 = vrot.lane.b32.xlu0 %v3589, 64
    %v3591 = vpop.permute.xlu0 %3590
    %v3592 = vadd.f32 %v3589, %v3591
    %v3593 = vtanh.pop %v3592
    %v3594 = vmul.f32 %v3579, %v3593
    %v3595 = vpack.c.bf16 %v3594, %v3594
    %3596 = vmatprep.subr.bf16.mxu0 %v612
    %3597 = vmatpush1.bf16.msra.mxu0 %v611
    %3598 = vmatprep.subr.bf16.mxu0 %v614
    %3599 = vmatpush1.bf16.msra.mxu0 %v613
    %3600 = vmatprep.subr.bf16.mxu0 %v616
    %3601 = vmatpush1.bf16.msra.mxu0 %v615
    %3602 = vmatprep.subr.bf16.mxu0 %v618
    %3603 = vmatpush1.bf16.msra.mxu0 %v617
    %3604 = vmatprep.subr.bf16.mxu0 %v620
    %3605 = vmatpush1.bf16.msra.mxu0 %v619
    %3606 = vmatprep.subr.bf16.mxu0 %v622
    %3607 = vmatpush1.bf16.msra.mxu0 %v621
    %3608 = vmatprep.subr.bf16.mxu0 %v624
    %3609 = vmatpush1.bf16.msra.mxu0 %v623
    %3610 = vmatprep.subr.bf16.mxu0 %v626
    %3611 = vmatpush1.bf16.msra.mxu0 %v625
    %3612 = vmatprep.subr.bf16.mxu0 0
    %3613 = vmatpush1.bf16.msra.mxu0 0
    %3614 = vmatprep.subr.bf16.mxu0 0
    %3615 = vmatpush1.bf16.msra.mxu0 0
    %3616 = vmatprep.subr.bf16.mxu0 0
    %3617 = vmatpush1.bf16.msra.mxu0 0
    %3618 = vmatprep.subr.bf16.mxu0 0
    %3619 = vmatpush1.bf16.msra.mxu0 0
    %3620 = vmatprep.subr.bf16.mxu0 0
    %3621 = vmatpush1.bf16.msra.mxu0 0
    %3622 = vmatprep.subr.bf16.mxu0 0
    %3623 = vmatpush1.bf16.msra.mxu0 0
    %3624 = vmatprep.subr.bf16.mxu0 0
    %3625 = vmatpush1.bf16.msra.mxu0 0
    %3626 = vmatprep.subr.bf16.mxu0 0
    %3627 = vmatpush1.bf16.msra.mxu0 0
    %3628 = vmatprep.mubr.bf16.mxu0 0
    %3629 = vmatmul.mubr.bf16.gmra.mrb[0].mxu0 %v3595
    %v3630 = vpop.f32.mrb[0].mxu0
    %v3631 = vadd.f32 0.0, %v3630
    %v3632 = vpop.f32.mrb[0].mxu0
    %v3633 = vadd.f32 0.0, %v3632
    %v3634 = vpop.f32.mrb[0].mxu0
    %v3635 = vpop.f32.mrb[0].mxu0
    %3636 = vdwg.mxu0
    %v3639 = vrot.slane %v3631, 7
    %v3640 = vrot.slane %v3633, 7
    %v3643 = vadd.f32 %v3513, %v3639
    %v3644 = vadd.f32 %v3515, %v3640
    %v3645 = vxor.u32 %v3643, 2147483648
    %v3646 = vxor.u32 %v3644, 2147483648
    %v3647 = vmul.f32 %v3645, 1.442695
    %v3648 = vpow.pop %v3647
    %v3649 = vmul.f32 %v3646, 1.442695
    %v3650 = vpow.pop %v3649
    %v3651 = vadd.f32 %v3648, 1.0
    %v3652 = vadd.f32 %v3650, 1.0
    %v3653 = vrcp.pop %v3651
    %v3654 = vmul.f32 1.0, %v3653
    %v3655 = vrcp.pop %v3652
    %v3656 = vmul.f32 1.0, %v3655
    %v3657 = vmul.f32 %v3656, 2.0
    %v3658 = vsub.f32 %v3657, 1.0
    %v3660 = vrot.slane %v3658, 1
    %v3662 = vsel %vm429, %v3592, %v3660
    %v3664 = vrot.slane %v3662, 7
    %v3666 = vmul.f32 %v3654, %v3664
    %v3668 = vrot.slane %v3666, 1
    %3670 = vrot.lane.b32.xlu0 %v3668, 64
    %v3671 = vpop.permute.xlu0 %3670
    %v3673 = vrot.slane %v3671, 7
    %v3675 = vadd.f32 %v3666, %v3673
    %v3676 = vtanh.pop %v3675
    %v3677 = vmul.f32 %v3656, %v3676
    %v3678 = vpack.c.bf16 %v3677, %v3677
    %v3680 = vshrl.u32 %v3678, 16
    %3683 = vmatprep.subr.bf16.mxu0 %v612
    %3684 = vmatpush1.bf16.msra.mxu0 %v611
    %3685 = vmatprep.subr.bf16.mxu0 %v614
    %3686 = vmatpush1.bf16.msra.mxu0 %v613
    %3687 = vmatprep.subr.bf16.mxu0 %v616
    %3688 = vmatpush1.bf16.msra.mxu0 %v615
    %3689 = vmatprep.subr.bf16.mxu0 %v618
    %3690 = vmatpush1.bf16.msra.mxu0 %v617
    %3691 = vmatprep.subr.bf16.mxu0 %v620
    %3692 = vmatpush1.bf16.msra.mxu0 %v619
    %3693 = vmatprep.subr.bf16.mxu0 %v622
    %3694 = vmatpush1.bf16.msra.mxu0 %v621
    %3695 = vmatprep.subr.bf16.mxu0 %v624
    %3696 = vmatpush1.bf16.msra.mxu0 %v623
    %3697 = vmatprep.subr.bf16.mxu0 %v626
    %3698 = vmatpush1.bf16.msra.mxu0 %v625
    %3699 = vmatprep.subr.bf16.mxu0 0
    %3700 = vmatpush1.bf16.msra.mxu0 0
    %3701 = vmatprep.subr.bf16.mxu0 0
    %3702 = vmatpush1.bf16.msra.mxu0 0
    %3703 = vmatprep.subr.bf16.mxu0 0
    %3704 = vmatpush1.bf16.msra.mxu0 0
    %3705 = vmatprep.subr.bf16.mxu0 0
    %3706 = vmatpush1.bf16.msra.mxu0 0
    %3707 = vmatprep.subr.bf16.mxu0 0
    %3708 = vmatpush1.bf16.msra.mxu0 0
    %3709 = vmatprep.subr.bf16.mxu0 0
    %3710 = vmatpush1.bf16.msra.mxu0 0
    %3711 = vmatprep.subr.bf16.mxu0 0
    %3712 = vmatpush1.bf16.msra.mxu0 0
    %3713 = vmatprep.subr.bf16.mxu0 0
    %3714 = vmatpush1.bf16.msra.mxu0 0
    %3715 = vmatprep.mubr.bf16.mxu0 0
    %3716 = vmatmul.mubr.bf16.gmra.mrb[0].mxu0 %v3680
    %v3717 = vpop.f32.mrb[0].mxu0
    %v3718 = vadd.f32 0.0, %v3717
    %v3719 = vpop.f32.mrb[0].mxu0
    %v3720 = vadd.f32 0.0, %v3719
    %v3721 = vpop.f32.mrb[0].mxu0
    %v3722 = vpop.f32.mrb[0].mxu0
    %3723 = vdwg.mxu0
    %v3726 = vrot.slane %v3718, 6
    %v3727 = vrot.slane %v3720, 6
    %v3730 = vadd.f32 %v3513, %v3726
    %v3731 = vadd.f32 %v3515, %v3727
    %v3732 = vxor.u32 %v3730, 2147483648
    %v3733 = vxor.u32 %v3731, 2147483648
    %v3734 = vmul.f32 %v3732, 1.442695
    %v3735 = vpow.pop %v3734
    %v3736 = vmul.f32 %v3733, 1.442695
    %v3737 = vpow.pop %v3736
    %v3738 = vadd.f32 %v3735, 1.0
    %v3739 = vadd.f32 %v3737, 1.0
    %v3740 = vrcp.pop %v3738
    %v3741 = vmul.f32 1.0, %v3740
    %v3742 = vrcp.pop %v3739
    %v3743 = vmul.f32 1.0, %v3742
    %v3744 = vmul.f32 %v3743, 2.0
    %v3745 = vsub.f32 %v3744, 1.0
    %v3747 = vrot.slane %v3745, 1
    %v3749 = vsel %vm429, %v3675, %v3747
    %v3751 = vrot.slane %v3749, 7
    %v3753 = vmul.f32 %v3741, %v3751
    %v3755 = vrot.slane %v3753, 2
    %3757 = vrot.lane.b32.xlu0 %v3755, 64
    %v3758 = vpop.permute.xlu0 %3757
    %v3760 = vrot.slane %v3758, 6
    %v3762 = vadd.f32 %v3753, %v3760
    %v3763 = vtanh.pop %v3762
    %v3764 = vmul.f32 %v3743, %v3763
    %v3765 = vpack.c.bf16 %v3764, %v3764
    %v3767 = vrot.slane %v3765, 1
    %3769 = vmatprep.subr.bf16.mxu0 %v612
    %3770 = vmatpush1.bf16.msra.mxu0 %v611
    %3771 = vmatprep.subr.bf16.mxu0 %v614
    %3772 = vmatpush1.bf16.msra.mxu0 %v613
    %3773 = vmatprep.subr.bf16.mxu0 %v616
    %3774 = vmatpush1.bf16.msra.mxu0 %v615
    %3775 = vmatprep.subr.bf16.mxu0 %v618
    %3776 = vmatpush1.bf16.msra.mxu0 %v617
    %3777 = vmatprep.subr.bf16.mxu0 %v620
    %3778 = vmatpush1.bf16.msra.mxu0 %v619
    %3779 = vmatprep.subr.bf16.mxu0 %v622
    %3780 = vmatpush1.bf16.msra.mxu0 %v621
    %3781 = vmatprep.subr.bf16.mxu0 %v624
    %3782 = vmatpush1.bf16.msra.mxu0 %v623
    %3783 = vmatprep.subr.bf16.mxu0 %v626
    %3784 = vmatpush1.bf16.msra.mxu0 %v625
    %3785 = vmatprep.subr.bf16.mxu0 0
    %3786 = vmatpush1.bf16.msra.mxu0 0
    %3787 = vmatprep.subr.bf16.mxu0 0
    %3788 = vmatpush1.bf16.msra.mxu0 0
    %3789 = vmatprep.subr.bf16.mxu0 0
    %3790 = vmatpush1.bf16.msra.mxu0 0
    %3791 = vmatprep.subr.bf16.mxu0 0
    %3792 = vmatpush1.bf16.msra.mxu0 0
    %3793 = vmatprep.subr.bf16.mxu0 0
    %3794 = vmatpush1.bf16.msra.mxu0 0
    %3795 = vmatprep.subr.bf16.mxu0 0
    %3796 = vmatpush1.bf16.msra.mxu0 0
    %3797 = vmatprep.subr.bf16.mxu0 0
    %3798 = vmatpush1.bf16.msra.mxu0 0
    %3799 = vmatprep.subr.bf16.mxu0 0
    %3800 = vmatpush1.bf16.msra.mxu0 0
    %3801 = vmatprep.mubr.bf16.mxu0 0
    %3802 = vmatmul.mubr.bf16.gmra.mrb[0].mxu0 %v3767
    %v3803 = vpop.f32.mrb[0].mxu0
    %v3804 = vadd.f32 0.0, %v3803
    %v3805 = vpop.f32.mrb[0].mxu0
    %v3806 = vadd.f32 0.0, %v3805
    %v3807 = vpop.f32.mrb[0].mxu0
    %v3808 = vpop.f32.mrb[0].mxu0
    %3809 = vdwg.mxu0
    %v3812 = vrot.slane %v3804, 5
    %v3813 = vrot.slane %v3806, 5
    %v3816 = vadd.f32 %v3513, %v3812
    %v3817 = vadd.f32 %v3515, %v3813
    %v3818 = vxor.u32 %v3816, 2147483648
    %v3819 = vxor.u32 %v3817, 2147483648
    %v3820 = vmul.f32 %v3818, 1.442695
    %v3821 = vpow.pop %v3820
    %v3822 = vmul.f32 %v3819, 1.442695
    %v3823 = vpow.pop %v3822
    %v3824 = vadd.f32 %v3821, 1.0
    %v3825 = vadd.f32 %v3823, 1.0
    %v3826 = vrcp.pop %v3824
    %v3827 = vmul.f32 1.0, %v3826
    %v3828 = vrcp.pop %v3825
    %v3829 = vmul.f32 1.0, %v3828
    %v3830 = vmul.f32 %v3829, 2.0
    %v3831 = vsub.f32 %v3830, 1.0
    %v3833 = vrot.slane %v3831, 1
    %v3835 = vsel %vm429, %v3762, %v3833
    %v3837 = vrot.slane %v3835, 7
    %v3839 = vmul.f32 %v3827, %v3837
    %v3841 = vrot.slane %v3839, 3
    %3843 = vrot.lane.b32.xlu0 %v3841, 64
    %v3844 = vpop.permute.xlu0 %3843
    %v3846 = vrot.slane %v3844, 5
    %v3848 = vadd.f32 %v3839, %v3846
    %v3849 = vtanh.pop %v3848
    %v3850 = vmul.f32 %v3829, %v3849
    %v3851 = vpack.c.bf16 %v3850, %v3850
    %v3853 = vshrl.u32 %v3851, 16
    %v3855 = vrot.slane %v3853, 1
    %3857 = vmatprep.subr.bf16.mxu0 %v612
    %3858 = vmatpush1.bf16.msra.mxu0 %v611
    %3859 = vmatprep.subr.bf16.mxu0 %v614
    %3860 = vmatpush1.bf16.msra.mxu0 %v613
    %3861 = vmatprep.subr.bf16.mxu0 %v616
    %3862 = vmatpush1.bf16.msra.mxu0 %v615
    %3863 = vmatprep.subr.bf16.mxu0 %v618
    %3864 = vmatpush1.bf16.msra.mxu0 %v617
    %3865 = vmatprep.subr.bf16.mxu0 %v620
    %3866 = vmatpush1.bf16.msra.mxu0 %v619
    %3867 = vmatprep.subr.bf16.mxu0 %v622
    %3868 = vmatpush1.bf16.msra.mxu0 %v621
    %3869 = vmatprep.subr.bf16.mxu0 %v624
    %3870 = vmatpush1.bf16.msra.mxu0 %v623
    %3871 = vmatprep.subr.bf16.mxu0 %v626
    %3872 = vmatpush1.bf16.msra.mxu0 %v625
    %3873 = vmatprep.subr.bf16.mxu0 0
    %3874 = vmatpush1.bf16.msra.mxu0 0
    %3875 = vmatprep.subr.bf16.mxu0 0
    %3876 = vmatpush1.bf16.msra.mxu0 0
    %3877 = vmatprep.subr.bf16.mxu0 0
    %3878 = vmatpush1.bf16.msra.mxu0 0
    %3879 = vmatprep.subr.bf16.mxu0 0
    %3880 = vmatpush1.bf16.msra.mxu0 0
    %3881 = vmatprep.subr.bf16.mxu0 0
    %3882 = vmatpush1.bf16.msra.mxu0 0
    %3883 = vmatprep.subr.bf16.mxu0 0
    %3884 = vmatpush1.bf16.msra.mxu0 0
    %3885 = vmatprep.subr.bf16.mxu0 0
    %3886 = vmatpush1.bf16.msra.mxu0 0
    %3887 = vmatprep.subr.bf16.mxu0 0
    %3888 = vmatpush1.bf16.msra.mxu0 0
    %3889 = vmatprep.mubr.bf16.mxu0 0
    %3890 = vmatmul.mubr.bf16.gmra.mrb[0].mxu0 %v3855
    %v3891 = vpop.f32.mrb[0].mxu0
    %v3892 = vadd.f32 0.0, %v3891
    %v3893 = vpop.f32.mrb[0].mxu0
    %v3894 = vadd.f32 0.0, %v3893
    %v3895 = vpop.f32.mrb[0].mxu0
    %v3896 = vpop.f32.mrb[0].mxu0
    %3897 = vdwg.mxu0
    %v3900 = vrot.slane %v3892, 4
    %v3901 = vrot.slane %v3894, 4
    %v3904 = vadd.f32 %v3513, %v3900
    %v3905 = vadd.f32 %v3515, %v3901
    %v3906 = vxor.u32 %v3904, 2147483648
    %v3907 = vxor.u32 %v3905, 2147483648
    %v3908 = vmul.f32 %v3906, 1.442695
    %v3909 = vpow.pop %v3908
    %v3910 = vmul.f32 %v3907, 1.442695
    %v3911 = vpow.pop %v3910
    %v3912 = vadd.f32 %v3909, 1.0
    %v3913 = vadd.f32 %v3911, 1.0
    %v3914 = vrcp.pop %v3912
    %v3915 = vmul.f32 1.0, %v3914
    %v3916 = vrcp.pop %v3913
    %v3917 = vmul.f32 1.0, %v3916
    %v3918 = vmul.f32 %v3917, 2.0
    %v3919 = vsub.f32 %v3918, 1.0
    %v3921 = vrot.slane %v3919, 1
    %v3923 = vsel %vm429, %v3848, %v3921
    %v3925 = vrot.slane %v3923, 7
    %v3927 = vmul.f32 %v3915, %v3925
    %v3929 = vrot.slane %v3927, 4
    %3931 = vrot.lane.b32.xlu0 %v3929, 64
    %v3932 = vpop.permute.xlu0 %3931
    %v3934 = vrot.slane %v3932, 4
    %v3936 = vadd.f32 %v3927, %v3934
    %v3937 = vtanh.pop %v3936
    %v3938 = vmul.f32 %v3917, %v3937
    %v3939 = vpack.c.bf16 %v3938, %v3938
    %v3941 = vrot.slane %v3939, 2
    %3943 = vmatprep.subr.bf16.mxu0 %v612
    %3944 = vmatpush1.bf16.msra.mxu0 %v611
    %3945 = vmatprep.subr.bf16.mxu0 %v614
    %3946 = vmatpush1.bf16.msra.mxu0 %v613
    %3947 = vmatprep.subr.bf16.mxu0 %v616
    %3948 = vmatpush1.bf16.msra.mxu0 %v615
    %3949 = vmatprep.subr.bf16.mxu0 %v618
    %3950 = vmatpush1.bf16.msra.mxu0 %v617
    %3951 = vmatprep.subr.bf16.mxu0 %v620
    %3952 = vmatpush1.bf16.msra.mxu0 %v619
    %3953 = vmatprep.subr.bf16.mxu0 %v622
    %3954 = vmatpush1.bf16.msra.mxu0 %v621
    %3955 = vmatprep.subr.bf16.mxu0 %v624
    %3956 = vmatpush1.bf16.msra.mxu0 %v623
    %3957 = vmatprep.subr.bf16.mxu0 %v626
    %3958 = vmatpush1.bf16.msra.mxu0 %v625
    %3959 = vmatprep.subr.bf16.mxu0 0
    %3960 = vmatpush1.bf16.msra.mxu0 0
    %3961 = vmatprep.subr.bf16.mxu0 0
    %3962 = vmatpush1.bf16.msra.mxu0 0
    %3963 = vmatprep.subr.bf16.mxu0 0
    %3964 = vmatpush1.bf16.msra.mxu0 0
    %3965 = vmatprep.subr.bf16.mxu0 0
    %3966 = vmatpush1.bf16.msra.mxu0 0
    %3967 = vmatprep.subr.bf16.mxu0 0
    %3968 = vmatpush1.bf16.msra.mxu0 0
    %3969 = vmatprep.subr.bf16.mxu0 0
    %3970 = vmatpush1.bf16.msra.mxu0 0
    %3971 = vmatprep.subr.bf16.mxu0 0
    %3972 = vmatpush1.bf16.msra.mxu0 0
    %3973 = vmatprep.subr.bf16.mxu0 0
    %3974 = vmatpush1.bf16.msra.mxu0 0
    %3975 = vmatprep.mubr.bf16.mxu0 0
    %3976 = vmatmul.mubr.bf16.gmra.mrb[0].mxu0 %v3941
    %v3977 = vpop.f32.mrb[0].mxu0
    %v3978 = vadd.f32 0.0, %v3977
    %v3979 = vpop.f32.mrb[0].mxu0
    %v3980 = vadd.f32 0.0, %v3979
    %v3981 = vpop.f32.mrb[0].mxu0
    %v3982 = vpop.f32.mrb[0].mxu0
    %3983 = vdwg.mxu0
    %v3986 = vrot.slane %v3978, 3
    %v3987 = vrot.slane %v3980, 3
    %v3990 = vadd.f32 %v3513, %v3986
    %v3991 = vadd.f32 %v3515, %v3987
    %v3992 = vxor.u32 %v3990, 2147483648
    %v3993 = vxor.u32 %v3991, 2147483648
    %v3994 = vmul.f32 %v3992, 1.442695
    %v3995 = vpow.pop %v3994
    %v3996 = vmul.f32 %v3993, 1.442695
    %v3997 = vpow.pop %v3996
    %v3998 = vadd.f32 %v3995, 1.0
    %v3999 = vadd.f32 %v3997, 1.0
    %v4000 = vrcp.pop %v3998
    %v4001 = vmul.f32 1.0, %v4000
    %v4002 = vrcp.pop %v3999
    %v4003 = vmul.f32 1.0, %v4002
    %v4004 = vmul.f32 %v4003, 2.0
    %v4005 = vsub.f32 %v4004, 1.0
    %v4007 = vrot.slane %v4005, 1
    %v4009 = vsel %vm429, %v3936, %v4007
    %v4011 = vrot.slane %v4009, 7
    %v4013 = vmul.f32 %v4001, %v4011
    %v4015 = vrot.slane %v4013, 5
    %4017 = vrot.lane.b32.xlu0 %v4015, 64
    %v4018 = vpop.permute.xlu0 %4017
    %v4020 = vrot.slane %v4018, 3
    %v4022 = vadd.f32 %v4013, %v4020
    %v4023 = vtanh.pop %v4022
    %v4024 = vmul.f32 %v4003, %v4023
    %v4025 = vpack.c.bf16 %v4024, %v4024
    %v4027 = vshrl.u32 %v4025, 16
    %v4029 = vrot.slane %v4027, 2
    %4031 = vmatprep.subr.bf16.mxu0 %v612
    %4032 = vmatpush1.bf16.msra.mxu0 %v611
    %4033 = vmatprep.subr.bf16.mxu0 %v614
    %4034 = vmatpush1.bf16.msra.mxu0 %v613
    %4035 = vmatprep.subr.bf16.mxu0 %v616
    %4036 = vmatpush1.bf16.msra.mxu0 %v615
    %4037 = vmatprep.subr.bf16.mxu0 %v618
    %4038 = vmatpush1.bf16.msra.mxu0 %v617
    %4039 = vmatprep.subr.bf16.mxu0 %v620
    %4040 = vmatpush1.bf16.msra.mxu0 %v619
    %4041 = vmatprep.subr.bf16.mxu0 %v622
    %4042 = vmatpush1.bf16.msra.mxu0 %v621
    %4043 = vmatprep.subr.bf16.mxu0 %v624
    %4044 = vmatpush1.bf16.msra.mxu0 %v623
    %4045 = vmatprep.subr.bf16.mxu0 %v626
    %4046 = vmatpush1.bf16.msra.mxu0 %v625
    %4047 = vmatprep.subr.bf16.mxu0 0
    %4048 = vmatpush1.bf16.msra.mxu0 0
    %4049 = vmatprep.subr.bf16.mxu0 0
    %4050 = vmatpush1.bf16.msra.mxu0 0
    %4051 = vmatprep.subr.bf16.mxu0 0
    %4052 = vmatpush1.bf16.msra.mxu0 0
    %4053 = vmatprep.subr.bf16.mxu0 0
    %4054 = vmatpush1.bf16.msra.mxu0 0
    %4055 = vmatprep.subr.bf16.mxu0 0
    %4056 = vmatpush1.bf16.msra.mxu0 0
    %4057 = vmatprep.subr.bf16.mxu0 0
    %4058 = vmatpush1.bf16.msra.mxu0 0
    %4059 = vmatprep.subr.bf16.mxu0 0
    %4060 = vmatpush1.bf16.msra.mxu0 0
    %4061 = vmatprep.subr.bf16.mxu0 0
    %4062 = vmatpush1.bf16.msra.mxu0 0
    %4063 = vmatprep.mubr.bf16.mxu0 0
    %4064 = vmatmul.mubr.bf16.gmra.mrb[0].mxu0 %v4029
    %v4065 = vpop.f32.mrb[0].mxu0
    %v4066 = vadd.f32 0.0, %v4065
    %v4067 = vpop.f32.mrb[0].mxu0
    %v4068 = vadd.f32 0.0, %v4067
    %v4069 = vpop.f32.mrb[0].mxu0
    %v4070 = vpop.f32.mrb[0].mxu0
    %4071 = vdwg.mxu0
    %v4074 = vrot.slane %v4066, 2
    %v4075 = vrot.slane %v4068, 2
    %v4078 = vadd.f32 %v3513, %v4074
    %v4079 = vadd.f32 %v3515, %v4075
    %v4080 = vxor.u32 %v4078, 2147483648
    %v4081 = vxor.u32 %v4079, 2147483648
    %v4082 = vmul.f32 %v4080, 1.442695
    %v4083 = vpow.pop %v4082
    %v4084 = vmul.f32 %v4081, 1.442695
    %v4085 = vpow.pop %v4084
    %v4086 = vadd.f32 %v4083, 1.0
    %v4087 = vadd.f32 %v4085, 1.0
    %v4088 = vrcp.pop %v4086
    %v4089 = vmul.f32 1.0, %v4088
    %v4090 = vrcp.pop %v4087
    %v4091 = vmul.f32 1.0, %v4090
    %v4092 = vmul.f32 %v4091, 2.0
    %v4093 = vsub.f32 %v4092, 1.0
    %v4095 = vrot.slane %v4093, 1
    %v4097 = vsel %vm429, %v4022, %v4095
    %v4099 = vrot.slane %v4097, 7
    %v4101 = vmul.f32 %v4089, %v4099
    %v4103 = vrot.slane %v4101, 6
    %4105 = vrot.lane.b32.xlu0 %v4103, 64
    %v4106 = vpop.permute.xlu0 %4105
    %v4108 = vrot.slane %v4106, 2
    %v4110 = vadd.f32 %v4101, %v4108
    %v4111 = vtanh.pop %v4110
    %v4112 = vmul.f32 %v4091, %v4111
    %v4113 = vpack.c.bf16 %v4112, %v4112
    %v4115 = vrot.slane %v4113, 3
    %4117 = vmatprep.subr.bf16.mxu0 %v612
    %4118 = vmatpush1.bf16.msra.mxu0 %v611
    %4119 = vmatprep.subr.bf16.mxu0 %v614
    %4120 = vmatpush1.bf16.msra.mxu0 %v613
    %4121 = vmatprep.subr.bf16.mxu0 %v616
    %4122 = vmatpush1.bf16.msra.mxu0 %v615
    %4123 = vmatprep.subr.bf16.mxu0 %v618
    %4124 = vmatpush1.bf16.msra.mxu0 %v617
    %4125 = vmatprep.subr.bf16.mxu0 %v620
    %4126 = vmatpush1.bf16.msra.mxu0 %v619
    %4127 = vmatprep.subr.bf16.mxu0 %v622
    %4128 = vmatpush1.bf16.msra.mxu0 %v621
    %4129 = vmatprep.subr.bf16.mxu0 %v624
    %4130 = vmatpush1.bf16.msra.mxu0 %v623
    %4131 = vmatprep.subr.bf16.mxu0 %v626
    %4132 = vmatpush1.bf16.msra.mxu0 %v625
    %4133 = vmatprep.subr.bf16.mxu0 0
    %4134 = vmatpush1.bf16.msra.mxu0 0
    %4135 = vmatprep.subr.bf16.mxu0 0
    %4136 = vmatpush1.bf16.msra.mxu0 0
    %4137 = vmatprep.subr.bf16.mxu0 0
    %4138 = vmatpush1.bf16.msra.mxu0 0
    %4139 = vmatprep.subr.bf16.mxu0 0
    %4140 = vmatpush1.bf16.msra.mxu0 0
    %4141 = vmatprep.subr.bf16.mxu0 0
    %4142 = vmatpush1.bf16.msra.mxu0 0
    %4143 = vmatprep.subr.bf16.mxu0 0
    %4144 = vmatpush1.bf16.msra.mxu0 0
    %4145 = vmatprep.subr.bf16.mxu0 0
    %4146 = vmatpush1.bf16.msra.mxu0 0
    %4147 = vmatprep.subr.bf16.mxu0 0
    %4148 = vmatpush1.bf16.msra.mxu0 0
    %4149 = vmatprep.mubr.bf16.mxu0 0
    %4150 = vmatmul.mubr.bf16.gmra.mrb[0].mxu0 %v4115
    %v4151 = vpop.f32.mrb[0].mxu0
    %v4152 = vadd.f32 0.0, %v4151
    %v4153 = vpop.f32.mrb[0].mxu0
    %v4154 = vadd.f32 0.0, %v4153
    %v4155 = vpop.f32.mrb[0].mxu0
    %v4156 = vpop.f32.mrb[0].mxu0
    %4157 = vdwg.mxu0
    %v4160 = vrot.slane %v4152, 1
    %v4161 = vrot.slane %v4154, 1
    %v4164 = vadd.f32 %v3513, %v4160
    %v4165 = vadd.f32 %v3515, %v4161
    %v4166 = vxor.u32 %v4164, 2147483648
    %v4167 = vxor.u32 %v4165, 2147483648
    %v4168 = vmul.f32 %v4166, 1.442695
    %v4169 = vpow.pop %v4168
    %v4170 = vmul.f32 %v4167, 1.442695
    %v4171 = vpow.pop %v4170
    %v4172 = vadd.f32 %v4169, 1.0
    %v4173 = vadd.f32 %v4171, 1.0
    %v4174 = vrcp.pop %v4172
    %v4175 = vmul.f32 1.0, %v4174
    %v4176 = vrcp.pop %v4173
    %v4177 = vmul.f32 1.0, %v4176
    %v4178 = vmul.f32 %v4177, 2.0
    %v4179 = vsub.f32 %v4178, 1.0
    %v4181 = vrot.slane %v4179, 1
    %v4183 = vsel %vm429, %v4110, %v4181
    %v4185 = vrot.slane %v4183, 7
    %v4187 = vmul.f32 %v4175, %v4185
    %v4189 = vrot.slane %v4187, 7
    %4191 = vrot.lane.b32.xlu0 %v4189, 64
    %v4192 = vpop.permute.xlu0 %4191
    %v4194 = vrot.slane %v4192, 1
    %v4196 = vadd.f32 %v4187, %v4194
    %v4197 = vtanh.pop %v4196
    %v4198 = vmul.f32 %v4177, %v4197
    %v4199 = vpack.c.bf16 %v391, %v391
    %4200 = vmatprep.subr.bf16.mxu0 %v491
    %4201 = vmatpush1.bf16.msra.mxu0 %v490
    %4202 = vmatprep.subr.bf16.mxu0 %v493
    %4203 = vmatpush1.bf16.msra.mxu0 %v492
    %4204 = vmatprep.subr.bf16.mxu0 %v495
    %4205 = vmatpush1.bf16.msra.mxu0 %v494
    %4206 = vmatprep.subr.bf16.mxu0 %v497
    %4207 = vmatpush1.bf16.msra.mxu0 %v496
    %4208 = vmatprep.subr.bf16.mxu0 %v499
    %4209 = vmatpush1.bf16.msra.mxu0 %v498
    %4210 = vmatprep.subr.bf16.mxu0 %v501
    %4211 = vmatpush1.bf16.msra.mxu0 %v500
    %4212 = vmatprep.subr.bf16.mxu0 %v503
    %4213 = vmatpush1.bf16.msra.mxu0 %v502
    %4214 = vmatprep.subr.bf16.mxu0 %v505
    %4215 = vmatpush1.bf16.msra.mxu0 %v504
    %4216 = vmatprep.subr.bf16.mxu0 0
    %4217 = vmatpush1.bf16.msra.mxu0 0
    %4218 = vmatprep.subr.bf16.mxu0 0
    %4219 = vmatpush1.bf16.msra.mxu0 0
    %4220 = vmatprep.subr.bf16.mxu0 0
    %4221 = vmatpush1.bf16.msra.mxu0 0
    %4222 = vmatprep.subr.bf16.mxu0 0
    %4223 = vmatpush1.bf16.msra.mxu0 0
    %4224 = vmatprep.subr.bf16.mxu0 0
    %4225 = vmatpush1.bf16.msra.mxu0 0
    %4226 = vmatprep.subr.bf16.mxu0 0
    %4227 = vmatpush1.bf16.msra.mxu0 0
    %4228 = vmatprep.subr.bf16.mxu0 0
    %4229 = vmatpush1.bf16.msra.mxu0 0
    %4230 = vmatprep.subr.bf16.mxu0 0
    %4231 = vmatpush1.bf16.msra.mxu0 0
    %4232 = vmatprep.mubr.bf16.mxu0 0
    %4233 = vmatmul.mubr.bf16.gmra.mrb[0].mxu0 %v4199
    %v4234 = vpop.f32.mrb[0].mxu0
    %v4235 = vadd.f32 %v435, %v4234
    %v4236 = vpop.f32.mrb[0].mxu0
    %v4237 = vadd.f32 %v439, %v4236
    %v4238 = vpop.f32.mrb[0].mxu0
    %v4239 = vpop.f32.mrb[0].mxu0
    %4240 = vdwg.mxu0
    %v4241 = vpack.c.bf16 %v4198, %v4198
    %v4243 = vshrl.u32 %v4241, 16
    %v4245 = vrot.slane %v4243, 3
    %4247 = vmatprep.subr.bf16.mxu0 %v612
    %4248 = vmatpush1.bf16.msra.mxu0 %v611
    %4249 = vmatprep.subr.bf16.mxu0 %v614
    %4250 = vmatpush1.bf16.msra.mxu0 %v613
    %4251 = vmatprep.subr.bf16.mxu0 %v616
    %4252 = vmatpush1.bf16.msra.mxu0 %v615
    %4253 = vmatprep.subr.bf16.mxu0 %v618
    %4254 = vmatpush1.bf16.msra.mxu0 %v617
    %4255 = vmatprep.subr.bf16.mxu0 %v620
    %4256 = vmatpush1.bf16.msra.mxu0 %v619
    %4257 = vmatprep.subr.bf16.mxu0 %v622
    %4258 = vmatpush1.bf16.msra.mxu0 %v621
    %4259 = vmatprep.subr.bf16.mxu0 %v624
    %4260 = vmatpush1.bf16.msra.mxu0 %v623
    %4261 = vmatprep.subr.bf16.mxu0 %v626
    %4262 = vmatpush1.bf16.msra.mxu0 %v625
    %4263 = vmatprep.subr.bf16.mxu0 0
    %4264 = vmatpush1.bf16.msra.mxu0 0
    %4265 = vmatprep.subr.bf16.mxu0 0
    %4266 = vmatpush1.bf16.msra.mxu0 0
    %4267 = vmatprep.subr.bf16.mxu0 0
    %4268 = vmatpush1.bf16.msra.mxu0 0
    %4269 = vmatprep.subr.bf16.mxu0 0
    %4270 = vmatpush1.bf16.msra.mxu0 0
    %4271 = vmatprep.subr.bf16.mxu0 0
    %4272 = vmatpush1.bf16.msra.mxu0 0
    %4273 = vmatprep.subr.bf16.mxu0 0
    %4274 = vmatpush1.bf16.msra.mxu0 0
    %4275 = vmatprep.subr.bf16.mxu0 0
    %4276 = vmatpush1.bf16.msra.mxu0 0
    %4277 = vmatprep.subr.bf16.mxu0 0
    %4278 = vmatpush1.bf16.msra.mxu0 0
    %4279 = vmatprep.mubr.bf16.mxu0 0
    %4280 = vmatmul.mubr.bf16.gmra.mrb[0].mxu0 %v4245
    %v4281 = vpop.f32.mrb[0].mxu0
    %v4282 = vadd.f32 0.0, %v4281
    %v4283 = vpop.f32.mrb[0].mxu0
    %v4284 = vadd.f32 0.0, %v4283
    %v4285 = vpop.f32.mrb[0].mxu0
    %v4286 = vpop.f32.mrb[0].mxu0
    %4287 = vdwg.mxu0
    %v4288 = vadd.f32 %v4235, %v4282
    %v4289 = vadd.f32 %v4237, %v4284
    %v4290 = vxor.u32 %v4288, 2147483648
    %v4291 = vxor.u32 %v4289, 2147483648
    %v4292 = vmul.f32 %v4290, 1.442695
    %v4293 = vpow.pop %v4292
    %v4294 = vmul.f32 %v4291, 1.442695
    %v4295 = vpow.pop %v4294
    %v4296 = vadd.f32 %v4293, 1.0
    %v4297 = vadd.f32 %v4295, 1.0
    %v4298 = vrcp.pop %v4296
    %v4299 = vmul.f32 1.0, %v4298
    %v4300 = vrcp.pop %v4297
    %v4301 = vmul.f32 1.0, %v4300
    %v4302 = vmul.f32 %v4301, 2.0
    %v4303 = vsub.f32 %v4302, 1.0
    %v4305 = vrot.slane %v4303, 1
    %v4307 = vsel %vm429, %v4196, %v4305
    %v4309 = vrot.slane %v4307, 7
    %v4311 = vmul.f32 %v4299, %v4309
    %4312 = vrot.lane.b32.xlu0 %v4311, 64
    %v4313 = vpop.permute.xlu0 %4312
    %v4314 = vadd.f32 %v4311, %v4313
    %v4315 = vtanh.pop %v4314
    %v4316 = vmul.f32 %v4301, %v4315
    %v4317 = vpack.c.bf16 %v4316, %v4316
    %4318 = vmatprep.subr.bf16.mxu0 %v612
    %4319 = vmatpush1.bf16.msra.mxu0 %v611
    %4320 = vmatprep.subr.bf16.mxu0 %v614
    %4321 = vmatpush1.bf16.msra.mxu0 %v613
    %4322 = vmatprep.subr.bf16.mxu0 %v616
    %4323 = vmatpush1.bf16.msra.mxu0 %v615
    %4324 = vmatprep.subr.bf16.mxu0 %v618
    %4325 = vmatpush1.bf16.msra.mxu0 %v617
    %4326 = vmatprep.subr.bf16.mxu0 %v620
    %4327 = vmatpush1.bf16.msra.mxu0 %v619
    %4328 = vmatprep.subr.bf16.mxu0 %v622
    %4329 = vmatpush1.bf16.msra.mxu0 %v621
    %4330 = vmatprep.subr.bf16.mxu0 %v624
    %4331 = vmatpush1.bf16.msra.mxu0 %v623
    %4332 = vmatprep.subr.bf16.mxu0 %v626
    %4333 = vmatpush1.bf16.msra.mxu0 %v625
    %4334 = vmatprep.subr.bf16.mxu0 0
    %4335 = vmatpush1.bf16.msra.mxu0 0
    %4336 = vmatprep.subr.bf16.mxu0 0
    %4337 = vmatpush1.bf16.msra.mxu0 0
    %4338 = vmatprep.subr.bf16.mxu0 0
    %4339 = vmatpush1.bf16.msra.mxu0 0
    %4340 = vmatprep.subr.bf16.mxu0 0
    %4341 = vmatpush1.bf16.msra.mxu0 0
    %4342 = vmatprep.subr.bf16.mxu0 0
    %4343 = vmatpush1.bf16.msra.mxu0 0
    %4344 = vmatprep.subr.bf16.mxu0 0
    %4345 = vmatpush1.bf16.msra.mxu0 0
    %4346 = vmatprep.subr.bf16.mxu0 0
    %4347 = vmatpush1.bf16.msra.mxu0 0
    %4348 = vmatprep.subr.bf16.mxu0 0
    %4349 = vmatpush1.bf16.msra.mxu0 0
    %4350 = vmatprep.mubr.bf16.mxu0 0
    %4351 = vmatmul.mubr.bf16.gmra.mrb[0].mxu0 %v4317
    %v4352 = vpop.f32.mrb[0].mxu0
    %v4353 = vadd.f32 0.0, %v4352
    %v4354 = vpop.f32.mrb[0].mxu0
    %v4355 = vadd.f32 0.0, %v4354
    %v4356 = vpop.f32.mrb[0].mxu0
    %v4357 = vpop.f32.mrb[0].mxu0
    %4358 = vdwg.mxu0
    %v4361 = vrot.slane %v4353, 7
    %v4362 = vrot.slane %v4355, 7
    %v4365 = vadd.f32 %v4235, %v4361
    %v4366 = vadd.f32 %v4237, %v4362
    %v4367 = vxor.u32 %v4365, 2147483648
    %v4368 = vxor.u32 %v4366, 2147483648
    %v4369 = vmul.f32 %v4367, 1.442695
    %v4370 = vpow.pop %v4369
    %v4371 = vmul.f32 %v4368, 1.442695
    %v4372 = vpow.pop %v4371
    %v4373 = vadd.f32 %v4370, 1.0
    %v4374 = vadd.f32 %v4372, 1.0
    %v4375 = vrcp.pop %v4373
    %v4376 = vmul.f32 1.0, %v4375
    %v4377 = vrcp.pop %v4374
    %v4378 = vmul.f32 1.0, %v4377
    %v4379 = vmul.f32 %v4378, 2.0
    %v4380 = vsub.f32 %v4379, 1.0
    %v4382 = vrot.slane %v4380, 1
    %v4384 = vsel %vm429, %v4314, %v4382
    %v4386 = vrot.slane %v4384, 7
    %v4388 = vmul.f32 %v4376, %v4386
    %v4390 = vrot.slane %v4388, 1
    %4392 = vrot.lane.b32.xlu0 %v4390, 64
    %v4393 = vpop.permute.xlu0 %4392
    %v4395 = vrot.slane %v4393, 7
    %v4397 = vadd.f32 %v4388, %v4395
    %v4398 = vtanh.pop %v4397
    %v4399 = vmul.f32 %v4378, %v4398
    %v4400 = vpack.c.bf16 %v4399, %v4399
    %v4402 = vshrl.u32 %v4400, 16
    %4405 = vmatprep.subr.bf16.mxu0 %v612
    %4406 = vmatpush1.bf16.msra.mxu0 %v611
    %4407 = vmatprep.subr.bf16.mxu0 %v614
    %4408 = vmatpush1.bf16.msra.mxu0 %v613
    %4409 = vmatprep.subr.bf16.mxu0 %v616
    %4410 = vmatpush1.bf16.msra.mxu0 %v615
    %4411 = vmatprep.subr.bf16.mxu0 %v618
    %4412 = vmatpush1.bf16.msra.mxu0 %v617
    %4413 = vmatprep.subr.bf16.mxu0 %v620
    %4414 = vmatpush1.bf16.msra.mxu0 %v619
    %4415 = vmatprep.subr.bf16.mxu0 %v622
    %4416 = vmatpush1.bf16.msra.mxu0 %v621
    %4417 = vmatprep.subr.bf16.mxu0 %v624
    %4418 = vmatpush1.bf16.msra.mxu0 %v623
    %4419 = vmatprep.subr.bf16.mxu0 %v626
    %4420 = vmatpush1.bf16.msra.mxu0 %v625
    %4421 = vmatprep.subr.bf16.mxu0 0
    %4422 = vmatpush1.bf16.msra.mxu0 0
    %4423 = vmatprep.subr.bf16.mxu0 0
    %4424 = vmatpush1.bf16.msra.mxu0 0
    %4425 = vmatprep.subr.bf16.mxu0 0
    %4426 = vmatpush1.bf16.msra.mxu0 0
    %4427 = vmatprep.subr.bf16.mxu0 0
    %4428 = vmatpush1.bf16.msra.mxu0 0
    %4429 = vmatprep.subr.bf16.mxu0 0
    %4430 = vmatpush1.bf16.msra.mxu0 0
    %4431 = vmatprep.subr.bf16.mxu0 0
    %4432 = vmatpush1.bf16.msra.mxu0 0
    %4433 = vmatprep.subr.bf16.mxu0 0
    %4434 = vmatpush1.bf16.msra.mxu0 0
    %4435 = vmatprep.subr.bf16.mxu0 0
    %4436 = vmatpush1.bf16.msra.mxu0 0
    %4437 = vmatprep.mubr.bf16.mxu0 0
    %4438 = vmatmul.mubr.bf16.gmra.mrb[0].mxu0 %v4402
    %v4439 = vpop.f32.mrb[0].mxu0
    %v4440 = vadd.f32 0.0, %v4439
    %v4441 = vpop.f32.mrb[0].mxu0
    %v4442 = vadd.f32 0.0, %v4441
    %v4443 = vpop.f32.mrb[0].mxu0
    %v4444 = vpop.f32.mrb[0].mxu0
    %4445 = vdwg.mxu0
    %v4448 = vrot.slane %v4440, 6
    %v4449 = vrot.slane %v4442, 6
    %v4452 = vadd.f32 %v4235, %v4448
    %v4453 = vadd.f32 %v4237, %v4449
    %v4454 = vxor.u32 %v4452, 2147483648
    %v4455 = vxor.u32 %v4453, 2147483648
    %v4456 = vmul.f32 %v4454, 1.442695
    %v4457 = vpow.pop %v4456
    %v4458 = vmul.f32 %v4455, 1.442695
    %v4459 = vpow.pop %v4458
    %v4460 = vadd.f32 %v4457, 1.0
    %v4461 = vadd.f32 %v4459, 1.0
    %v4462 = vrcp.pop %v4460
    %v4463 = vmul.f32 1.0, %v4462
    %v4464 = vrcp.pop %v4461
    %v4465 = vmul.f32 1.0, %v4464
    %v4466 = vmul.f32 %v4465, 2.0
    %v4467 = vsub.f32 %v4466, 1.0
    %v4469 = vrot.slane %v4467, 1
    %v4471 = vsel %vm429, %v4397, %v4469
    %v4473 = vrot.slane %v4471, 7
    %v4475 = vmul.f32 %v4463, %v4473
    %v4477 = vrot.slane %v4475, 2
    %4479 = vrot.lane.b32.xlu0 %v4477, 64
    %v4480 = vpop.permute.xlu0 %4479
    %v4482 = vrot.slane %v4480, 6
    %v4484 = vadd.f32 %v4475, %v4482
    %v4485 = vtanh.pop %v4484
    %v4486 = vmul.f32 %v4465, %v4485
    %v4487 = vpack.c.bf16 %v4486, %v4486
    %v4489 = vrot.slane %v4487, 1
    %4491 = vmatprep.subr.bf16.mxu0 %v612
    %4492 = vmatpush1.bf16.msra.mxu0 %v611
    %4493 = vmatprep.subr.bf16.mxu0 %v614
    %4494 = vmatpush1.bf16.msra.mxu0 %v613
    %4495 = vmatprep.subr.bf16.mxu0 %v616
    %4496 = vmatpush1.bf16.msra.mxu0 %v615
    %4497 = vmatprep.subr.bf16.mxu0 %v618
    %4498 = vmatpush1.bf16.msra.mxu0 %v617
    %4499 = vmatprep.subr.bf16.mxu0 %v620
    %4500 = vmatpush1.bf16.msra.mxu0 %v619
    %4501 = vmatprep.subr.bf16.mxu0 %v622
    %4502 = vmatpush1.bf16.msra.mxu0 %v621
    %4503 = vmatprep.subr.bf16.mxu0 %v624
    %4504 = vmatpush1.bf16.msra.mxu0 %v623
    %4505 = vmatprep.subr.bf16.mxu0 %v626
    %4506 = vmatpush1.bf16.msra.mxu0 %v625
    %4507 = vmatprep.subr.bf16.mxu0 0
    %4508 = vmatpush1.bf16.msra.mxu0 0
    %4509 = vmatprep.subr.bf16.mxu0 0
    %4510 = vmatpush1.bf16.msra.mxu0 0
    %4511 = vmatprep.subr.bf16.mxu0 0
    %4512 = vmatpush1.bf16.msra.mxu0 0
    %4513 = vmatprep.subr.bf16.mxu0 0
    %4514 = vmatpush1.bf16.msra.mxu0 0
    %4515 = vmatprep.subr.bf16.mxu0 0
    %4516 = vmatpush1.bf16.msra.mxu0 0
    %4517 = vmatprep.subr.bf16.mxu0 0
    %4518 = vmatpush1.bf16.msra.mxu0 0
    %4519 = vmatprep.subr.bf16.mxu0 0
    %4520 = vmatpush1.bf16.msra.mxu0 0
    %4521 = vmatprep.subr.bf16.mxu0 0
    %4522 = vmatpush1.bf16.msra.mxu0 0
    %4523 = vmatprep.mubr.bf16.mxu0 0
    %4524 = vmatmul.mubr.bf16.gmra.mrb[0].mxu0 %v4489
    %v4525 = vpop.f32.mrb[0].mxu0
    %v4526 = vadd.f32 0.0, %v4525
    %v4527 = vpop.f32.mrb[0].mxu0
    %v4528 = vadd.f32 0.0, %v4527
    %v4529 = vpop.f32.mrb[0].mxu0
    %v4530 = vpop.f32.mrb[0].mxu0
    %4531 = vdwg.mxu0
    %v4534 = vrot.slane %v4526, 5
    %v4535 = vrot.slane %v4528, 5
    %v4538 = vadd.f32 %v4235, %v4534
    %v4539 = vadd.f32 %v4237, %v4535
    %v4540 = vxor.u32 %v4538, 2147483648
    %v4541 = vxor.u32 %v4539, 2147483648
    %v4542 = vmul.f32 %v4540, 1.442695
    %v4543 = vpow.pop %v4542
    %v4544 = vmul.f32 %v4541, 1.442695
    %v4545 = vpow.pop %v4544
    %v4546 = vadd.f32 %v4543, 1.0
    %v4547 = vadd.f32 %v4545, 1.0
    %v4548 = vrcp.pop %v4546
    %v4549 = vmul.f32 1.0, %v4548
    %v4550 = vrcp.pop %v4547
    %v4551 = vmul.f32 1.0, %v4550
    %v4552 = vmul.f32 %v4551, 2.0
    %v4553 = vsub.f32 %v4552, 1.0
    %v4555 = vrot.slane %v4553, 1
    %v4557 = vsel %vm429, %v4484, %v4555
    %v4559 = vrot.slane %v4557, 7
    %v4561 = vmul.f32 %v4549, %v4559
    %v4563 = vrot.slane %v4561, 3
    %4565 = vrot.lane.b32.xlu0 %v4563, 64
    %v4566 = vpop.permute.xlu0 %4565
    %v4568 = vrot.slane %v4566, 5
    %v4570 = vadd.f32 %v4561, %v4568
    %v4571 = vtanh.pop %v4570
    %v4572 = vmul.f32 %v4551, %v4571
    %v4573 = vpack.c.bf16 %v4572, %v4572
    %v4575 = vshrl.u32 %v4573, 16
    %v4577 = vrot.slane %v4575, 1
    %4579 = vmatprep.subr.bf16.mxu0 %v612
    %4580 = vmatpush1.bf16.msra.mxu0 %v611
    %4581 = vmatprep.subr.bf16.mxu0 %v614
    %4582 = vmatpush1.bf16.msra.mxu0 %v613
    %4583 = vmatprep.subr.bf16.mxu0 %v616
    %4584 = vmatpush1.bf16.msra.mxu0 %v615
    %4585 = vmatprep.subr.bf16.mxu0 %v618
    %4586 = vmatpush1.bf16.msra.mxu0 %v617
    %4587 = vmatprep.subr.bf16.mxu0 %v620
    %4588 = vmatpush1.bf16.msra.mxu0 %v619
    %4589 = vmatprep.subr.bf16.mxu0 %v622
    %4590 = vmatpush1.bf16.msra.mxu0 %v621
    %4591 = vmatprep.subr.bf16.mxu0 %v624
    %4592 = vmatpush1.bf16.msra.mxu0 %v623
    %4593 = vmatprep.subr.bf16.mxu0 %v626
    %4594 = vmatpush1.bf16.msra.mxu0 %v625
    %4595 = vmatprep.subr.bf16.mxu0 0
    %4596 = vmatpush1.bf16.msra.mxu0 0
    %4597 = vmatprep.subr.bf16.mxu0 0
    %4598 = vmatpush1.bf16.msra.mxu0 0
    %4599 = vmatprep.subr.bf16.mxu0 0
    %4600 = vmatpush1.bf16.msra.mxu0 0
    %4601 = vmatprep.subr.bf16.mxu0 0
    %4602 = vmatpush1.bf16.msra.mxu0 0
    %4603 = vmatprep.subr.bf16.mxu0 0
    %4604 = vmatpush1.bf16.msra.mxu0 0
    %4605 = vmatprep.subr.bf16.mxu0 0
    %4606 = vmatpush1.bf16.msra.mxu0 0
    %4607 = vmatprep.subr.bf16.mxu0 0
    %4608 = vmatpush1.bf16.msra.mxu0 0
    %4609 = vmatprep.subr.bf16.mxu0 0
    %4610 = vmatpush1.bf16.msra.mxu0 0
    %4611 = vmatprep.mubr.bf16.mxu0 0
    %4612 = vmatmul.mubr.bf16.gmra.mrb[0].mxu0 %v4577
    %v4613 = vpop.f32.mrb[0].mxu0
    %v4614 = vadd.f32 0.0, %v4613
    %v4615 = vpop.f32.mrb[0].mxu0
    %v4616 = vadd.f32 0.0, %v4615
    %v4617 = vpop.f32.mrb[0].mxu0
    %v4618 = vpop.f32.mrb[0].mxu0
    %4619 = vdwg.mxu0
    %v4622 = vrot.slane %v4614, 4
    %v4623 = vrot.slane %v4616, 4
    %v4626 = vadd.f32 %v4235, %v4622
    %v4627 = vadd.f32 %v4237, %v4623
    %v4628 = vxor.u32 %v4626, 2147483648
    %v4629 = vxor.u32 %v4627, 2147483648
    %v4630 = vmul.f32 %v4628, 1.442695
    %v4631 = vpow.pop %v4630
    %v4632 = vmul.f32 %v4629, 1.442695
    %v4633 = vpow.pop %v4632
    %v4634 = vadd.f32 %v4631, 1.0
    %v4635 = vadd.f32 %v4633, 1.0
    %v4636 = vrcp.pop %v4634
    %v4637 = vmul.f32 1.0, %v4636
    %v4638 = vrcp.pop %v4635
    %v4639 = vmul.f32 1.0, %v4638
    %v4640 = vmul.f32 %v4639, 2.0
    %v4641 = vsub.f32 %v4640, 1.0
    %v4643 = vrot.slane %v4641, 1
    %v4645 = vsel %vm429, %v4570, %v4643
    %v4647 = vrot.slane %v4645, 7
    %v4649 = vmul.f32 %v4637, %v4647
    %v4651 = vrot.slane %v4649, 4
    %4653 = vrot.lane.b32.xlu0 %v4651, 64
    %v4654 = vpop.permute.xlu0 %4653
    %v4656 = vrot.slane %v4654, 4
    %v4658 = vadd.f32 %v4649, %v4656
    %v4659 = vtanh.pop %v4658
    %v4660 = vmul.f32 %v4639, %v4659
    %v4661 = vpack.c.bf16 %v4660, %v4660
    %v4663 = vrot.slane %v4661, 2
    %4665 = vmatprep.subr.bf16.mxu0 %v612
    %4666 = vmatpush1.bf16.msra.mxu0 %v611
    %4667 = vmatprep.subr.bf16.mxu0 %v614
    %4668 = vmatpush1.bf16.msra.mxu0 %v613
    %4669 = vmatprep.subr.bf16.mxu0 %v616
    %4670 = vmatpush1.bf16.msra.mxu0 %v615
    %4671 = vmatprep.subr.bf16.mxu0 %v618
    %4672 = vmatpush1.bf16.msra.mxu0 %v617
    %4673 = vmatprep.subr.bf16.mxu0 %v620
    %4674 = vmatpush1.bf16.msra.mxu0 %v619
    %4675 = vmatprep.subr.bf16.mxu0 %v622
    %4676 = vmatpush1.bf16.msra.mxu0 %v621
    %4677 = vmatprep.subr.bf16.mxu0 %v624
    %4678 = vmatpush1.bf16.msra.mxu0 %v623
    %4679 = vmatprep.subr.bf16.mxu0 %v626
    %4680 = vmatpush1.bf16.msra.mxu0 %v625
    %4681 = vmatprep.subr.bf16.mxu0 0
    %4682 = vmatpush1.bf16.msra.mxu0 0
    %4683 = vmatprep.subr.bf16.mxu0 0
    %4684 = vmatpush1.bf16.msra.mxu0 0
    %4685 = vmatprep.subr.bf16.mxu0 0
    %4686 = vmatpush1.bf16.msra.mxu0 0
    %4687 = vmatprep.subr.bf16.mxu0 0
    %4688 = vmatpush1.bf16.msra.mxu0 0
    %4689 = vmatprep.subr.bf16.mxu0 0
    %4690 = vmatpush1.bf16.msra.mxu0 0
    %4691 = vmatprep.subr.bf16.mxu0 0
    %4692 = vmatpush1.bf16.msra.mxu0 0
    %4693 = vmatprep.subr.bf16.mxu0 0
    %4694 = vmatpush1.bf16.msra.mxu0 0
    %4695 = vmatprep.subr.bf16.mxu0 0
    %4696 = vmatpush1.bf16.msra.mxu0 0
    %4697 = vmatprep.mubr.bf16.mxu0 0
    %4698 = vmatmul.mubr.bf16.gmra.mrb[0].mxu0 %v4663
    %v4699 = vpop.f32.mrb[0].mxu0
    %v4700 = vadd.f32 0.0, %v4699
    %v4701 = vpop.f32.mrb[0].mxu0
    %v4702 = vadd.f32 0.0, %v4701
    %v4703 = vpop.f32.mrb[0].mxu0
    %v4704 = vpop.f32.mrb[0].mxu0
    %4705 = vdwg.mxu0
    %v4708 = vrot.slane %v4700, 3
    %v4709 = vrot.slane %v4702, 3
    %v4712 = vadd.f32 %v4235, %v4708
    %v4713 = vadd.f32 %v4237, %v4709
    %v4714 = vxor.u32 %v4712, 2147483648
    %v4715 = vxor.u32 %v4713, 2147483648
    %v4716 = vmul.f32 %v4714, 1.442695
    %v4717 = vpow.pop %v4716
    %v4718 = vmul.f32 %v4715, 1.442695
    %v4719 = vpow.pop %v4718
    %v4720 = vadd.f32 %v4717, 1.0
    %v4721 = vadd.f32 %v4719, 1.0
    %v4722 = vrcp.pop %v4720
    %v4723 = vmul.f32 1.0, %v4722
    %v4724 = vrcp.pop %v4721
    %v4725 = vmul.f32 1.0, %v4724
    %v4726 = vmul.f32 %v4725, 2.0
    %v4727 = vsub.f32 %v4726, 1.0
    %v4729 = vrot.slane %v4727, 1
    %v4731 = vsel %vm429, %v4658, %v4729
    %v4733 = vrot.slane %v4731, 7
    %v4735 = vmul.f32 %v4723, %v4733
    %v4737 = vrot.slane %v4735, 5
    %4739 = vrot.lane.b32.xlu0 %v4737, 64
    %v4740 = vpop.permute.xlu0 %4739
    %v4742 = vrot.slane %v4740, 3
    %v4744 = vadd.f32 %v4735, %v4742
    %v4745 = vtanh.pop %v4744
    %v4746 = vmul.f32 %v4725, %v4745
    %v4747 = vpack.c.bf16 %v4746, %v4746
    %v4749 = vshrl.u32 %v4747, 16
    %v4751 = vrot.slane %v4749, 2
    %4753 = vmatprep.subr.bf16.mxu0 %v612
    %4754 = vmatpush1.bf16.msra.mxu0 %v611
    %4755 = vmatprep.subr.bf16.mxu0 %v614
    %4756 = vmatpush1.bf16.msra.mxu0 %v613
    %4757 = vmatprep.subr.bf16.mxu0 %v616
    %4758 = vmatpush1.bf16.msra.mxu0 %v615
    %4759 = vmatprep.subr.bf16.mxu0 %v618
    %4760 = vmatpush1.bf16.msra.mxu0 %v617
    %4761 = vmatprep.subr.bf16.mxu0 %v620
    %4762 = vmatpush1.bf16.msra.mxu0 %v619
    %4763 = vmatprep.subr.bf16.mxu0 %v622
    %4764 = vmatpush1.bf16.msra.mxu0 %v621
    %4765 = vmatprep.subr.bf16.mxu0 %v624
    %4766 = vmatpush1.bf16.msra.mxu0 %v623
    %4767 = vmatprep.subr.bf16.mxu0 %v626
    %4768 = vmatpush1.bf16.msra.mxu0 %v625
    %4769 = vmatprep.subr.bf16.mxu0 0
    %4770 = vmatpush1.bf16.msra.mxu0 0
    %4771 = vmatprep.subr.bf16.mxu0 0
    %4772 = vmatpush1.bf16.msra.mxu0 0
    %4773 = vmatprep.subr.bf16.mxu0 0
    %4774 = vmatpush1.bf16.msra.mxu0 0
    %4775 = vmatprep.subr.bf16.mxu0 0
    %4776 = vmatpush1.bf16.msra.mxu0 0
    %4777 = vmatprep.subr.bf16.mxu0 0
    %4778 = vmatpush1.bf16.msra.mxu0 0
    %4779 = vmatprep.subr.bf16.mxu0 0
    %4780 = vmatpush1.bf16.msra.mxu0 0
    %4781 = vmatprep.subr.bf16.mxu0 0
    %4782 = vmatpush1.bf16.msra.mxu0 0
    %4783 = vmatprep.subr.bf16.mxu0 0
    %4784 = vmatpush1.bf16.msra.mxu0 0
    %4785 = vmatprep.mubr.bf16.mxu0 0
    %4786 = vmatmul.mubr.bf16.gmra.mrb[0].mxu0 %v4751
    %v4787 = vpop.f32.mrb[0].mxu0
    %v4788 = vadd.f32 0.0, %v4787
    %v4789 = vpop.f32.mrb[0].mxu0
    %v4790 = vadd.f32 0.0, %v4789
    %v4791 = vpop.f32.mrb[0].mxu0
    %v4792 = vpop.f32.mrb[0].mxu0
    %4793 = vdwg.mxu0
    %v4796 = vrot.slane %v4788, 2
    %v4797 = vrot.slane %v4790, 2
    %v4800 = vadd.f32 %v4235, %v4796
    %v4801 = vadd.f32 %v4237, %v4797
    %v4802 = vxor.u32 %v4800, 2147483648
    %v4803 = vxor.u32 %v4801, 2147483648
    %v4804 = vmul.f32 %v4802, 1.442695
    %v4805 = vpow.pop %v4804
    %v4806 = vmul.f32 %v4803, 1.442695
    %v4807 = vpow.pop %v4806
    %v4808 = vadd.f32 %v4805, 1.0
    %v4809 = vadd.f32 %v4807, 1.0
    %v4810 = vrcp.pop %v4808
    %v4811 = vmul.f32 1.0, %v4810
    %v4812 = vrcp.pop %v4809
    %v4813 = vmul.f32 1.0, %v4812
    %v4814 = vmul.f32 %v4813, 2.0
    %v4815 = vsub.f32 %v4814, 1.0
    %v4817 = vrot.slane %v4815, 1
    %v4819 = vsel %vm429, %v4744, %v4817
    %v4821 = vrot.slane %v4819, 7
    %v4823 = vmul.f32 %v4811, %v4821
    %v4825 = vrot.slane %v4823, 6
    %4827 = vrot.lane.b32.xlu0 %v4825, 64
    %v4828 = vpop.permute.xlu0 %4827
    %v4830 = vrot.slane %v4828, 2
    %v4832 = vadd.f32 %v4823, %v4830
    %v4833 = vtanh.pop %v4832
    %v4834 = vmul.f32 %v4813, %v4833
    %v4835 = vpack.c.bf16 %v4834, %v4834
    %v4837 = vrot.slane %v4835, 3
    %4839 = vmatprep.subr.bf16.mxu0 %v612
    %4840 = vmatpush1.bf16.msra.mxu0 %v611
    %4841 = vmatprep.subr.bf16.mxu0 %v614
    %4842 = vmatpush1.bf16.msra.mxu0 %v613
    %4843 = vmatprep.subr.bf16.mxu0 %v616
    %4844 = vmatpush1.bf16.msra.mxu0 %v615
    %4845 = vmatprep.subr.bf16.mxu0 %v618
    %4846 = vmatpush1.bf16.msra.mxu0 %v617
    %4847 = vmatprep.subr.bf16.mxu0 %v620
    %4848 = vmatpush1.bf16.msra.mxu0 %v619
    %4849 = vmatprep.subr.bf16.mxu0 %v622
    %4850 = vmatpush1.bf16.msra.mxu0 %v621
    %4851 = vmatprep.subr.bf16.mxu0 %v624
    %4852 = vmatpush1.bf16.msra.mxu0 %v623
    %4853 = vmatprep.subr.bf16.mxu0 %v626
    %4854 = vmatpush1.bf16.msra.mxu0 %v625
    %4855 = vmatprep.subr.bf16.mxu0 0
    %4856 = vmatpush1.bf16.msra.mxu0 0
    %4857 = vmatprep.subr.bf16.mxu0 0
    %4858 = vmatpush1.bf16.msra.mxu0 0
    %4859 = vmatprep.subr.bf16.mxu0 0
    %4860 = vmatpush1.bf16.msra.mxu0 0
    %4861 = vmatprep.subr.bf16.mxu0 0
    %4862 = vmatpush1.bf16.msra.mxu0 0
    %4863 = vmatprep.subr.bf16.mxu0 0
    %4864 = vmatpush1.bf16.msra.mxu0 0
    %4865 = vmatprep.subr.bf16.mxu0 0
    %4866 = vmatpush1.bf16.msra.mxu0 0
    %4867 = vmatprep.subr.bf16.mxu0 0
    %4868 = vmatpush1.bf16.msra.mxu0 0
    %4869 = vmatprep.subr.bf16.mxu0 0
    %4870 = vmatpush1.bf16.msra.mxu0 0
    %4871 = vmatprep.mubr.bf16.mxu0 0
    %4872 = vmatmul.mubr.bf16.gmra.mrb[0].mxu0 %v4837
    %v4873 = vpop.f32.mrb[0].mxu0
    %v4874 = vadd.f32 0.0, %v4873
    %v4875 = vpop.f32.mrb[0].mxu0
    %v4876 = vadd.f32 0.0, %v4875
    %v4877 = vpop.f32.mrb[0].mxu0
    %v4878 = vpop.f32.mrb[0].mxu0
    %4879 = vdwg.mxu0
    %v4882 = vrot.slane %v4874, 1
    %v4883 = vrot.slane %v4876, 1
    %v4886 = vadd.f32 %v4235, %v4882
    %v4887 = vadd.f32 %v4237, %v4883
    %v4888 = vxor.u32 %v4886, 2147483648
    %v4889 = vxor.u32 %v4887, 2147483648
    %v4890 = vmul.f32 %v4888, 1.442695
    %v4891 = vpow.pop %v4890
    %v4892 = vmul.f32 %v4889, 1.442695
    %v4893 = vpow.pop %v4892
    %v4894 = vadd.f32 %v4891, 1.0
    %v4895 = vadd.f32 %v4893, 1.0
    %v4896 = vrcp.pop %v4894
    %v4897 = vmul.f32 1.0, %v4896
    %v4898 = vrcp.pop %v4895
    %v4899 = vmul.f32 1.0, %v4898
    %v4900 = vmul.f32 %v4899, 2.0
    %v4901 = vsub.f32 %v4900, 1.0
    %v4903 = vrot.slane %v4901, 1
    %v4905 = vsel %vm429, %v4832, %v4903
    %v4907 = vrot.slane %v4905, 7
    %v4909 = vmul.f32 %v4897, %v4907
    %v4911 = vrot.slane %v4909, 7
    %4913 = vrot.lane.b32.xlu0 %v4911, 64
    %v4914 = vpop.permute.xlu0 %4913
    %v4916 = vrot.slane %v4914, 1
    %v4918 = vadd.f32 %v4909, %v4916
    %v4919 = vtanh.pop %v4918
    %v4920 = vmul.f32 %v4899, %v4919
    %v4921 = vpack.c.bf16 %v392, %v392
    %4922 = vmatprep.subr.bf16.mxu0 %v491
    %4923 = vmatpush1.bf16.msra.mxu0 %v490
    %4924 = vmatprep.subr.bf16.mxu0 %v493
    %4925 = vmatpush1.bf16.msra.mxu0 %v492
    %4926 = vmatprep.subr.bf16.mxu0 %v495
    %4927 = vmatpush1.bf16.msra.mxu0 %v494
    %4928 = vmatprep.subr.bf16.mxu0 %v497
    %4929 = vmatpush1.bf16.msra.mxu0 %v496
    %4930 = vmatprep.subr.bf16.mxu0 %v499
    %4931 = vmatpush1.bf16.msra.mxu0 %v498
    %4932 = vmatprep.subr.bf16.mxu0 %v501
    %4933 = vmatpush1.bf16.msra.mxu0 %v500
    %4934 = vmatprep.subr.bf16.mxu0 %v503
    %4935 = vmatpush1.bf16.msra.mxu0 %v502
    %4936 = vmatprep.subr.bf16.mxu0 %v505
    %4937 = vmatpush1.bf16.msra.mxu0 %v504
    %4938 = vmatprep.subr.bf16.mxu0 0
    %4939 = vmatpush1.bf16.msra.mxu0 0
    %4940 = vmatprep.subr.bf16.mxu0 0
    %4941 = vmatpush1.bf16.msra.mxu0 0
    %4942 = vmatprep.subr.bf16.mxu0 0
    %4943 = vmatpush1.bf16.msra.mxu0 0
    %4944 = vmatprep.subr.bf16.mxu0 0
    %4945 = vmatpush1.bf16.msra.mxu0 0
    %4946 = vmatprep.subr.bf16.mxu0 0
    %4947 = vmatpush1.bf16.msra.mxu0 0
    %4948 = vmatprep.subr.bf16.mxu0 0
    %4949 = vmatpush1.bf16.msra.mxu0 0
    %4950 = vmatprep.subr.bf16.mxu0 0
    %4951 = vmatpush1.bf16.msra.mxu0 0
    %4952 = vmatprep.subr.bf16.mxu0 0
    %4953 = vmatpush1.bf16.msra.mxu0 0
    %4954 = vmatprep.mubr.bf16.mxu0 0
    %4955 = vmatmul.mubr.bf16.gmra.mrb[0].mxu0 %v4921
    %v4956 = vpop.f32.mrb[0].mxu0
    %v4957 = vadd.f32 %v435, %v4956
    %v4958 = vpop.f32.mrb[0].mxu0
    %v4959 = vadd.f32 %v439, %v4958
    %v4960 = vpop.f32.mrb[0].mxu0
    %v4961 = vpop.f32.mrb[0].mxu0
    %4962 = vdwg.mxu0
    %v4963 = vpack.c.bf16 %v4920, %v4920
    %v4965 = vshrl.u32 %v4963, 16
    %v4967 = vrot.slane %v4965, 3
    %4969 = vmatprep.subr.bf16.mxu0 %v612
    %4970 = vmatpush1.bf16.msra.mxu0 %v611
    %4971 = vmatprep.subr.bf16.mxu0 %v614
    %4972 = vmatpush1.bf16.msra.mxu0 %v613
    %4973 = vmatprep.subr.bf16.mxu0 %v616
    %4974 = vmatpush1.bf16.msra.mxu0 %v615
    %4975 = vmatprep.subr.bf16.mxu0 %v618
    %4976 = vmatpush1.bf16.msra.mxu0 %v617
    %4977 = vmatprep.subr.bf16.mxu0 %v620
    %4978 = vmatpush1.bf16.msra.mxu0 %v619
    %4979 = vmatprep.subr.bf16.mxu0 %v622
    %4980 = vmatpush1.bf16.msra.mxu0 %v621
    %4981 = vmatprep.subr.bf16.mxu0 %v624
    %4982 = vmatpush1.bf16.msra.mxu0 %v623
    %4983 = vmatprep.subr.bf16.mxu0 %v626
    %4984 = vmatpush1.bf16.msra.mxu0 %v625
    %4985 = vmatprep.subr.bf16.mxu0 0
    %4986 = vmatpush1.bf16.msra.mxu0 0
    %4987 = vmatprep.subr.bf16.mxu0 0
    %4988 = vmatpush1.bf16.msra.mxu0 0
    %4989 = vmatprep.subr.bf16.mxu0 0
    %4990 = vmatpush1.bf16.msra.mxu0 0
    %4991 = vmatprep.subr.bf16.mxu0 0
    %4992 = vmatpush1.bf16.msra.mxu0 0
    %4993 = vmatprep.subr.bf16.mxu0 0
    %4994 = vmatpush1.bf16.msra.mxu0 0
    %4995 = vmatprep.subr.bf16.mxu0 0
    %4996 = vmatpush1.bf16.msra.mxu0 0
    %4997 = vmatprep.subr.bf16.mxu0 0
    %4998 = vmatpush1.bf16.msra.mxu0 0
    %4999 = vmatprep.subr.bf16.mxu0 0
    %5000 = vmatpush1.bf16.msra.mxu0 0
    %5001 = vmatprep.mubr.bf16.mxu0 0
    %5002 = vmatmul.mubr.bf16.gmra.mrb[0].mxu0 %v4967
    %v5003 = vpop.f32.mrb[0].mxu0
    %v5004 = vadd.f32 0.0, %v5003
    %v5005 = vpop.f32.mrb[0].mxu0
    %v5006 = vadd.f32 0.0, %v5005
    %v5007 = vpop.f32.mrb[0].mxu0
    %v5008 = vpop.f32.mrb[0].mxu0
    %5009 = vdwg.mxu0
    %v5010 = vadd.f32 %v4957, %v5004
    %v5011 = vadd.f32 %v4959, %v5006
    %v5012 = vxor.u32 %v5010, 2147483648
    %v5013 = vxor.u32 %v5011, 2147483648
    %v5014 = vmul.f32 %v5012, 1.442695
    %v5015 = vpow.pop %v5014
    %v5016 = vmul.f32 %v5013, 1.442695
    %v5017 = vpow.pop %v5016
    %v5018 = vadd.f32 %v5015, 1.0
    %v5019 = vadd.f32 %v5017, 1.0
    %v5020 = vrcp.pop %v5018
    %v5021 = vmul.f32 1.0, %v5020
    %v5022 = vrcp.pop %v5019
    %v5023 = vmul.f32 1.0, %v5022
    %v5024 = vmul.f32 %v5023, 2.0
    %v5025 = vsub.f32 %v5024, 1.0
    %v5027 = vrot.slane %v5025, 1
    %v5029 = vsel %vm429, %v4918, %v5027
    %v5031 = vrot.slane %v5029, 7
    %v5033 = vmul.f32 %v5021, %v5031
    %5034 = vrot.lane.b32.xlu0 %v5033, 64
    %v5035 = vpop.permute.xlu0 %5034
    %v5036 = vadd.f32 %v5033, %v5035
    %v5037 = vtanh.pop %v5036
    %v5038 = vmul.f32 %v5023, %v5037
    %v5039 = vpack.c.bf16 %v5038, %v5038
    %5040 = vmatprep.subr.bf16.mxu0 %v612
    %5041 = vmatpush1.bf16.msra.mxu0 %v611
    %5042 = vmatprep.subr.bf16.mxu0 %v614
    %5043 = vmatpush1.bf16.msra.mxu0 %v613
    %5044 = vmatprep.subr.bf16.mxu0 %v616
    %5045 = vmatpush1.bf16.msra.mxu0 %v615
    %5046 = vmatprep.subr.bf16.mxu0 %v618
    %5047 = vmatpush1.bf16.msra.mxu0 %v617
    %5048 = vmatprep.subr.bf16.mxu0 %v620
    %5049 = vmatpush1.bf16.msra.mxu0 %v619
    %5050 = vmatprep.subr.bf16.mxu0 %v622
    %5051 = vmatpush1.bf16.msra.mxu0 %v621
    %5052 = vmatprep.subr.bf16.mxu0 %v624
    %5053 = vmatpush1.bf16.msra.mxu0 %v623
    %5054 = vmatprep.subr.bf16.mxu0 %v626
    %5055 = vmatpush1.bf16.msra.mxu0 %v625
    %5056 = vmatprep.subr.bf16.mxu0 0
    %5057 = vmatpush1.bf16.msra.mxu0 0
    %5058 = vmatprep.subr.bf16.mxu0 0
    %5059 = vmatpush1.bf16.msra.mxu0 0
    %5060 = vmatprep.subr.bf16.mxu0 0
    %5061 = vmatpush1.bf16.msra.mxu0 0
    %5062 = vmatprep.subr.bf16.mxu0 0
    %5063 = vmatpush1.bf16.msra.mxu0 0
    %5064 = vmatprep.subr.bf16.mxu0 0
    %5065 = vmatpush1.bf16.msra.mxu0 0
    %5066 = vmatprep.subr.bf16.mxu0 0
    %5067 = vmatpush1.bf16.msra.mxu0 0
    %5068 = vmatprep.subr.bf16.mxu0 0
    %5069 = vmatpush1.bf16.msra.mxu0 0
    %5070 = vmatprep.subr.bf16.mxu0 0
    %5071 = vmatpush1.bf16.msra.mxu0 0
    %5072 = vmatprep.mubr.bf16.mxu0 0
    %5073 = vmatmul.mubr.bf16.gmra.mrb[0].mxu0 %v5039
    %v5074 = vpop.f32.mrb[0].mxu0
    %v5075 = vadd.f32 0.0, %v5074
    %v5076 = vpop.f32.mrb[0].mxu0
    %v5077 = vadd.f32 0.0, %v5076
    %v5078 = vpop.f32.mrb[0].mxu0
    %v5079 = vpop.f32.mrb[0].mxu0
    %5080 = vdwg.mxu0
    %v5083 = vrot.slane %v5075, 7
    %v5084 = vrot.slane %v5077, 7
    %v5087 = vadd.f32 %v4957, %v5083
    %v5088 = vadd.f32 %v4959, %v5084
    %v5089 = vxor.u32 %v5087, 2147483648
    %v5090 = vxor.u32 %v5088, 2147483648
    %v5091 = vmul.f32 %v5089, 1.442695
    %v5092 = vpow.pop %v5091
    %v5093 = vmul.f32 %v5090, 1.442695
    %v5094 = vpow.pop %v5093
    %v5095 = vadd.f32 %v5092, 1.0
    %v5096 = vadd.f32 %v5094, 1.0
    %v5097 = vrcp.pop %v5095
    %v5098 = vmul.f32 1.0, %v5097
    %v5099 = vrcp.pop %v5096
    %v5100 = vmul.f32 1.0, %v5099
    %v5101 = vmul.f32 %v5100, 2.0
    %v5102 = vsub.f32 %v5101, 1.0
    %v5104 = vrot.slane %v5102, 1
    %v5106 = vsel %vm429, %v5036, %v5104
    %v5108 = vrot.slane %v5106, 7
    %v5110 = vmul.f32 %v5098, %v5108
    %v5112 = vrot.slane %v5110, 1
    %5114 = vrot.lane.b32.xlu0 %v5112, 64
    %v5115 = vpop.permute.xlu0 %5114
    %v5117 = vrot.slane %v5115, 7
    %v5119 = vadd.f32 %v5110, %v5117
    %v5120 = vtanh.pop %v5119
    %v5121 = vmul.f32 %v5100, %v5120
    %v5122 = vpack.c.bf16 %v5121, %v5121
    %v5124 = vshrl.u32 %v5122, 16
    %5127 = vmatprep.subr.bf16.mxu0 %v612
    %5128 = vmatpush1.bf16.msra.mxu0 %v611
    %5129 = vmatprep.subr.bf16.mxu0 %v614
    %5130 = vmatpush1.bf16.msra.mxu0 %v613
    %5131 = vmatprep.subr.bf16.mxu0 %v616
    %5132 = vmatpush1.bf16.msra.mxu0 %v615
    %5133 = vmatprep.subr.bf16.mxu0 %v618
    %5134 = vmatpush1.bf16.msra.mxu0 %v617
    %5135 = vmatprep.subr.bf16.mxu0 %v620
    %5136 = vmatpush1.bf16.msra.mxu0 %v619
    %5137 = vmatprep.subr.bf16.mxu0 %v622
    %5138 = vmatpush1.bf16.msra.mxu0 %v621
    %5139 = vmatprep.subr.bf16.mxu0 %v624
    %5140 = vmatpush1.bf16.msra.mxu0 %v623
    %5141 = vmatprep.subr.bf16.mxu0 %v626
    %5142 = vmatpush1.bf16.msra.mxu0 %v625
    %5143 = vmatprep.subr.bf16.mxu0 0
    %5144 = vmatpush1.bf16.msra.mxu0 0
    %5145 = vmatprep.subr.bf16.mxu0 0
    %5146 = vmatpush1.bf16.msra.mxu0 0
    %5147 = vmatprep.subr.bf16.mxu0 0
    %5148 = vmatpush1.bf16.msra.mxu0 0
    %5149 = vmatprep.subr.bf16.mxu0 0
    %5150 = vmatpush1.bf16.msra.mxu0 0
    %5151 = vmatprep.subr.bf16.mxu0 0
    %5152 = vmatpush1.bf16.msra.mxu0 0
    %5153 = vmatprep.subr.bf16.mxu0 0
    %5154 = vmatpush1.bf16.msra.mxu0 0
    %5155 = vmatprep.subr.bf16.mxu0 0
    %5156 = vmatpush1.bf16.msra.mxu0 0
    %5157 = vmatprep.subr.bf16.mxu0 0
    %5158 = vmatpush1.bf16.msra.mxu0 0
    %5159 = vmatprep.mubr.bf16.mxu0 0
    %5160 = vmatmul.mubr.bf16.gmra.mrb[0].mxu0 %v5124
    %v5161 = vpop.f32.mrb[0].mxu0
    %v5162 = vadd.f32 0.0, %v5161
    %v5163 = vpop.f32.mrb[0].mxu0
    %v5164 = vadd.f32 0.0, %v5163
    %v5165 = vpop.f32.mrb[0].mxu0
    %v5166 = vpop.f32.mrb[0].mxu0
    %5167 = vdwg.mxu0
    %v5170 = vrot.slane %v5162, 6
    %v5171 = vrot.slane %v5164, 6
    %v5174 = vadd.f32 %v4957, %v5170
    %v5175 = vadd.f32 %v4959, %v5171
    %v5176 = vxor.u32 %v5174, 2147483648
    %v5177 = vxor.u32 %v5175, 2147483648
    %v5178 = vmul.f32 %v5176, 1.442695
    %v5179 = vpow.pop %v5178
    %v5180 = vmul.f32 %v5177, 1.442695
    %v5181 = vpow.pop %v5180
    %v5182 = vadd.f32 %v5179, 1.0
    %v5183 = vadd.f32 %v5181, 1.0
    %v5184 = vrcp.pop %v5182
    %v5185 = vmul.f32 1.0, %v5184
    %v5186 = vrcp.pop %v5183
    %v5187 = vmul.f32 1.0, %v5186
    %v5188 = vmul.f32 %v5187, 2.0
    %v5189 = vsub.f32 %v5188, 1.0
    %v5191 = vrot.slane %v5189, 1
    %v5193 = vsel %vm429, %v5119, %v5191
    %v5195 = vrot.slane %v5193, 7
    %v5197 = vmul.f32 %v5185, %v5195
    %v5199 = vrot.slane %v5197, 2
    %5201 = vrot.lane.b32.xlu0 %v5199, 64
    %v5202 = vpop.permute.xlu0 %5201
    %v5204 = vrot.slane %v5202, 6
    %v5206 = vadd.f32 %v5197, %v5204
    %v5207 = vtanh.pop %v5206
    %v5208 = vmul.f32 %v5187, %v5207
    %v5209 = vpack.c.bf16 %v5208, %v5208
    %v5211 = vrot.slane %v5209, 1
    %5213 = vmatprep.subr.bf16.mxu0 %v612
    %5214 = vmatpush1.bf16.msra.mxu0 %v611
    %5215 = vmatprep.subr.bf16.mxu0 %v614
    %5216 = vmatpush1.bf16.msra.mxu0 %v613
    %5217 = vmatprep.subr.bf16.mxu0 %v616
    %5218 = vmatpush1.bf16.msra.mxu0 %v615
    %5219 = vmatprep.subr.bf16.mxu0 %v618
    %5220 = vmatpush1.bf16.msra.mxu0 %v617
    %5221 = vmatprep.subr.bf16.mxu0 %v620
    %5222 = vmatpush1.bf16.msra.mxu0 %v619
    %5223 = vmatprep.subr.bf16.mxu0 %v622
    %5224 = vmatpush1.bf16.msra.mxu0 %v621
    %5225 = vmatprep.subr.bf16.mxu0 %v624
    %5226 = vmatpush1.bf16.msra.mxu0 %v623
    %5227 = vmatprep.subr.bf16.mxu0 %v626
    %5228 = vmatpush1.bf16.msra.mxu0 %v625
    %5229 = vmatprep.subr.bf16.mxu0 0
    %5230 = vmatpush1.bf16.msra.mxu0 0
    %5231 = vmatprep.subr.bf16.mxu0 0
    %5232 = vmatpush1.bf16.msra.mxu0 0
    %5233 = vmatprep.subr.bf16.mxu0 0
    %5234 = vmatpush1.bf16.msra.mxu0 0
    %5235 = vmatprep.subr.bf16.mxu0 0
    %5236 = vmatpush1.bf16.msra.mxu0 0
    %5237 = vmatprep.subr.bf16.mxu0 0
    %5238 = vmatpush1.bf16.msra.mxu0 0
    %5239 = vmatprep.subr.bf16.mxu0 0
    %5240 = vmatpush1.bf16.msra.mxu0 0
    %5241 = vmatprep.subr.bf16.mxu0 0
    %5242 = vmatpush1.bf16.msra.mxu0 0
    %5243 = vmatprep.subr.bf16.mxu0 0
    %5244 = vmatpush1.bf16.msra.mxu0 0
    %5245 = vmatprep.mubr.bf16.mxu0 0
    %5246 = vmatmul.mubr.bf16.gmra.mrb[0].mxu0 %v5211
    %v5247 = vpop.f32.mrb[0].mxu0
    %v5248 = vadd.f32 0.0, %v5247
    %v5249 = vpop.f32.mrb[0].mxu0
    %v5250 = vadd.f32 0.0, %v5249
    %v5251 = vpop.f32.mrb[0].mxu0
    %v5252 = vpop.f32.mrb[0].mxu0
    %5253 = vdwg.mxu0
    %v5256 = vrot.slane %v5248, 5
    %v5257 = vrot.slane %v5250, 5
    %v5260 = vadd.f32 %v4957, %v5256
    %v5261 = vadd.f32 %v4959, %v5257
    %v5262 = vxor.u32 %v5260, 2147483648
    %v5263 = vxor.u32 %v5261, 2147483648
    %v5264 = vmul.f32 %v5262, 1.442695
    %v5265 = vpow.pop %v5264
    %v5266 = vmul.f32 %v5263, 1.442695
    %v5267 = vpow.pop %v5266
    %v5268 = vadd.f32 %v5265, 1.0
    %v5269 = vadd.f32 %v5267, 1.0
    %v5270 = vrcp.pop %v5268
    %v5271 = vmul.f32 1.0, %v5270
    %v5272 = vrcp.pop %v5269
    %v5273 = vmul.f32 1.0, %v5272
    %v5274 = vmul.f32 %v5273, 2.0
    %v5275 = vsub.f32 %v5274, 1.0
    %v5277 = vrot.slane %v5275, 1
    %v5279 = vsel %vm429, %v5206, %v5277
    %v5281 = vrot.slane %v5279, 7
    %v5283 = vmul.f32 %v5271, %v5281
    %v5285 = vrot.slane %v5283, 3
    %5287 = vrot.lane.b32.xlu0 %v5285, 64
    %v5288 = vpop.permute.xlu0 %5287
    %v5290 = vrot.slane %v5288, 5
    %v5292 = vadd.f32 %v5283, %v5290
    %v5293 = vtanh.pop %v5292
    %v5294 = vmul.f32 %v5273, %v5293
    %v5295 = vpack.c.bf16 %v5294, %v5294
    %v5297 = vshrl.u32 %v5295, 16
    %v5299 = vrot.slane %v5297, 1
    %5301 = vmatprep.subr.bf16.mxu0 %v612
    %5302 = vmatpush1.bf16.msra.mxu0 %v611
    %5303 = vmatprep.subr.bf16.mxu0 %v614
    %5304 = vmatpush1.bf16.msra.mxu0 %v613
    %5305 = vmatprep.subr.bf16.mxu0 %v616
    %5306 = vmatpush1.bf16.msra.mxu0 %v615
    %5307 = vmatprep.subr.bf16.mxu0 %v618
    %5308 = vmatpush1.bf16.msra.mxu0 %v617
    %5309 = vmatprep.subr.bf16.mxu0 %v620
    %5310 = vmatpush1.bf16.msra.mxu0 %v619
    %5311 = vmatprep.subr.bf16.mxu0 %v622
    %5312 = vmatpush1.bf16.msra.mxu0 %v621
    %5313 = vmatprep.subr.bf16.mxu0 %v624
    %5314 = vmatpush1.bf16.msra.mxu0 %v623
    %5315 = vmatprep.subr.bf16.mxu0 %v626
    %5316 = vmatpush1.bf16.msra.mxu0 %v625
    %5317 = vmatprep.subr.bf16.mxu0 0
    %5318 = vmatpush1.bf16.msra.mxu0 0
    %5319 = vmatprep.subr.bf16.mxu0 0
    %5320 = vmatpush1.bf16.msra.mxu0 0
    %5321 = vmatprep.subr.bf16.mxu0 0
    %5322 = vmatpush1.bf16.msra.mxu0 0
    %5323 = vmatprep.subr.bf16.mxu0 0
    %5324 = vmatpush1.bf16.msra.mxu0 0
    %5325 = vmatprep.subr.bf16.mxu0 0
    %5326 = vmatpush1.bf16.msra.mxu0 0
    %5327 = vmatprep.subr.bf16.mxu0 0
    %5328 = vmatpush1.bf16.msra.mxu0 0
    %5329 = vmatprep.subr.bf16.mxu0 0
    %5330 = vmatpush1.bf16.msra.mxu0 0
    %5331 = vmatprep.subr.bf16.mxu0 0
    %5332 = vmatpush1.bf16.msra.mxu0 0
    %5333 = vmatprep.mubr.bf16.mxu0 0
    %5334 = vmatmul.mubr.bf16.gmra.mrb[0].mxu0 %v5299
    %v5335 = vpop.f32.mrb[0].mxu0
    %v5336 = vadd.f32 0.0, %v5335
    %v5337 = vpop.f32.mrb[0].mxu0
    %v5338 = vadd.f32 0.0, %v5337
    %v5339 = vpop.f32.mrb[0].mxu0
    %v5340 = vpop.f32.mrb[0].mxu0
    %5341 = vdwg.mxu0
    %v5344 = vrot.slane %v5336, 4
    %v5345 = vrot.slane %v5338, 4
    %v5348 = vadd.f32 %v4957, %v5344
    %v5349 = vadd.f32 %v4959, %v5345
    %v5350 = vxor.u32 %v5348, 2147483648
    %v5351 = vxor.u32 %v5349, 2147483648
    %v5352 = vmul.f32 %v5350, 1.442695
    %v5353 = vpow.pop %v5352
    %v5354 = vmul.f32 %v5351, 1.442695
    %v5355 = vpow.pop %v5354
    %v5356 = vadd.f32 %v5353, 1.0
    %v5357 = vadd.f32 %v5355, 1.0
    %v5358 = vrcp.pop %v5356
    %v5359 = vmul.f32 1.0, %v5358
    %v5360 = vrcp.pop %v5357
    %v5361 = vmul.f32 1.0, %v5360
    %v5362 = vmul.f32 %v5361, 2.0
    %v5363 = vsub.f32 %v5362, 1.0
    %v5365 = vrot.slane %v5363, 1
    %v5367 = vsel %vm429, %v5292, %v5365
    %v5369 = vrot.slane %v5367, 7
    %v5371 = vmul.f32 %v5359, %v5369
    %v5373 = vrot.slane %v5371, 4
    %5375 = vrot.lane.b32.xlu0 %v5373, 64
    %v5376 = vpop.permute.xlu0 %5375
    %v5378 = vrot.slane %v5376, 4
    %v5380 = vadd.f32 %v5371, %v5378
    %v5381 = vtanh.pop %v5380
    %v5382 = vmul.f32 %v5361, %v5381
    %v5383 = vpack.c.bf16 %v5382, %v5382
    %v5385 = vrot.slane %v5383, 2
    %5387 = vmatprep.subr.bf16.mxu0 %v612
    %5388 = vmatpush1.bf16.msra.mxu0 %v611
    %5389 = vmatprep.subr.bf16.mxu0 %v614
    %5390 = vmatpush1.bf16.msra.mxu0 %v613
    %5391 = vmatprep.subr.bf16.mxu0 %v616
    %5392 = vmatpush1.bf16.msra.mxu0 %v615
    %5393 = vmatprep.subr.bf16.mxu0 %v618
    %5394 = vmatpush1.bf16.msra.mxu0 %v617
    %5395 = vmatprep.subr.bf16.mxu0 %v620
    %5396 = vmatpush1.bf16.msra.mxu0 %v619
    %5397 = vmatprep.subr.bf16.mxu0 %v622
    %5398 = vmatpush1.bf16.msra.mxu0 %v621
    %5399 = vmatprep.subr.bf16.mxu0 %v624
    %5400 = vmatpush1.bf16.msra.mxu0 %v623
    %5401 = vmatprep.subr.bf16.mxu0 %v626
    %5402 = vmatpush1.bf16.msra.mxu0 %v625
    %5403 = vmatprep.subr.bf16.mxu0 0
    %5404 = vmatpush1.bf16.msra.mxu0 0
    %5405 = vmatprep.subr.bf16.mxu0 0
    %5406 = vmatpush1.bf16.msra.mxu0 0
    %5407 = vmatprep.subr.bf16.mxu0 0
    %5408 = vmatpush1.bf16.msra.mxu0 0
    %5409 = vmatprep.subr.bf16.mxu0 0
    %5410 = vmatpush1.bf16.msra.mxu0 0
    %5411 = vmatprep.subr.bf16.mxu0 0
    %5412 = vmatpush1.bf16.msra.mxu0 0
    %5413 = vmatprep.subr.bf16.mxu0 0
    %5414 = vmatpush1.bf16.msra.mxu0 0
    %5415 = vmatprep.subr.bf16.mxu0 0
    %5416 = vmatpush1.bf16.msra.mxu0 0
    %5417 = vmatprep.subr.bf16.mxu0 0
    %5418 = vmatpush1.bf16.msra.mxu0 0
    %5419 = vmatprep.mubr.bf16.mxu0 0
    %5420 = vmatmul.mubr.bf16.gmra.mrb[0].mxu0 %v5385
    %v5421 = vpop.f32.mrb[0].mxu0
    %v5422 = vadd.f32 0.0, %v5421
    %v5423 = vpop.f32.mrb[0].mxu0
    %v5424 = vadd.f32 0.0, %v5423
    %v5425 = vpop.f32.mrb[0].mxu0
    %v5426 = vpop.f32.mrb[0].mxu0
    %5427 = vdwg.mxu0
    %v5430 = vrot.slane %v5422, 3
    %v5431 = vrot.slane %v5424, 3
    %v5434 = vadd.f32 %v4957, %v5430
    %v5435 = vadd.f32 %v4959, %v5431
    %v5436 = vxor.u32 %v5434, 2147483648
    %v5437 = vxor.u32 %v5435, 2147483648
    %v5438 = vmul.f32 %v5436, 1.442695
    %v5439 = vpow.pop %v5438
    %v5440 = vmul.f32 %v5437, 1.442695
    %v5441 = vpow.pop %v5440
    %v5442 = vadd.f32 %v5439, 1.0
    %v5443 = vadd.f32 %v5441, 1.0
    %v5444 = vrcp.pop %v5442
    %v5445 = vmul.f32 1.0, %v5444
    %v5446 = vrcp.pop %v5443
    %v5447 = vmul.f32 1.0, %v5446
    %v5448 = vmul.f32 %v5447, 2.0
    %v5449 = vsub.f32 %v5448, 1.0
    %v5451 = vrot.slane %v5449, 1
    %v5453 = vsel %vm429, %v5380, %v5451
    %v5455 = vrot.slane %v5453, 7
    %v5457 = vmul.f32 %v5445, %v5455
    %v5459 = vrot.slane %v5457, 5
    %5461 = vrot.lane.b32.xlu0 %v5459, 64
    %v5462 = vpop.permute.xlu0 %5461
    %v5464 = vrot.slane %v5462, 3
    %v5466 = vadd.f32 %v5457, %v5464
    %v5467 = vtanh.pop %v5466
    %v5468 = vmul.f32 %v5447, %v5467
    %v5469 = vpack.c.bf16 %v5468, %v5468
    %v5471 = vshrl.u32 %v5469, 16
    %v5473 = vrot.slane %v5471, 2
    %5475 = vmatprep.subr.bf16.mxu0 %v612
    %5476 = vmatpush1.bf16.msra.mxu0 %v611
    %5477 = vmatprep.subr.bf16.mxu0 %v614
    %5478 = vmatpush1.bf16.msra.mxu0 %v613
    %5479 = vmatprep.subr.bf16.mxu0 %v616
    %5480 = vmatpush1.bf16.msra.mxu0 %v615
    %5481 = vmatprep.subr.bf16.mxu0 %v618
    %5482 = vmatpush1.bf16.msra.mxu0 %v617
    %5483 = vmatprep.subr.bf16.mxu0 %v620
    %5484 = vmatpush1.bf16.msra.mxu0 %v619
    %5485 = vmatprep.subr.bf16.mxu0 %v622
    %5486 = vmatpush1.bf16.msra.mxu0 %v621
    %5487 = vmatprep.subr.bf16.mxu0 %v624
    %5488 = vmatpush1.bf16.msra.mxu0 %v623
    %5489 = vmatprep.subr.bf16.mxu0 %v626
    %5490 = vmatpush1.bf16.msra.mxu0 %v625
    %5491 = vmatprep.subr.bf16.mxu0 0
    %5492 = vmatpush1.bf16.msra.mxu0 0
    %5493 = vmatprep.subr.bf16.mxu0 0
    %5494 = vmatpush1.bf16.msra.mxu0 0
    %5495 = vmatprep.subr.bf16.mxu0 0
    %5496 = vmatpush1.bf16.msra.mxu0 0
    %5497 = vmatprep.subr.bf16.mxu0 0
    %5498 = vmatpush1.bf16.msra.mxu0 0
    %5499 = vmatprep.subr.bf16.mxu0 0
    %5500 = vmatpush1.bf16.msra.mxu0 0
    %5501 = vmatprep.subr.bf16.mxu0 0
    %5502 = vmatpush1.bf16.msra.mxu0 0
    %5503 = vmatprep.subr.bf16.mxu0 0
    %5504 = vmatpush1.bf16.msra.mxu0 0
    %5505 = vmatprep.subr.bf16.mxu0 0
    %5506 = vmatpush1.bf16.msra.mxu0 0
    %5507 = vmatprep.mubr.bf16.mxu0 0
    %5508 = vmatmul.mubr.bf16.gmra.mrb[0].mxu0 %v5473
    %v5509 = vpop.f32.mrb[0].mxu0
    %v5510 = vadd.f32 0.0, %v5509
    %v5511 = vpop.f32.mrb[0].mxu0
    %v5512 = vadd.f32 0.0, %v5511
    %v5513 = vpop.f32.mrb[0].mxu0
    %v5514 = vpop.f32.mrb[0].mxu0
    %5515 = vdwg.mxu0
    %v5518 = vrot.slane %v5510, 2
    %v5519 = vrot.slane %v5512, 2
    %v5522 = vadd.f32 %v4957, %v5518
    %v5523 = vadd.f32 %v4959, %v5519
    %v5524 = vxor.u32 %v5522, 2147483648
    %v5525 = vxor.u32 %v5523, 2147483648
    %v5526 = vmul.f32 %v5524, 1.442695
    %v5527 = vpow.pop %v5526
    %v5528 = vmul.f32 %v5525, 1.442695
    %v5529 = vpow.pop %v5528
    %v5530 = vadd.f32 %v5527, 1.0
    %v5531 = vadd.f32 %v5529, 1.0
    %v5532 = vrcp.pop %v5530
    %v5533 = vmul.f32 1.0, %v5532
    %v5534 = vrcp.pop %v5531
    %v5535 = vmul.f32 1.0, %v5534
    %v5536 = vmul.f32 %v5535, 2.0
    %v5537 = vsub.f32 %v5536, 1.0
    %v5539 = vrot.slane %v5537, 1
    %v5541 = vsel %vm429, %v5466, %v5539
    %v5543 = vrot.slane %v5541, 7
    %v5545 = vmul.f32 %v5533, %v5543
    %v5547 = vrot.slane %v5545, 6
    %5549 = vrot.lane.b32.xlu0 %v5547, 64
    %v5550 = vpop.permute.xlu0 %5549
    %v5552 = vrot.slane %v5550, 2
    %v5554 = vadd.f32 %v5545, %v5552
    %v5555 = vtanh.pop %v5554
    %v5556 = vmul.f32 %v5535, %v5555
    %v5557 = vpack.c.bf16 %v5556, %v5556
    %v5559 = vrot.slane %v5557, 3
    %5561 = vmatprep.subr.bf16.mxu0 %v612
    %5562 = vmatpush1.bf16.msra.mxu0 %v611
    %5563 = vmatprep.subr.bf16.mxu0 %v614
    %5564 = vmatpush1.bf16.msra.mxu0 %v613
    %5565 = vmatprep.subr.bf16.mxu0 %v616
    %5566 = vmatpush1.bf16.msra.mxu0 %v615
    %5567 = vmatprep.subr.bf16.mxu0 %v618
    %5568 = vmatpush1.bf16.msra.mxu0 %v617
    %5569 = vmatprep.subr.bf16.mxu0 %v620
    %5570 = vmatpush1.bf16.msra.mxu0 %v619
    %5571 = vmatprep.subr.bf16.mxu0 %v622
    %5572 = vmatpush1.bf16.msra.mxu0 %v621
    %5573 = vmatprep.subr.bf16.mxu0 %v624
    %5574 = vmatpush1.bf16.msra.mxu0 %v623
    %5575 = vmatprep.subr.bf16.mxu0 %v626
    %5576 = vmatpush1.bf16.msra.mxu0 %v625
    %5577 = vmatprep.subr.bf16.mxu0 0
    %5578 = vmatpush1.bf16.msra.mxu0 0
    %5579 = vmatprep.subr.bf16.mxu0 0
    %5580 = vmatpush1.bf16.msra.mxu0 0
    %5581 = vmatprep.subr.bf16.mxu0 0
    %5582 = vmatpush1.bf16.msra.mxu0 0
    %5583 = vmatprep.subr.bf16.mxu0 0
    %5584 = vmatpush1.bf16.msra.mxu0 0
    %5585 = vmatprep.subr.bf16.mxu0 0
    %5586 = vmatpush1.bf16.msra.mxu0 0
    %5587 = vmatprep.subr.bf16.mxu0 0
    %5588 = vmatpush1.bf16.msra.mxu0 0
    %5589 = vmatprep.subr.bf16.mxu0 0
    %5590 = vmatpush1.bf16.msra.mxu0 0
    %5591 = vmatprep.subr.bf16.mxu0 0
    %5592 = vmatpush1.bf16.msra.mxu0 0
    %5593 = vmatprep.mubr.bf16.mxu0 0
    %5594 = vmatmul.mubr.bf16.gmra.mrb[0].mxu0 %v5559
    %v5595 = vpop.f32.mrb[0].mxu0
    %v5596 = vadd.f32 0.0, %v5595
    %v5597 = vpop.f32.mrb[0].mxu0
    %v5598 = vadd.f32 0.0, %v5597
    %v5599 = vpop.f32.mrb[0].mxu0
    %v5600 = vpop.f32.mrb[0].mxu0
    %5601 = vdwg.mxu0
    %v5604 = vrot.slane %v5596, 1
    %v5605 = vrot.slane %v5598, 1
    %v5608 = vadd.f32 %v4957, %v5604
    %v5609 = vadd.f32 %v4959, %v5605
    %v5610 = vxor.u32 %v5608, 2147483648
    %v5611 = vxor.u32 %v5609, 2147483648
    %v5612 = vmul.f32 %v5610, 1.442695
    %v5613 = vpow.pop %v5612
    %v5614 = vmul.f32 %v5611, 1.442695
    %v5615 = vpow.pop %v5614
    %v5616 = vadd.f32 %v5613, 1.0
    %v5617 = vadd.f32 %v5615, 1.0
    %v5618 = vrcp.pop %v5616
    %v5619 = vmul.f32 1.0, %v5618
    %v5620 = vrcp.pop %v5617
    %v5621 = vmul.f32 1.0, %v5620
    %v5622 = vmul.f32 %v5621, 2.0
    %v5623 = vsub.f32 %v5622, 1.0
    %v5625 = vrot.slane %v5623, 1
    %v5627 = vsel %vm429, %v5554, %v5625
    %v5629 = vrot.slane %v5627, 7
    %v5631 = vmul.f32 %v5619, %v5629
    %v5633 = vrot.slane %v5631, 7
    %5635 = vrot.lane.b32.xlu0 %v5633, 64
    %v5636 = vpop.permute.xlu0 %5635
    %v5638 = vrot.slane %v5636, 1
    %v5640 = vadd.f32 %v5631, %v5638
    %v5641 = vtanh.pop %v5640
    %v5642 = vmul.f32 %v5621, %v5641
    %v5643 = vpack.c.bf16 %v393, %v393
    %5644 = vmatprep.subr.bf16.mxu0 %v491
    %5645 = vmatpush1.bf16.msra.mxu0 %v490
    %5646 = vmatprep.subr.bf16.mxu0 %v493
    %5647 = vmatpush1.bf16.msra.mxu0 %v492
    %5648 = vmatprep.subr.bf16.mxu0 %v495
    %5649 = vmatpush1.bf16.msra.mxu0 %v494
    %5650 = vmatprep.subr.bf16.mxu0 %v497
    %5651 = vmatpush1.bf16.msra.mxu0 %v496
    %5652 = vmatprep.subr.bf16.mxu0 %v499
    %5653 = vmatpush1.bf16.msra.mxu0 %v498
    %5654 = vmatprep.subr.bf16.mxu0 %v501
    %5655 = vmatpush1.bf16.msra.mxu0 %v500
    %5656 = vmatprep.subr.bf16.mxu0 %v503
    %5657 = vmatpush1.bf16.msra.mxu0 %v502
    %5658 = vmatprep.subr.bf16.mxu0 %v505
    %5659 = vmatpush1.bf16.msra.mxu0 %v504
    %5660 = vmatprep.subr.bf16.mxu0 0
    %5661 = vmatpush1.bf16.msra.mxu0 0
    %5662 = vmatprep.subr.bf16.mxu0 0
    %5663 = vmatpush1.bf16.msra.mxu0 0
    %5664 = vmatprep.subr.bf16.mxu0 0
    %5665 = vmatpush1.bf16.msra.mxu0 0
    %5666 = vmatprep.subr.bf16.mxu0 0
    %5667 = vmatpush1.bf16.msra.mxu0 0
    %5668 = vmatprep.subr.bf16.mxu0 0
    %5669 = vmatpush1.bf16.msra.mxu0 0
    %5670 = vmatprep.subr.bf16.mxu0 0
    %5671 = vmatpush1.bf16.msra.mxu0 0
    %5672 = vmatprep.subr.bf16.mxu0 0
    %5673 = vmatpush1.bf16.msra.mxu0 0
    %5674 = vmatprep.subr.bf16.mxu0 0
    %5675 = vmatpush1.bf16.msra.mxu0 0
    %5676 = vmatprep.mubr.bf16.mxu0 0
    %5677 = vmatmul.mubr.bf16.gmra.mrb[0].mxu0 %v5643
    %v5678 = vpop.f32.mrb[0].mxu0
    %v5679 = vadd.f32 %v435, %v5678
    %v5680 = vpop.f32.mrb[0].mxu0
    %v5681 = vadd.f32 %v439, %v5680
    %v5682 = vpop.f32.mrb[0].mxu0
    %v5683 = vpop.f32.mrb[0].mxu0
    %5684 = vdwg.mxu0
    %v5685 = vpack.c.bf16 %v5642, %v5642
    %v5687 = vshrl.u32 %v5685, 16
    %v5689 = vrot.slane %v5687, 3
    %5691 = vmatprep.subr.bf16.mxu0 %v612
    %5692 = vmatpush1.bf16.msra.mxu0 %v611
    %5693 = vmatprep.subr.bf16.mxu0 %v614
    %5694 = vmatpush1.bf16.msra.mxu0 %v613
    %5695 = vmatprep.subr.bf16.mxu0 %v616
    %5696 = vmatpush1.bf16.msra.mxu0 %v615
    %5697 = vmatprep.subr.bf16.mxu0 %v618
    %5698 = vmatpush1.bf16.msra.mxu0 %v617
    %5699 = vmatprep.subr.bf16.mxu0 %v620
    %5700 = vmatpush1.bf16.msra.mxu0 %v619
    %5701 = vmatprep.subr.bf16.mxu0 %v622
    %5702 = vmatpush1.bf16.msra.mxu0 %v621
    %5703 = vmatprep.subr.bf16.mxu0 %v624
    %5704 = vmatpush1.bf16.msra.mxu0 %v623
    %5705 = vmatprep.subr.bf16.mxu0 %v626
    %5706 = vmatpush1.bf16.msra.mxu0 %v625
    %5707 = vmatprep.subr.bf16.mxu0 0
    %5708 = vmatpush1.bf16.msra.mxu0 0
    %5709 = vmatprep.subr.bf16.mxu0 0
    %5710 = vmatpush1.bf16.msra.mxu0 0
    %5711 = vmatprep.subr.bf16.mxu0 0
    %5712 = vmatpush1.bf16.msra.mxu0 0
    %5713 = vmatprep.subr.bf16.mxu0 0
    %5714 = vmatpush1.bf16.msra.mxu0 0
    %5715 = vmatprep.subr.bf16.mxu0 0
    %5716 = vmatpush1.bf16.msra.mxu0 0
    %5717 = vmatprep.subr.bf16.mxu0 0
    %5718 = vmatpush1.bf16.msra.mxu0 0
    %5719 = vmatprep.subr.bf16.mxu0 0
    %5720 = vmatpush1.bf16.msra.mxu0 0
    %5721 = vmatprep.subr.bf16.mxu0 0
    %5722 = vmatpush1.bf16.msra.mxu0 0
    %5723 = vmatprep.mubr.bf16.mxu0 0
    %5724 = vmatmul.mubr.bf16.gmra.mrb[0].mxu0 %v5689
    %v5725 = vpop.f32.mrb[0].mxu0
    %v5726 = vadd.f32 0.0, %v5725
    %v5727 = vpop.f32.mrb[0].mxu0
    %v5728 = vadd.f32 0.0, %v5727
    %v5729 = vpop.f32.mrb[0].mxu0
    %v5730 = vpop.f32.mrb[0].mxu0
    %5731 = vdwg.mxu0
    %v5732 = vadd.f32 %v5679, %v5726
    %v5733 = vadd.f32 %v5681, %v5728
    %v5734 = vxor.u32 %v5732, 2147483648
    %v5735 = vxor.u32 %v5733, 2147483648
    %v5736 = vmul.f32 %v5734, 1.442695
    %v5737 = vpow.pop %v5736
    %v5738 = vmul.f32 %v5735, 1.442695
    %v5739 = vpow.pop %v5738
    %v5740 = vadd.f32 %v5737, 1.0
    %v5741 = vadd.f32 %v5739, 1.0
    %v5742 = vrcp.pop %v5740
    %v5743 = vmul.f32 1.0, %v5742
    %v5744 = vrcp.pop %v5741
    %v5745 = vmul.f32 1.0, %v5744
    %v5746 = vmul.f32 %v5745, 2.0
    %v5747 = vsub.f32 %v5746, 1.0
    %v5749 = vrot.slane %v5747, 1
    %v5751 = vsel %vm429, %v5640, %v5749
    %v5753 = vrot.slane %v5751, 7
    %v5755 = vmul.f32 %v5743, %v5753
    %5756 = vrot.lane.b32.xlu0 %v5755, 64
    %v5757 = vpop.permute.xlu0 %5756
    %v5758 = vadd.f32 %v5755, %v5757
    %v5759 = vtanh.pop %v5758
    %v5760 = vmul.f32 %v5745, %v5759
    %v5761 = vpack.c.bf16 %v5760, %v5760
    %5762 = vmatprep.subr.bf16.mxu0 %v612
    %5763 = vmatpush1.bf16.msra.mxu0 %v611
    %5764 = vmatprep.subr.bf16.mxu0 %v614
    %5765 = vmatpush1.bf16.msra.mxu0 %v613
    %5766 = vmatprep.subr.bf16.mxu0 %v616
    %5767 = vmatpush1.bf16.msra.mxu0 %v615
    %5768 = vmatprep.subr.bf16.mxu0 %v618
    %5769 = vmatpush1.bf16.msra.mxu0 %v617
    %5770 = vmatprep.subr.bf16.mxu0 %v620
    %5771 = vmatpush1.bf16.msra.mxu0 %v619
    %5772 = vmatprep.subr.bf16.mxu0 %v622
    %5773 = vmatpush1.bf16.msra.mxu0 %v621
    %5774 = vmatprep.subr.bf16.mxu0 %v624
    %5775 = vmatpush1.bf16.msra.mxu0 %v623
    %5776 = vmatprep.subr.bf16.mxu0 %v626
    %5777 = vmatpush1.bf16.msra.mxu0 %v625
    %5778 = vmatprep.subr.bf16.mxu0 0
    %5779 = vmatpush1.bf16.msra.mxu0 0
    %5780 = vmatprep.subr.bf16.mxu0 0
    %5781 = vmatpush1.bf16.msra.mxu0 0
    %5782 = vmatprep.subr.bf16.mxu0 0
    %5783 = vmatpush1.bf16.msra.mxu0 0
    %5784 = vmatprep.subr.bf16.mxu0 0
    %5785 = vmatpush1.bf16.msra.mxu0 0
    %5786 = vmatprep.subr.bf16.mxu0 0
    %5787 = vmatpush1.bf16.msra.mxu0 0
    %5788 = vmatprep.subr.bf16.mxu0 0
    %5789 = vmatpush1.bf16.msra.mxu0 0
    %5790 = vmatprep.subr.bf16.mxu0 0
    %5791 = vmatpush1.bf16.msra.mxu0 0
    %5792 = vmatprep.subr.bf16.mxu0 0
    %5793 = vmatpush1.bf16.msra.mxu0 0
    %5794 = vmatprep.mubr.bf16.mxu0 0
    %5795 = vmatmul.mubr.bf16.gmra.mrb[0].mxu0 %v5761
    %v5796 = vpop.f32.mrb[0].mxu0
    %v5797 = vadd.f32 0.0, %v5796
    %v5798 = vpop.f32.mrb[0].mxu0
    %v5799 = vadd.f32 0.0, %v5798
    %v5800 = vpop.f32.mrb[0].mxu0
    %v5801 = vpop.f32.mrb[0].mxu0
    %5802 = vdwg.mxu0
    %v5805 = vrot.slane %v5797, 7
    %v5806 = vrot.slane %v5799, 7
    %v5809 = vadd.f32 %v5679, %v5805
    %v5810 = vadd.f32 %v5681, %v5806
    %v5811 = vxor.u32 %v5809, 2147483648
    %v5812 = vxor.u32 %v5810, 2147483648
    %v5813 = vmul.f32 %v5811, 1.442695
    %v5814 = vpow.pop %v5813
    %v5815 = vmul.f32 %v5812, 1.442695
    %v5816 = vpow.pop %v5815
    %v5817 = vadd.f32 %v5814, 1.0
    %v5818 = vadd.f32 %v5816, 1.0
    %v5819 = vrcp.pop %v5817
    %v5820 = vmul.f32 1.0, %v5819
    %v5821 = vrcp.pop %v5818
    %v5822 = vmul.f32 1.0, %v5821
    %v5823 = vmul.f32 %v5822, 2.0
    %v5824 = vsub.f32 %v5823, 1.0
    %v5826 = vrot.slane %v5824, 1
    %v5828 = vsel %vm429, %v5758, %v5826
    %v5830 = vrot.slane %v5828, 7
    %v5832 = vmul.f32 %v5820, %v5830
    %v5834 = vrot.slane %v5832, 1
    %5836 = vrot.lane.b32.xlu0 %v5834, 64
    %v5837 = vpop.permute.xlu0 %5836
    %v5839 = vrot.slane %v5837, 7
    %v5841 = vadd.f32 %v5832, %v5839
    %v5842 = vtanh.pop %v5841
    %v5843 = vmul.f32 %v5822, %v5842
    %v5844 = vpack.c.bf16 %v5843, %v5843
    %v5846 = vshrl.u32 %v5844, 16
    %5849 = vmatprep.subr.bf16.mxu0 %v612
    %5850 = vmatpush1.bf16.msra.mxu0 %v611
    %5851 = vmatprep.subr.bf16.mxu0 %v614
    %5852 = vmatpush1.bf16.msra.mxu0 %v613
    %5853 = vmatprep.subr.bf16.mxu0 %v616
    %5854 = vmatpush1.bf16.msra.mxu0 %v615
    %5855 = vmatprep.subr.bf16.mxu0 %v618
    %5856 = vmatpush1.bf16.msra.mxu0 %v617
    %5857 = vmatprep.subr.bf16.mxu0 %v620
    %5858 = vmatpush1.bf16.msra.mxu0 %v619
    %5859 = vmatprep.subr.bf16.mxu0 %v622
    %5860 = vmatpush1.bf16.msra.mxu0 %v621
    %5861 = vmatprep.subr.bf16.mxu0 %v624
    %5862 = vmatpush1.bf16.msra.mxu0 %v623
    %5863 = vmatprep.subr.bf16.mxu0 %v626
    %5864 = vmatpush1.bf16.msra.mxu0 %v625
    %5865 = vmatprep.subr.bf16.mxu0 0
    %5866 = vmatpush1.bf16.msra.mxu0 0
    %5867 = vmatprep.subr.bf16.mxu0 0
    %5868 = vmatpush1.bf16.msra.mxu0 0
    %5869 = vmatprep.subr.bf16.mxu0 0
    %5870 = vmatpush1.bf16.msra.mxu0 0
    %5871 = vmatprep.subr.bf16.mxu0 0
    %5872 = vmatpush1.bf16.msra.mxu0 0
    %5873 = vmatprep.subr.bf16.mxu0 0
    %5874 = vmatpush1.bf16.msra.mxu0 0
    %5875 = vmatprep.subr.bf16.mxu0 0
    %5876 = vmatpush1.bf16.msra.mxu0 0
    %5877 = vmatprep.subr.bf16.mxu0 0
    %5878 = vmatpush1.bf16.msra.mxu0 0
    %5879 = vmatprep.subr.bf16.mxu0 0
    %5880 = vmatpush1.bf16.msra.mxu0 0
    %5881 = vmatprep.mubr.bf16.mxu0 0
    %5882 = vmatmul.mubr.bf16.gmra.mrb[0].mxu0 %v5846
    %v5883 = vpop.f32.mrb[0].mxu0
    %v5884 = vadd.f32 0.0, %v5883
    %v5885 = vpop.f32.mrb[0].mxu0
    %v5886 = vadd.f32 0.0, %v5885
    %v5887 = vpop.f32.mrb[0].mxu0
    %v5888 = vpop.f32.mrb[0].mxu0
    %5889 = vdwg.mxu0
    %v5892 = vrot.slane %v5884, 6
    %v5893 = vrot.slane %v5886, 6
    %v5896 = vadd.f32 %v5679, %v5892
    %v5897 = vadd.f32 %v5681, %v5893
    %v5898 = vxor.u32 %v5896, 2147483648
    %v5899 = vxor.u32 %v5897, 2147483648
    %v5900 = vmul.f32 %v5898, 1.442695
    %v5901 = vpow.pop %v5900
    %v5902 = vmul.f32 %v5899, 1.442695
    %v5903 = vpow.pop %v5902
    %v5904 = vadd.f32 %v5901, 1.0
    %v5905 = vadd.f32 %v5903, 1.0
    %v5906 = vrcp.pop %v5904
    %v5907 = vmul.f32 1.0, %v5906
    %v5908 = vrcp.pop %v5905
    %v5909 = vmul.f32 1.0, %v5908
    %v5910 = vmul.f32 %v5909, 2.0
    %v5911 = vsub.f32 %v5910, 1.0
    %v5913 = vrot.slane %v5911, 1
    %v5915 = vsel %vm429, %v5841, %v5913
    %v5917 = vrot.slane %v5915, 7
    %v5919 = vmul.f32 %v5907, %v5917
    %v5921 = vrot.slane %v5919, 2
    %5923 = vrot.lane.b32.xlu0 %v5921, 64
    %v5924 = vpop.permute.xlu0 %5923
    %v5926 = vrot.slane %v5924, 6
    %v5928 = vadd.f32 %v5919, %v5926
    %v5929 = vtanh.pop %v5928
    %v5930 = vmul.f32 %v5909, %v5929
    %v5931 = vpack.c.bf16 %v5930, %v5930
    %v5933 = vrot.slane %v5931, 1
    %5935 = vmatprep.subr.bf16.mxu0 %v612
    %5936 = vmatpush1.bf16.msra.mxu0 %v611
    %5937 = vmatprep.subr.bf16.mxu0 %v614
    %5938 = vmatpush1.bf16.msra.mxu0 %v613
    %5939 = vmatprep.subr.bf16.mxu0 %v616
    %5940 = vmatpush1.bf16.msra.mxu0 %v615
    %5941 = vmatprep.subr.bf16.mxu0 %v618
    %5942 = vmatpush1.bf16.msra.mxu0 %v617
    %5943 = vmatprep.subr.bf16.mxu0 %v620
    %5944 = vmatpush1.bf16.msra.mxu0 %v619
    %5945 = vmatprep.subr.bf16.mxu0 %v622
    %5946 = vmatpush1.bf16.msra.mxu0 %v621
    %5947 = vmatprep.subr.bf16.mxu0 %v624
    %5948 = vmatpush1.bf16.msra.mxu0 %v623
    %5949 = vmatprep.subr.bf16.mxu0 %v626
    %5950 = vmatpush1.bf16.msra.mxu0 %v625
    %5951 = vmatprep.subr.bf16.mxu0 0
    %5952 = vmatpush1.bf16.msra.mxu0 0
    %5953 = vmatprep.subr.bf16.mxu0 0
    %5954 = vmatpush1.bf16.msra.mxu0 0
    %5955 = vmatprep.subr.bf16.mxu0 0
    %5956 = vmatpush1.bf16.msra.mxu0 0
    %5957 = vmatprep.subr.bf16.mxu0 0
    %5958 = vmatpush1.bf16.msra.mxu0 0
    %5959 = vmatprep.subr.bf16.mxu0 0
    %5960 = vmatpush1.bf16.msra.mxu0 0
    %5961 = vmatprep.subr.bf16.mxu0 0
    %5962 = vmatpush1.bf16.msra.mxu0 0
    %5963 = vmatprep.subr.bf16.mxu0 0
    %5964 = vmatpush1.bf16.msra.mxu0 0
    %5965 = vmatprep.subr.bf16.mxu0 0
    %5966 = vmatpush1.bf16.msra.mxu0 0
    %5967 = vmatprep.mubr.bf16.mxu0 0
    %5968 = vmatmul.mubr.bf16.gmra.mrb[0].mxu0 %v5933
    %v5969 = vpop.f32.mrb[0].mxu0
    %v5970 = vadd.f32 0.0, %v5969
    %v5971 = vpop.f32.mrb[0].mxu0
    %v5972 = vadd.f32 0.0, %v5971
    %v5973 = vpop.f32.mrb[0].mxu0
    %v5974 = vpop.f32.mrb[0].mxu0
    %5975 = vdwg.mxu0
    %v5978 = vrot.slane %v5970, 5
    %v5979 = vrot.slane %v5972, 5
    %v5982 = vadd.f32 %v5679, %v5978
    %v5983 = vadd.f32 %v5681, %v5979
    %v5984 = vxor.u32 %v5982, 2147483648
    %v5985 = vxor.u32 %v5983, 2147483648
    %v5986 = vmul.f32 %v5984, 1.442695
    %v5987 = vpow.pop %v5986
    %v5988 = vmul.f32 %v5985, 1.442695
    %v5989 = vpow.pop %v5988
    %v5990 = vadd.f32 %v5987, 1.0
    %v5991 = vadd.f32 %v5989, 1.0
    %v5992 = vrcp.pop %v5990
    %v5993 = vmul.f32 1.0, %v5992
    %v5994 = vrcp.pop %v5991
    %v5995 = vmul.f32 1.0, %v5994
    %v5996 = vmul.f32 %v5995, 2.0
    %v5997 = vsub.f32 %v5996, 1.0
    %v5999 = vrot.slane %v5997, 1
    %v6001 = vsel %vm429, %v5928, %v5999
    %v6003 = vrot.slane %v6001, 7
    %v6005 = vmul.f32 %v5993, %v6003
    %v6007 = vrot.slane %v6005, 3
    %6009 = vrot.lane.b32.xlu0 %v6007, 64
    %v6010 = vpop.permute.xlu0 %6009
    %v6012 = vrot.slane %v6010, 5
    %v6014 = vadd.f32 %v6005, %v6012
    %v6015 = vtanh.pop %v6014
    %v6016 = vmul.f32 %v5995, %v6015
    %v6017 = vpack.c.bf16 %v6016, %v6016
    %v6019 = vshrl.u32 %v6017, 16
    %v6021 = vrot.slane %v6019, 1
    %6023 = vmatprep.subr.bf16.mxu0 %v612
    %6024 = vmatpush1.bf16.msra.mxu0 %v611
    %6025 = vmatprep.subr.bf16.mxu0 %v614
    %6026 = vmatpush1.bf16.msra.mxu0 %v613
    %6027 = vmatprep.subr.bf16.mxu0 %v616
    %6028 = vmatpush1.bf16.msra.mxu0 %v615
    %6029 = vmatprep.subr.bf16.mxu0 %v618
    %6030 = vmatpush1.bf16.msra.mxu0 %v617
    %6031 = vmatprep.subr.bf16.mxu0 %v620
    %6032 = vmatpush1.bf16.msra.mxu0 %v619
    %6033 = vmatprep.subr.bf16.mxu0 %v622
    %6034 = vmatpush1.bf16.msra.mxu0 %v621
    %6035 = vmatprep.subr.bf16.mxu0 %v624
    %6036 = vmatpush1.bf16.msra.mxu0 %v623
    %6037 = vmatprep.subr.bf16.mxu0 %v626
    %6038 = vmatpush1.bf16.msra.mxu0 %v625
    %6039 = vmatprep.subr.bf16.mxu0 0
    %6040 = vmatpush1.bf16.msra.mxu0 0
    %6041 = vmatprep.subr.bf16.mxu0 0
    %6042 = vmatpush1.bf16.msra.mxu0 0
    %6043 = vmatprep.subr.bf16.mxu0 0
    %6044 = vmatpush1.bf16.msra.mxu0 0
    %6045 = vmatprep.subr.bf16.mxu0 0
    %6046 = vmatpush1.bf16.msra.mxu0 0
    %6047 = vmatprep.subr.bf16.mxu0 0
    %6048 = vmatpush1.bf16.msra.mxu0 0
    %6049 = vmatprep.subr.bf16.mxu0 0
    %6050 = vmatpush1.bf16.msra.mxu0 0
    %6051 = vmatprep.subr.bf16.mxu0 0
    %6052 = vmatpush1.bf16.msra.mxu0 0
    %6053 = vmatprep.subr.bf16.mxu0 0
    %6054 = vmatpush1.bf16.msra.mxu0 0
    %6055 = vmatprep.mubr.bf16.mxu0 0
    %6056 = vmatmul.mubr.bf16.gmra.mrb[0].mxu0 %v6021
    %v6057 = vpop.f32.mrb[0].mxu0
    %v6058 = vadd.f32 0.0, %v6057
    %v6059 = vpop.f32.mrb[0].mxu0
    %v6060 = vadd.f32 0.0, %v6059
    %v6061 = vpop.f32.mrb[0].mxu0
    %v6062 = vpop.f32.mrb[0].mxu0
    %6063 = vdwg.mxu0
    %v6066 = vrot.slane %v6058, 4
    %v6067 = vrot.slane %v6060, 4
    %v6070 = vadd.f32 %v5679, %v6066
    %v6071 = vadd.f32 %v5681, %v6067
    %v6072 = vxor.u32 %v6070, 2147483648
    %v6073 = vxor.u32 %v6071, 2147483648
    %v6074 = vmul.f32 %v6072, 1.442695
    %v6075 = vpow.pop %v6074
    %v6076 = vmul.f32 %v6073, 1.442695
    %v6077 = vpow.pop %v6076
    %v6078 = vadd.f32 %v6075, 1.0
    %v6079 = vadd.f32 %v6077, 1.0
    %v6080 = vrcp.pop %v6078
    %v6081 = vmul.f32 1.0, %v6080
    %v6082 = vrcp.pop %v6079
    %v6083 = vmul.f32 1.0, %v6082
    %v6084 = vmul.f32 %v6083, 2.0
    %v6085 = vsub.f32 %v6084, 1.0
    %v6087 = vrot.slane %v6085, 1
    %v6089 = vsel %vm429, %v6014, %v6087
    %v6091 = vrot.slane %v6089, 7
    %v6093 = vmul.f32 %v6081, %v6091
    %v6095 = vrot.slane %v6093, 4
    %6097 = vrot.lane.b32.xlu0 %v6095, 64
    %v6098 = vpop.permute.xlu0 %6097
    %v6100 = vrot.slane %v6098, 4
    %v6102 = vadd.f32 %v6093, %v6100
    %v6103 = vtanh.pop %v6102
    %v6104 = vmul.f32 %v6083, %v6103
    %v6105 = vpack.c.bf16 %v6104, %v6104
    %v6107 = vrot.slane %v6105, 2
    %6109 = vmatprep.subr.bf16.mxu0 %v612
    %6110 = vmatpush1.bf16.msra.mxu0 %v611
    %6111 = vmatprep.subr.bf16.mxu0 %v614
    %6112 = vmatpush1.bf16.msra.mxu0 %v613
    %6113 = vmatprep.subr.bf16.mxu0 %v616
    %6114 = vmatpush1.bf16.msra.mxu0 %v615
    %6115 = vmatprep.subr.bf16.mxu0 %v618
    %6116 = vmatpush1.bf16.msra.mxu0 %v617
    %6117 = vmatprep.subr.bf16.mxu0 %v620
    %6118 = vmatpush1.bf16.msra.mxu0 %v619
    %6119 = vmatprep.subr.bf16.mxu0 %v622
    %6120 = vmatpush1.bf16.msra.mxu0 %v621
    %6121 = vmatprep.subr.bf16.mxu0 %v624
    %6122 = vmatpush1.bf16.msra.mxu0 %v623
    %6123 = vmatprep.subr.bf16.mxu0 %v626
    %6124 = vmatpush1.bf16.msra.mxu0 %v625
    %6125 = vmatprep.subr.bf16.mxu0 0
    %6126 = vmatpush1.bf16.msra.mxu0 0
    %6127 = vmatprep.subr.bf16.mxu0 0
    %6128 = vmatpush1.bf16.msra.mxu0 0
    %6129 = vmatprep.subr.bf16.mxu0 0
    %6130 = vmatpush1.bf16.msra.mxu0 0
    %6131 = vmatprep.subr.bf16.mxu0 0
    %6132 = vmatpush1.bf16.msra.mxu0 0
    %6133 = vmatprep.subr.bf16.mxu0 0
    %6134 = vmatpush1.bf16.msra.mxu0 0
    %6135 = vmatprep.subr.bf16.mxu0 0
    %6136 = vmatpush1.bf16.msra.mxu0 0
    %6137 = vmatprep.subr.bf16.mxu0 0
    %6138 = vmatpush1.bf16.msra.mxu0 0
    %6139 = vmatprep.subr.bf16.mxu0 0
    %6140 = vmatpush1.bf16.msra.mxu0 0
    %6141 = vmatprep.mubr.bf16.mxu0 0
    %6142 = vmatmul.mubr.bf16.gmra.mrb[0].mxu0 %v6107
    %v6143 = vpop.f32.mrb[0].mxu0
    %v6144 = vadd.f32 0.0, %v6143
    %v6145 = vpop.f32.mrb[0].mxu0
    %v6146 = vadd.f32 0.0, %v6145
    %v6147 = vpop.f32.mrb[0].mxu0
    %v6148 = vpop.f32.mrb[0].mxu0
    %6149 = vdwg.mxu0
    %v6152 = vrot.slane %v6144, 3
    %v6153 = vrot.slane %v6146, 3
    %v6156 = vadd.f32 %v5679, %v6152
    %v6157 = vadd.f32 %v5681, %v6153
    %v6158 = vxor.u32 %v6156, 2147483648
    %v6159 = vxor.u32 %v6157, 2147483648
    %v6160 = vmul.f32 %v6158, 1.442695
    %v6161 = vpow.pop %v6160
    %v6162 = vmul.f32 %v6159, 1.442695
    %v6163 = vpow.pop %v6162
    %v6164 = vadd.f32 %v6161, 1.0
    %v6165 = vadd.f32 %v6163, 1.0
    %v6166 = vrcp.pop %v6164
    %v6167 = vmul.f32 1.0, %v6166
    %v6168 = vrcp.pop %v6165
    %v6169 = vmul.f32 1.0, %v6168
    %v6170 = vmul.f32 %v6169, 2.0
    %v6171 = vsub.f32 %v6170, 1.0
    %v6173 = vrot.slane %v6171, 1
    %v6175 = vsel %vm429, %v6102, %v6173
    %v6177 = vrot.slane %v6175, 7
    %v6179 = vmul.f32 %v6167, %v6177
    %v6181 = vrot.slane %v6179, 5
    %6183 = vrot.lane.b32.xlu0 %v6181, 64
    %v6184 = vpop.permute.xlu0 %6183
    %v6186 = vrot.slane %v6184, 3
    %v6188 = vadd.f32 %v6179, %v6186
    %v6189 = vtanh.pop %v6188
    %v6190 = vmul.f32 %v6169, %v6189
    %v6191 = vpack.c.bf16 %v6190, %v6190
    %v6193 = vshrl.u32 %v6191, 16
    %v6195 = vrot.slane %v6193, 2
    %6197 = vmatprep.subr.bf16.mxu0 %v612
    %6198 = vmatpush1.bf16.msra.mxu0 %v611
    %6199 = vmatprep.subr.bf16.mxu0 %v614
    %6200 = vmatpush1.bf16.msra.mxu0 %v613
    %6201 = vmatprep.subr.bf16.mxu0 %v616
    %6202 = vmatpush1.bf16.msra.mxu0 %v615
    %6203 = vmatprep.subr.bf16.mxu0 %v618
    %6204 = vmatpush1.bf16.msra.mxu0 %v617
    %6205 = vmatprep.subr.bf16.mxu0 %v620
    %6206 = vmatpush1.bf16.msra.mxu0 %v619
    %6207 = vmatprep.subr.bf16.mxu0 %v622
    %6208 = vmatpush1.bf16.msra.mxu0 %v621
    %6209 = vmatprep.subr.bf16.mxu0 %v624
    %6210 = vmatpush1.bf16.msra.mxu0 %v623
    %6211 = vmatprep.subr.bf16.mxu0 %v626
    %6212 = vmatpush1.bf16.msra.mxu0 %v625
    %6213 = vmatprep.subr.bf16.mxu0 0
    %6214 = vmatpush1.bf16.msra.mxu0 0
    %6215 = vmatprep.subr.bf16.mxu0 0
    %6216 = vmatpush1.bf16.msra.mxu0 0
    %6217 = vmatprep.subr.bf16.mxu0 0
    %6218 = vmatpush1.bf16.msra.mxu0 0
    %6219 = vmatprep.subr.bf16.mxu0 0
    %6220 = vmatpush1.bf16.msra.mxu0 0
    %6221 = vmatprep.subr.bf16.mxu0 0
    %6222 = vmatpush1.bf16.msra.mxu0 0
    %6223 = vmatprep.subr.bf16.mxu0 0
    %6224 = vmatpush1.bf16.msra.mxu0 0
    %6225 = vmatprep.subr.bf16.mxu0 0
    %6226 = vmatpush1.bf16.msra.mxu0 0
    %6227 = vmatprep.subr.bf16.mxu0 0
    %6228 = vmatpush1.bf16.msra.mxu0 0
    %6229 = vmatprep.mubr.bf16.mxu0 0
    %6230 = vmatmul.mubr.bf16.gmra.mrb[0].mxu0 %v6195
    %v6231 = vpop.f32.mrb[0].mxu0
    %v6232 = vadd.f32 0.0, %v6231
    %v6233 = vpop.f32.mrb[0].mxu0
    %v6234 = vadd.f32 0.0, %v6233
    %v6235 = vpop.f32.mrb[0].mxu0
    %v6236 = vpop.f32.mrb[0].mxu0
    %6237 = vdwg.mxu0
    %v6240 = vrot.slane %v6232, 2
    %v6241 = vrot.slane %v6234, 2
    %v6244 = vadd.f32 %v5679, %v6240
    %v6245 = vadd.f32 %v5681, %v6241
    %v6246 = vxor.u32 %v6244, 2147483648
    %v6247 = vxor.u32 %v6245, 2147483648
    %v6248 = vmul.f32 %v6246, 1.442695
    %v6249 = vpow.pop %v6248
    %v6250 = vmul.f32 %v6247, 1.442695
    %v6251 = vpow.pop %v6250
    %v6252 = vadd.f32 %v6249, 1.0
    %v6253 = vadd.f32 %v6251, 1.0
    %v6254 = vrcp.pop %v6252
    %v6255 = vmul.f32 1.0, %v6254
    %v6256 = vrcp.pop %v6253
    %v6257 = vmul.f32 1.0, %v6256
    %v6258 = vmul.f32 %v6257, 2.0
    %v6259 = vsub.f32 %v6258, 1.0
    %v6261 = vrot.slane %v6259, 1
    %v6263 = vsel %vm429, %v6188, %v6261
    %v6265 = vrot.slane %v6263, 7
    %v6267 = vmul.f32 %v6255, %v6265
    %v6269 = vrot.slane %v6267, 6
    %6271 = vrot.lane.b32.xlu0 %v6269, 64
    %v6272 = vpop.permute.xlu0 %6271
    %v6274 = vrot.slane %v6272, 2
    %v6276 = vadd.f32 %v6267, %v6274
    %v6277 = vtanh.pop %v6276
    %v6278 = vmul.f32 %v6257, %v6277
    %v6279 = vpack.c.bf16 %v6278, %v6278
    %v6281 = vrot.slane %v6279, 3
    %6283 = vmatprep.subr.bf16.mxu0 %v612
    %6284 = vmatpush1.bf16.msra.mxu0 %v611
    %6285 = vmatprep.subr.bf16.mxu0 %v614
    %6286 = vmatpush1.bf16.msra.mxu0 %v613
    %6287 = vmatprep.subr.bf16.mxu0 %v616
    %6288 = vmatpush1.bf16.msra.mxu0 %v615
    %6289 = vmatprep.subr.bf16.mxu0 %v618
    %6290 = vmatpush1.bf16.msra.mxu0 %v617
    %6291 = vmatprep.subr.bf16.mxu0 %v620
    %6292 = vmatpush1.bf16.msra.mxu0 %v619
    %6293 = vmatprep.subr.bf16.mxu0 %v622
    %6294 = vmatpush1.bf16.msra.mxu0 %v621
    %6295 = vmatprep.subr.bf16.mxu0 %v624
    %6296 = vmatpush1.bf16.msra.mxu0 %v623
    %6297 = vmatprep.subr.bf16.mxu0 %v626
    %6298 = vmatpush1.bf16.msra.mxu0 %v625
    %6299 = vmatprep.subr.bf16.mxu0 0
    %6300 = vmatpush1.bf16.msra.mxu0 0
    %6301 = vmatprep.subr.bf16.mxu0 0
    %6302 = vmatpush1.bf16.msra.mxu0 0
    %6303 = vmatprep.subr.bf16.mxu0 0
    %6304 = vmatpush1.bf16.msra.mxu0 0
    %6305 = vmatprep.subr.bf16.mxu0 0
    %6306 = vmatpush1.bf16.msra.mxu0 0
    %6307 = vmatprep.subr.bf16.mxu0 0
    %6308 = vmatpush1.bf16.msra.mxu0 0
    %6309 = vmatprep.subr.bf16.mxu0 0
    %6310 = vmatpush1.bf16.msra.mxu0 0
    %6311 = vmatprep.subr.bf16.mxu0 0
    %6312 = vmatpush1.bf16.msra.mxu0 0
    %6313 = vmatprep.subr.bf16.mxu0 0
    %6314 = vmatpush1.bf16.msra.mxu0 0
    %6315 = vmatprep.mubr.bf16.mxu0 0
    %6316 = vmatmul.mubr.bf16.gmra.mrb[0].mxu0 %v6281
    %v6317 = vpop.f32.mrb[0].mxu0
    %v6318 = vadd.f32 0.0, %v6317
    %v6319 = vpop.f32.mrb[0].mxu0
    %v6320 = vadd.f32 0.0, %v6319
    %v6321 = vpop.f32.mrb[0].mxu0
    %v6322 = vpop.f32.mrb[0].mxu0
    %6323 = vdwg.mxu0
    %v6326 = vrot.slane %v6318, 1
    %v6327 = vrot.slane %v6320, 1
    %v6330 = vadd.f32 %v5679, %v6326
    %v6331 = vadd.f32 %v5681, %v6327
    %v6332 = vxor.u32 %v6330, 2147483648
    %v6333 = vxor.u32 %v6331, 2147483648
    %v6334 = vmul.f32 %v6332, 1.442695
    %v6335 = vpow.pop %v6334
    %v6336 = vmul.f32 %v6333, 1.442695
    %v6337 = vpow.pop %v6336
    %v6338 = vadd.f32 %v6335, 1.0
    %v6339 = vadd.f32 %v6337, 1.0
    %v6340 = vrcp.pop %v6338
    %v6341 = vmul.f32 1.0, %v6340
    %v6342 = vrcp.pop %v6339
    %v6343 = vmul.f32 1.0, %v6342
    %v6344 = vmul.f32 %v6343, 2.0
    %v6345 = vsub.f32 %v6344, 1.0
    %v6347 = vrot.slane %v6345, 1
    %v6349 = vsel %vm429, %v6276, %v6347
    %v6351 = vrot.slane %v6349, 7
    %v6353 = vmul.f32 %v6341, %v6351
    %v6355 = vrot.slane %v6353, 7
    %6357 = vrot.lane.b32.xlu0 %v6355, 64
    %v6358 = vpop.permute.xlu0 %6357
    %v6360 = vrot.slane %v6358, 1
    %v6362 = vadd.f32 %v6353, %v6360
    %v6363 = vtanh.pop %v6362
    %v6364 = vmul.f32 %v6343, %v6363
    %v6365 = vmax.f32 %v6364, 0.0
    %v6366 = vpack.c.bf16 %v6365, %v6365
    %v6367 = vld [vmem:[%s5] sm:$0xf]
    %v6368 = vld [vmem:[%s5 + $0x4] sm:$0xf]
    %v6369 = vld [vmem:[%s5 + $0x8] sm:$0xf]
    %v6370 = vld [vmem:[%s5 + $0xc] sm:$0xf]
    %v6371 = vld [vmem:[%s5 + $0x10] sm:$0xf]
    %v6372 = vld [vmem:[%s5 + $0x14] sm:$0xf]
    %v6373 = vld [vmem:[%s5 + $0x18] sm:$0xf]
    %v6374 = vld [vmem:[%s5 + $0x1c] sm:$0xf]
    %v6375 = vld [vmem:[%s5 + $0x20] sm:$0xf]
    %v6376 = vld [vmem:[%s5 + $0x24] sm:$0xf]
    %v6377 = vld [vmem:[%s5 + $0x28] sm:$0xf]
    %v6378 = vld [vmem:[%s5 + $0x2c] sm:$0xf]
    %v6379 = vld [vmem:[%s5 + $0x30] sm:$0xf]
    %v6380 = vld [vmem:[%s5 + $0x34] sm:$0xf]
    %v6381 = vld [vmem:[%s5 + $0x38] sm:$0xf]
    %v6382 = vld [vmem:[%s5 + $0x3c] sm:$0xf]
    %v6384 = vshrl.u32 %v6366, 16
    %v6386 = vrot.slane %v6384, 3
    %v6404 = vunpack.c.l.b16 %v6367
    %v6405 = vunpack.c.l.b16 %v6368
    %v6406 = vunpack.c.l.b16 %v6369
    %v6407 = vunpack.c.l.b16 %v6370
    %v6408 = vunpack.c.l.b16 %v6371
    %v6409 = vunpack.c.l.b16 %v6372
    %v6410 = vunpack.c.l.b16 %v6373
    %v6411 = vunpack.c.l.b16 %v6374
    %v6412 = vunpack.c.l.b16 %v6375
    %v6413 = vunpack.c.l.b16 %v6376
    %v6414 = vunpack.c.l.b16 %v6377
    %v6415 = vunpack.c.l.b16 %v6378
    %v6416 = vunpack.c.l.b16 %v6379
    %v6417 = vunpack.c.l.b16 %v6380
    %v6418 = vunpack.c.l.b16 %v6381
    %v6419 = vunpack.c.l.b16 %v6382
    %v6420 = vpack.c.b16 %v6405, %v6404
    %v6421 = vpack.c.b16 %v6407, %v6406
    %v6422 = vpack.c.b16 %v6409, %v6408
    %v6423 = vpack.c.b16 %v6411, %v6410
    %v6424 = vpack.c.b16 %v6413, %v6412
    %v6425 = vpack.c.b16 %v6415, %v6414
    %v6426 = vpack.c.b16 %v6417, %v6416
    %v6427 = vpack.c.b16 %v6419, %v6418
    %6436 = vmatprep.subr.bf16.mxu0 0
    %6437 = vmatpush1.bf16.msra.mxu0 %v6420
    %6438 = vmatprep.subr.bf16.mxu0 0
    %6439 = vmatpush1.bf16.msra.mxu0 %v6421
    %6440 = vmatprep.subr.bf16.mxu0 0
    %6441 = vmatpush1.bf16.msra.mxu0 %v6422
    %6442 = vmatprep.subr.bf16.mxu0 0
    %6443 = vmatpush1.bf16.msra.mxu0 %v6423
    %6444 = vmatprep.subr.bf16.mxu0 0
    %6445 = vmatpush1.bf16.msra.mxu0 %v6424
    %6446 = vmatprep.subr.bf16.mxu0 0
    %6447 = vmatpush1.bf16.msra.mxu0 %v6425
    %6448 = vmatprep.subr.bf16.mxu0 0
    %6449 = vmatpush1.bf16.msra.mxu0 %v6426
    %6450 = vmatprep.subr.bf16.mxu0 0
    %6451 = vmatpush1.bf16.msra.mxu0 %v6427
    %6452 = vmatprep.subr.bf16.mxu0 0
    %6453 = vmatpush1.bf16.msra.mxu0 0
    %6454 = vmatprep.subr.bf16.mxu0 0
    %6455 = vmatpush1.bf16.msra.mxu0 0
    %6456 = vmatprep.subr.bf16.mxu0 0
    %6457 = vmatpush1.bf16.msra.mxu0 0
    %6458 = vmatprep.subr.bf16.mxu0 0
    %6459 = vmatpush1.bf16.msra.mxu0 0
    %6460 = vmatprep.subr.bf16.mxu0 0
    %6461 = vmatpush1.bf16.msra.mxu0 0
    %6462 = vmatprep.subr.bf16.mxu0 0
    %6463 = vmatpush1.bf16.msra.mxu0 0
    %6464 = vmatprep.subr.bf16.mxu0 0
    %6465 = vmatpush1.bf16.msra.mxu0 0
    %6466 = vmatprep.subr.bf16.mxu0 0
    %6467 = vmatpush1.bf16.msra.mxu0 0
    %6468 = vmatprep.mubr.bf16.mxu0 0
    %6469 = vmatmul.mubr.bf16.gmra.mrb[0].mxu0 %v6386
    %v6470 = vpop.f32.mrb[0].mxu0
    %v6471 = vadd.f32 0.0, %v6470
    %v6472 = vpop.f32.mrb[0].mxu0
    %v6473 = vpop.f32.mrb[0].mxu0
    %v6474 = vpop.f32.mrb[0].mxu0
    %6475 = vdwg.mxu0
    %v6476 = vmax.f32 %v6471, 0.0
    %v6477 = vpack.c.bf16 %v6476, %v6476
    %v6478 = vld [vmem:[%s6] sm:$0xf]
    %v6479 = vld [vmem:[%s6 + $0x4] sm:$0xf]
    %v6480 = vld [vmem:[%s6 + $0x8] sm:$0xf]
    %v6481 = vld [vmem:[%s6 + $0xc] sm:$0xf]
    %v6482 = vld [vmem:[%s7] sm:$0x1]
    %v6487 = vunpack.c.l.b16 %v6478
    %v6488 = vunpack.c.l.b16 %v6479
    %v6489 = vunpack.c.l.b16 %v6480
    %v6490 = vunpack.c.l.b16 %v6481
    %v6491 = vpack.c.b16 %v6488, %v6487
    %v6492 = vpack.c.b16 %v6490, %v6489
    %vm6495 = vcmask 261120
    %v6497 = vsel %vm6495, %v6477, 0
    %6499 = vmatprep.subr.bf16.mxu0 0
    %6500 = vmatpush1.bf16.msra.mxu0 %v6491
    %6501 = vmatprep.subr.bf16.mxu0 0
    %6502 = vmatpush1.bf16.msra.mxu0 %v6492
    %6503 = vmatprep.subr.bf16.mxu0 0
    %6504 = vmatpush1.bf16.msra.mxu0 0
    %6505 = vmatprep.subr.bf16.mxu0 0
    %6506 = vmatpush1.bf16.msra.mxu0 0
    %6507 = vmatprep.subr.bf16.mxu0 0
    %6508 = vmatpush1.bf16.msra.mxu0 0
    %6509 = vmatprep.subr.bf16.mxu0 0
    %6510 = vmatpush1.bf16.msra.mxu0 0
    %6511 = vmatprep.subr.bf16.mxu0 0
    %6512 = vmatpush1.bf16.msra.mxu0 0
    %6513 = vmatprep.subr.bf16.mxu0 0
    %6514 = vmatpush1.bf16.msra.mxu0 0
    %6515 = vmatprep.subr.bf16.mxu0 0
    %6516 = vmatpush1.bf16.msra.mxu0 0
    %6517 = vmatprep.subr.bf16.mxu0 0
    %6518 = vmatpush1.bf16.msra.mxu0 0
    %6519 = vmatprep.subr.bf16.mxu0 0
    %6520 = vmatpush1.bf16.msra.mxu0 0
    %6521 = vmatprep.subr.bf16.mxu0 0
    %6522 = vmatpush1.bf16.msra.mxu0 0
    %6523 = vmatprep.subr.bf16.mxu0 0
    %6524 = vmatpush1.bf16.msra.mxu0 0
    %6525 = vmatprep.subr.bf16.mxu0 0
    %6526 = vmatpush1.bf16.msra.mxu0 0
    %6527 = vmatprep.subr.bf16.mxu0 0
    %6528 = vmatpush1.bf16.msra.mxu0 0
    %6529 = vmatprep.subr.bf16.mxu0 0
    %6530 = vmatpush1.bf16.msra.mxu0 0
    %6531 = vmatprep.mubr.bf16.mxu0 0
    %6532 = vmatmul.mubr.bf16.gmra.mrb[0].mxu0 %v6497
    %v6533 = vpop.f32.mrb[0].mxu0
    %v6534 = vadd.f32 %v6482, %v6533
    %v6535 = vpop.f32.mrb[0].mxu0
    %v6536 = vpop.f32.mrb[0].mxu0
    %v6537 = vpop.f32.mrb[0].mxu0
    %6538 = vdwg.mxu0
    %vm6539 = vcmask 65536
    %6540 = vst.msk [vmem:[#allocation2] sm:$0x1] %vm6539, %v6534
    // Predicated region
    $region34: #{simple_conv_lstm2.1} parent=1 // pred_check
      _
    $region35: #{simple_conv_lstm2.1} parent=1 // pred_check_branch
      %6542 = sbr.rel (0) target = $region37
    $region36: #{simple_conv_lstm2.1} parent=1 // pred_region
      %s6544 = ssub.s32 16, 16
      %6545 = vsyncadd [#allocation3], %s6544
      %s6547 = sshll.u32 [#allocation2], 4
      %s6548 = int_to_ptr.vmem [resolvable:$true] %s6547
      %6550 = dma.vmem_to_hbm [thread:$0]  %s6548, 16, %s8, [#allocation3]
    $region37: #{simple_conv_lstm2.1} parent=1 // pred_fallthru
      _
    // Predicated region
    $region38: #{simple_conv_lstm2.1} parent=1 // pred_check
      _
    $region39: #{simple_conv_lstm2.1} parent=1 // pred_check_branch
      %6552 = sbr.rel (0) target = $region41
    $region40: #{simple_conv_lstm2.1} parent=1 // pred_region
      %6553 = dma.done [#allocation3], 16
    $region41: #{simple_conv_lstm2.1} parent=1 // pred_fallthru
      _
    %6554 = vsyncpa [#allocation3], 1

</llo_original>
